<compile_context>
chip_gen: v6e
topology: v6e:2x2x1
jax: 0.10.0
libtpu: 0.0.40
codegen_flags: <defaults>
</compile_context>

<pallas_src>
import functools

import numpy as np
import jax
import jax.numpy as jnp
from jax.experimental import pallas as pl
from jax.experimental.pallas import tpu as pltpu


# ---------------------------------------------------------------------------
# Fused kernel: one full SwinTransformerBlock (attn + MLP) per grid step.
# x arrives already in window order (windows contiguous on the token axis);
# the output stays in window order (LN/MLP are token-permutation invariant).
# ---------------------------------------------------------------------------

def _swin_tblock_kernel(x_ref, g1_ref, b1_ref, wqkv_ref, bqkv_ref,
                        wproj_ref, bproj_ref, bias_ref,
                        g2_ref, b2_ref, w1_ref, bb1_ref, w2_ref, bb2_ref,
                        o_ref, *, heads, nW, N, eps):
    L, C = x_ref.shape                       # L = nW * N tokens, window-major
    hd = C // heads

    x = x_ref[...].astype(jnp.float32)

    # --- LayerNorm 1 (single pass) ---
    mu = jnp.mean(x, axis=-1, keepdims=True)
    var = jnp.mean(x * x, axis=-1, keepdims=True) - mu * mu
    xn = (x - mu) * jax.lax.rsqrt(var + eps)
    xn = xn * g1_ref[...].astype(jnp.float32) + b1_ref[...].astype(jnp.float32)

    # --- QKV projection (attention scale pre-folded into Q columns) ---
    qkv = jnp.dot(xn.astype(jnp.bfloat16), wqkv_ref[...],
                  preferred_element_type=jnp.float32)
    qkv = qkv + bqkv_ref[...].astype(jnp.float32)            # (L, 3C)

    # --- windowed multi-head attention: heads unrolled, windows batched.
    # Each head's (P @ V) is projected with its (hd, C) slice of Wproj and
    # accumulated into the full-lane-width output -> no narrow concatenate.
    acc = None
    for h in range(heads):
        qh = qkv[:, h * hd:(h + 1) * hd].reshape(nW, N, hd)
        kh = qkv[:, C + h * hd:C + (h + 1) * hd].reshape(nW, N, hd)
        vh = qkv[:, 2 * C + h * hd:2 * C + (h + 1) * hd].reshape(nW, N, hd)

        s = jax.lax.dot_general(
            qh.astype(jnp.bfloat16), kh.astype(jnp.bfloat16),
            dimension_numbers=(((2,), (2,)), ((0,), (0,))),
            preferred_element_type=jnp.float32)               # (nW, N, N)
        s = s + bias_ref[h].astype(jnp.float32)               # (nWb, N, N) broadcasts

        s = s - jnp.max(s, axis=-1, keepdims=True)
        p = jnp.exp(s)
        p = p / jnp.sum(p, axis=-1, keepdims=True)            # exact softmax

        oh = jax.lax.dot_general(
            p.astype(jnp.bfloat16), vh.astype(jnp.bfloat16),
            dimension_numbers=(((2,), (1,)), ((0,), (0,))),
            preferred_element_type=jnp.float32)               # (nW, N, hd)

        contrib = jnp.dot(oh.reshape(L, hd).astype(jnp.bfloat16),
                          wproj_ref[h],                        # (hd, C) bf16
                          preferred_element_type=jnp.float32)  # (L, C)
        acc = contrib if acc is None else acc + contrib

    x1 = x + acc + bproj_ref[...].astype(jnp.float32)          # fused residual

    # --- LayerNorm 2 + MLP (fc1 + GELU + fc2) + residual ---
    mu2 = jnp.mean(x1, axis=-1, keepdims=True)
    var2 = jnp.mean(x1 * x1, axis=-1, keepdims=True) - mu2 * mu2
    x2n = (x1 - mu2) * jax.lax.rsqrt(var2 + eps)
    x2n = x2n * g2_ref[...].astype(jnp.float32) + b2_ref[...].astype(jnp.float32)

    hmid = jnp.dot(x2n.astype(jnp.bfloat16), w1_ref[...],
                   preferred_element_type=jnp.float32) + bb1_ref[...].astype(jnp.float32)
    # TODO(synk): PyTorch nn.GELU defaults to exact erf GELU; tanh approximation
    # is used to guarantee Mosaic lowering (differences ~1e-3).
    hmid = jax.nn.gelu(hmid, approximate=True)

    y = jnp.dot(hmid.astype(jnp.bfloat16), w2_ref[...],
                preferred_element_type=jnp.float32) + bb2_ref[...].astype(jnp.float32)

    o_ref[...] = (x1 + y).astype(o_ref.dtype)


def swin_transformer_block(xw, p, bias_mask, heads, eps=1e-5):
    """One fused SwinTransformerBlock. xw: (B, L, C) tokens in window order."""
    B, L, C = xw.shape
    hd = C // heads
    N = bias_mask.shape[-1]
    nW = L // N
    Hd = p['fc1_w'].shape[1]
    scale = hd ** -0.5

    # fold attention scale into the Q columns of the QKV projection (free)
    col_scale = jnp.concatenate([jnp.full((C,), scale, jnp.float32),
                                 jnp.ones((2 * C,), jnp.float32)])
    wqkv = (p['qkv_w'] * col_scale).astype(jnp.bfloat16)
    bqkv = (p['qkv_b'] * col_scale).reshape(1, 3 * C)
    wproj = p['proj_w'].reshape(heads, hd, C).astype(jnp.bfloat16)

    def full(shape):
        return pl.BlockSpec(shape, lambda b, _n=len(shape): (0,) * _n)

    kernel = functools.partial(_swin_tblock_kernel, heads=heads, nW=nW, N=N, eps=eps)
    return pl.pallas_call(
        kernel,
        out_shape=jax.ShapeDtypeStruct((B, L, C), xw.dtype),
        grid=(B,),
        in_specs=[
            pl.BlockSpec((None, L, C), lambda b: (b, 0, 0)),
            full((1, C)), full((1, C)),
            full((C, 3 * C)), full((1, 3 * C)),
            full((heads, hd, C)), full((1, C)),
            full(bias_mask.shape),
            full((1, C)), full((1, C)),
            full((C, Hd)), full((1, Hd)),
            full((Hd, C)), full((1, C)),
        ],
        out_specs=pl.BlockSpec((None, L, C), lambda b: (b, 0, 0)),
        compiler_params=pltpu.CompilerParams(dimension_semantics=("parallel",)),
    )(xw,
      p['norm1_g'].reshape(1, C), p['norm1_b'].reshape(1, C),
      wqkv, bqkv,
      wproj, p['proj_b'].reshape(1, C),
      bias_mask,
      p['norm2_g'].reshape(1, C), p['norm2_b'].reshape(1, C),
      p['fc1_w'].astype(jnp.bfloat16), p['fc1_b'].reshape(1, Hd),
      p['fc2_w'].astype(jnp.bfloat16), p['fc2_b'].reshape(1, C))


# ---------------------------------------------------------------------------
# Host-side glue: window permutations (shift folded in), rel-pos bias, SW mask
# ---------------------------------------------------------------------------

def _window_permutation(H, W, ws, shift):
    # (window, intra-window) order -> flat H*W token index, cyclic shift folded in.
    rows = (np.arange(H) + shift) % H        # roll(x, -shift): y[i] = x[(i+shift)%H]
    cols = (np.arange(W) + shift) % W
    gr = rows.reshape(H // ws, ws)
    gc = cols.reshape(W // ws, ws)
    idx = gr[:, None, :, None] * W + gc[None, :, None, :]    # (H/ws, W/ws, ws, ws)
    fwd = idx.reshape(-1).astype(np.int32)
    inv = np.argsort(fwd).astype(np.int32)
    return fwd, inv


def _relative_position_bias(table, ws, heads):
    coords = np.stack(np.meshgrid(np.arange(ws), np.arange(ws), indexing='ij'))
    cf = coords.reshape(2, -1)                                # (2, N)
    rel = (cf[:, :, None] - cf[:, None, :]).transpose(1, 2, 0)
    rel[..., 0] += ws - 1
    rel[..., 1] += ws - 1
    rel[..., 0] *= 2 * ws - 1
    idx = rel.sum(-1)                                         # (N, N)
    N = ws * ws
    bias = table[idx.reshape(-1)].reshape(N, N, heads)
    return jnp.transpose(bias, (2, 0, 1))                     # (heads, N, N)


def _attn_mask(H, W, ws, shift):
    # Standard Swin SW-MSA mask, static numpy, (nW, N, N).
    img = np.zeros((H, W), np.int32)
    cnt = 0
    for hs in (slice(0, -ws), slice(-ws, -shift), slice(-shift, None)):
        for wsl in (slice(0, -ws), slice(-ws, -shift), slice(-shift, None)):
            img[hs, wsl] = cnt
            cnt += 1
    mw = img.reshape(H // ws, ws, W // ws, ws).transpose(0, 2, 1, 3).reshape(-1, ws * ws)
    am = mw[:, None, :] - mw[:, :, None]
    return np.where(am != 0, -100.0, 0.0).astype(np.float32)


def _bias_mask(p, H, W, ws, shift, heads):
    # (heads, nW_or_1, N, N): rel-pos bias pre-combined with the shift mask.
    bias = _relative_position_bias(p['rpb_table'], ws, heads)     # (heads, N, N)
    if shift > 0:
        mask = jnp.asarray(_attn_mask(H, W, ws, shift))            # (nW, N, N)
        return bias[:, None, :, :] + mask[None, :, :, :]
    return bias[:, None, :, :]


# ---------------------------------------------------------------------------
# SwinBlock forward: swtb2(swtb1(x)); swtb1 unshifted, swtb2 shifted.
# ---------------------------------------------------------------------------

def swin_block(x, params, H, W, ws, shift_size, heads, eps=1e-5):
    B, L, C = x.shape
    fwd0, inv0 = _window_permutation(H, W, ws, 0)
    fwd_s, inv_s = _window_permutation(H, W, ws, shift_size)
    perm_mid = inv0[fwd_s]            # W0 window order -> shifted window order

    bm1 = _bias_mask(params['swtb1'], H, W, ws, 0, heads)
    bm2 = _bias_mask(params['swtb2'], H, W, ws, shift_size, heads)

    # window partition (shift 0) once; kernels keep window order throughout
    xw = jnp.take(x, jnp.asarray(fwd0), axis=1)
    y1 = swin_transformer_block(xw, params['swtb1'], bm1, heads, eps)

    # single composed permutation between the two blocks (MLP is permutation-invariant)
    if not np.array_equal(perm_mid, np.arange(L)):
        y1 = jnp.take(y1, jnp.asarray(perm_mid), axis=1)
    y2 = swin_transformer_block(y1, params['swtb2'], bm2, heads, eps)

    # single window-reverse back to the original (B, H*W, C) token order
    return jnp.take(y2, jnp.asarray(inv_s), axis=1)


# ---------------------------------------------------------------------------
# Deterministic parameter init (shapes follow a standard Swin block)
# ---------------------------------------------------------------------------

def init_block_params(key, dim, heads, ws, mlp_ratio=4):
    ks = jax.random.split(key, 5)
    hidden = dim * mlp_ratio

    def tn(k, shape):
        return (0.02 * jax.random.normal(k, shape)).astype(jnp.float32)

    return dict(
        norm1_g=jnp.ones((dim,), jnp.float32),
        norm1_b=jnp.zeros((dim,), jnp.float32),
        qkv_w=tn(ks[0], (dim, 3 * dim)),      # stored (in, out); y = x @ W + b
        qkv_b=jnp.zeros((3 * dim,), jnp.float32),
        proj_w=tn(ks[1], (dim, dim)),
        proj_b=jnp.zeros((dim,), jnp.float32),
        rpb_table=tn(ks[2], ((2 * ws - 1) ** 2, heads)),
        norm2_g=jnp.ones((dim,), jnp.float32),
        norm2_b=jnp.zeros((dim,), jnp.float32),
        fc1_w=tn(ks[3], (dim, hidden)),
        fc1_b=jnp.zeros((hidden,), jnp.float32),
        fc2_w=tn(ks[4], (hidden, dim)),
        fc2_b=jnp.zeros((dim,), jnp.float32),
    )


if __name__ == "__main__":
    dim = 32
    H = W = 8                 # input_resolution = (8, 8)
    window_size = 4
    heads = 4
    shift_size = 2            # SwinBlock(shift_size=2): swtb2 uses the shifted path
    B = 2

    key = jax.random.PRNGKey(0)
    kx, k1, k2 = jax.random.split(key, 3)
    x = jax.random.normal(kx, (B, H * W, dim), jnp.float32)
    params = dict(swtb1=init_block_params(k1, dim, heads, window_size),
                  swtb2=init_block_params(k2, dim, heads, window_size))

    fn = jax.jit(functools.partial(swin_block, H=H, W=W, ws=window_size,
                                   shift_size=shift_size, heads=heads))
    out = fn(x, params)
    jax.block_until_ready(out)
    assert out.shape == (B, H * W, dim) and out.dtype == jnp.float32
    assert bool(jnp.all(jnp.isfinite(out)))
    print("KERNEL_OK")
</pallas_src>

<mosaic_0001>
module attributes {stable_mosaic.version = 11 : i64} {
  func.func @_swin_tblock_kernel(%arg0: i32, %arg1: memref<1x64x32xf32, #tpu.memory_space<vmem>>, %arg2: memref<1x32xf32, #tpu.memory_space<vmem>>, %arg3: memref<1x32xf32, #tpu.memory_space<vmem>>, %arg4: memref<32x96xbf16, #tpu.memory_space<vmem>>, %arg5: memref<1x96xf32, #tpu.memory_space<vmem>>, %arg6: memref<4x8x32xbf16, #tpu.memory_space<vmem>>, %arg7: memref<1x32xf32, #tpu.memory_space<vmem>>, %arg8: memref<4x1x16x16xf32, #tpu.memory_space<vmem>>, %arg9: memref<1x32xf32, #tpu.memory_space<vmem>>, %arg10: memref<1x32xf32, #tpu.memory_space<vmem>>, %arg11: memref<32x128xbf16, #tpu.memory_space<vmem>>, %arg12: memref<1x128xf32, #tpu.memory_space<vmem>>, %arg13: memref<128x32xbf16, #tpu.memory_space<vmem>>, %arg14: memref<1x32xf32, #tpu.memory_space<vmem>>, %arg15: memref<1x64x32xf32, #tpu.memory_space<vmem>>) attributes {dimension_semantics = [#tpu.dimension_semantics<parallel>], iteration_bounds = array<i64: 2>, scalar_prefetch = 0 : i64, scratch_operands = 0 : i64, tpu.core_type = #tpu.core_type<tc>, window_params = [{transform_indices = @transform_0, window_bounds = array<i64: 1, 64, 32>}, {pipeline_mode = #tpu.pipeline_mode<synchronous>, transform_indices = @transform_1, window_bounds = array<i64: 1, 32>}, {pipeline_mode = #tpu.pipeline_mode<synchronous>, transform_indices = @transform_2, window_bounds = array<i64: 1, 32>}, {pipeline_mode = #tpu.pipeline_mode<synchronous>, transform_indices = @transform_3, window_bounds = array<i64: 32, 96>}, {pipeline_mode = #tpu.pipeline_mode<synchronous>, transform_indices = @transform_4, window_bounds = array<i64: 1, 96>}, {pipeline_mode = #tpu.pipeline_mode<synchronous>, transform_indices = @transform_5, window_bounds = array<i64: 4, 8, 32>}, {pipeline_mode = #tpu.pipeline_mode<synchronous>, transform_indices = @transform_6, window_bounds = array<i64: 1, 32>}, {pipeline_mode = #tpu.pipeline_mode<synchronous>, transform_indices = @transform_7, window_bounds = array<i64: 4, 1, 16, 16>}, {pipeline_mode = #tpu.pipeline_mode<synchronous>, transform_indices = @transform_8, window_bounds = array<i64: 1, 32>}, {pipeline_mode = #tpu.pipeline_mode<synchronous>, transform_indices = @transform_9, window_bounds = array<i64: 1, 32>}, {pipeline_mode = #tpu.pipeline_mode<synchronous>, transform_indices = @transform_10, window_bounds = array<i64: 32, 128>}, {pipeline_mode = #tpu.pipeline_mode<synchronous>, transform_indices = @transform_11, window_bounds = array<i64: 1, 128>}, {pipeline_mode = #tpu.pipeline_mode<synchronous>, transform_indices = @transform_12, window_bounds = array<i64: 128, 32>}, {pipeline_mode = #tpu.pipeline_mode<synchronous>, transform_indices = @transform_13, window_bounds = array<i64: 1, 32>}, {transform_indices = @transform_14, window_bounds = array<i64: 1, 64, 32>}]} {
    %c0 = arith.constant 0 : index
    %c0_0 = arith.constant 0 : index
    %c0_1 = arith.constant 0 : index
    %0 = vector.load %arg1[%c0, %c0_0, %c0_1] : memref<1x64x32xf32, #tpu.memory_space<vmem>>, vector<1x64x32xf32>
    %1 = vector.shape_cast %0 : vector<1x64x32xf32> to vector<64x32xf32>
    %cst = arith.constant dense<0.000000e+00> : vector<64xf32>
    %2 = vector.multi_reduction <add>, %1, %cst [1] : vector<64x32xf32> to vector<64xf32>
    %3 = vector.shape_cast %2 : vector<64xf32> to vector<64x1xf32>
    %cst_2 = arith.constant 3.200000e+01 : f32
    %4 = vector.broadcast %cst_2 : f32 to vector<64x1xf32>
    %5 = arith.divf %3, %4 : vector<64x1xf32>
    %6 = arith.mulf %1, %1 : vector<64x32xf32>
    %cst_3 = arith.constant dense<0.000000e+00> : vector<64xf32>
    %7 = vector.multi_reduction <add>, %6, %cst_3 [1] : vector<64x32xf32> to vector<64xf32>
    %8 = vector.shape_cast %7 : vector<64xf32> to vector<64x1xf32>
    %cst_4 = arith.constant 3.200000e+01 : f32
    %9 = vector.broadcast %cst_4 : f32 to vector<64x1xf32>
    %10 = arith.divf %8, %9 : vector<64x1xf32>
    %11 = arith.mulf %5, %5 : vector<64x1xf32>
    %12 = arith.subf %10, %11 : vector<64x1xf32>
    %13 = vector.broadcast %5 : vector<64x1xf32> to vector<64x32xf32>
    %14 = arith.subf %1, %13 : vector<64x32xf32>
    %cst_5 = arith.constant 9.99999974E-6 : f32
    %15 = vector.broadcast %cst_5 : f32 to vector<64x1xf32>
    %16 = arith.addf %12, %15 : vector<64x1xf32>
    %17 = math.rsqrt %16 : vector<64x1xf32>
    %18 = vector.broadcast %17 : vector<64x1xf32> to vector<64x32xf32>
    %19 = arith.mulf %14, %18 : vector<64x32xf32>
    %c0_6 = arith.constant 0 : index
    %c0_7 = arith.constant 0 : index
    %20 = vector.load %arg2[%c0_6, %c0_7] : memref<1x32xf32, #tpu.memory_space<vmem>>, vector<1x32xf32>
    %21 = vector.broadcast %20 : vector<1x32xf32> to vector<64x32xf32>
    %22 = arith.mulf %19, %21 : vector<64x32xf32>
    %c0_8 = arith.constant 0 : index
    %c0_9 = arith.constant 0 : index
    %23 = vector.load %arg3[%c0_8, %c0_9] : memref<1x32xf32, #tpu.memory_space<vmem>>, vector<1x32xf32>
    %24 = vector.broadcast %23 : vector<1x32xf32> to vector<64x32xf32>
    %25 = arith.addf %22, %24 : vector<64x32xf32>
    %26 = arith.truncf %25 : vector<64x32xf32> to vector<64x32xbf16>
    %c0_10 = arith.constant 0 : index
    %c0_11 = arith.constant 0 : index
    %27 = vector.load %arg4[%c0_10, %c0_11] : memref<32x96xbf16, #tpu.memory_space<vmem>>, vector<32x96xbf16>
    %cst_12 = arith.constant dense<0.000000e+00> : vector<64x96xf32>
    %28 = tpu.matmul %26, %27, %cst_12 {dimension_numbers = #tpu.dot_dimension_numbers<[1], [0], [0], [1], [0, 0, 1, 1], [], []>} : vector<64x32xbf16>, vector<32x96xbf16>, vector<64x96xf32> -> vector<64x96xf32>
    %c0_13 = arith.constant 0 : index
    %c0_14 = arith.constant 0 : index
    %29 = vector.load %arg5[%c0_13, %c0_14] : memref<1x96xf32, #tpu.memory_space<vmem>>, vector<1x96xf32>
    %30 = vector.broadcast %29 : vector<1x96xf32> to vector<64x96xf32>
    %31 = arith.addf %28, %30 : vector<64x96xf32>
    %32 = vector.extract_strided_slice %31 {offsets = [0, 0], sizes = [64, 8], strides = [1, 1]} : vector<64x96xf32> to vector<64x8xf32>
    %33 = vector.shape_cast %32 : vector<64x8xf32> to vector<4x16x8xf32>
    %34 = vector.extract_strided_slice %31 {offsets = [0, 32], sizes = [64, 8], strides = [1, 1]} : vector<64x96xf32> to vector<64x8xf32>
    %35 = vector.shape_cast %34 : vector<64x8xf32> to vector<4x16x8xf32>
    %36 = vector.extract_strided_slice %31 {offsets = [0, 64], sizes = [64, 8], strides = [1, 1]} : vector<64x96xf32> to vector<64x8xf32>
    %37 = vector.shape_cast %36 : vector<64x8xf32> to vector<4x16x8xf32>
    %38 = arith.truncf %33 : vector<4x16x8xf32> to vector<4x16x8xbf16>
    %39 = arith.truncf %35 : vector<4x16x8xf32> to vector<4x16x8xbf16>
    %cst_15 = arith.constant dense<0.000000e+00> : vector<4x16x16xf32>
    %40 = tpu.matmul %38, %39, %cst_15 {dimension_numbers = #tpu.dot_dimension_numbers<[2], [2], [1], [1], [0, 0, 0, 1, 1, 1], [0], [0]>} : vector<4x16x8xbf16>, vector<4x16x8xbf16>, vector<4x16x16xf32> -> vector<4x16x16xf32>
    %c0_16 = arith.constant 0 : index
    %c0_17 = arith.constant 0 : index
    %c0_18 = arith.constant 0 : index
    %c0_19 = arith.constant 0 : index
    %41 = vector.load %arg8[%c0_16, %c0_17, %c0_18, %c0_19] : memref<4x1x16x16xf32, #tpu.memory_space<vmem>>, vector<1x1x16x16xf32>
    %42 = vector.shape_cast %41 : vector<1x1x16x16xf32> to vector<1x16x16xf32>
    %43 = vector.broadcast %42 : vector<1x16x16xf32> to vector<4x16x16xf32>
    %44 = arith.addf %40, %43 : vector<4x16x16xf32>
    %cst_20 = arith.constant dense<0xFF800000> : vector<4x16xf32>
    %45 = vector.multi_reduction <maximumf>, %44, %cst_20 [2] : vector<4x16x16xf32> to vector<4x16xf32>
    %46 = vector.shape_cast %45 : vector<4x16xf32> to vector<4x16x1xf32>
    %47 = vector.broadcast %46 : vector<4x16x1xf32> to vector<4x16x16xf32>
    %48 = arith.subf %44, %47 : vector<4x16x16xf32>
    %49 = math.exp %48 : vector<4x16x16xf32>
    %cst_21 = arith.constant dense<0.000000e+00> : vector<4x16xf32>
    %50 = vector.multi_reduction <add>, %49, %cst_21 [2] : vector<4x16x16xf32> to vector<4x16xf32>
    %51 = vector.shape_cast %50 : vector<4x16xf32> to vector<4x16x1xf32>
    %52 = vector.broadcast %51 : vector<4x16x1xf32> to vector<4x16x16xf32>
    %53 = arith.divf %49, %52 : vector<4x16x16xf32>
    %54 = arith.truncf %53 : vector<4x16x16xf32> to vector<4x16x16xbf16>
    %55 = arith.truncf %37 : vector<4x16x8xf32> to vector<4x16x8xbf16>
    %cst_22 = arith.constant dense<0.000000e+00> : vector<4x16x8xf32>
    %56 = tpu.matmul %54, %55, %cst_22 {dimension_numbers = #tpu.dot_dimension_numbers<[2], [1], [1], [2], [0, 0, 0, 1, 1, 2], [0], [0]>} : vector<4x16x16xbf16>, vector<4x16x8xbf16>, vector<4x16x8xf32> -> vector<4x16x8xf32>
    %57 = vector.shape_cast %56 : vector<4x16x8xf32> to vector<64x8xf32>
    %58 = arith.truncf %57 : vector<64x8xf32> to vector<64x8xbf16>
    %c0_23 = arith.constant 0 : index
    %c0_24 = arith.constant 0 : index
    %c0_25 = arith.constant 0 : index
    %59 = vector.load %arg6[%c0_23, %c0_24, %c0_25] : memref<4x8x32xbf16, #tpu.memory_space<vmem>>, vector<1x8x32xbf16>
    %60 = vector.shape_cast %59 : vector<1x8x32xbf16> to vector<8x32xbf16>
    %cst_26 = arith.constant dense<0.000000e+00> : vector<64x32xf32>
    %61 = tpu.matmul %58, %60, %cst_26 {dimension_numbers = #tpu.dot_dimension_numbers<[1], [0], [0], [1], [0, 0, 1, 1], [], []>} : vector<64x8xbf16>, vector<8x32xbf16>, vector<64x32xf32> -> vector<64x32xf32>
    %62 = vector.extract_strided_slice %31 {offsets = [0, 8], sizes = [64, 8], strides = [1, 1]} : vector<64x96xf32> to vector<64x8xf32>
    %63 = vector.shape_cast %62 : vector<64x8xf32> to vector<4x16x8xf32>
    %64 = vector.extract_strided_slice %31 {offsets = [0, 40], sizes = [64, 8], strides = [1, 1]} : vector<64x96xf32> to vector<64x8xf32>
    %65 = vector.shape_cast %64 : vector<64x8xf32> to vector<4x16x8xf32>
    %66 = vector.extract_strided_slice %31 {offsets = [0, 72], sizes = [64, 8], strides = [1, 1]} : vector<64x96xf32> to vector<64x8xf32>
    %67 = vector.shape_cast %66 : vector<64x8xf32> to vector<4x16x8xf32>
    %68 = arith.truncf %63 : vector<4x16x8xf32> to vector<4x16x8xbf16>
    %69 = arith.truncf %65 : vector<4x16x8xf32> to vector<4x16x8xbf16>
    %cst_27 = arith.constant dense<0.000000e+00> : vector<4x16x16xf32>
    %70 = tpu.matmul %68, %69, %cst_27 {dimension_numbers = #tpu.dot_dimension_numbers<[2], [2], [1], [1], [0, 0, 0, 1, 1, 1], [0], [0]>} : vector<4x16x8xbf16>, vector<4x16x8xbf16>, vector<4x16x16xf32> -> vector<4x16x16xf32>
    %c1 = arith.constant 1 : index
    %c0_28 = arith.constant 0 : index
    %c0_29 = arith.constant 0 : index
    %c0_30 = arith.constant 0 : index
    %71 = vector.load %arg8[%c1, %c0_28, %c0_29, %c0_30] : memref<4x1x16x16xf32, #tpu.memory_space<vmem>>, vector<1x1x16x16xf32>
    %72 = vector.shape_cast %71 : vector<1x1x16x16xf32> to vector<1x16x16xf32>
    %73 = vector.broadcast %72 : vector<1x16x16xf32> to vector<4x16x16xf32>
    %74 = arith.addf %70, %73 : vector<4x16x16xf32>
    %cst_31 = arith.constant dense<0xFF800000> : vector<4x16xf32>
    %75 = vector.multi_reduction <maximumf>, %74, %cst_31 [2] : vector<4x16x16xf32> to vector<4x16xf32>
    %76 = vector.shape_cast %75 : vector<4x16xf32> to vector<4x16x1xf32>
    %77 = vector.broadcast %76 : vector<4x16x1xf32> to vector<4x16x16xf32>
    %78 = arith.subf %74, %77 : vector<4x16x16xf32>
    %79 = math.exp %78 : vector<4x16x16xf32>
    %cst_32 = arith.constant dense<0.000000e+00> : vector<4x16xf32>
    %80 = vector.multi_reduction <add>, %79, %cst_32 [2] : vector<4x16x16xf32> to vector<4x16xf32>
    %81 = vector.shape_cast %80 : vector<4x16xf32> to vector<4x16x1xf32>
    %82 = vector.broadcast %81 : vector<4x16x1xf32> to vector<4x16x16xf32>
    %83 = arith.divf %79, %82 : vector<4x16x16xf32>
    %84 = arith.truncf %83 : vector<4x16x16xf32> to vector<4x16x16xbf16>
    %85 = arith.truncf %67 : vector<4x16x8xf32> to vector<4x16x8xbf16>
    %cst_33 = arith.constant dense<0.000000e+00> : vector<4x16x8xf32>
    %86 = tpu.matmul %84, %85, %cst_33 {dimension_numbers = #tpu.dot_dimension_numbers<[2], [1], [1], [2], [0, 0, 0, 1, 1, 2], [0], [0]>} : vector<4x16x16xbf16>, vector<4x16x8xbf16>, vector<4x16x8xf32> -> vector<4x16x8xf32>
    %87 = vector.shape_cast %86 : vector<4x16x8xf32> to vector<64x8xf32>
    %88 = arith.truncf %87 : vector<64x8xf32> to vector<64x8xbf16>
    %c1_34 = arith.constant 1 : index
    %c0_35 = arith.constant 0 : index
    %c0_36 = arith.constant 0 : index
    %89 = vector.load %arg6[%c1_34, %c0_35, %c0_36] : memref<4x8x32xbf16, #tpu.memory_space<vmem>>, vector<1x8x32xbf16>
    %90 = vector.shape_cast %89 : vector<1x8x32xbf16> to vector<8x32xbf16>
    %cst_37 = arith.constant dense<0.000000e+00> : vector<64x32xf32>
    %91 = tpu.matmul %88, %90, %cst_37 {dimension_numbers = #tpu.dot_dimension_numbers<[1], [0], [0], [1], [0, 0, 1, 1], [], []>} : vector<64x8xbf16>, vector<8x32xbf16>, vector<64x32xf32> -> vector<64x32xf32>
    %92 = arith.addf %61, %91 : vector<64x32xf32>
    %93 = vector.extract_strided_slice %31 {offsets = [0, 16], sizes = [64, 8], strides = [1, 1]} : vector<64x96xf32> to vector<64x8xf32>
    %94 = vector.shape_cast %93 : vector<64x8xf32> to vector<4x16x8xf32>
    %95 = vector.extract_strided_slice %31 {offsets = [0, 48], sizes = [64, 8], strides = [1, 1]} : vector<64x96xf32> to vector<64x8xf32>
    %96 = vector.shape_cast %95 : vector<64x8xf32> to vector<4x16x8xf32>
    %97 = vector.extract_strided_slice %31 {offsets = [0, 80], sizes = [64, 8], strides = [1, 1]} : vector<64x96xf32> to vector<64x8xf32>
    %98 = vector.shape_cast %97 : vector<64x8xf32> to vector<4x16x8xf32>
    %99 = arith.truncf %94 : vector<4x16x8xf32> to vector<4x16x8xbf16>
    %100 = arith.truncf %96 : vector<4x16x8xf32> to vector<4x16x8xbf16>
    %cst_38 = arith.constant dense<0.000000e+00> : vector<4x16x16xf32>
    %101 = tpu.matmul %99, %100, %cst_38 {dimension_numbers = #tpu.dot_dimension_numbers<[2], [2], [1], [1], [0, 0, 0, 1, 1, 1], [0], [0]>} : vector<4x16x8xbf16>, vector<4x16x8xbf16>, vector<4x16x16xf32> -> vector<4x16x16xf32>
    %c2 = arith.constant 2 : index
    %c0_39 = arith.constant 0 : index
    %c0_40 = arith.constant 0 : index
    %c0_41 = arith.constant 0 : index
    %102 = vector.load %arg8[%c2, %c0_39, %c0_40, %c0_41] : memref<4x1x16x16xf32, #tpu.memory_space<vmem>>, vector<1x1x16x16xf32>
    %103 = vector.shape_cast %102 : vector<1x1x16x16xf32> to vector<1x16x16xf32>
    %104 = vector.broadcast %103 : vector<1x16x16xf32> to vector<4x16x16xf32>
    %105 = arith.addf %101, %104 : vector<4x16x16xf32>
    %cst_42 = arith.constant dense<0xFF800000> : vector<4x16xf32>
    %106 = vector.multi_reduction <maximumf>, %105, %cst_42 [2] : vector<4x16x16xf32> to vector<4x16xf32>
    %107 = vector.shape_cast %106 : vector<4x16xf32> to vector<4x16x1xf32>
    %108 = vector.broadcast %107 : vector<4x16x1xf32> to vector<4x16x16xf32>
    %109 = arith.subf %105, %108 : vector<4x16x16xf32>
    %110 = math.exp %109 : vector<4x16x16xf32>
    %cst_43 = arith.constant dense<0.000000e+00> : vector<4x16xf32>
    %111 = vector.multi_reduction <add>, %110, %cst_43 [2] : vector<4x16x16xf32> to vector<4x16xf32>
    %112 = vector.shape_cast %111 : vector<4x16xf32> to vector<4x16x1xf32>
    %113 = vector.broadcast %112 : vector<4x16x1xf32> to vector<4x16x16xf32>
    %114 = arith.divf %110, %113 : vector<4x16x16xf32>
    %115 = arith.truncf %114 : vector<4x16x16xf32> to vector<4x16x16xbf16>
    %116 = arith.truncf %98 : vector<4x16x8xf32> to vector<4x16x8xbf16>
    %cst_44 = arith.constant dense<0.000000e+00> : vector<4x16x8xf32>
    %117 = tpu.matmul %115, %116, %cst_44 {dimension_numbers = #tpu.dot_dimension_numbers<[2], [1], [1], [2], [0, 0, 0, 1, 1, 2], [0], [0]>} : vector<4x16x16xbf16>, vector<4x16x8xbf16>, vector<4x16x8xf32> -> vector<4x16x8xf32>
    %118 = vector.shape_cast %117 : vector<4x16x8xf32> to vector<64x8xf32>
    %119 = arith.truncf %118 : vector<64x8xf32> to vector<64x8xbf16>
    %c2_45 = arith.constant 2 : index
    %c0_46 = arith.constant 0 : index
    %c0_47 = arith.constant 0 : index
    %120 = vector.load %arg6[%c2_45, %c0_46, %c0_47] : memref<4x8x32xbf16, #tpu.memory_space<vmem>>, vector<1x8x32xbf16>
    %121 = vector.shape_cast %120 : vector<1x8x32xbf16> to vector<8x32xbf16>
    %cst_48 = arith.constant dense<0.000000e+00> : vector<64x32xf32>
    %122 = tpu.matmul %119, %121, %cst_48 {dimension_numbers = #tpu.dot_dimension_numbers<[1], [0], [0], [1], [0, 0, 1, 1], [], []>} : vector<64x8xbf16>, vector<8x32xbf16>, vector<64x32xf32> -> vector<64x32xf32>
    %123 = arith.addf %92, %122 : vector<64x32xf32>
    %124 = vector.extract_strided_slice %31 {offsets = [0, 24], sizes = [64, 8], strides = [1, 1]} : vector<64x96xf32> to vector<64x8xf32>
    %125 = vector.shape_cast %124 : vector<64x8xf32> to vector<4x16x8xf32>
    %126 = vector.extract_strided_slice %31 {offsets = [0, 56], sizes = [64, 8], strides = [1, 1]} : vector<64x96xf32> to vector<64x8xf32>
    %127 = vector.shape_cast %126 : vector<64x8xf32> to vector<4x16x8xf32>
    %128 = vector.extract_strided_slice %31 {offsets = [0, 88], sizes = [64, 8], strides = [1, 1]} : vector<64x96xf32> to vector<64x8xf32>
    %129 = vector.shape_cast %128 : vector<64x8xf32> to vector<4x16x8xf32>
    %130 = arith.truncf %125 : vector<4x16x8xf32> to vector<4x16x8xbf16>
    %131 = arith.truncf %127 : vector<4x16x8xf32> to vector<4x16x8xbf16>
    %cst_49 = arith.constant dense<0.000000e+00> : vector<4x16x16xf32>
    %132 = tpu.matmul %130, %131, %cst_49 {dimension_numbers = #tpu.dot_dimension_numbers<[2], [2], [1], [1], [0, 0, 0, 1, 1, 1], [0], [0]>} : vector<4x16x8xbf16>, vector<4x16x8xbf16>, vector<4x16x16xf32> -> vector<4x16x16xf32>
    %c3 = arith.constant 3 : index
    %c0_50 = arith.constant 0 : index
    %c0_51 = arith.constant 0 : index
    %c0_52 = arith.constant 0 : index
    %133 = vector.load %arg8[%c3, %c0_50, %c0_51, %c0_52] : memref<4x1x16x16xf32, #tpu.memory_space<vmem>>, vector<1x1x16x16xf32>
    %134 = vector.shape_cast %133 : vector<1x1x16x16xf32> to vector<1x16x16xf32>
    %135 = vector.broadcast %134 : vector<1x16x16xf32> to vector<4x16x16xf32>
    %136 = arith.addf %132, %135 : vector<4x16x16xf32>
    %cst_53 = arith.constant dense<0xFF800000> : vector<4x16xf32>
    %137 = vector.multi_reduction <maximumf>, %136, %cst_53 [2] : vector<4x16x16xf32> to vector<4x16xf32>
    %138 = vector.shape_cast %137 : vector<4x16xf32> to vector<4x16x1xf32>
    %139 = vector.broadcast %138 : vector<4x16x1xf32> to vector<4x16x16xf32>
    %140 = arith.subf %136, %139 : vector<4x16x16xf32>
    %141 = math.exp %140 : vector<4x16x16xf32>
    %cst_54 = arith.constant dense<0.000000e+00> : vector<4x16xf32>
    %142 = vector.multi_reduction <add>, %141, %cst_54 [2] : vector<4x16x16xf32> to vector<4x16xf32>
    %143 = vector.shape_cast %142 : vector<4x16xf32> to vector<4x16x1xf32>
    %144 = vector.broadcast %143 : vector<4x16x1xf32> to vector<4x16x16xf32>
    %145 = arith.divf %141, %144 : vector<4x16x16xf32>
    %146 = arith.truncf %145 : vector<4x16x16xf32> to vector<4x16x16xbf16>
    %147 = arith.truncf %129 : vector<4x16x8xf32> to vector<4x16x8xbf16>
    %cst_55 = arith.constant dense<0.000000e+00> : vector<4x16x8xf32>
    %148 = tpu.matmul %146, %147, %cst_55 {dimension_numbers = #tpu.dot_dimension_numbers<[2], [1], [1], [2], [0, 0, 0, 1, 1, 2], [0], [0]>} : vector<4x16x16xbf16>, vector<4x16x8xbf16>, vector<4x16x8xf32> -> vector<4x16x8xf32>
    %149 = vector.shape_cast %148 : vector<4x16x8xf32> to vector<64x8xf32>
    %150 = arith.truncf %149 : vector<64x8xf32> to vector<64x8xbf16>
    %c3_56 = arith.constant 3 : index
    %c0_57 = arith.constant 0 : index
    %c0_58 = arith.constant 0 : index
    %151 = vector.load %arg6[%c3_56, %c0_57, %c0_58] : memref<4x8x32xbf16, #tpu.memory_space<vmem>>, vector<1x8x32xbf16>
    %152 = vector.shape_cast %151 : vector<1x8x32xbf16> to vector<8x32xbf16>
    %cst_59 = arith.constant dense<0.000000e+00> : vector<64x32xf32>
    %153 = tpu.matmul %150, %152, %cst_59 {dimension_numbers = #tpu.dot_dimension_numbers<[1], [0], [0], [1], [0, 0, 1, 1], [], []>} : vector<64x8xbf16>, vector<8x32xbf16>, vector<64x32xf32> -> vector<64x32xf32>
    %154 = arith.addf %123, %153 : vector<64x32xf32>
    %155 = arith.addf %1, %154 : vector<64x32xf32>
    %c0_60 = arith.constant 0 : index
    %c0_61 = arith.constant 0 : index
    %156 = vector.load %arg7[%c0_60, %c0_61] : memref<1x32xf32, #tpu.memory_space<vmem>>, vector<1x32xf32>
    %157 = vector.broadcast %156 : vector<1x32xf32> to vector<64x32xf32>
    %158 = arith.addf %155, %157 : vector<64x32xf32>
    %cst_62 = arith.constant dense<0.000000e+00> : vector<64xf32>
    %159 = vector.multi_reduction <add>, %158, %cst_62 [1] : vector<64x32xf32> to vector<64xf32>
    %160 = vector.shape_cast %159 : vector<64xf32> to vector<64x1xf32>
    %cst_63 = arith.constant 3.200000e+01 : f32
    %161 = vector.broadcast %cst_63 : f32 to vector<64x1xf32>
    %162 = arith.divf %160, %161 : vector<64x1xf32>
    %163 = arith.mulf %158, %158 : vector<64x32xf32>
    %cst_64 = arith.constant dense<0.000000e+00> : vector<64xf32>
    %164 = vector.multi_reduction <add>, %163, %cst_64 [1] : vector<64x32xf32> to vector<64xf32>
    %165 = vector.shape_cast %164 : vector<64xf32> to vector<64x1xf32>
    %cst_65 = arith.constant 3.200000e+01 : f32
    %166 = vector.broadcast %cst_65 : f32 to vector<64x1xf32>
    %167 = arith.divf %165, %166 : vector<64x1xf32>
    %168 = arith.mulf %162, %162 : vector<64x1xf32>
    %169 = arith.subf %167, %168 : vector<64x1xf32>
    %170 = vector.broadcast %162 : vector<64x1xf32> to vector<64x32xf32>
    %171 = arith.subf %158, %170 : vector<64x32xf32>
    %cst_66 = arith.constant 9.99999974E-6 : f32
    %172 = vector.broadcast %cst_66 : f32 to vector<64x1xf32>
    %173 = arith.addf %169, %172 : vector<64x1xf32>
    %174 = math.rsqrt %173 : vector<64x1xf32>
    %175 = vector.broadcast %174 : vector<64x1xf32> to vector<64x32xf32>
    %176 = arith.mulf %171, %175 : vector<64x32xf32>
    %c0_67 = arith.constant 0 : index
    %c0_68 = arith.constant 0 : index
    %177 = vector.load %arg9[%c0_67, %c0_68] : memref<1x32xf32, #tpu.memory_space<vmem>>, vector<1x32xf32>
    %178 = vector.broadcast %177 : vector<1x32xf32> to vector<64x32xf32>
    %179 = arith.mulf %176, %178 : vector<64x32xf32>
    %c0_69 = arith.constant 0 : index
    %c0_70 = arith.constant 0 : index
    %180 = vector.load %arg10[%c0_69, %c0_70] : memref<1x32xf32, #tpu.memory_space<vmem>>, vector<1x32xf32>
    %181 = vector.broadcast %180 : vector<1x32xf32> to vector<64x32xf32>
    %182 = arith.addf %179, %181 : vector<64x32xf32>
    %183 = arith.truncf %182 : vector<64x32xf32> to vector<64x32xbf16>
    %c0_71 = arith.constant 0 : index
    %c0_72 = arith.constant 0 : index
    %184 = vector.load %arg11[%c0_71, %c0_72] : memref<32x128xbf16, #tpu.memory_space<vmem>>, vector<32x128xbf16>
    %cst_73 = arith.constant dense<0.000000e+00> : vector<64x128xf32>
    %185 = tpu.matmul %183, %184, %cst_73 {dimension_numbers = #tpu.dot_dimension_numbers<[1], [0], [0], [1], [0, 0, 1, 1], [], []>} : vector<64x32xbf16>, vector<32x128xbf16>, vector<64x128xf32> -> vector<64x128xf32>
    %c0_74 = arith.constant 0 : index
    %c0_75 = arith.constant 0 : index
    %186 = vector.load %arg12[%c0_74, %c0_75] : memref<1x128xf32, #tpu.memory_space<vmem>>, vector<1x128xf32>
    %187 = vector.broadcast %186 : vector<1x128xf32> to vector<64x128xf32>
    %188 = arith.addf %185, %187 : vector<64x128xf32>
    %189 = arith.mulf %188, %188 : vector<64x128xf32>
    %190 = arith.mulf %188, %189 : vector<64x128xf32>
    %cst_76 = arith.constant 4.471500e-02 : f32
    %191 = vector.broadcast %cst_76 : f32 to vector<64x128xf32>
    %192 = arith.mulf %191, %190 : vector<64x128xf32>
    %193 = arith.addf %188, %192 : vector<64x128xf32>
    %cst_77 = arith.constant 0.797884583 : f32
    %194 = vector.broadcast %cst_77 : f32 to vector<64x128xf32>
    %195 = arith.mulf %194, %193 : vector<64x128xf32>
    %196 = math.tanh %195 : vector<64x128xf32>
    %cst_78 = arith.constant 1.000000e+00 : f32
    %197 = vector.broadcast %cst_78 : f32 to vector<64x128xf32>
    %198 = arith.addf %197, %196 : vector<64x128xf32>
    %cst_79 = arith.constant 5.000000e-01 : f32
    %199 = vector.broadcast %cst_79 : f32 to vector<64x128xf32>
    %200 = arith.mulf %199, %198 : vector<64x128xf32>
    %201 = arith.mulf %188, %200 : vector<64x128xf32>
    %202 = arith.truncf %201 : vector<64x128xf32> to vector<64x128xbf16>
    %c0_80 = arith.constant 0 : index
    %c0_81 = arith.constant 0 : index
    %203 = vector.load %arg13[%c0_80, %c0_81] : memref<128x32xbf16, #tpu.memory_space<vmem>>, vector<128x32xbf16>
    %cst_82 = arith.constant dense<0.000000e+00> : vector<64x32xf32>
    %204 = tpu.matmul %202, %203, %cst_82 {dimension_numbers = #tpu.dot_dimension_numbers<[1], [0], [0], [1], [0, 0, 1, 1], [], []>} : vector<64x128xbf16>, vector<128x32xbf16>, vector<64x32xf32> -> vector<64x32xf32>
    %c0_83 = arith.constant 0 : index
    %c0_84 = arith.constant 0 : index
    %205 = vector.load %arg14[%c0_83, %c0_84] : memref<1x32xf32, #tpu.memory_space<vmem>>, vector<1x32xf32>
    %206 = vector.broadcast %205 : vector<1x32xf32> to vector<64x32xf32>
    %207 = arith.addf %204, %206 : vector<64x32xf32>
    %208 = arith.addf %158, %207 : vector<64x32xf32>
    %c0_85 = arith.constant 0 : index
    %c0_86 = arith.constant 0 : index
    %c0_87 = arith.constant 0 : index
    %209 = vector.load %arg15[%c0_85, %c0_86, %c0_87] : memref<1x64x32xf32, #tpu.memory_space<vmem>>, vector<1x64x32xf32>
    %210 = vector.shape_cast %209 : vector<1x64x32xf32> to vector<64x32xf32>
    %211 = vector.shape_cast %208 : vector<64x32xf32> to vector<1x64x32xf32>
    tpu.vector_store %arg15[%c0_85, %c0_86, %c0_87], %211 {strides = array<i32>} : memref<1x64x32xf32, #tpu.memory_space<vmem>>, vector<1x64x32xf32>,
    return
  }
  func.func @transform_0(%arg0: i32) -> (i32, i32, i32) {
    %c0_i32 = arith.constant 0 : i32
    %c0_i32_0 = arith.constant 0 : i32
    %c0_i32_1 = arith.constant 0 : i32
    return %arg0, %c0_i32, %c0_i32_0 : i32, i32, i32
  }
  func.func @transform_1(%arg0: i32) -> (i32, i32) {
    %c0_i32 = arith.constant 0 : i32
    %c0_i32_0 = arith.constant 0 : i32
    %c0_i32_1 = arith.constant 0 : i32
    return %c0_i32, %c0_i32_0 : i32, i32
  }
  func.func @transform_2(%arg0: i32) -> (i32, i32) {
    %c0_i32 = arith.constant 0 : i32
    %c0_i32_0 = arith.constant 0 : i32
    %c0_i32_1 = arith.constant 0 : i32
    return %c0_i32, %c0_i32_0 : i32, i32
  }
  func.func @transform_3(%arg0: i32) -> (i32, i32) {
    %c0_i32 = arith.constant 0 : i32
    %c0_i32_0 = arith.constant 0 : i32
    %c0_i32_1 = arith.constant 0 : i32
    return %c0_i32, %c0_i32_0 : i32, i32
  }
  func.func @transform_4(%arg0: i32) -> (i32, i32) {
    %c0_i32 = arith.constant 0 : i32
    %c0_i32_0 = arith.constant 0 : i32
    %c0_i32_1 = arith.constant 0 : i32
    return %c0_i32, %c0_i32_0 : i32, i32
  }
  func.func @transform_5(%arg0: i32) -> (i32, i32, i32) {
    %c0_i32 = arith.constant 0 : i32
    %c0_i32_0 = arith.constant 0 : i32
    %c0_i32_1 = arith.constant 0 : i32
    %c0_i32_2 = arith.constant 0 : i32
    return %c0_i32, %c0_i32_0, %c0_i32_1 : i32, i32, i32
  }
  func.func @transform_6(%arg0: i32) -> (i32, i32) {
    %c0_i32 = arith.constant 0 : i32
    %c0_i32_0 = arith.constant 0 : i32
    %c0_i32_1 = arith.constant 0 : i32
    return %c0_i32, %c0_i32_0 : i32, i32
  }
  func.func @transform_7(%arg0: i32) -> (i32, i32, i32, i32) {
    %c0_i32 = arith.constant 0 : i32
    %c0_i32_0 = arith.constant 0 : i32
    %c0_i32_1 = arith.constant 0 : i32
    %c0_i32_2 = arith.constant 0 : i32
    %c0_i32_3 = arith.constant 0 : i32
    return %c0_i32, %c0_i32_0, %c0_i32_1, %c0_i32_2 : i32, i32, i32, i32
  }
  func.func @transform_8(%arg0: i32) -> (i32, i32) {
    %c0_i32 = arith.constant 0 : i32
    %c0_i32_0 = arith.constant 0 : i32
    %c0_i32_1 = arith.constant 0 : i32
    return %c0_i32, %c0_i32_0 : i32, i32
  }
  func.func @transform_9(%arg0: i32) -> (i32, i32) {
    %c0_i32 = arith.constant 0 : i32
    %c0_i32_0 = arith.constant 0 : i32
    %c0_i32_1 = arith.constant 0 : i32
    return %c0_i32, %c0_i32_0 : i32, i32
  }
  func.func @transform_10(%arg0: i32) -> (i32, i32) {
    %c0_i32 = arith.constant 0 : i32
    %c0_i32_0 = arith.constant 0 : i32
    %c0_i32_1 = arith.constant 0 : i32
    return %c0_i32, %c0_i32_0 : i32, i32
  }
  func.func @transform_11(%arg0: i32) -> (i32, i32) {
    %c0_i32 = arith.constant 0 : i32
    %c0_i32_0 = arith.constant 0 : i32
    %c0_i32_1 = arith.constant 0 : i32
    return %c0_i32, %c0_i32_0 : i32, i32
  }
  func.func @transform_12(%arg0: i32) -> (i32, i32) {
    %c0_i32 = arith.constant 0 : i32
    %c0_i32_0 = arith.constant 0 : i32
    %c0_i32_1 = arith.constant 0 : i32
    return %c0_i32, %c0_i32_0 : i32, i32
  }
  func.func @transform_13(%arg0: i32) -> (i32, i32) {
    %c0_i32 = arith.constant 0 : i32
    %c0_i32_0 = arith.constant 0 : i32
    %c0_i32_1 = arith.constant 0 : i32
    return %c0_i32, %c0_i32_0 : i32, i32
  }
  func.func @transform_14(%arg0: i32) -> (i32, i32, i32) {
    %c0_i32 = arith.constant 0 : i32
    %c0_i32_0 = arith.constant 0 : i32
    %c0_i32_1 = arith.constant 0 : i32
    return %arg0, %c0_i32, %c0_i32_0 : i32, i32, i32
  }
}

module attributes {stable_mosaic.version = 11 : i64} {
  func.func @_swin_tblock_kernel(%arg0: i32, %arg1: memref<1x64x32xf32, #tpu.memory_space<vmem>>, %arg2: memref<1x32xf32, #tpu.memory_space<vmem>>, %arg3: memref<1x32xf32, #tpu.memory_space<vmem>>, %arg4: memref<32x96xbf16, #tpu.memory_space<vmem>>, %arg5: memref<1x96xf32, #tpu.memory_space<vmem>>, %arg6: memref<4x8x32xbf16, #tpu.memory_space<vmem>>, %arg7: memref<1x32xf32, #tpu.memory_space<vmem>>, %arg8: memref<4x4x16x16xf32, #tpu.memory_space<vmem>>, %arg9: memref<1x32xf32, #tpu.memory_space<vmem>>, %arg10: memref<1x32xf32, #tpu.memory_space<vmem>>, %arg11: memref<32x128xbf16, #tpu.memory_space<vmem>>, %arg12: memref<1x128xf32, #tpu.memory_space<vmem>>, %arg13: memref<128x32xbf16, #tpu.memory_space<vmem>>, %arg14: memref<1x32xf32, #tpu.memory_space<vmem>>, %arg15: memref<1x64x32xf32, #tpu.memory_space<vmem>>) attributes {dimension_semantics = [#tpu.dimension_semantics<parallel>], iteration_bounds = array<i64: 2>, scalar_prefetch = 0 : i64, scratch_operands = 0 : i64, tpu.core_type = #tpu.core_type<tc>, window_params = [{transform_indices = @transform_0, window_bounds = array<i64: 1, 64, 32>}, {pipeline_mode = #tpu.pipeline_mode<synchronous>, transform_indices = @transform_1, window_bounds = array<i64: 1, 32>}, {pipeline_mode = #tpu.pipeline_mode<synchronous>, transform_indices = @transform_2, window_bounds = array<i64: 1, 32>}, {pipeline_mode = #tpu.pipeline_mode<synchronous>, transform_indices = @transform_3, window_bounds = array<i64: 32, 96>}, {pipeline_mode = #tpu.pipeline_mode<synchronous>, transform_indices = @transform_4, window_bounds = array<i64: 1, 96>}, {pipeline_mode = #tpu.pipeline_mode<synchronous>, transform_indices = @transform_5, window_bounds = array<i64: 4, 8, 32>}, {pipeline_mode = #tpu.pipeline_mode<synchronous>, transform_indices = @transform_6, window_bounds = array<i64: 1, 32>}, {pipeline_mode = #tpu.pipeline_mode<synchronous>, transform_indices = @transform_7, window_bounds = array<i64: 4, 4, 16, 16>}, {pipeline_mode = #tpu.pipeline_mode<synchronous>, transform_indices = @transform_8, window_bounds = array<i64: 1, 32>}, {pipeline_mode = #tpu.pipeline_mode<synchronous>, transform_indices = @transform_9, window_bounds = array<i64: 1, 32>}, {pipeline_mode = #tpu.pipeline_mode<synchronous>, transform_indices = @transform_10, window_bounds = array<i64: 32, 128>}, {pipeline_mode = #tpu.pipeline_mode<synchronous>, transform_indices = @transform_11, window_bounds = array<i64: 1, 128>}, {pipeline_mode = #tpu.pipeline_mode<synchronous>, transform_indices = @transform_12, window_bounds = array<i64: 128, 32>}, {pipeline_mode = #tpu.pipeline_mode<synchronous>, transform_indices = @transform_13, window_bounds = array<i64: 1, 32>}, {transform_indices = @transform_14, window_bounds = array<i64: 1, 64, 32>}]} {
    %c0 = arith.constant 0 : index
    %c0_0 = arith.constant 0 : index
    %c0_1 = arith.constant 0 : index
    %0 = vector.load %arg1[%c0, %c0_0, %c0_1] : memref<1x64x32xf32, #tpu.memory_space<vmem>>, vector<1x64x32xf32>
    %1 = vector.shape_cast %0 : vector<1x64x32xf32> to vector<64x32xf32>
    %cst = arith.constant dense<0.000000e+00> : vector<64xf32>
    %2 = vector.multi_reduction <add>, %1, %cst [1] : vector<64x32xf32> to vector<64xf32>
    %3 = vector.shape_cast %2 : vector<64xf32> to vector<64x1xf32>
    %cst_2 = arith.constant 3.200000e+01 : f32
    %4 = vector.broadcast %cst_2 : f32 to vector<64x1xf32>
    %5 = arith.divf %3, %4 : vector<64x1xf32>
    %6 = arith.mulf %1, %1 : vector<64x32xf32>
    %cst_3 = arith.constant dense<0.000000e+00> : vector<64xf32>
    %7 = vector.multi_reduction <add>, %6, %cst_3 [1] : vector<64x32xf32> to vector<64xf32>
    %8 = vector.shape_cast %7 : vector<64xf32> to vector<64x1xf32>
    %cst_4 = arith.constant 3.200000e+01 : f32
    %9 = vector.broadcast %cst_4 : f32 to vector<64x1xf32>
    %10 = arith.divf %8, %9 : vector<64x1xf32>
    %11 = arith.mulf %5, %5 : vector<64x1xf32>
    %12 = arith.subf %10, %11 : vector<64x1xf32>
    %13 = vector.broadcast %5 : vector<64x1xf32> to vector<64x32xf32>
    %14 = arith.subf %1, %13 : vector<64x32xf32>
    %cst_5 = arith.constant 9.99999974E-6 : f32
    %15 = vector.broadcast %cst_5 : f32 to vector<64x1xf32>
    %16 = arith.addf %12, %15 : vector<64x1xf32>
    %17 = math.rsqrt %16 : vector<64x1xf32>
    %18 = vector.broadcast %17 : vector<64x1xf32> to vector<64x32xf32>
    %19 = arith.mulf %14, %18 : vector<64x32xf32>
    %c0_6 = arith.constant 0 : index
    %c0_7 = arith.constant 0 : index
    %20 = vector.load %arg2[%c0_6, %c0_7] : memref<1x32xf32, #tpu.memory_space<vmem>>, vector<1x32xf32>
    %21 = vector.broadcast %20 : vector<1x32xf32> to vector<64x32xf32>
    %22 = arith.mulf %19, %21 : vector<64x32xf32>
    %c0_8 = arith.constant 0 : index
    %c0_9 = arith.constant 0 : index
    %23 = vector.load %arg3[%c0_8, %c0_9] : memref<1x32xf32, #tpu.memory_space<vmem>>, vector<1x32xf32>
    %24 = vector.broadcast %23 : vector<1x32xf32> to vector<64x32xf32>
    %25 = arith.addf %22, %24 : vector<64x32xf32>
    %26 = arith.truncf %25 : vector<64x32xf32> to vector<64x32xbf16>
    %c0_10 = arith.constant 0 : index
    %c0_11 = arith.constant 0 : index
    %27 = vector.load %arg4[%c0_10, %c0_11] : memref<32x96xbf16, #tpu.memory_space<vmem>>, vector<32x96xbf16>
    %cst_12 = arith.constant dense<0.000000e+00> : vector<64x96xf32>
    %28 = tpu.matmul %26, %27, %cst_12 {dimension_numbers = #tpu.dot_dimension_numbers<[1], [0], [0], [1], [0, 0, 1, 1], [], []>} : vector<64x32xbf16>, vector<32x96xbf16>, vector<64x96xf32> -> vector<64x96xf32>
    %c0_13 = arith.constant 0 : index
    %c0_14 = arith.constant 0 : index
    %29 = vector.load %arg5[%c0_13, %c0_14] : memref<1x96xf32, #tpu.memory_space<vmem>>, vector<1x96xf32>
    %30 = vector.broadcast %29 : vector<1x96xf32> to vector<64x96xf32>
    %31 = arith.addf %28, %30 : vector<64x96xf32>
    %32 = vector.extract_strided_slice %31 {offsets = [0, 0], sizes = [64, 8], strides = [1, 1]} : vector<64x96xf32> to vector<64x8xf32>
    %33 = vector.shape_cast %32 : vector<64x8xf32> to vector<4x16x8xf32>
    %34 = vector.extract_strided_slice %31 {offsets = [0, 32], sizes = [64, 8], strides = [1, 1]} : vector<64x96xf32> to vector<64x8xf32>
    %35 = vector.shape_cast %34 : vector<64x8xf32> to vector<4x16x8xf32>
    %36 = vector.extract_strided_slice %31 {offsets = [0, 64], sizes = [64, 8], strides = [1, 1]} : vector<64x96xf32> to vector<64x8xf32>
    %37 = vector.shape_cast %36 : vector<64x8xf32> to vector<4x16x8xf32>
    %38 = arith.truncf %33 : vector<4x16x8xf32> to vector<4x16x8xbf16>
    %39 = arith.truncf %35 : vector<4x16x8xf32> to vector<4x16x8xbf16>
    %cst_15 = arith.constant dense<0.000000e+00> : vector<4x16x16xf32>
    %40 = tpu.matmul %38, %39, %cst_15 {dimension_numbers = #tpu.dot_dimension_numbers<[2], [2], [1], [1], [0, 0, 0, 1, 1, 1], [0], [0]>} : vector<4x16x8xbf16>, vector<4x16x8xbf16>, vector<4x16x16xf32> -> vector<4x16x16xf32>
    %c0_16 = arith.constant 0 : index
    %c0_17 = arith.constant 0 : index
    %c0_18 = arith.constant 0 : index
    %c0_19 = arith.constant 0 : index
    %41 = vector.load %arg8[%c0_16, %c0_17, %c0_18, %c0_19] : memref<4x4x16x16xf32, #tpu.memory_space<vmem>>, vector<1x4x16x16xf32>
    %42 = vector.shape_cast %41 : vector<1x4x16x16xf32> to vector<4x16x16xf32>
    %43 = arith.addf %40, %42 : vector<4x16x16xf32>
    %cst_20 = arith.constant dense<0xFF800000> : vector<4x16xf32>
    %44 = vector.multi_reduction <maximumf>, %43, %cst_20 [2] : vector<4x16x16xf32> to vector<4x16xf32>
    %45 = vector.shape_cast %44 : vector<4x16xf32> to vector<4x16x1xf32>
    %46 = vector.broadcast %45 : vector<4x16x1xf32> to vector<4x16x16xf32>
    %47 = arith.subf %43, %46 : vector<4x16x16xf32>
    %48 = math.exp %47 : vector<4x16x16xf32>
    %cst_21 = arith.constant dense<0.000000e+00> : vector<4x16xf32>
    %49 = vector.multi_reduction <add>, %48, %cst_21 [2] : vector<4x16x16xf32> to vector<4x16xf32>
    %50 = vector.shape_cast %49 : vector<4x16xf32> to vector<4x16x1xf32>
    %51 = vector.broadcast %50 : vector<4x16x1xf32> to vector<4x16x16xf32>
    %52 = arith.divf %48, %51 : vector<4x16x16xf32>
    %53 = arith.truncf %52 : vector<4x16x16xf32> to vector<4x16x16xbf16>
    %54 = arith.truncf %37 : vector<4x16x8xf32> to vector<4x16x8xbf16>
    %cst_22 = arith.constant dense<0.000000e+00> : vector<4x16x8xf32>
    %55 = tpu.matmul %53, %54, %cst_22 {dimension_numbers = #tpu.dot_dimension_numbers<[2], [1], [1], [2], [0, 0, 0, 1, 1, 2], [0], [0]>} : vector<4x16x16xbf16>, vector<4x16x8xbf16>, vector<4x16x8xf32> -> vector<4x16x8xf32>
    %56 = vector.shape_cast %55 : vector<4x16x8xf32> to vector<64x8xf32>
    %57 = arith.truncf %56 : vector<64x8xf32> to vector<64x8xbf16>
    %c0_23 = arith.constant 0 : index
    %c0_24 = arith.constant 0 : index
    %c0_25 = arith.constant 0 : index
    %58 = vector.load %arg6[%c0_23, %c0_24, %c0_25] : memref<4x8x32xbf16, #tpu.memory_space<vmem>>, vector<1x8x32xbf16>
    %59 = vector.shape_cast %58 : vector<1x8x32xbf16> to vector<8x32xbf16>
    %cst_26 = arith.constant dense<0.000000e+00> : vector<64x32xf32>
    %60 = tpu.matmul %57, %59, %cst_26 {dimension_numbers = #tpu.dot_dimension_numbers<[1], [0], [0], [1], [0, 0, 1, 1], [], []>} : vector<64x8xbf16>, vector<8x32xbf16>, vector<64x32xf32> -> vector<64x32xf32>
    %61 = vector.extract_strided_slice %31 {offsets = [0, 8], sizes = [64, 8], strides = [1, 1]} : vector<64x96xf32> to vector<64x8xf32>
    %62 = vector.shape_cast %61 : vector<64x8xf32> to vector<4x16x8xf32>
    %63 = vector.extract_strided_slice %31 {offsets = [0, 40], sizes = [64, 8], strides = [1, 1]} : vector<64x96xf32> to vector<64x8xf32>
    %64 = vector.shape_cast %63 : vector<64x8xf32> to vector<4x16x8xf32>
    %65 = vector.extract_strided_slice %31 {offsets = [0, 72], sizes = [64, 8], strides = [1, 1]} : vector<64x96xf32> to vector<64x8xf32>
    %66 = vector.shape_cast %65 : vector<64x8xf32> to vector<4x16x8xf32>
    %67 = arith.truncf %62 : vector<4x16x8xf32> to vector<4x16x8xbf16>
    %68 = arith.truncf %64 : vector<4x16x8xf32> to vector<4x16x8xbf16>
    %cst_27 = arith.constant dense<0.000000e+00> : vector<4x16x16xf32>
    %69 = tpu.matmul %67, %68, %cst_27 {dimension_numbers = #tpu.dot_dimension_numbers<[2], [2], [1], [1], [0, 0, 0, 1, 1, 1], [0], [0]>} : vector<4x16x8xbf16>, vector<4x16x8xbf16>, vector<4x16x16xf32> -> vector<4x16x16xf32>
    %c1 = arith.constant 1 : index
    %c0_28 = arith.constant 0 : index
    %c0_29 = arith.constant 0 : index
    %c0_30 = arith.constant 0 : index
    %70 = vector.load %arg8[%c1, %c0_28, %c0_29, %c0_30] : memref<4x4x16x16xf32, #tpu.memory_space<vmem>>, vector<1x4x16x16xf32>
    %71 = vector.shape_cast %70 : vector<1x4x16x16xf32> to vector<4x16x16xf32>
    %72 = arith.addf %69, %71 : vector<4x16x16xf32>
    %cst_31 = arith.constant dense<0xFF800000> : vector<4x16xf32>
    %73 = vector.multi_reduction <maximumf>, %72, %cst_31 [2] : vector<4x16x16xf32> to vector<4x16xf32>
    %74 = vector.shape_cast %73 : vector<4x16xf32> to vector<4x16x1xf32>
    %75 = vector.broadcast %74 : vector<4x16x1xf32> to vector<4x16x16xf32>
    %76 = arith.subf %72, %75 : vector<4x16x16xf32>
    %77 = math.exp %76 : vector<4x16x16xf32>
    %cst_32 = arith.constant dense<0.000000e+00> : vector<4x16xf32>
    %78 = vector.multi_reduction <add>, %77, %cst_32 [2] : vector<4x16x16xf32> to vector<4x16xf32>
    %79 = vector.shape_cast %78 : vector<4x16xf32> to vector<4x16x1xf32>
    %80 = vector.broadcast %79 : vector<4x16x1xf32> to vector<4x16x16xf32>
    %81 = arith.divf %77, %80 : vector<4x16x16xf32>
    %82 = arith.truncf %81 : vector<4x16x16xf32> to vector<4x16x16xbf16>
    %83 = arith.truncf %66 : vector<4x16x8xf32> to vector<4x16x8xbf16>
    %cst_33 = arith.constant dense<0.000000e+00> : vector<4x16x8xf32>
    %84 = tpu.matmul %82, %83, %cst_33 {dimension_numbers = #tpu.dot_dimension_numbers<[2], [1], [1], [2], [0, 0, 0, 1, 1, 2], [0], [0]>} : vector<4x16x16xbf16>, vector<4x16x8xbf16>, vector<4x16x8xf32> -> vector<4x16x8xf32>
    %85 = vector.shape_cast %84 : vector<4x16x8xf32> to vector<64x8xf32>
    %86 = arith.truncf %85 : vector<64x8xf32> to vector<64x8xbf16>
    %c1_34 = arith.constant 1 : index
    %c0_35 = arith.constant 0 : index
    %c0_36 = arith.constant 0 : index
    %87 = vector.load %arg6[%c1_34, %c0_35, %c0_36] : memref<4x8x32xbf16, #tpu.memory_space<vmem>>, vector<1x8x32xbf16>
    %88 = vector.shape_cast %87 : vector<1x8x32xbf16> to vector<8x32xbf16>
    %cst_37 = arith.constant dense<0.000000e+00> : vector<64x32xf32>
    %89 = tpu.matmul %86, %88, %cst_37 {dimension_numbers = #tpu.dot_dimension_numbers<[1], [0], [0], [1], [0, 0, 1, 1], [], []>} : vector<64x8xbf16>, vector<8x32xbf16>, vector<64x32xf32> -> vector<64x32xf32>
    %90 = arith.addf %60, %89 : vector<64x32xf32>
    %91 = vector.extract_strided_slice %31 {offsets = [0, 16], sizes = [64, 8], strides = [1, 1]} : vector<64x96xf32> to vector<64x8xf32>
    %92 = vector.shape_cast %91 : vector<64x8xf32> to vector<4x16x8xf32>
    %93 = vector.extract_strided_slice %31 {offsets = [0, 48], sizes = [64, 8], strides = [1, 1]} : vector<64x96xf32> to vector<64x8xf32>
    %94 = vector.shape_cast %93 : vector<64x8xf32> to vector<4x16x8xf32>
    %95 = vector.extract_strided_slice %31 {offsets = [0, 80], sizes = [64, 8], strides = [1, 1]} : vector<64x96xf32> to vector<64x8xf32>
    %96 = vector.shape_cast %95 : vector<64x8xf32> to vector<4x16x8xf32>
    %97 = arith.truncf %92 : vector<4x16x8xf32> to vector<4x16x8xbf16>
    %98 = arith.truncf %94 : vector<4x16x8xf32> to vector<4x16x8xbf16>
    %cst_38 = arith.constant dense<0.000000e+00> : vector<4x16x16xf32>
    %99 = tpu.matmul %97, %98, %cst_38 {dimension_numbers = #tpu.dot_dimension_numbers<[2], [2], [1], [1], [0, 0, 0, 1, 1, 1], [0], [0]>} : vector<4x16x8xbf16>, vector<4x16x8xbf16>, vector<4x16x16xf32> -> vector<4x16x16xf32>
    %c2 = arith.constant 2 : index
    %c0_39 = arith.constant 0 : index
    %c0_40 = arith.constant 0 : index
    %c0_41 = arith.constant 0 : index
    %100 = vector.load %arg8[%c2, %c0_39, %c0_40, %c0_41] : memref<4x4x16x16xf32, #tpu.memory_space<vmem>>, vector<1x4x16x16xf32>
    %101 = vector.shape_cast %100 : vector<1x4x16x16xf32> to vector<4x16x16xf32>
    %102 = arith.addf %99, %101 : vector<4x16x16xf32>
    %cst_42 = arith.constant dense<0xFF800000> : vector<4x16xf32>
    %103 = vector.multi_reduction <maximumf>, %102, %cst_42 [2] : vector<4x16x16xf32> to vector<4x16xf32>
    %104 = vector.shape_cast %103 : vector<4x16xf32> to vector<4x16x1xf32>
    %105 = vector.broadcast %104 : vector<4x16x1xf32> to vector<4x16x16xf32>
    %106 = arith.subf %102, %105 : vector<4x16x16xf32>
    %107 = math.exp %106 : vector<4x16x16xf32>
    %cst_43 = arith.constant dense<0.000000e+00> : vector<4x16xf32>
    %108 = vector.multi_reduction <add>, %107, %cst_43 [2] : vector<4x16x16xf32> to vector<4x16xf32>
    %109 = vector.shape_cast %108 : vector<4x16xf32> to vector<4x16x1xf32>
    %110 = vector.broadcast %109 : vector<4x16x1xf32> to vector<4x16x16xf32>
    %111 = arith.divf %107, %110 : vector<4x16x16xf32>
    %112 = arith.truncf %111 : vector<4x16x16xf32> to vector<4x16x16xbf16>
    %113 = arith.truncf %96 : vector<4x16x8xf32> to vector<4x16x8xbf16>
    %cst_44 = arith.constant dense<0.000000e+00> : vector<4x16x8xf32>
    %114 = tpu.matmul %112, %113, %cst_44 {dimension_numbers = #tpu.dot_dimension_numbers<[2], [1], [1], [2], [0, 0, 0, 1, 1, 2], [0], [0]>} : vector<4x16x16xbf16>, vector<4x16x8xbf16>, vector<4x16x8xf32> -> vector<4x16x8xf32>
    %115 = vector.shape_cast %114 : vector<4x16x8xf32> to vector<64x8xf32>
    %116 = arith.truncf %115 : vector<64x8xf32> to vector<64x8xbf16>
    %c2_45 = arith.constant 2 : index
    %c0_46 = arith.constant 0 : index
    %c0_47 = arith.constant 0 : index
    %117 = vector.load %arg6[%c2_45, %c0_46, %c0_47] : memref<4x8x32xbf16, #tpu.memory_space<vmem>>, vector<1x8x32xbf16>
    %118 = vector.shape_cast %117 : vector<1x8x32xbf16> to vector<8x32xbf16>
    %cst_48 = arith.constant dense<0.000000e+00> : vector<64x32xf32>
    %119 = tpu.matmul %116, %118, %cst_48 {dimension_numbers = #tpu.dot_dimension_numbers<[1], [0], [0], [1], [0, 0, 1, 1], [], []>} : vector<64x8xbf16>, vector<8x32xbf16>, vector<64x32xf32> -> vector<64x32xf32>
    %120 = arith.addf %90, %119 : vector<64x32xf32>
    %121 = vector.extract_strided_slice %31 {offsets = [0, 24], sizes = [64, 8], strides = [1, 1]} : vector<64x96xf32> to vector<64x8xf32>
    %122 = vector.shape_cast %121 : vector<64x8xf32> to vector<4x16x8xf32>
    %123 = vector.extract_strided_slice %31 {offsets = [0, 56], sizes = [64, 8], strides = [1, 1]} : vector<64x96xf32> to vector<64x8xf32>
    %124 = vector.shape_cast %123 : vector<64x8xf32> to vector<4x16x8xf32>
    %125 = vector.extract_strided_slice %31 {offsets = [0, 88], sizes = [64, 8], strides = [1, 1]} : vector<64x96xf32> to vector<64x8xf32>
    %126 = vector.shape_cast %125 : vector<64x8xf32> to vector<4x16x8xf32>
    %127 = arith.truncf %122 : vector<4x16x8xf32> to vector<4x16x8xbf16>
    %128 = arith.truncf %124 : vector<4x16x8xf32> to vector<4x16x8xbf16>
    %cst_49 = arith.constant dense<0.000000e+00> : vector<4x16x16xf32>
    %129 = tpu.matmul %127, %128, %cst_49 {dimension_numbers = #tpu.dot_dimension_numbers<[2], [2], [1], [1], [0, 0, 0, 1, 1, 1], [0], [0]>} : vector<4x16x8xbf16>, vector<4x16x8xbf16>, vector<4x16x16xf32> -> vector<4x16x16xf32>
    %c3 = arith.constant 3 : index
    %c0_50 = arith.constant 0 : index
    %c0_51 = arith.constant 0 : index
    %c0_52 = arith.constant 0 : index
    %130 = vector.load %arg8[%c3, %c0_50, %c0_51, %c0_52] : memref<4x4x16x16xf32, #tpu.memory_space<vmem>>, vector<1x4x16x16xf32>
    %131 = vector.shape_cast %130 : vector<1x4x16x16xf32> to vector<4x16x16xf32>
    %132 = arith.addf %129, %131 : vector<4x16x16xf32>
    %cst_53 = arith.constant dense<0xFF800000> : vector<4x16xf32>
    %133 = vector.multi_reduction <maximumf>, %132, %cst_53 [2] : vector<4x16x16xf32> to vector<4x16xf32>
    %134 = vector.shape_cast %133 : vector<4x16xf32> to vector<4x16x1xf32>
    %135 = vector.broadcast %134 : vector<4x16x1xf32> to vector<4x16x16xf32>
    %136 = arith.subf %132, %135 : vector<4x16x16xf32>
    %137 = math.exp %136 : vector<4x16x16xf32>
    %cst_54 = arith.constant dense<0.000000e+00> : vector<4x16xf32>
    %138 = vector.multi_reduction <add>, %137, %cst_54 [2] : vector<4x16x16xf32> to vector<4x16xf32>
    %139 = vector.shape_cast %138 : vector<4x16xf32> to vector<4x16x1xf32>
    %140 = vector.broadcast %139 : vector<4x16x1xf32> to vector<4x16x16xf32>
    %141 = arith.divf %137, %140 : vector<4x16x16xf32>
    %142 = arith.truncf %141 : vector<4x16x16xf32> to vector<4x16x16xbf16>
    %143 = arith.truncf %126 : vector<4x16x8xf32> to vector<4x16x8xbf16>
    %cst_55 = arith.constant dense<0.000000e+00> : vector<4x16x8xf32>
    %144 = tpu.matmul %142, %143, %cst_55 {dimension_numbers = #tpu.dot_dimension_numbers<[2], [1], [1], [2], [0, 0, 0, 1, 1, 2], [0], [0]>} : vector<4x16x16xbf16>, vector<4x16x8xbf16>, vector<4x16x8xf32> -> vector<4x16x8xf32>
    %145 = vector.shape_cast %144 : vector<4x16x8xf32> to vector<64x8xf32>
    %146 = arith.truncf %145 : vector<64x8xf32> to vector<64x8xbf16>
    %c3_56 = arith.constant 3 : index
    %c0_57 = arith.constant 0 : index
    %c0_58 = arith.constant 0 : index
    %147 = vector.load %arg6[%c3_56, %c0_57, %c0_58] : memref<4x8x32xbf16, #tpu.memory_space<vmem>>, vector<1x8x32xbf16>
    %148 = vector.shape_cast %147 : vector<1x8x32xbf16> to vector<8x32xbf16>
    %cst_59 = arith.constant dense<0.000000e+00> : vector<64x32xf32>
    %149 = tpu.matmul %146, %148, %cst_59 {dimension_numbers = #tpu.dot_dimension_numbers<[1], [0], [0], [1], [0, 0, 1, 1], [], []>} : vector<64x8xbf16>, vector<8x32xbf16>, vector<64x32xf32> -> vector<64x32xf32>
    %150 = arith.addf %120, %149 : vector<64x32xf32>
    %151 = arith.addf %1, %150 : vector<64x32xf32>
    %c0_60 = arith.constant 0 : index
    %c0_61 = arith.constant 0 : index
    %152 = vector.load %arg7[%c0_60, %c0_61] : memref<1x32xf32, #tpu.memory_space<vmem>>, vector<1x32xf32>
    %153 = vector.broadcast %152 : vector<1x32xf32> to vector<64x32xf32>
    %154 = arith.addf %151, %153 : vector<64x32xf32>
    %cst_62 = arith.constant dense<0.000000e+00> : vector<64xf32>
    %155 = vector.multi_reduction <add>, %154, %cst_62 [1] : vector<64x32xf32> to vector<64xf32>
    %156 = vector.shape_cast %155 : vector<64xf32> to vector<64x1xf32>
    %cst_63 = arith.constant 3.200000e+01 : f32
    %157 = vector.broadcast %cst_63 : f32 to vector<64x1xf32>
    %158 = arith.divf %156, %157 : vector<64x1xf32>
    %159 = arith.mulf %154, %154 : vector<64x32xf32>
    %cst_64 = arith.constant dense<0.000000e+00> : vector<64xf32>
    %160 = vector.multi_reduction <add>, %159, %cst_64 [1] : vector<64x32xf32> to vector<64xf32>
    %161 = vector.shape_cast %160 : vector<64xf32> to vector<64x1xf32>
    %cst_65 = arith.constant 3.200000e+01 : f32
    %162 = vector.broadcast %cst_65 : f32 to vector<64x1xf32>
    %163 = arith.divf %161, %162 : vector<64x1xf32>
    %164 = arith.mulf %158, %158 : vector<64x1xf32>
    %165 = arith.subf %163, %164 : vector<64x1xf32>
    %166 = vector.broadcast %158 : vector<64x1xf32> to vector<64x32xf32>
    %167 = arith.subf %154, %166 : vector<64x32xf32>
    %cst_66 = arith.constant 9.99999974E-6 : f32
    %168 = vector.broadcast %cst_66 : f32 to vector<64x1xf32>
    %169 = arith.addf %165, %168 : vector<64x1xf32>
    %170 = math.rsqrt %169 : vector<64x1xf32>
    %171 = vector.broadcast %170 : vector<64x1xf32> to vector<64x32xf32>
    %172 = arith.mulf %167, %171 : vector<64x32xf32>
    %c0_67 = arith.constant 0 : index
    %c0_68 = arith.constant 0 : index
    %173 = vector.load %arg9[%c0_67, %c0_68] : memref<1x32xf32, #tpu.memory_space<vmem>>, vector<1x32xf32>
    %174 = vector.broadcast %173 : vector<1x32xf32> to vector<64x32xf32>
    %175 = arith.mulf %172, %174 : vector<64x32xf32>
    %c0_69 = arith.constant 0 : index
    %c0_70 = arith.constant 0 : index
    %176 = vector.load %arg10[%c0_69, %c0_70] : memref<1x32xf32, #tpu.memory_space<vmem>>, vector<1x32xf32>
    %177 = vector.broadcast %176 : vector<1x32xf32> to vector<64x32xf32>
    %178 = arith.addf %175, %177 : vector<64x32xf32>
    %179 = arith.truncf %178 : vector<64x32xf32> to vector<64x32xbf16>
    %c0_71 = arith.constant 0 : index
    %c0_72 = arith.constant 0 : index
    %180 = vector.load %arg11[%c0_71, %c0_72] : memref<32x128xbf16, #tpu.memory_space<vmem>>, vector<32x128xbf16>
    %cst_73 = arith.constant dense<0.000000e+00> : vector<64x128xf32>
    %181 = tpu.matmul %179, %180, %cst_73 {dimension_numbers = #tpu.dot_dimension_numbers<[1], [0], [0], [1], [0, 0, 1, 1], [], []>} : vector<64x32xbf16>, vector<32x128xbf16>, vector<64x128xf32> -> vector<64x128xf32>
    %c0_74 = arith.constant 0 : index
    %c0_75 = arith.constant 0 : index
    %182 = vector.load %arg12[%c0_74, %c0_75] : memref<1x128xf32, #tpu.memory_space<vmem>>, vector<1x128xf32>
    %183 = vector.broadcast %182 : vector<1x128xf32> to vector<64x128xf32>
    %184 = arith.addf %181, %183 : vector<64x128xf32>
    %185 = arith.mulf %184, %184 : vector<64x128xf32>
    %186 = arith.mulf %184, %185 : vector<64x128xf32>
    %cst_76 = arith.constant 4.471500e-02 : f32
    %187 = vector.broadcast %cst_76 : f32 to vector<64x128xf32>
    %188 = arith.mulf %187, %186 : vector<64x128xf32>
    %189 = arith.addf %184, %188 : vector<64x128xf32>
    %cst_77 = arith.constant 0.797884583 : f32
    %190 = vector.broadcast %cst_77 : f32 to vector<64x128xf32>
    %191 = arith.mulf %190, %189 : vector<64x128xf32>
    %192 = math.tanh %191 : vector<64x128xf32>
    %cst_78 = arith.constant 1.000000e+00 : f32
    %193 = vector.broadcast %cst_78 : f32 to vector<64x128xf32>
    %194 = arith.addf %193, %192 : vector<64x128xf32>
    %cst_79 = arith.constant 5.000000e-01 : f32
    %195 = vector.broadcast %cst_79 : f32 to vector<64x128xf32>
    %196 = arith.mulf %195, %194 : vector<64x128xf32>
    %197 = arith.mulf %184, %196 : vector<64x128xf32>
    %198 = arith.truncf %197 : vector<64x128xf32> to vector<64x128xbf16>
    %c0_80 = arith.constant 0 : index
    %c0_81 = arith.constant 0 : index
    %199 = vector.load %arg13[%c0_80, %c0_81] : memref<128x32xbf16, #tpu.memory_space<vmem>>, vector<128x32xbf16>
    %cst_82 = arith.constant dense<0.000000e+00> : vector<64x32xf32>
    %200 = tpu.matmul %198, %199, %cst_82 {dimension_numbers = #tpu.dot_dimension_numbers<[1], [0], [0], [1], [0, 0, 1, 1], [], []>} : vector<64x128xbf16>, vector<128x32xbf16>, vector<64x32xf32> -> vector<64x32xf32>
    %c0_83 = arith.constant 0 : index
    %c0_84 = arith.constant 0 : index
    %201 = vector.load %arg14[%c0_83, %c0_84] : memref<1x32xf32, #tpu.memory_space<vmem>>, vector<1x32xf32>
    %202 = vector.broadcast %201 : vector<1x32xf32> to vector<64x32xf32>
    %203 = arith.addf %200, %202 : vector<64x32xf32>
    %204 = arith.addf %154, %203 : vector<64x32xf32>
    %c0_85 = arith.constant 0 : index
    %c0_86 = arith.constant 0 : index
    %c0_87 = arith.constant 0 : index
    %205 = vector.load %arg15[%c0_85, %c0_86, %c0_87] : memref<1x64x32xf32, #tpu.memory_space<vmem>>, vector<1x64x32xf32>
    %206 = vector.shape_cast %205 : vector<1x64x32xf32> to vector<64x32xf32>
    %207 = vector.shape_cast %204 : vector<64x32xf32> to vector<1x64x32xf32>
    tpu.vector_store %arg15[%c0_85, %c0_86, %c0_87], %207 {strides = array<i32>} : memref<1x64x32xf32, #tpu.memory_space<vmem>>, vector<1x64x32xf32>,
    return
  }
  func.func @transform_0(%arg0: i32) -> (i32, i32, i32) {
    %c0_i32 = arith.constant 0 : i32
    %c0_i32_0 = arith.constant 0 : i32
    %c0_i32_1 = arith.constant 0 : i32
    return %arg0, %c0_i32, %c0_i32_0 : i32, i32, i32
  }
  func.func @transform_1(%arg0: i32) -> (i32, i32) {
    %c0_i32 = arith.constant 0 : i32
    %c0_i32_0 = arith.constant 0 : i32
    %c0_i32_1 = arith.constant 0 : i32
    return %c0_i32, %c0_i32_0 : i32, i32
  }
  func.func @transform_2(%arg0: i32) -> (i32, i32) {
    %c0_i32 = arith.constant 0 : i32
    %c0_i32_0 = arith.constant 0 : i32
    %c0_i32_1 = arith.constant 0 : i32
    return %c0_i32, %c0_i32_0 : i32, i32
  }
  func.func @transform_3(%arg0: i32) -> (i32, i32) {
    %c0_i32 = arith.constant 0 : i32
    %c0_i32_0 = arith.constant 0 : i32
    %c0_i32_1 = arith.constant 0 : i32
    return %c0_i32, %c0_i32_0 : i32, i32
  }
  func.func @transform_4(%arg0: i32) -> (i32, i32) {
    %c0_i32 = arith.constant 0 : i32
    %c0_i32_0 = arith.constant 0 : i32
    %c0_i32_1 = arith.constant 0 : i32
    return %c0_i32, %c0_i32_0 : i32, i32
  }
  func.func @transform_5(%arg0: i32) -> (i32, i32, i32) {
    %c0_i32 = arith.constant 0 : i32
    %c0_i32_0 = arith.constant 0 : i32
    %c0_i32_1 = arith.constant 0 : i32
    %c0_i32_2 = arith.constant 0 : i32
    return %c0_i32, %c0_i32_0, %c0_i32_1 : i32, i32, i32
  }
  func.func @transform_6(%arg0: i32) -> (i32, i32) {
    %c0_i32 = arith.constant 0 : i32
    %c0_i32_0 = arith.constant 0 : i32
    %c0_i32_1 = arith.constant 0 : i32
    return %c0_i32, %c0_i32_0 : i32, i32
  }
  func.func @transform_7(%arg0: i32) -> (i32, i32, i32, i32) {
    %c0_i32 = arith.constant 0 : i32
    %c0_i32_0 = arith.constant 0 : i32
    %c0_i32_1 = arith.constant 0 : i32
    %c0_i32_2 = arith.constant 0 : i32
    %c0_i32_3 = arith.constant 0 : i32
    return %c0_i32, %c0_i32_0, %c0_i32_1, %c0_i32_2 : i32, i32, i32, i32
  }
  func.func @transform_8(%arg0: i32) -> (i32, i32) {
    %c0_i32 = arith.constant 0 : i32
    %c0_i32_0 = arith.constant 0 : i32
    %c0_i32_1 = arith.constant 0 : i32
    return %c0_i32, %c0_i32_0 : i32, i32
  }
  func.func @transform_9(%arg0: i32) -> (i32, i32) {
    %c0_i32 = arith.constant 0 : i32
    %c0_i32_0 = arith.constant 0 : i32
    %c0_i32_1 = arith.constant 0 : i32
    return %c0_i32, %c0_i32_0 : i32, i32
  }
  func.func @transform_10(%arg0: i32) -> (i32, i32) {
    %c0_i32 = arith.constant 0 : i32
    %c0_i32_0 = arith.constant 0 : i32
    %c0_i32_1 = arith.constant 0 : i32
    return %c0_i32, %c0_i32_0 : i32, i32
  }
  func.func @transform_11(%arg0: i32) -> (i32, i32) {
    %c0_i32 = arith.constant 0 : i32
    %c0_i32_0 = arith.constant 0 : i32
    %c0_i32_1 = arith.constant 0 : i32
    return %c0_i32, %c0_i32_0 : i32, i32
  }
  func.func @transform_12(%arg0: i32) -> (i32, i32) {
    %c0_i32 = arith.constant 0 : i32
    %c0_i32_0 = arith.constant 0 : i32
    %c0_i32_1 = arith.constant 0 : i32
    return %c0_i32, %c0_i32_0 : i32, i32
  }
  func.func @transform_13(%arg0: i32) -> (i32, i32) {
    %c0_i32 = arith.constant 0 : i32
    %c0_i32_0 = arith.constant 0 : i32
    %c0_i32_1 = arith.constant 0 : i32
    return %c0_i32, %c0_i32_0 : i32, i32
  }
  func.func @transform_14(%arg0: i32) -> (i32, i32, i32) {
    %c0_i32 = arith.constant 0 : i32
    %c0_i32_0 = arith.constant 0 : i32
    %c0_i32_1 = arith.constant 0 : i32
    return %arg0, %c0_i32, %c0_i32_0 : i32, i32, i32
  }
}

</mosaic_0001>

<llo_original>
// kernel: swin_block.3
$region0: #{swin_block.3}
  #allocation0 [shape = 'u32[]', space=smem, size = 0x4, offset = 0x4, fixed_abs, tag = 'smem constant byte address 0x4 - core index']
  #allocation1 [shape = 'u32[144,128]{1,0:T(1,128)}', space=vmem, size = 0x12000, scoped, tag = 'internal scratch']
  %s0 = inlined_call_operand.vmem [shape: f32[2,64,32], index: 0, kind: input, shape index: {}]
  %s1 = inlined_call_operand.vmem [shape: f32[1,32], index: 1, kind: input, shape index: {}]
  %s2 = inlined_call_operand.vmem [shape: f32[1,32], index: 2, kind: input, shape index: {}]
  %s3 = inlined_call_operand.vmem [shape: bf16[32,96], index: 3, kind: input, shape index: {}]
  %s4 = inlined_call_operand.vmem [shape: f32[1,96], index: 4, kind: input, shape index: {}]
  %s5 = inlined_call_operand.vmem [shape: bf16[4,8,32], index: 5, kind: input, shape index: {}]
  %s6 = inlined_call_operand.vmem [shape: f32[1,32], index: 6, kind: input, shape index: {}]
  %s7 = inlined_call_operand.vmem [shape: f32[4,4,16,16], index: 7, kind: input, shape index: {}]
  %s8 = inlined_call_operand.vmem [shape: f32[1,32], index: 8, kind: input, shape index: {}]
  %s9 = inlined_call_operand.vmem [shape: f32[1,32], index: 9, kind: input, shape index: {}]
  %s10 = inlined_call_operand.vmem [shape: bf16[32,128], index: 10, kind: input, shape index: {}]
  %s11 = inlined_call_operand.vmem [shape: f32[1,128], index: 11, kind: input, shape index: {}]
  %s12 = inlined_call_operand.vmem [shape: bf16[128,32], index: 12, kind: input, shape index: {}]
  %s13 = inlined_call_operand.vmem [shape: f32[1,32], index: 13, kind: input, shape index: {}]
  %s14 = inlined_call_operand.vmem [shape: f32[2,64,32], index: 14, kind: output, shape index: {}]
  %s15 = sld [smem:[#allocation0]]
  $region89: #{swin_block.3} parent=0
    _
  %s17 = ssub.s32 1, %s15
  %s18 = scalar_select 0, %s17, %s15
  loop: start=0, step=1, limit=4
  $region2: #{swin_block.3} parent=0 // loop_pre_header
    _
  $region3: #{swin_block.3} parent=0 // loop_header
    %s20 = sphi 0, %s24
    %p21 = scmp.ge.s32.totalorder %s20, 4
    %s30 = sphi 0, %s32
    %s33 = sphi 0, %s30
    %s34 = sphi 0, %s33
    %s50 = sphi 0, %s34
    %s54 = sphi 0, %s54
    %s56 = sphi 0, %s54
    %s57 = sphi 0, %s56
    %s71 = sphi 0, %s57
    %s75 = sphi 0, %s75
    %s77 = sphi 0, %s75
    %s78 = sphi 0, %s77
    %s92 = sphi 0, %s78
    %s96 = sphi 0, %s96
    %s98 = sphi 0, %s96
    %s99 = sphi 0, %s98
    %s113 = sphi 0, %s99
    %s117 = sphi 0, %s117
    %s119 = sphi 0, %s117
    %s120 = sphi 0, %s119
    %s134 = sphi 0, %s120
    %s138 = sphi 0, %s138
    %s140 = sphi 0, %s138
    %s141 = sphi 0, %s140
    %s155 = sphi 0, %s141
    %s159 = sphi 0, %s159
    %s161 = sphi 0, %s159
    %s162 = sphi 0, %s161
    %s176 = sphi 0, %s162
    %s180 = sphi 0, %s180
    %s182 = sphi 0, %s180
    %s183 = sphi 0, %s182
    %s197 = sphi 0, %s183
    %s201 = sphi 0, %s201
    %s203 = sphi 0, %s201
    %s204 = sphi 0, %s203
    %s218 = sphi 0, %s204
    %s222 = sphi 0, %s222
    %s224 = sphi 0, %s222
    %s225 = sphi 0, %s224
    %s239 = sphi 0, %s225
    %s243 = sphi 0, %s243
    %s245 = sphi 0, %s243
    %s246 = sphi 0, %s245
    %s260 = sphi 0, %s246
    %s264 = sphi 0, %s264
    %s266 = sphi 0, %s264
    %s267 = sphi 0, %s266
    %s281 = sphi 0, %s267
    %s285 = sphi 0, %s285
    %s287 = sphi 0, %s285
    %s288 = sphi 0, %s287
    %s302 = sphi 0, %s288
    %s306 = sphi 0, %s306
    %s308 = sphi 0, %s306
    %s309 = sphi 0, %s308
    %s323 = sphi 0, %s309
    %s329 = sphi 0, %s331
    %s332 = sphi 0, %s329
    %s333 = sphi 0, %s332
    %s349 = sphi 0, %s333
  $region4: #{swin_block.3} parent=0 // loop_header_branch
    %23 = sbr.rel (%p21) target = $region8
  $region5: #{swin_block.3} parent=0 // loop_body
    %s25 = ssub.s32 %s20, 1
    %s26 = ssub.s32 %s20, 2
    %s27 = sadd.s32 %s20, 1
    %s28 = ssub.s32 %s20, %s27
    %p29 = scmp.eq.s32.totalorder %s28, 0
    %s31 = sadd.s32 %s30, 1
    %s32 = scalar_select %p29, %s30, %s31
    %p35 = pneg %p29
    %p36 = scmp.eq.s32.totalorder %s20, 1
    %p37 = por %p35, %p36
    %p38 = scmp.ne.s32.totalorder %s30, %s33
    %p39 = scmp.eq.s32.totalorder %s20, 0
    %p40 = por %p38, %p39
    %p41 = scmp.ne.s32.totalorder %s30, %s33
    %p42 = scmp.eq.s32.totalorder %s25, 1
    %p43 = por %p41, %p42
    %p44 = scmp.ne.s32.totalorder %s33, %s34
    %p45 = scmp.eq.s32.totalorder %s25, 0
    %p46 = por %p44, %p45
    %p47 = scmp.ne.s32.totalorder %s33, %s34
    %p48 = scmp.eq.s32.totalorder %s26, 1
    %p49 = por %p47, %p48
    %p51 = scmp.ne.s32.totalorder %s34, %s50
    %p52 = scmp.eq.s32.totalorder %s26, 0
    %p53 = por %p51, %p52
    %s55 = sadd.s32 %s54, 1
    %p58 = scmp.eq.s32.totalorder %s20, 1
    %p59 = scmp.ne.s32.totalorder %s54, %s56
    %p60 = scmp.eq.s32.totalorder %s20, 0
    %p61 = por %p59, %p60
    %p62 = scmp.ne.s32.totalorder %s54, %s56
    %p63 = scmp.eq.s32.totalorder %s25, 1
    %p64 = por %p62, %p63
    %p65 = scmp.ne.s32.totalorder %s56, %s57
    %p66 = scmp.eq.s32.totalorder %s25, 0
    %p67 = por %p65, %p66
    %p68 = scmp.ne.s32.totalorder %s56, %s57
    %p69 = scmp.eq.s32.totalorder %s26, 1
    %p70 = por %p68, %p69
    %p72 = scmp.ne.s32.totalorder %s57, %s71
    %p73 = scmp.eq.s32.totalorder %s26, 0
    %p74 = por %p72, %p73
    %s76 = sadd.s32 %s75, 1
    %p79 = scmp.eq.s32.totalorder %s20, 1
    %p80 = scmp.ne.s32.totalorder %s75, %s77
    %p81 = scmp.eq.s32.totalorder %s20, 0
    %p82 = por %p80, %p81
    %p83 = scmp.ne.s32.totalorder %s75, %s77
    %p84 = scmp.eq.s32.totalorder %s25, 1
    %p85 = por %p83, %p84
    %p86 = scmp.ne.s32.totalorder %s77, %s78
    %p87 = scmp.eq.s32.totalorder %s25, 0
    %p88 = por %p86, %p87
    %p89 = scmp.ne.s32.totalorder %s77, %s78
    %p90 = scmp.eq.s32.totalorder %s26, 1
    %p91 = por %p89, %p90
    %p93 = scmp.ne.s32.totalorder %s78, %s92
    %p94 = scmp.eq.s32.totalorder %s26, 0
    %p95 = por %p93, %p94
    %s97 = sadd.s32 %s96, 1
    %p100 = scmp.eq.s32.totalorder %s20, 1
    %p101 = scmp.ne.s32.totalorder %s96, %s98
    %p102 = scmp.eq.s32.totalorder %s20, 0
    %p103 = por %p101, %p102
    %p104 = scmp.ne.s32.totalorder %s96, %s98
    %p105 = scmp.eq.s32.totalorder %s25, 1
    %p106 = por %p104, %p105
    %p107 = scmp.ne.s32.totalorder %s98, %s99
    %p108 = scmp.eq.s32.totalorder %s25, 0
    %p109 = por %p107, %p108
    %p110 = scmp.ne.s32.totalorder %s98, %s99
    %p111 = scmp.eq.s32.totalorder %s26, 1
    %p112 = por %p110, %p111
    %p114 = scmp.ne.s32.totalorder %s99, %s113
    %p115 = scmp.eq.s32.totalorder %s26, 0
    %p116 = por %p114, %p115
    %s118 = sadd.s32 %s117, 1
    %p121 = scmp.eq.s32.totalorder %s20, 1
    %p122 = scmp.ne.s32.totalorder %s117, %s119
    %p123 = scmp.eq.s32.totalorder %s20, 0
    %p124 = por %p122, %p123
    %p125 = scmp.ne.s32.totalorder %s117, %s119
    %p126 = scmp.eq.s32.totalorder %s25, 1
    %p127 = por %p125, %p126
    %p128 = scmp.ne.s32.totalorder %s119, %s120
    %p129 = scmp.eq.s32.totalorder %s25, 0
    %p130 = por %p128, %p129
    %p131 = scmp.ne.s32.totalorder %s119, %s120
    %p132 = scmp.eq.s32.totalorder %s26, 1
    %p133 = por %p131, %p132
    %p135 = scmp.ne.s32.totalorder %s120, %s134
    %p136 = scmp.eq.s32.totalorder %s26, 0
    %p137 = por %p135, %p136
    %s139 = sadd.s32 %s138, 1
    %p142 = scmp.eq.s32.totalorder %s20, 1
    %p143 = scmp.ne.s32.totalorder %s138, %s140
    %p144 = scmp.eq.s32.totalorder %s20, 0
    %p145 = por %p143, %p144
    %p146 = scmp.ne.s32.totalorder %s138, %s140
    %p147 = scmp.eq.s32.totalorder %s25, 1
    %p148 = por %p146, %p147
    %p149 = scmp.ne.s32.totalorder %s140, %s141
    %p150 = scmp.eq.s32.totalorder %s25, 0
    %p151 = por %p149, %p150
    %p152 = scmp.ne.s32.totalorder %s140, %s141
    %p153 = scmp.eq.s32.totalorder %s26, 1
    %p154 = por %p152, %p153
    %p156 = scmp.ne.s32.totalorder %s141, %s155
    %p157 = scmp.eq.s32.totalorder %s26, 0
    %p158 = por %p156, %p157
    %s160 = sadd.s32 %s159, 1
    %p163 = scmp.eq.s32.totalorder %s20, 1
    %p164 = scmp.ne.s32.totalorder %s159, %s161
    %p165 = scmp.eq.s32.totalorder %s20, 0
    %p166 = por %p164, %p165
    %p167 = scmp.ne.s32.totalorder %s159, %s161
    %p168 = scmp.eq.s32.totalorder %s25, 1
    %p169 = por %p167, %p168
    %p170 = scmp.ne.s32.totalorder %s161, %s162
    %p171 = scmp.eq.s32.totalorder %s25, 0
    %p172 = por %p170, %p171
    %p173 = scmp.ne.s32.totalorder %s161, %s162
    %p174 = scmp.eq.s32.totalorder %s26, 1
    %p175 = por %p173, %p174
    %p177 = scmp.ne.s32.totalorder %s162, %s176
    %p178 = scmp.eq.s32.totalorder %s26, 0
    %p179 = por %p177, %p178
    %s181 = sadd.s32 %s180, 1
    %p184 = scmp.eq.s32.totalorder %s20, 1
    %p185 = scmp.ne.s32.totalorder %s180, %s182
    %p186 = scmp.eq.s32.totalorder %s20, 0
    %p187 = por %p185, %p186
    %p188 = scmp.ne.s32.totalorder %s180, %s182
    %p189 = scmp.eq.s32.totalorder %s25, 1
    %p190 = por %p188, %p189
    %p191 = scmp.ne.s32.totalorder %s182, %s183
    %p192 = scmp.eq.s32.totalorder %s25, 0
    %p193 = por %p191, %p192
    %p194 = scmp.ne.s32.totalorder %s182, %s183
    %p195 = scmp.eq.s32.totalorder %s26, 1
    %p196 = por %p194, %p195
    %p198 = scmp.ne.s32.totalorder %s183, %s197
    %p199 = scmp.eq.s32.totalorder %s26, 0
    %p200 = por %p198, %p199
    %s202 = sadd.s32 %s201, 1
    %p205 = scmp.eq.s32.totalorder %s20, 1
    %p206 = scmp.ne.s32.totalorder %s201, %s203
    %p207 = scmp.eq.s32.totalorder %s20, 0
    %p208 = por %p206, %p207
    %p209 = scmp.ne.s32.totalorder %s201, %s203
    %p210 = scmp.eq.s32.totalorder %s25, 1
    %p211 = por %p209, %p210
    %p212 = scmp.ne.s32.totalorder %s203, %s204
    %p213 = scmp.eq.s32.totalorder %s25, 0
    %p214 = por %p212, %p213
    %p215 = scmp.ne.s32.totalorder %s203, %s204
    %p216 = scmp.eq.s32.totalorder %s26, 1
    %p217 = por %p215, %p216
    %p219 = scmp.ne.s32.totalorder %s204, %s218
    %p220 = scmp.eq.s32.totalorder %s26, 0
    %p221 = por %p219, %p220
    %s223 = sadd.s32 %s222, 1
    %p226 = scmp.eq.s32.totalorder %s20, 1
    %p227 = scmp.ne.s32.totalorder %s222, %s224
    %p228 = scmp.eq.s32.totalorder %s20, 0
    %p229 = por %p227, %p228
    %p230 = scmp.ne.s32.totalorder %s222, %s224
    %p231 = scmp.eq.s32.totalorder %s25, 1
    %p232 = por %p230, %p231
    %p233 = scmp.ne.s32.totalorder %s224, %s225
    %p234 = scmp.eq.s32.totalorder %s25, 0
    %p235 = por %p233, %p234
    %p236 = scmp.ne.s32.totalorder %s224, %s225
    %p237 = scmp.eq.s32.totalorder %s26, 1
    %p238 = por %p236, %p237
    %p240 = scmp.ne.s32.totalorder %s225, %s239
    %p241 = scmp.eq.s32.totalorder %s26, 0
    %p242 = por %p240, %p241
    %s244 = sadd.s32 %s243, 1
    %p247 = scmp.eq.s32.totalorder %s20, 1
    %p248 = scmp.ne.s32.totalorder %s243, %s245
    %p249 = scmp.eq.s32.totalorder %s20, 0
    %p250 = por %p248, %p249
    %p251 = scmp.ne.s32.totalorder %s243, %s245
    %p252 = scmp.eq.s32.totalorder %s25, 1
    %p253 = por %p251, %p252
    %p254 = scmp.ne.s32.totalorder %s245, %s246
    %p255 = scmp.eq.s32.totalorder %s25, 0
    %p256 = por %p254, %p255
    %p257 = scmp.ne.s32.totalorder %s245, %s246
    %p258 = scmp.eq.s32.totalorder %s26, 1
    %p259 = por %p257, %p258
    %p261 = scmp.ne.s32.totalorder %s246, %s260
    %p262 = scmp.eq.s32.totalorder %s26, 0
    %p263 = por %p261, %p262
    %s265 = sadd.s32 %s264, 1
    %p268 = scmp.eq.s32.totalorder %s20, 1
    %p269 = scmp.ne.s32.totalorder %s264, %s266
    %p270 = scmp.eq.s32.totalorder %s20, 0
    %p271 = por %p269, %p270
    %p272 = scmp.ne.s32.totalorder %s264, %s266
    %p273 = scmp.eq.s32.totalorder %s25, 1
    %p274 = por %p272, %p273
    %p275 = scmp.ne.s32.totalorder %s266, %s267
    %p276 = scmp.eq.s32.totalorder %s25, 0
    %p277 = por %p275, %p276
    %p278 = scmp.ne.s32.totalorder %s266, %s267
    %p279 = scmp.eq.s32.totalorder %s26, 1
    %p280 = por %p278, %p279
    %p282 = scmp.ne.s32.totalorder %s267, %s281
    %p283 = scmp.eq.s32.totalorder %s26, 0
    %p284 = por %p282, %p283
    %s286 = sadd.s32 %s285, 1
    %p289 = scmp.eq.s32.totalorder %s20, 1
    %p290 = scmp.ne.s32.totalorder %s285, %s287
    %p291 = scmp.eq.s32.totalorder %s20, 0
    %p292 = por %p290, %p291
    %p293 = scmp.ne.s32.totalorder %s285, %s287
    %p294 = scmp.eq.s32.totalorder %s25, 1
    %p295 = por %p293, %p294
    %p296 = scmp.ne.s32.totalorder %s287, %s288
    %p297 = scmp.eq.s32.totalorder %s25, 0
    %p298 = por %p296, %p297
    %p299 = scmp.ne.s32.totalorder %s287, %s288
    %p300 = scmp.eq.s32.totalorder %s26, 1
    %p301 = por %p299, %p300
    %p303 = scmp.ne.s32.totalorder %s288, %s302
    %p304 = scmp.eq.s32.totalorder %s26, 0
    %p305 = por %p303, %p304
    %s307 = sadd.s32 %s306, 1
    %p310 = scmp.eq.s32.totalorder %s20, 1
    %p311 = scmp.ne.s32.totalorder %s306, %s308
    %p312 = scmp.eq.s32.totalorder %s20, 0
    %p313 = por %p311, %p312
    %p314 = scmp.ne.s32.totalorder %s306, %s308
    %p315 = scmp.eq.s32.totalorder %s25, 1
    %p316 = por %p314, %p315
    %p317 = scmp.ne.s32.totalorder %s308, %s309
    %p318 = scmp.eq.s32.totalorder %s25, 0
    %p319 = por %p317, %p318
    %p320 = scmp.ne.s32.totalorder %s308, %s309
    %p321 = scmp.eq.s32.totalorder %s26, 1
    %p322 = por %p320, %p321
    %p324 = scmp.ne.s32.totalorder %s309, %s323
    %p325 = scmp.eq.s32.totalorder %s26, 0
    %p326 = por %p324, %p325
    %s327 = ssub.s32 %s20, %s27
    %p328 = scmp.eq.s32.totalorder %s327, 0
    %s330 = sadd.s32 %s329, 1
    %s331 = scalar_select %p328, %s329, %s330
    %p334 = pneg %p328
    %p335 = scmp.eq.s32.totalorder %s20, 1
    %p336 = por %p334, %p335
    %p337 = scmp.ne.s32.totalorder %s329, %s332
    %p338 = scmp.eq.s32.totalorder %s20, 0
    %p339 = por %p337, %p338
    %p340 = scmp.ne.s32.totalorder %s329, %s332
    %p341 = scmp.eq.s32.totalorder %s25, 1
    %p342 = por %p340, %p341
    %p343 = scmp.ne.s32.totalorder %s332, %s333
    %p344 = scmp.eq.s32.totalorder %s25, 0
    %p345 = por %p343, %p344
    %p346 = scmp.ne.s32.totalorder %s332, %s333
    %p347 = scmp.eq.s32.totalorder %s26, 1
    %p348 = por %p346, %p347
    %p350 = scmp.ne.s32.totalorder %s333, %s349
    %p351 = scmp.eq.s32.totalorder %s26, 0
    %p352 = por %p350, %p351
    %p353 = scmp.le.s32.totalorder 1, %s20
    %p354 = scmp.lt.s32.totalorder %s20, 3
    %p355 = pnand %p353, %p354
    %p356 = pneg %p355
    // Predicated region
    $region9: #{swin_block.3} parent=5 // pred_check
      _
    $region10: #{swin_block.3} parent=5 // pred_check_branch
      %358 = sbr.rel (%p355) target = $region12
    $region11: #{swin_block.3} parent=5 // pred_region
      %s359 = ssub.s32 %s20, 1
      // Predicated region
      $region13: #{swin_block.3} parent=11 // pred_check
        %p360 = pneg %p67
      $region14: #{swin_block.3} parent=11 // pred_check_branch
        %362 = sbr.rel (%p360) target = $region16
      $region15: #{swin_block.3} parent=11 // pred_region
        _
      $region16: #{swin_block.3} parent=11 // pred_fallthru
        _
      // Predicated region
      $region17: #{swin_block.3} parent=11 // pred_check
        %p363 = pneg %p88
      $region18: #{swin_block.3} parent=11 // pred_check_branch
        %365 = sbr.rel (%p363) target = $region20
      $region19: #{swin_block.3} parent=11 // pred_region
        _
      $region20: #{swin_block.3} parent=11 // pred_fallthru
        _
      // Predicated region
      $region21: #{swin_block.3} parent=11 // pred_check
        %p366 = pneg %p109
      $region22: #{swin_block.3} parent=11 // pred_check_branch
        %368 = sbr.rel (%p366) target = $region24
      $region23: #{swin_block.3} parent=11 // pred_region
        _
      $region24: #{swin_block.3} parent=11 // pred_fallthru
        _
      // Predicated region
      $region25: #{swin_block.3} parent=11 // pred_check
        %p369 = pneg %p130
      $region26: #{swin_block.3} parent=11 // pred_check_branch
        %371 = sbr.rel (%p369) target = $region28
      $region27: #{swin_block.3} parent=11 // pred_region
        _
      $region28: #{swin_block.3} parent=11 // pred_fallthru
        _
      // Predicated region
      $region29: #{swin_block.3} parent=11 // pred_check
        %p372 = pneg %p151
      $region30: #{swin_block.3} parent=11 // pred_check_branch
        %374 = sbr.rel (%p372) target = $region32
      $region31: #{swin_block.3} parent=11 // pred_region
        _
      $region32: #{swin_block.3} parent=11 // pred_fallthru
        _
      // Predicated region
      $region33: #{swin_block.3} parent=11 // pred_check
        %p375 = pneg %p172
      $region34: #{swin_block.3} parent=11 // pred_check_branch
        %377 = sbr.rel (%p375) target = $region36
      $region35: #{swin_block.3} parent=11 // pred_region
        _
      $region36: #{swin_block.3} parent=11 // pred_fallthru
        _
      // Predicated region
      $region37: #{swin_block.3} parent=11 // pred_check
        %p378 = pneg %p193
      $region38: #{swin_block.3} parent=11 // pred_check_branch
        %380 = sbr.rel (%p378) target = $region40
      $region39: #{swin_block.3} parent=11 // pred_region
        _
      $region40: #{swin_block.3} parent=11 // pred_fallthru
        _
      // Predicated region
      $region41: #{swin_block.3} parent=11 // pred_check
        %p381 = pneg %p214
      $region42: #{swin_block.3} parent=11 // pred_check_branch
        %383 = sbr.rel (%p381) target = $region44
      $region43: #{swin_block.3} parent=11 // pred_region
        _
      $region44: #{swin_block.3} parent=11 // pred_fallthru
        _
      // Predicated region
      $region45: #{swin_block.3} parent=11 // pred_check
        %p384 = pneg %p235
      $region46: #{swin_block.3} parent=11 // pred_check_branch
        %386 = sbr.rel (%p384) target = $region48
      $region47: #{swin_block.3} parent=11 // pred_region
        _
      $region48: #{swin_block.3} parent=11 // pred_fallthru
        _
      // Predicated region
      $region49: #{swin_block.3} parent=11 // pred_check
        %p387 = pneg %p256
      $region50: #{swin_block.3} parent=11 // pred_check_branch
        %389 = sbr.rel (%p387) target = $region52
      $region51: #{swin_block.3} parent=11 // pred_region
        _
      $region52: #{swin_block.3} parent=11 // pred_fallthru
        _
      // Predicated region
      $region53: #{swin_block.3} parent=11 // pred_check
        %p390 = pneg %p277
      $region54: #{swin_block.3} parent=11 // pred_check_branch
        %392 = sbr.rel (%p390) target = $region56
      $region55: #{swin_block.3} parent=11 // pred_region
        _
      $region56: #{swin_block.3} parent=11 // pred_fallthru
        _
      // Predicated region
      $region57: #{swin_block.3} parent=11 // pred_check
        %p393 = pneg %p298
      $region58: #{swin_block.3} parent=11 // pred_check_branch
        %395 = sbr.rel (%p393) target = $region60
      $region59: #{swin_block.3} parent=11 // pred_region
        _
      $region60: #{swin_block.3} parent=11 // pred_fallthru
        _
      // Predicated region
      $region61: #{swin_block.3} parent=11 // pred_check
        %p396 = pneg %p319
      $region62: #{swin_block.3} parent=11 // pred_check_branch
        %398 = sbr.rel (%p396) target = $region64
      $region63: #{swin_block.3} parent=11 // pred_region
        _
      $region64: #{swin_block.3} parent=11 // pred_fallthru
        _
    $region12: #{swin_block.3} parent=5 // pred_fallthru
      _
    %p399 = scmp.lt.s32.totalorder %s20, 2
    // Predicated region
    $region65: #{swin_block.3} parent=5 // pred_check
      %p400 = pneg %p399
    $region66: #{swin_block.3} parent=5 // pred_check_branch
      %402 = sbr.rel (%p400) target = $region68
    $region67: #{swin_block.3} parent=5 // pred_region
      // Predicated region
      $region69: #{swin_block.3} parent=67 // pred_check
        %p403 = pneg %p40
      $region70: #{swin_block.3} parent=67 // pred_check_branch
        %405 = sbr.rel (%p403) target = $region72
      $region71: #{swin_block.3} parent=67 // pred_region
        %p406 = scmp.lt.s32.totalorder %s20, 1
        %s407 = scalar_select %p406, %s20, 1
        %s408 = smul.addr %s407, 8
        %s409 = smul.addr %s408, 8
        %s410 = scalar_lea.vmem %s0, %s409
      $region72: #{swin_block.3} parent=67 // pred_fallthru
        _
    $region68: #{swin_block.3} parent=5 // pred_fallthru
      _
    %p411 = scmp.le.s32.totalorder 1, %s20
    %p412 = scmp.lt.s32.totalorder %s20, 3
    %p413 = pnand %p411, %p412
    %p414 = pneg %p413
    // Predicated region
    $region73: #{swin_block.3} parent=5 // pred_check
      _
    $region74: #{swin_block.3} parent=5 // pred_check_branch
      %416 = sbr.rel (%p413) target = $region76
    $region75: #{swin_block.3} parent=5 // pred_region
      %s417 = ssub.s32 %s20, 1
      %p418 = scmp.lt.s32.totalorder %s25, 1
      %s419 = scalar_select %p418, %s25, 1
      %s420 = smul.addr %s419, 8
      %s421 = smul.addr %s420, 8
      %s422 = scalar_lea.vmem %s0, %s421
      %p423 = pneg %p46
      %p424 = pneg %p43
      %p425 = pneg %p67
      %p426 = pneg %p64
      %p427 = pneg %p88
      %p428 = pneg %p85
      %p429 = pneg %p109
      %p430 = pneg %p106
      %p431 = pneg %p130
      %p432 = pneg %p127
      %p433 = pneg %p151
      %p434 = pneg %p148
      %p435 = pneg %p172
      %p436 = pneg %p169
      %p437 = pneg %p193
      %p438 = pneg %p190
      %p439 = pneg %p214
      %p440 = pneg %p211
      %p441 = pneg %p235
      %p442 = pneg %p232
      %p443 = pneg %p256
      %p444 = pneg %p253
      %p445 = pneg %p277
      %p446 = pneg %p274
      %p447 = pneg %p298
      %p448 = pneg %p295
      %p449 = pneg %p319
      %p450 = pneg %p316
      %p451 = pneg %p345
      %p452 = pneg %p342
      %p453 = scmp.lt.s32.totalorder %s25, 1
      %s454 = scalar_select %p453, %s25, 1
      %s455 = smul.addr %s454, 8
      %s456 = smul.addr %s455, 8
      %s457 = scalar_lea.vmem %s14, %s456
      %p458 = scmp.lt.s32.totalorder %s25, 1
      %s459 = scalar_select %p458, %s25, 1
      %s460 = smul.addr %s459, 8
      %s461 = smul.addr %s460, 8
      %s462 = scalar_lea.vmem %s0, %s461
      %p463 = scmp.lt.s32.totalorder %s25, 1
      %s464 = scalar_select %p463, %s25, 1
      %s465 = smul.addr %s464, 8
      %s466 = smul.addr %s465, 8
      %s467 = scalar_lea.vmem %s14, %s466
      %v469 = vld [vmem:[%s462] sm:$0xff]
      %v470 = vld [vmem:[%s462 + $0x8] sm:$0xff]
      %v471 = vld [vmem:[%s462 + $0x10] sm:$0xff]
      %v472 = vld [vmem:[%s462 + $0x18] sm:$0xff]
      %v473 = vld [vmem:[%s462 + $0x20] sm:$0xff]
      %v474 = vld [vmem:[%s462 + $0x28] sm:$0xff]
      %v475 = vld [vmem:[%s462 + $0x30] sm:$0xff]
      %v476 = vld [vmem:[%s462 + $0x38] sm:$0xff]
      %vm477 = vcmask 261120
      %v478 = vsel %vm477, %v469, 0.0
      %479 = vadd.xlane.f32.xlu0 %v478
      %v480 = vpop.xlane.xlu0 %479
      %v481 = vsel %vm477, %v470, 0.0
      %482 = vadd.xlane.f32.xlu0 %v481
      %v483 = vpop.xlane.xlu0 %482
      %v484 = vsel %vm477, %v471, 0.0
      %485 = vadd.xlane.f32.xlu0 %v484
      %v486 = vpop.xlane.xlu0 %485
      %v487 = vsel %vm477, %v472, 0.0
      %488 = vadd.xlane.f32.xlu0 %v487
      %v489 = vpop.xlane.xlu0 %488
      %v490 = vsel %vm477, %v473, 0.0
      %491 = vadd.xlane.f32.xlu0 %v490
      %v492 = vpop.xlane.xlu0 %491
      %v493 = vsel %vm477, %v474, 0.0
      %494 = vadd.xlane.f32.xlu0 %v493
      %v495 = vpop.xlane.xlu0 %494
      %v496 = vsel %vm477, %v475, 0.0
      %497 = vadd.xlane.f32.xlu0 %v496
      %v498 = vpop.xlane.xlu0 %497
      %v499 = vsel %vm477, %v476, 0.0
      %500 = vadd.xlane.f32.xlu0 %v499
      %v501 = vpop.xlane.xlu0 %500
      %v502 = vrcp.pop 32.0
      %v503 = vmul.f32 %v480, %v502
      %v504 = vmul.f32 %v483, %v502
      %v505 = vmul.f32 %v486, %v502
      %v506 = vmul.f32 %v489, %v502
      %v507 = vmul.f32 %v492, %v502
      %v508 = vmul.f32 %v495, %v502
      %v509 = vmul.f32 %v498, %v502
      %v510 = vmul.f32 %v501, %v502
      %v511 = vmul.f32 %v469, %v469
      %v512 = vmul.f32 %v470, %v470
      %v513 = vmul.f32 %v471, %v471
      %v514 = vmul.f32 %v472, %v472
      %v515 = vmul.f32 %v473, %v473
      %v516 = vmul.f32 %v474, %v474
      %v517 = vmul.f32 %v475, %v475
      %v518 = vmul.f32 %v476, %v476
      %v519 = vsel %vm477, %v511, 0.0
      %520 = vadd.xlane.f32.xlu0 %v519
      %v521 = vpop.xlane.xlu0 %520
      %v522 = vsel %vm477, %v512, 0.0
      %523 = vadd.xlane.f32.xlu0 %v522
      %v524 = vpop.xlane.xlu0 %523
      %v525 = vsel %vm477, %v513, 0.0
      %526 = vadd.xlane.f32.xlu0 %v525
      %v527 = vpop.xlane.xlu0 %526
      %v528 = vsel %vm477, %v514, 0.0
      %529 = vadd.xlane.f32.xlu0 %v528
      %v530 = vpop.xlane.xlu0 %529
      %v531 = vsel %vm477, %v515, 0.0
      %532 = vadd.xlane.f32.xlu0 %v531
      %v533 = vpop.xlane.xlu0 %532
      %v534 = vsel %vm477, %v516, 0.0
      %535 = vadd.xlane.f32.xlu0 %v534
      %v536 = vpop.xlane.xlu0 %535
      %v537 = vsel %vm477, %v517, 0.0
      %538 = vadd.xlane.f32.xlu0 %v537
      %v539 = vpop.xlane.xlu0 %538
      %v540 = vsel %vm477, %v518, 0.0
      %541 = vadd.xlane.f32.xlu0 %v540
      %v542 = vpop.xlane.xlu0 %541
      %v543 = vmul.f32 %v521, %v502
      %v544 = vmul.f32 %v524, %v502
      %v545 = vmul.f32 %v527, %v502
      %v546 = vmul.f32 %v530, %v502
      %v547 = vmul.f32 %v533, %v502
      %v548 = vmul.f32 %v536, %v502
      %v549 = vmul.f32 %v539, %v502
      %v550 = vmul.f32 %v542, %v502
      %v551 = vmul.f32 %v503, %v503
      %v552 = vmul.f32 %v504, %v504
      %v553 = vmul.f32 %v505, %v505
      %v554 = vmul.f32 %v506, %v506
      %v555 = vmul.f32 %v507, %v507
      %v556 = vmul.f32 %v508, %v508
      %v557 = vmul.f32 %v509, %v509
      %v558 = vmul.f32 %v510, %v510
      %v559 = vsub.f32 %v543, %v551
      %v560 = vsub.f32 %v544, %v552
      %v561 = vsub.f32 %v545, %v553
      %v562 = vsub.f32 %v546, %v554
      %v563 = vsub.f32 %v547, %v555
      %v564 = vsub.f32 %v548, %v556
      %v565 = vsub.f32 %v549, %v557
      %v566 = vsub.f32 %v550, %v558
      %v567 = vsub.f32 %v469, %v503
      %v568 = vsub.f32 %v470, %v504
      %v569 = vsub.f32 %v471, %v505
      %v570 = vsub.f32 %v472, %v506
      %v571 = vsub.f32 %v473, %v507
      %v572 = vsub.f32 %v474, %v508
      %v573 = vsub.f32 %v475, %v509
      %v574 = vsub.f32 %v476, %v510
      %v575 = vadd.f32 %v559, 1e-05
      %v576 = vadd.f32 %v560, 1e-05
      %v577 = vadd.f32 %v561, 1e-05
      %v578 = vadd.f32 %v562, 1e-05
      %v579 = vadd.f32 %v563, 1e-05
      %v580 = vadd.f32 %v564, 1e-05
      %v581 = vadd.f32 %v565, 1e-05
      %v582 = vadd.f32 %v566, 1e-05
      %v583 = vrsqrt.pop %v575
      %v584 = vrsqrt.pop %v576
      %v585 = vrsqrt.pop %v577
      %v586 = vrsqrt.pop %v578
      %v587 = vrsqrt.pop %v579
      %v588 = vrsqrt.pop %v580
      %v589 = vrsqrt.pop %v581
      %v590 = vrsqrt.pop %v582
      %v591 = vmul.f32 %v567, %v583
      %v592 = vmul.f32 %v568, %v584
      %v593 = vmul.f32 %v569, %v585
      %v594 = vmul.f32 %v570, %v586
      %v595 = vmul.f32 %v571, %v587
      %v596 = vmul.f32 %v572, %v588
      %v597 = vmul.f32 %v573, %v589
      %v598 = vmul.f32 %v574, %v590
      %v599 = vld [vmem:[%s1] sm:$0x1]
      %v601 = vlaneseq
      %v602 = vshrl.u32 %v601, 7
      %v603 = vsub.s32 0, %v602
      %v604 = vrot.slane %v599, %v603
      %v606 = vmul.f32 %v591, %v604
      %v607 = vmul.f32 %v592, %v604
      %v608 = vmul.f32 %v593, %v604
      %v609 = vmul.f32 %v594, %v604
      %v610 = vmul.f32 %v595, %v604
      %v611 = vmul.f32 %v596, %v604
      %v612 = vmul.f32 %v597, %v604
      %v613 = vmul.f32 %v598, %v604
      %v614 = vld [vmem:[%s2] sm:$0x1]
      %v616 = vlaneseq
      %v617 = vshrl.u32 %v616, 7
      %v618 = vsub.s32 0, %v617
      %v619 = vrot.slane %v614, %v618
      %v621 = vadd.f32 %v606, %v619
      %v622 = vadd.f32 %v607, %v619
      %v623 = vadd.f32 %v608, %v619
      %v624 = vadd.f32 %v609, %v619
      %v625 = vadd.f32 %v610, %v619
      %v626 = vadd.f32 %v611, %v619
      %v627 = vadd.f32 %v612, %v619
      %v628 = vadd.f32 %v613, %v619
      %v629 = vpack.c.bf16 %v622, %v621
      %v630 = vpack.c.bf16 %v624, %v623
      %v631 = vpack.c.bf16 %v626, %v625
      %v632 = vpack.c.bf16 %v628, %v627
      %v633 = vld [vmem:[%s3] sm:$0xf]
      %v634 = vld [vmem:[%s3 + $0x4] sm:$0xf]
      %v635 = vld [vmem:[%s3 + $0x8] sm:$0xf]
      %v636 = vld [vmem:[%s3 + $0xc] sm:$0xf]
      %v637 = vld [vmem:[%s4] sm:$0x1]
      %v639 = vlaneseq
      %v640 = vshrl.u32 %v639, 7
      %v641 = vsub.s32 0, %v640
      %v642 = vrot.slane %v637, %v641
      %v648 = vunpack.c.l.b16 %v633
      %v649 = vunpack.c.l.b16 %v634
      %v650 = vunpack.c.l.b16 %v635
      %v651 = vunpack.c.l.b16 %v636
      %v652 = vpack.c.b16 %v649, %v648
      %v653 = vpack.c.b16 %v651, %v650
      %v657 = vsel %vm477, %v629, 0
      %v660 = vsel %vm477, %v630, 0
      %v663 = vsel %vm477, %v631, 0
      %v666 = vsel %vm477, %v632, 0
      %668 = vmatprep.subr.bf16.mxu0 0
      %669 = vmatpush1.bf16.msra.mxu0 0
      %670 = vmatprep.subr.bf16.mxu0 0
      %671 = vmatpush1.bf16.msra.mxu0 0
      %672 = vmatprep.subr.bf16.mxu0 0
      %673 = vmatpush1.bf16.msra.mxu0 0
      %674 = vmatprep.subr.bf16.mxu0 0
      %675 = vmatpush1.bf16.msra.mxu0 0
      %676 = vmatprep.subr.bf16.mxu0 0
      %677 = vmatpush1.bf16.msra.mxu0 0
      %678 = vmatprep.subr.bf16.mxu0 0
      %679 = vmatpush1.bf16.msra.mxu0 0
      %680 = vmatprep.subr.bf16.mxu0 0
      %681 = vmatpush1.bf16.msra.mxu0 %v653
      %682 = vmatprep.subr.bf16.mxu0 0
      %683 = vmatpush1.bf16.msra.mxu0 %v652
      %684 = vmatprep.subr.bf16.mxu0 0
      %685 = vmatpush2.bf16.msra.mxu0 0
      %686 = vmatprep.subr.bf16.mxu0 0
      %687 = vmatpush2.bf16.msra.mxu0 0
      %688 = vmatprep.subr.bf16.mxu0 0
      %689 = vmatpush2.bf16.msra.mxu0 0
      %690 = vmatprep.subr.bf16.mxu0 0
      %691 = vmatpush2.bf16.msra.mxu0 0
      %692 = vmatprep.subr.bf16.mxu0 0
      %693 = vmatpush2.bf16.msra.mxu0 0
      %694 = vmatprep.subr.bf16.mxu0 0
      %695 = vmatpush2.bf16.msra.mxu0 0
      %696 = vmatprep.subr.bf16.mxu0 0
      %697 = vmatpush2.bf16.msra.mxu0 0
      %698 = vmatprep.subr.bf16.mxu0 0
      %699 = vmatpush2.bf16.msra.mxu0 0
      %700 = vmatprep.mubr.bf16.mxu0 0
      %701 = vmatmul.mubr.bf16.gmra.mxu0 %v657
      %v702 = vpop.f32.mrf.mxu0
      %v703 = vadd.f32 %v642, %v702
      %v704 = vpop.f32.mrf.mxu0
      %v705 = vpop.f32.mrf.mxu0
      %v706 = vadd.f32 %v642, %v705
      %v707 = vpop.f32.mrf.mxu0
      %708 = vmatprep.mubr.bf16.mxu0 0
      %709 = vmatmul.mubr.bf16.gmra.mxu0 %v660
      %v710 = vpop.f32.mrf.mxu0
      %v711 = vadd.f32 %v642, %v710
      %v712 = vpop.f32.mrf.mxu0
      %v713 = vpop.f32.mrf.mxu0
      %v714 = vadd.f32 %v642, %v713
      %v715 = vpop.f32.mrf.mxu0
      %716 = vmatprep.mubr.bf16.mxu0 0
      %717 = vmatmul.mubr.bf16.gmra.mxu0 %v663
      %v718 = vpop.f32.mrf.mxu0
      %v719 = vadd.f32 %v642, %v718
      %v720 = vpop.f32.mrf.mxu0
      %v721 = vpop.f32.mrf.mxu0
      %v722 = vadd.f32 %v642, %v721
      %v723 = vpop.f32.mrf.mxu0
      %724 = vmatprep.mubr.bf16.mxu0 0
      %725 = vmatmul.mubr.bf16.gmra.mxu0 %v666
      %v726 = vpop.f32.mrf.mxu0
      %v727 = vadd.f32 %v642, %v726
      %v728 = vpop.f32.mrf.mxu0
      %v729 = vpop.f32.mrf.mxu0
      %v730 = vadd.f32 %v642, %v729
      %v731 = vpop.f32.mrf.mxu0
      %732 = vdwg.mxu0
      %v733 = vpack.c.bf16 %v706, %v703
      %v734 = vpack.c.bf16 %v714, %v711
      %v735 = vpack.c.bf16 %v722, %v719
      %v736 = vpack.c.bf16 %v730, %v727
      %v737 = vld [vmem:[%s7] sm:$0xff]
      %v738 = vld [vmem:[%s7 + $0x8] sm:$0xff]
      %v739 = vld [vmem:[%s7 + $0x10] sm:$0xff]
      %v740 = vld [vmem:[%s7 + $0x18] sm:$0xff]
      %v741 = vld [vmem:[%s7 + $0x20] sm:$0xff]
      %v742 = vld [vmem:[%s7 + $0x28] sm:$0xff]
      %v743 = vld [vmem:[%s7 + $0x30] sm:$0xff]
      %v744 = vld [vmem:[%s7 + $0x38] sm:$0xff]
      %746 = vrot.lane.b32.xlu0 %v733, 96
      %v747 = vpop.permute.xlu0 %746
      %vm748 = vcmask 64512
      %v750 = vsel %vm748, %v733, 0
      %v753 = vsel %vm748, %v747, 0
      %755 = vmatprep.subr.bf16.mxu0 0
      %756 = vmatpush1.bf16.xpose.msra.mxu0 0
      %757 = vmatprep.subr.bf16.mxu0 0
      %758 = vmatpush1.bf16.xpose.msra.mxu0 0
      %759 = vmatprep.subr.bf16.mxu0 0
      %760 = vmatpush1.bf16.xpose.msra.mxu0 0
      %761 = vmatprep.subr.bf16.mxu0 0
      %762 = vmatpush1.bf16.xpose.msra.mxu0 0
      %763 = vmatprep.subr.bf16.mxu0 0
      %764 = vmatpush1.bf16.xpose.msra.mxu0 0
      %765 = vmatprep.subr.bf16.mxu0 0
      %766 = vmatpush1.bf16.xpose.msra.mxu0 0
      %767 = vmatprep.subr.bf16.mxu0 0
      %768 = vmatpush1.bf16.xpose.msra.mxu0 0
      %769 = vmatprep.subr.bf16.mxu0 0
      %770 = vmatpush1.bf16.xpose.msra.mxu0 %v753
      %771 = vmatprep.subr.bf16.mxu0 0
      %772 = vmatpush2.bf16.xpose.msra.mxu0 0
      %773 = vmatprep.subr.bf16.mxu0 0
      %774 = vmatpush2.bf16.xpose.msra.mxu0 0
      %775 = vmatprep.subr.bf16.mxu0 0
      %776 = vmatpush2.bf16.xpose.msra.mxu0 0
      %777 = vmatprep.subr.bf16.mxu0 0
      %778 = vmatpush2.bf16.xpose.msra.mxu0 0
      %779 = vmatprep.subr.bf16.mxu0 0
      %780 = vmatpush2.bf16.xpose.msra.mxu0 0
      %781 = vmatprep.subr.bf16.mxu0 0
      %782 = vmatpush2.bf16.xpose.msra.mxu0 0
      %783 = vmatprep.subr.bf16.mxu0 0
      %784 = vmatpush2.bf16.xpose.msra.mxu0 0
      %785 = vmatprep.subr.bf16.mxu0 0
      %786 = vmatpush2.bf16.xpose.msra.mxu0 0
      %787 = vmatprep.mubr.bf16.mxu0 0
      %788 = vmatmul.mubr.bf16.gmra.mxu0 %v750
      %v789 = vpop.f32.mrf.mxu0
      %v790 = vadd.f32 %v737, %v789
      %v791 = vpop.f32.mrf.mxu0
      %v792 = vpop.f32.mrf.mxu0
      %v793 = vadd.f32 %v738, %v792
      %v794 = vpop.f32.mrf.mxu0
      %795 = vdwg.mxu0
      %797 = vrot.lane.b32.xlu0 %v734, 96
      %v798 = vpop.permute.xlu0 %797
      %v800 = vsel %vm748, %v734, 0
      %v803 = vsel %vm748, %v798, 0
      %805 = vmatprep.subr.bf16.mxu0 0
      %806 = vmatpush1.bf16.xpose.msra.mxu0 0
      %807 = vmatprep.subr.bf16.mxu0 0
      %808 = vmatpush1.bf16.xpose.msra.mxu0 0
      %809 = vmatprep.subr.bf16.mxu0 0
      %810 = vmatpush1.bf16.xpose.msra.mxu0 0
      %811 = vmatprep.subr.bf16.mxu0 0
      %812 = vmatpush1.bf16.xpose.msra.mxu0 0
      %813 = vmatprep.subr.bf16.mxu0 0
      %814 = vmatpush1.bf16.xpose.msra.mxu0 0
      %815 = vmatprep.subr.bf16.mxu0 0
      %816 = vmatpush1.bf16.xpose.msra.mxu0 0
      %817 = vmatprep.subr.bf16.mxu0 0
      %818 = vmatpush1.bf16.xpose.msra.mxu0 0
      %819 = vmatprep.subr.bf16.mxu0 0
      %820 = vmatpush1.bf16.xpose.msra.mxu0 %v803
      %821 = vmatprep.subr.bf16.mxu0 0
      %822 = vmatpush2.bf16.xpose.msra.mxu0 0
      %823 = vmatprep.subr.bf16.mxu0 0
      %824 = vmatpush2.bf16.xpose.msra.mxu0 0
      %825 = vmatprep.subr.bf16.mxu0 0
      %826 = vmatpush2.bf16.xpose.msra.mxu0 0
      %827 = vmatprep.subr.bf16.mxu0 0
      %828 = vmatpush2.bf16.xpose.msra.mxu0 0
      %829 = vmatprep.subr.bf16.mxu0 0
      %830 = vmatpush2.bf16.xpose.msra.mxu0 0
      %831 = vmatprep.subr.bf16.mxu0 0
      %832 = vmatpush2.bf16.xpose.msra.mxu0 0
      %833 = vmatprep.subr.bf16.mxu0 0
      %834 = vmatpush2.bf16.xpose.msra.mxu0 0
      %835 = vmatprep.subr.bf16.mxu0 0
      %836 = vmatpush2.bf16.xpose.msra.mxu0 0
      %837 = vmatprep.mubr.bf16.mxu0 0
      %838 = vmatmul.mubr.bf16.gmra.mxu0 %v800
      %v839 = vpop.f32.mrf.mxu0
      %v840 = vadd.f32 %v739, %v839
      %v841 = vpop.f32.mrf.mxu0
      %v842 = vpop.f32.mrf.mxu0
      %v843 = vadd.f32 %v740, %v842
      %v844 = vpop.f32.mrf.mxu0
      %845 = vdwg.mxu0
      %847 = vrot.lane.b32.xlu0 %v735, 96
      %v848 = vpop.permute.xlu0 %847
      %v850 = vsel %vm748, %v735, 0
      %v853 = vsel %vm748, %v848, 0
      %855 = vmatprep.subr.bf16.mxu0 0
      %856 = vmatpush1.bf16.xpose.msra.mxu0 0
      %857 = vmatprep.subr.bf16.mxu0 0
      %858 = vmatpush1.bf16.xpose.msra.mxu0 0
      %859 = vmatprep.subr.bf16.mxu0 0
      %860 = vmatpush1.bf16.xpose.msra.mxu0 0
      %861 = vmatprep.subr.bf16.mxu0 0
      %862 = vmatpush1.bf16.xpose.msra.mxu0 0
      %863 = vmatprep.subr.bf16.mxu0 0
      %864 = vmatpush1.bf16.xpose.msra.mxu0 0
      %865 = vmatprep.subr.bf16.mxu0 0
      %866 = vmatpush1.bf16.xpose.msra.mxu0 0
      %867 = vmatprep.subr.bf16.mxu0 0
      %868 = vmatpush1.bf16.xpose.msra.mxu0 0
      %869 = vmatprep.subr.bf16.mxu0 0
      %870 = vmatpush1.bf16.xpose.msra.mxu0 %v853
      %871 = vmatprep.subr.bf16.mxu0 0
      %872 = vmatpush2.bf16.xpose.msra.mxu0 0
      %873 = vmatprep.subr.bf16.mxu0 0
      %874 = vmatpush2.bf16.xpose.msra.mxu0 0
      %875 = vmatprep.subr.bf16.mxu0 0
      %876 = vmatpush2.bf16.xpose.msra.mxu0 0
      %877 = vmatprep.subr.bf16.mxu0 0
      %878 = vmatpush2.bf16.xpose.msra.mxu0 0
      %879 = vmatprep.subr.bf16.mxu0 0
      %880 = vmatpush2.bf16.xpose.msra.mxu0 0
      %881 = vmatprep.subr.bf16.mxu0 0
      %882 = vmatpush2.bf16.xpose.msra.mxu0 0
      %883 = vmatprep.subr.bf16.mxu0 0
      %884 = vmatpush2.bf16.xpose.msra.mxu0 0
      %885 = vmatprep.subr.bf16.mxu0 0
      %886 = vmatpush2.bf16.xpose.msra.mxu0 0
      %887 = vmatprep.mubr.bf16.mxu0 0
      %888 = vmatmul.mubr.bf16.gmra.mxu0 %v850
      %v889 = vpop.f32.mrf.mxu0
      %v890 = vadd.f32 %v741, %v889
      %v891 = vpop.f32.mrf.mxu0
      %v892 = vpop.f32.mrf.mxu0
      %v893 = vadd.f32 %v742, %v892
      %v894 = vpop.f32.mrf.mxu0
      %895 = vdwg.mxu0
      %897 = vrot.lane.b32.xlu0 %v736, 96
      %v898 = vpop.permute.xlu0 %897
      %v900 = vsel %vm748, %v736, 0
      %v903 = vsel %vm748, %v898, 0
      %905 = vmatprep.subr.bf16.mxu0 0
      %906 = vmatpush1.bf16.xpose.msra.mxu0 0
      %907 = vmatprep.subr.bf16.mxu0 0
      %908 = vmatpush1.bf16.xpose.msra.mxu0 0
      %909 = vmatprep.subr.bf16.mxu0 0
      %910 = vmatpush1.bf16.xpose.msra.mxu0 0
      %911 = vmatprep.subr.bf16.mxu0 0
      %912 = vmatpush1.bf16.xpose.msra.mxu0 0
      %913 = vmatprep.subr.bf16.mxu0 0
      %914 = vmatpush1.bf16.xpose.msra.mxu0 0
      %915 = vmatprep.subr.bf16.mxu0 0
      %916 = vmatpush1.bf16.xpose.msra.mxu0 0
      %917 = vmatprep.subr.bf16.mxu0 0
      %918 = vmatpush1.bf16.xpose.msra.mxu0 0
      %919 = vmatprep.subr.bf16.mxu0 0
      %920 = vmatpush1.bf16.xpose.msra.mxu0 %v903
      %921 = vmatprep.subr.bf16.mxu0 0
      %922 = vmatpush2.bf16.xpose.msra.mxu0 0
      %923 = vmatprep.subr.bf16.mxu0 0
      %924 = vmatpush2.bf16.xpose.msra.mxu0 0
      %925 = vmatprep.subr.bf16.mxu0 0
      %926 = vmatpush2.bf16.xpose.msra.mxu0 0
      %927 = vmatprep.subr.bf16.mxu0 0
      %928 = vmatpush2.bf16.xpose.msra.mxu0 0
      %929 = vmatprep.subr.bf16.mxu0 0
      %930 = vmatpush2.bf16.xpose.msra.mxu0 0
      %931 = vmatprep.subr.bf16.mxu0 0
      %932 = vmatpush2.bf16.xpose.msra.mxu0 0
      %933 = vmatprep.subr.bf16.mxu0 0
      %934 = vmatpush2.bf16.xpose.msra.mxu0 0
      %935 = vmatprep.subr.bf16.mxu0 0
      %936 = vmatpush2.bf16.xpose.msra.mxu0 0
      %937 = vmatprep.mubr.bf16.mxu0 0
      %938 = vmatmul.mubr.bf16.gmra.mxu0 %v900
      %v939 = vpop.f32.mrf.mxu0
      %v940 = vadd.f32 %v743, %v939
      %v941 = vpop.f32.mrf.mxu0
      %v942 = vpop.f32.mrf.mxu0
      %v943 = vadd.f32 %v744, %v942
      %v944 = vpop.f32.mrf.mxu0
      %945 = vdwg.mxu0
      %vm946 = vcmask 130048
      %v947 = vsel %vm946, %v790, -inf
      %948 = vmax.xlane.f32.xlu0 %v947
      %v949 = vpop.xlane.xlu0 %948
      %v950 = vsel %vm946, %v793, -inf
      %951 = vmax.xlane.f32.xlu0 %v950
      %v952 = vpop.xlane.xlu0 %951
      %v953 = vsel %vm946, %v840, -inf
      %954 = vmax.xlane.f32.xlu0 %v953
      %v955 = vpop.xlane.xlu0 %954
      %v956 = vsel %vm946, %v843, -inf
      %957 = vmax.xlane.f32.xlu0 %v956
      %v958 = vpop.xlane.xlu0 %957
      %v959 = vsel %vm946, %v890, -inf
      %960 = vmax.xlane.f32.xlu0 %v959
      %v961 = vpop.xlane.xlu0 %960
      %v962 = vsel %vm946, %v893, -inf
      %963 = vmax.xlane.f32.xlu0 %v962
      %v964 = vpop.xlane.xlu0 %963
      %v965 = vsel %vm946, %v940, -inf
      %966 = vmax.xlane.f32.xlu0 %v965
      %v967 = vpop.xlane.xlu0 %966
      %v968 = vsel %vm946, %v943, -inf
      %969 = vmax.xlane.f32.xlu0 %v968
      %v970 = vpop.xlane.xlu0 %969
      %v971 = vsub.f32 %v790, %v949
      %v972 = vsub.f32 %v793, %v952
      %v973 = vsub.f32 %v840, %v955
      %v974 = vsub.f32 %v843, %v958
      %v975 = vsub.f32 %v890, %v961
      %v976 = vsub.f32 %v893, %v964
      %v977 = vsub.f32 %v940, %v967
      %v978 = vsub.f32 %v943, %v970
      %v979 = vmul.f32 %v971, 1.442695
      %v980 = vpow.pop %v979
      %v981 = vmul.f32 %v972, 1.442695
      %v982 = vpow.pop %v981
      %v983 = vmul.f32 %v973, 1.442695
      %v984 = vpow.pop %v983
      %v985 = vmul.f32 %v974, 1.442695
      %v986 = vpow.pop %v985
      %v987 = vmul.f32 %v975, 1.442695
      %v988 = vpow.pop %v987
      %v989 = vmul.f32 %v976, 1.442695
      %v990 = vpow.pop %v989
      %v991 = vmul.f32 %v977, 1.442695
      %v992 = vpow.pop %v991
      %v993 = vmul.f32 %v978, 1.442695
      %v994 = vpow.pop %v993
      %v995 = vsel %vm946, %v980, 0.0
      %996 = vadd.xlane.f32.xlu0 %v995
      %v997 = vpop.xlane.xlu0 %996
      %v998 = vsel %vm946, %v982, 0.0
      %999 = vadd.xlane.f32.xlu0 %v998
      %v1000 = vpop.xlane.xlu0 %999
      %v1001 = vsel %vm946, %v984, 0.0
      %1002 = vadd.xlane.f32.xlu0 %v1001
      %v1003 = vpop.xlane.xlu0 %1002
      %v1004 = vsel %vm946, %v986, 0.0
      %1005 = vadd.xlane.f32.xlu0 %v1004
      %v1006 = vpop.xlane.xlu0 %1005
      %v1007 = vsel %vm946, %v988, 0.0
      %1008 = vadd.xlane.f32.xlu0 %v1007
      %v1009 = vpop.xlane.xlu0 %1008
      %v1010 = vsel %vm946, %v990, 0.0
      %1011 = vadd.xlane.f32.xlu0 %v1010
      %v1012 = vpop.xlane.xlu0 %1011
      %v1013 = vsel %vm946, %v992, 0.0
      %1014 = vadd.xlane.f32.xlu0 %v1013
      %v1015 = vpop.xlane.xlu0 %1014
      %v1016 = vsel %vm946, %v994, 0.0
      %1017 = vadd.xlane.f32.xlu0 %v1016
      %v1018 = vpop.xlane.xlu0 %1017
      %v1019 = vrcp.pop %v997
      %v1020 = vmul.f32 %v980, %v1019
      %v1021 = vrcp.pop %v1000
      %v1022 = vmul.f32 %v982, %v1021
      %v1023 = vrcp.pop %v1003
      %v1024 = vmul.f32 %v984, %v1023
      %v1025 = vrcp.pop %v1006
      %v1026 = vmul.f32 %v986, %v1025
      %v1027 = vrcp.pop %v1009
      %v1028 = vmul.f32 %v988, %v1027
      %v1029 = vrcp.pop %v1012
      %v1030 = vmul.f32 %v990, %v1029
      %v1031 = vrcp.pop %v1015
      %v1032 = vmul.f32 %v992, %v1031
      %v1033 = vrcp.pop %v1018
      %v1034 = vmul.f32 %v994, %v1033
      %v1035 = vpack.c.bf16 %v1022, %v1020
      %v1036 = vpack.c.bf16 %v1026, %v1024
      %v1037 = vpack.c.bf16 %v1030, %v1028
      %v1038 = vpack.c.bf16 %v1034, %v1032
      %1039 = vrot.lane.b32.xlu0 %v733, 64
      %v1040 = vpop.permute.xlu0 %1039
      %v1043 = vsel %vm946, %v1035, 0
      %1045 = vmatprep.subr.bf16.mxu0 0
      %1046 = vmatpush1.bf16.msra.mxu0 0
      %1047 = vmatprep.subr.bf16.mxu0 0
      %1048 = vmatpush1.bf16.msra.mxu0 0
      %1049 = vmatprep.subr.bf16.mxu0 0
      %1050 = vmatpush1.bf16.msra.mxu0 0
      %1051 = vmatprep.subr.bf16.mxu0 0
      %1052 = vmatpush1.bf16.msra.mxu0 0
      %1053 = vmatprep.subr.bf16.mxu0 0
      %1054 = vmatpush1.bf16.msra.mxu0 0
      %1055 = vmatprep.subr.bf16.mxu0 0
      %1056 = vmatpush1.bf16.msra.mxu0 0
      %1057 = vmatprep.subr.bf16.mxu0 0
      %1058 = vmatpush1.bf16.msra.mxu0 0
      %1059 = vmatprep.subr.bf16.mxu0 0
      %1060 = vmatpush1.bf16.msra.mxu0 %v1040
      %1061 = vmatprep.subr.bf16.mxu0 0
      %1062 = vmatpush2.bf16.msra.mxu0 0
      %1063 = vmatprep.subr.bf16.mxu0 0
      %1064 = vmatpush2.bf16.msra.mxu0 0
      %1065 = vmatprep.subr.bf16.mxu0 0
      %1066 = vmatpush2.bf16.msra.mxu0 0
      %1067 = vmatprep.subr.bf16.mxu0 0
      %1068 = vmatpush2.bf16.msra.mxu0 0
      %1069 = vmatprep.subr.bf16.mxu0 0
      %1070 = vmatpush2.bf16.msra.mxu0 0
      %1071 = vmatprep.subr.bf16.mxu0 0
      %1072 = vmatpush2.bf16.msra.mxu0 0
      %1073 = vmatprep.subr.bf16.mxu0 0
      %1074 = vmatpush2.bf16.msra.mxu0 0
      %1075 = vmatprep.subr.bf16.mxu0 0
      %1076 = vmatpush2.bf16.msra.mxu0 0
      %1077 = vmatprep.mubr.bf16.mxu0 0
      %1078 = vmatmul.mubr.bf16.gmra.mxu0 %v1043
      %v1079 = vpop.f32.mrf.mxu0
      %v1080 = vadd.f32 0.0, %v1079
      %v1081 = vpop.f32.mrf.mxu0
      %v1082 = vpop.f32.mrf.mxu0
      %v1083 = vadd.f32 0.0, %v1082
      %v1084 = vpop.f32.mrf.mxu0
      %1085 = vdwg.mxu0
      %1086 = vrot.lane.b32.xlu0 %v734, 64
      %v1087 = vpop.permute.xlu0 %1086
      %v1090 = vsel %vm946, %v1036, 0
      %1092 = vmatprep.subr.bf16.mxu0 0
      %1093 = vmatpush1.bf16.msra.mxu0 0
      %1094 = vmatprep.subr.bf16.mxu0 0
      %1095 = vmatpush1.bf16.msra.mxu0 0
      %1096 = vmatprep.subr.bf16.mxu0 0
      %1097 = vmatpush1.bf16.msra.mxu0 0
      %1098 = vmatprep.subr.bf16.mxu0 0
      %1099 = vmatpush1.bf16.msra.mxu0 0
      %1100 = vmatprep.subr.bf16.mxu0 0
      %1101 = vmatpush1.bf16.msra.mxu0 0
      %1102 = vmatprep.subr.bf16.mxu0 0
      %1103 = vmatpush1.bf16.msra.mxu0 0
      %1104 = vmatprep.subr.bf16.mxu0 0
      %1105 = vmatpush1.bf16.msra.mxu0 0
      %1106 = vmatprep.subr.bf16.mxu0 0
      %1107 = vmatpush1.bf16.msra.mxu0 %v1087
      %1108 = vmatprep.subr.bf16.mxu0 0
      %1109 = vmatpush2.bf16.msra.mxu0 0
      %1110 = vmatprep.subr.bf16.mxu0 0
      %1111 = vmatpush2.bf16.msra.mxu0 0
      %1112 = vmatprep.subr.bf16.mxu0 0
      %1113 = vmatpush2.bf16.msra.mxu0 0
      %1114 = vmatprep.subr.bf16.mxu0 0
      %1115 = vmatpush2.bf16.msra.mxu0 0
      %1116 = vmatprep.subr.bf16.mxu0 0
      %1117 = vmatpush2.bf16.msra.mxu0 0
      %1118 = vmatprep.subr.bf16.mxu0 0
      %1119 = vmatpush2.bf16.msra.mxu0 0
      %1120 = vmatprep.subr.bf16.mxu0 0
      %1121 = vmatpush2.bf16.msra.mxu0 0
      %1122 = vmatprep.subr.bf16.mxu0 0
      %1123 = vmatpush2.bf16.msra.mxu0 0
      %1124 = vmatprep.mubr.bf16.mxu0 0
      %1125 = vmatmul.mubr.bf16.gmra.mxu0 %v1090
      %v1126 = vpop.f32.mrf.mxu0
      %v1127 = vadd.f32 0.0, %v1126
      %v1128 = vpop.f32.mrf.mxu0
      %v1129 = vpop.f32.mrf.mxu0
      %v1130 = vadd.f32 0.0, %v1129
      %v1131 = vpop.f32.mrf.mxu0
      %1132 = vdwg.mxu0
      %1133 = vrot.lane.b32.xlu0 %v735, 64
      %v1134 = vpop.permute.xlu0 %1133
      %v1137 = vsel %vm946, %v1037, 0
      %1139 = vmatprep.subr.bf16.mxu0 0
      %1140 = vmatpush1.bf16.msra.mxu0 0
      %1141 = vmatprep.subr.bf16.mxu0 0
      %1142 = vmatpush1.bf16.msra.mxu0 0
      %1143 = vmatprep.subr.bf16.mxu0 0
      %1144 = vmatpush1.bf16.msra.mxu0 0
      %1145 = vmatprep.subr.bf16.mxu0 0
      %1146 = vmatpush1.bf16.msra.mxu0 0
      %1147 = vmatprep.subr.bf16.mxu0 0
      %1148 = vmatpush1.bf16.msra.mxu0 0
      %1149 = vmatprep.subr.bf16.mxu0 0
      %1150 = vmatpush1.bf16.msra.mxu0 0
      %1151 = vmatprep.subr.bf16.mxu0 0
      %1152 = vmatpush1.bf16.msra.mxu0 0
      %1153 = vmatprep.subr.bf16.mxu0 0
      %1154 = vmatpush1.bf16.msra.mxu0 %v1134
      %1155 = vmatprep.subr.bf16.mxu0 0
      %1156 = vmatpush2.bf16.msra.mxu0 0
      %1157 = vmatprep.subr.bf16.mxu0 0
      %1158 = vmatpush2.bf16.msra.mxu0 0
      %1159 = vmatprep.subr.bf16.mxu0 0
      %1160 = vmatpush2.bf16.msra.mxu0 0
      %1161 = vmatprep.subr.bf16.mxu0 0
      %1162 = vmatpush2.bf16.msra.mxu0 0
      %1163 = vmatprep.subr.bf16.mxu0 0
      %1164 = vmatpush2.bf16.msra.mxu0 0
      %1165 = vmatprep.subr.bf16.mxu0 0
      %1166 = vmatpush2.bf16.msra.mxu0 0
      %1167 = vmatprep.subr.bf16.mxu0 0
      %1168 = vmatpush2.bf16.msra.mxu0 0
      %1169 = vmatprep.subr.bf16.mxu0 0
      %1170 = vmatpush2.bf16.msra.mxu0 0
      %1171 = vmatprep.mubr.bf16.mxu0 0
      %1172 = vmatmul.mubr.bf16.gmra.mxu0 %v1137
      %v1173 = vpop.f32.mrf.mxu0
      %v1174 = vadd.f32 0.0, %v1173
      %v1175 = vpop.f32.mrf.mxu0
      %v1176 = vpop.f32.mrf.mxu0
      %v1177 = vadd.f32 0.0, %v1176
      %v1178 = vpop.f32.mrf.mxu0
      %1179 = vdwg.mxu0
      %1180 = vrot.lane.b32.xlu0 %v736, 64
      %v1181 = vpop.permute.xlu0 %1180
      %v1184 = vsel %vm946, %v1038, 0
      %1186 = vmatprep.subr.bf16.mxu0 0
      %1187 = vmatpush1.bf16.msra.mxu0 0
      %1188 = vmatprep.subr.bf16.mxu0 0
      %1189 = vmatpush1.bf16.msra.mxu0 0
      %1190 = vmatprep.subr.bf16.mxu0 0
      %1191 = vmatpush1.bf16.msra.mxu0 0
      %1192 = vmatprep.subr.bf16.mxu0 0
      %1193 = vmatpush1.bf16.msra.mxu0 0
      %1194 = vmatprep.subr.bf16.mxu0 0
      %1195 = vmatpush1.bf16.msra.mxu0 0
      %1196 = vmatprep.subr.bf16.mxu0 0
      %1197 = vmatpush1.bf16.msra.mxu0 0
      %1198 = vmatprep.subr.bf16.mxu0 0
      %1199 = vmatpush1.bf16.msra.mxu0 0
      %1200 = vmatprep.subr.bf16.mxu0 0
      %1201 = vmatpush1.bf16.msra.mxu0 %v1181
      %1202 = vmatprep.subr.bf16.mxu0 0
      %1203 = vmatpush2.bf16.msra.mxu0 0
      %1204 = vmatprep.subr.bf16.mxu0 0
      %1205 = vmatpush2.bf16.msra.mxu0 0
      %1206 = vmatprep.subr.bf16.mxu0 0
      %1207 = vmatpush2.bf16.msra.mxu0 0
      %1208 = vmatprep.subr.bf16.mxu0 0
      %1209 = vmatpush2.bf16.msra.mxu0 0
      %1210 = vmatprep.subr.bf16.mxu0 0
      %1211 = vmatpush2.bf16.msra.mxu0 0
      %1212 = vmatprep.subr.bf16.mxu0 0
      %1213 = vmatpush2.bf16.msra.mxu0 0
      %1214 = vmatprep.subr.bf16.mxu0 0
      %1215 = vmatpush2.bf16.msra.mxu0 0
      %1216 = vmatprep.subr.bf16.mxu0 0
      %1217 = vmatpush2.bf16.msra.mxu0 0
      %1218 = vmatprep.mubr.bf16.mxu0 0
      %1219 = vmatmul.mubr.bf16.gmra.mxu0 %v1184
      %v1220 = vpop.f32.mrf.mxu0
      %v1221 = vadd.f32 0.0, %v1220
      %v1222 = vpop.f32.mrf.mxu0
      %v1223 = vpop.f32.mrf.mxu0
      %v1224 = vadd.f32 0.0, %v1223
      %v1225 = vpop.f32.mrf.mxu0
      %1226 = vdwg.mxu0
      %v1227 = vpack.c.bf16 %v1083, %v1080
      %v1228 = vpack.c.bf16 %v1130, %v1127
      %v1229 = vpack.c.bf16 %v1177, %v1174
      %v1230 = vpack.c.bf16 %v1224, %v1221
      %v1231 = vld [vmem:[%s5] sm:$0xf]
      %s1232 = scalar_lea.vmem %s7, 64
      %v1233 = vld [vmem:[%s1232] sm:$0xff]
      %v1234 = vld [vmem:[%s1232 + $0x8] sm:$0xff]
      %v1235 = vld [vmem:[%s1232 + $0x10] sm:$0xff]
      %v1236 = vld [vmem:[%s1232 + $0x18] sm:$0xff]
      %v1237 = vld [vmem:[%s1232 + $0x20] sm:$0xff]
      %v1238 = vld [vmem:[%s1232 + $0x28] sm:$0xff]
      %v1239 = vld [vmem:[%s1232 + $0x30] sm:$0xff]
      %v1240 = vld [vmem:[%s1232 + $0x38] sm:$0xff]
      %1241 = vrot.lane.b32.xlu0 %v733, 120
      %v1242 = vpop.permute.xlu0 %1241
      %1243 = vrot.lane.b32.xlu0 %v733, 88
      %v1244 = vpop.permute.xlu0 %1243
      %v1246 = vsel %vm748, %v1242, 0
      %v1249 = vsel %vm748, %v1244, 0
      %1251 = vmatprep.subr.bf16.mxu0 0
      %1252 = vmatpush1.bf16.xpose.msra.mxu0 0
      %1253 = vmatprep.subr.bf16.mxu0 0
      %1254 = vmatpush1.bf16.xpose.msra.mxu0 0
      %1255 = vmatprep.subr.bf16.mxu0 0
      %1256 = vmatpush1.bf16.xpose.msra.mxu0 0
      %1257 = vmatprep.subr.bf16.mxu0 0
      %1258 = vmatpush1.bf16.xpose.msra.mxu0 0
      %1259 = vmatprep.subr.bf16.mxu0 0
      %1260 = vmatpush1.bf16.xpose.msra.mxu0 0
      %1261 = vmatprep.subr.bf16.mxu0 0
      %1262 = vmatpush1.bf16.xpose.msra.mxu0 0
      %1263 = vmatprep.subr.bf16.mxu0 0
      %1264 = vmatpush1.bf16.xpose.msra.mxu0 0
      %1265 = vmatprep.subr.bf16.mxu0 0
      %1266 = vmatpush1.bf16.xpose.msra.mxu0 %v1249
      %1267 = vmatprep.subr.bf16.mxu0 0
      %1268 = vmatpush2.bf16.xpose.msra.mxu0 0
      %1269 = vmatprep.subr.bf16.mxu0 0
      %1270 = vmatpush2.bf16.xpose.msra.mxu0 0
      %1271 = vmatprep.subr.bf16.mxu0 0
      %1272 = vmatpush2.bf16.xpose.msra.mxu0 0
      %1273 = vmatprep.subr.bf16.mxu0 0
      %1274 = vmatpush2.bf16.xpose.msra.mxu0 0
      %1275 = vmatprep.subr.bf16.mxu0 0
      %1276 = vmatpush2.bf16.xpose.msra.mxu0 0
      %1277 = vmatprep.subr.bf16.mxu0 0
      %1278 = vmatpush2.bf16.xpose.msra.mxu0 0
      %1279 = vmatprep.subr.bf16.mxu0 0
      %1280 = vmatpush2.bf16.xpose.msra.mxu0 0
      %1281 = vmatprep.subr.bf16.mxu0 0
      %1282 = vmatpush2.bf16.xpose.msra.mxu0 0
      %1283 = vmatprep.mubr.bf16.mxu0 0
      %1284 = vmatmul.mubr.bf16.gmra.mxu0 %v1246
      %v1285 = vpop.f32.mrf.mxu0
      %v1286 = vadd.f32 %v1233, %v1285
      %v1287 = vpop.f32.mrf.mxu0
      %v1288 = vpop.f32.mrf.mxu0
      %v1289 = vadd.f32 %v1234, %v1288
      %v1290 = vpop.f32.mrf.mxu0
      %1291 = vdwg.mxu0
      %1292 = vrot.lane.b32.xlu0 %v734, 120
      %v1293 = vpop.permute.xlu0 %1292
      %1294 = vrot.lane.b32.xlu0 %v734, 88
      %v1295 = vpop.permute.xlu0 %1294
      %v1297 = vsel %vm748, %v1293, 0
      %v1300 = vsel %vm748, %v1295, 0
      %1302 = vmatprep.subr.bf16.mxu0 0
      %1303 = vmatpush1.bf16.xpose.msra.mxu0 0
      %1304 = vmatprep.subr.bf16.mxu0 0
      %1305 = vmatpush1.bf16.xpose.msra.mxu0 0
      %1306 = vmatprep.subr.bf16.mxu0 0
      %1307 = vmatpush1.bf16.xpose.msra.mxu0 0
      %1308 = vmatprep.subr.bf16.mxu0 0
      %1309 = vmatpush1.bf16.xpose.msra.mxu0 0
      %1310 = vmatprep.subr.bf16.mxu0 0
      %1311 = vmatpush1.bf16.xpose.msra.mxu0 0
      %1312 = vmatprep.subr.bf16.mxu0 0
      %1313 = vmatpush1.bf16.xpose.msra.mxu0 0
      %1314 = vmatprep.subr.bf16.mxu0 0
      %1315 = vmatpush1.bf16.xpose.msra.mxu0 0
      %1316 = vmatprep.subr.bf16.mxu0 0
      %1317 = vmatpush1.bf16.xpose.msra.mxu0 %v1300
      %1318 = vmatprep.subr.bf16.mxu0 0
      %1319 = vmatpush2.bf16.xpose.msra.mxu0 0
      %1320 = vmatprep.subr.bf16.mxu0 0
      %1321 = vmatpush2.bf16.xpose.msra.mxu0 0
      %1322 = vmatprep.subr.bf16.mxu0 0
      %1323 = vmatpush2.bf16.xpose.msra.mxu0 0
      %1324 = vmatprep.subr.bf16.mxu0 0
      %1325 = vmatpush2.bf16.xpose.msra.mxu0 0
      %1326 = vmatprep.subr.bf16.mxu0 0
      %1327 = vmatpush2.bf16.xpose.msra.mxu0 0
      %1328 = vmatprep.subr.bf16.mxu0 0
      %1329 = vmatpush2.bf16.xpose.msra.mxu0 0
      %1330 = vmatprep.subr.bf16.mxu0 0
      %1331 = vmatpush2.bf16.xpose.msra.mxu0 0
      %1332 = vmatprep.subr.bf16.mxu0 0
      %1333 = vmatpush2.bf16.xpose.msra.mxu0 0
      %1334 = vmatprep.mubr.bf16.mxu0 0
      %1335 = vmatmul.mubr.bf16.gmra.mxu0 %v1297
      %v1336 = vpop.f32.mrf.mxu0
      %v1337 = vadd.f32 %v1235, %v1336
      %v1338 = vpop.f32.mrf.mxu0
      %v1339 = vpop.f32.mrf.mxu0
      %v1340 = vadd.f32 %v1236, %v1339
      %v1341 = vpop.f32.mrf.mxu0
      %1342 = vdwg.mxu0
      %1343 = vrot.lane.b32.xlu0 %v735, 120
      %v1344 = vpop.permute.xlu0 %1343
      %1345 = vrot.lane.b32.xlu0 %v735, 88
      %v1346 = vpop.permute.xlu0 %1345
      %v1348 = vsel %vm748, %v1344, 0
      %v1351 = vsel %vm748, %v1346, 0
      %1353 = vmatprep.subr.bf16.mxu0 0
      %1354 = vmatpush1.bf16.xpose.msra.mxu0 0
      %1355 = vmatprep.subr.bf16.mxu0 0
      %1356 = vmatpush1.bf16.xpose.msra.mxu0 0
      %1357 = vmatprep.subr.bf16.mxu0 0
      %1358 = vmatpush1.bf16.xpose.msra.mxu0 0
      %1359 = vmatprep.subr.bf16.mxu0 0
      %1360 = vmatpush1.bf16.xpose.msra.mxu0 0
      %1361 = vmatprep.subr.bf16.mxu0 0
      %1362 = vmatpush1.bf16.xpose.msra.mxu0 0
      %1363 = vmatprep.subr.bf16.mxu0 0
      %1364 = vmatpush1.bf16.xpose.msra.mxu0 0
      %1365 = vmatprep.subr.bf16.mxu0 0
      %1366 = vmatpush1.bf16.xpose.msra.mxu0 0
      %1367 = vmatprep.subr.bf16.mxu0 0
      %1368 = vmatpush1.bf16.xpose.msra.mxu0 %v1351
      %1369 = vmatprep.subr.bf16.mxu0 0
      %1370 = vmatpush2.bf16.xpose.msra.mxu0 0
      %1371 = vmatprep.subr.bf16.mxu0 0
      %1372 = vmatpush2.bf16.xpose.msra.mxu0 0
      %1373 = vmatprep.subr.bf16.mxu0 0
      %1374 = vmatpush2.bf16.xpose.msra.mxu0 0
      %1375 = vmatprep.subr.bf16.mxu0 0
      %1376 = vmatpush2.bf16.xpose.msra.mxu0 0
      %1377 = vmatprep.subr.bf16.mxu0 0
      %1378 = vmatpush2.bf16.xpose.msra.mxu0 0
      %1379 = vmatprep.subr.bf16.mxu0 0
      %1380 = vmatpush2.bf16.xpose.msra.mxu0 0
      %1381 = vmatprep.subr.bf16.mxu0 0
      %1382 = vmatpush2.bf16.xpose.msra.mxu0 0
      %1383 = vmatprep.subr.bf16.mxu0 0
      %1384 = vmatpush2.bf16.xpose.msra.mxu0 0
      %1385 = vmatprep.mubr.bf16.mxu0 0
      %1386 = vmatmul.mubr.bf16.gmra.mxu0 %v1348
      %v1387 = vpop.f32.mrf.mxu0
      %v1388 = vadd.f32 %v1237, %v1387
      %v1389 = vpop.f32.mrf.mxu0
      %v1390 = vpop.f32.mrf.mxu0
      %v1391 = vadd.f32 %v1238, %v1390
      %v1392 = vpop.f32.mrf.mxu0
      %1393 = vdwg.mxu0
      %1394 = vrot.lane.b32.xlu0 %v736, 120
      %v1395 = vpop.permute.xlu0 %1394
      %1396 = vrot.lane.b32.xlu0 %v736, 88
      %v1397 = vpop.permute.xlu0 %1396
      %v1399 = vsel %vm748, %v1395, 0
      %v1402 = vsel %vm748, %v1397, 0
      %1404 = vmatprep.subr.bf16.mxu0 0
      %1405 = vmatpush1.bf16.xpose.msra.mxu0 0
      %1406 = vmatprep.subr.bf16.mxu0 0
      %1407 = vmatpush1.bf16.xpose.msra.mxu0 0
      %1408 = vmatprep.subr.bf16.mxu0 0
      %1409 = vmatpush1.bf16.xpose.msra.mxu0 0
      %1410 = vmatprep.subr.bf16.mxu0 0
      %1411 = vmatpush1.bf16.xpose.msra.mxu0 0
      %1412 = vmatprep.subr.bf16.mxu0 0
      %1413 = vmatpush1.bf16.xpose.msra.mxu0 0
      %1414 = vmatprep.subr.bf16.mxu0 0
      %1415 = vmatpush1.bf16.xpose.msra.mxu0 0
      %1416 = vmatprep.subr.bf16.mxu0 0
      %1417 = vmatpush1.bf16.xpose.msra.mxu0 0
      %1418 = vmatprep.subr.bf16.mxu0 0
      %1419 = vmatpush1.bf16.xpose.msra.mxu0 %v1402
      %1420 = vmatprep.subr.bf16.mxu0 0
      %1421 = vmatpush2.bf16.xpose.msra.mxu0 0
      %1422 = vmatprep.subr.bf16.mxu0 0
      %1423 = vmatpush2.bf16.xpose.msra.mxu0 0
      %1424 = vmatprep.subr.bf16.mxu0 0
      %1425 = vmatpush2.bf16.xpose.msra.mxu0 0
      %1426 = vmatprep.subr.bf16.mxu0 0
      %1427 = vmatpush2.bf16.xpose.msra.mxu0 0
      %1428 = vmatprep.subr.bf16.mxu0 0
      %1429 = vmatpush2.bf16.xpose.msra.mxu0 0
      %1430 = vmatprep.subr.bf16.mxu0 0
      %1431 = vmatpush2.bf16.xpose.msra.mxu0 0
      %1432 = vmatprep.subr.bf16.mxu0 0
      %1433 = vmatpush2.bf16.xpose.msra.mxu0 0
      %1434 = vmatprep.subr.bf16.mxu0 0
      %1435 = vmatpush2.bf16.xpose.msra.mxu0 0
      %1436 = vmatprep.mubr.bf16.mxu0 0
      %1437 = vmatmul.mubr.bf16.gmra.mxu0 %v1399
      %v1438 = vpop.f32.mrf.mxu0
      %v1439 = vadd.f32 %v1239, %v1438
      %v1440 = vpop.f32.mrf.mxu0
      %v1441 = vpop.f32.mrf.mxu0
      %v1442 = vadd.f32 %v1240, %v1441
      %v1443 = vpop.f32.mrf.mxu0
      %1444 = vdwg.mxu0
      %v1445 = vsel %vm946, %v1286, -inf
      %1446 = vmax.xlane.f32.xlu0 %v1445
      %v1447 = vpop.xlane.xlu0 %1446
      %v1448 = vsel %vm946, %v1289, -inf
      %1449 = vmax.xlane.f32.xlu0 %v1448
      %v1450 = vpop.xlane.xlu0 %1449
      %v1451 = vsel %vm946, %v1337, -inf
      %1452 = vmax.xlane.f32.xlu0 %v1451
      %v1453 = vpop.xlane.xlu0 %1452
      %v1454 = vsel %vm946, %v1340, -inf
      %1455 = vmax.xlane.f32.xlu0 %v1454
      %v1456 = vpop.xlane.xlu0 %1455
      %v1457 = vsel %vm946, %v1388, -inf
      %1458 = vmax.xlane.f32.xlu0 %v1457
      %v1459 = vpop.xlane.xlu0 %1458
      %v1460 = vsel %vm946, %v1391, -inf
      %1461 = vmax.xlane.f32.xlu0 %v1460
      %v1462 = vpop.xlane.xlu0 %1461
      %v1463 = vsel %vm946, %v1439, -inf
      %1464 = vmax.xlane.f32.xlu0 %v1463
      %v1465 = vpop.xlane.xlu0 %1464
      %v1466 = vsel %vm946, %v1442, -inf
      %1467 = vmax.xlane.f32.xlu0 %v1466
      %v1468 = vpop.xlane.xlu0 %1467
      %v1469 = vsub.f32 %v1286, %v1447
      %v1470 = vsub.f32 %v1289, %v1450
      %v1471 = vsub.f32 %v1337, %v1453
      %v1472 = vsub.f32 %v1340, %v1456
      %v1473 = vsub.f32 %v1388, %v1459
      %v1474 = vsub.f32 %v1391, %v1462
      %v1475 = vsub.f32 %v1439, %v1465
      %v1476 = vsub.f32 %v1442, %v1468
      %v1477 = vmul.f32 %v1469, 1.442695
      %v1478 = vpow.pop %v1477
      %v1479 = vmul.f32 %v1470, 1.442695
      %v1480 = vpow.pop %v1479
      %v1481 = vmul.f32 %v1471, 1.442695
      %v1482 = vpow.pop %v1481
      %v1483 = vmul.f32 %v1472, 1.442695
      %v1484 = vpow.pop %v1483
      %v1485 = vmul.f32 %v1473, 1.442695
      %v1486 = vpow.pop %v1485
      %v1487 = vmul.f32 %v1474, 1.442695
      %v1488 = vpow.pop %v1487
      %v1489 = vmul.f32 %v1475, 1.442695
      %v1490 = vpow.pop %v1489
      %v1491 = vmul.f32 %v1476, 1.442695
      %v1492 = vpow.pop %v1491
      %v1493 = vsel %vm946, %v1478, 0.0
      %1494 = vadd.xlane.f32.xlu0 %v1493
      %v1495 = vpop.xlane.xlu0 %1494
      %v1496 = vsel %vm946, %v1480, 0.0
      %1497 = vadd.xlane.f32.xlu0 %v1496
      %v1498 = vpop.xlane.xlu0 %1497
      %v1499 = vsel %vm946, %v1482, 0.0
      %1500 = vadd.xlane.f32.xlu0 %v1499
      %v1501 = vpop.xlane.xlu0 %1500
      %v1502 = vsel %vm946, %v1484, 0.0
      %1503 = vadd.xlane.f32.xlu0 %v1502
      %v1504 = vpop.xlane.xlu0 %1503
      %v1505 = vsel %vm946, %v1486, 0.0
      %1506 = vadd.xlane.f32.xlu0 %v1505
      %v1507 = vpop.xlane.xlu0 %1506
      %v1508 = vsel %vm946, %v1488, 0.0
      %1509 = vadd.xlane.f32.xlu0 %v1508
      %v1510 = vpop.xlane.xlu0 %1509
      %v1511 = vsel %vm946, %v1490, 0.0
      %1512 = vadd.xlane.f32.xlu0 %v1511
      %v1513 = vpop.xlane.xlu0 %1512
      %v1514 = vsel %vm946, %v1492, 0.0
      %1515 = vadd.xlane.f32.xlu0 %v1514
      %v1516 = vpop.xlane.xlu0 %1515
      %v1517 = vrcp.pop %v1495
      %v1518 = vmul.f32 %v1478, %v1517
      %v1519 = vrcp.pop %v1498
      %v1520 = vmul.f32 %v1480, %v1519
      %v1521 = vrcp.pop %v1501
      %v1522 = vmul.f32 %v1482, %v1521
      %v1523 = vrcp.pop %v1504
      %v1524 = vmul.f32 %v1484, %v1523
      %v1525 = vrcp.pop %v1507
      %v1526 = vmul.f32 %v1486, %v1525
      %v1527 = vrcp.pop %v1510
      %v1528 = vmul.f32 %v1488, %v1527
      %v1529 = vrcp.pop %v1513
      %v1530 = vmul.f32 %v1490, %v1529
      %v1531 = vrcp.pop %v1516
      %v1532 = vmul.f32 %v1492, %v1531
      %v1533 = vpack.c.bf16 %v1520, %v1518
      %v1534 = vpack.c.bf16 %v1524, %v1522
      %v1535 = vpack.c.bf16 %v1528, %v1526
      %v1536 = vpack.c.bf16 %v1532, %v1530
      %1537 = vrot.lane.b32.xlu0 %v733, 56
      %v1538 = vpop.permute.xlu0 %1537
      %v1541 = vsel %vm946, %v1533, 0
      %1543 = vmatprep.subr.bf16.mxu0 0
      %1544 = vmatpush1.bf16.msra.mxu0 0
      %1545 = vmatprep.subr.bf16.mxu0 0
      %1546 = vmatpush1.bf16.msra.mxu0 0
      %1547 = vmatprep.subr.bf16.mxu0 0
      %1548 = vmatpush1.bf16.msra.mxu0 0
      %1549 = vmatprep.subr.bf16.mxu0 0
      %1550 = vmatpush1.bf16.msra.mxu0 0
      %1551 = vmatprep.subr.bf16.mxu0 0
      %1552 = vmatpush1.bf16.msra.mxu0 0
      %1553 = vmatprep.subr.bf16.mxu0 0
      %1554 = vmatpush1.bf16.msra.mxu0 0
      %1555 = vmatprep.subr.bf16.mxu0 0
      %1556 = vmatpush1.bf16.msra.mxu0 0
      %1557 = vmatprep.subr.bf16.mxu0 0
      %1558 = vmatpush1.bf16.msra.mxu0 %v1538
      %1559 = vmatprep.subr.bf16.mxu0 0
      %1560 = vmatpush2.bf16.msra.mxu0 0
      %1561 = vmatprep.subr.bf16.mxu0 0
      %1562 = vmatpush2.bf16.msra.mxu0 0
      %1563 = vmatprep.subr.bf16.mxu0 0
      %1564 = vmatpush2.bf16.msra.mxu0 0
      %1565 = vmatprep.subr.bf16.mxu0 0
      %1566 = vmatpush2.bf16.msra.mxu0 0
      %1567 = vmatprep.subr.bf16.mxu0 0
      %1568 = vmatpush2.bf16.msra.mxu0 0
      %1569 = vmatprep.subr.bf16.mxu0 0
      %1570 = vmatpush2.bf16.msra.mxu0 0
      %1571 = vmatprep.subr.bf16.mxu0 0
      %1572 = vmatpush2.bf16.msra.mxu0 0
      %1573 = vmatprep.subr.bf16.mxu0 0
      %1574 = vmatpush2.bf16.msra.mxu0 0
      %1575 = vmatprep.mubr.bf16.mxu0 0
      %1576 = vmatmul.mubr.bf16.gmra.mxu0 %v1541
      %v1577 = vpop.f32.mrf.mxu0
      %v1578 = vadd.f32 0.0, %v1577
      %v1579 = vpop.f32.mrf.mxu0
      %v1580 = vpop.f32.mrf.mxu0
      %v1581 = vadd.f32 0.0, %v1580
      %v1582 = vpop.f32.mrf.mxu0
      %1583 = vdwg.mxu0
      %1584 = vrot.lane.b32.xlu0 %v734, 56
      %v1585 = vpop.permute.xlu0 %1584
      %v1588 = vsel %vm946, %v1534, 0
      %1590 = vmatprep.subr.bf16.mxu0 0
      %1591 = vmatpush1.bf16.msra.mxu0 0
      %1592 = vmatprep.subr.bf16.mxu0 0
      %1593 = vmatpush1.bf16.msra.mxu0 0
      %1594 = vmatprep.subr.bf16.mxu0 0
      %1595 = vmatpush1.bf16.msra.mxu0 0
      %1596 = vmatprep.subr.bf16.mxu0 0
      %1597 = vmatpush1.bf16.msra.mxu0 0
      %1598 = vmatprep.subr.bf16.mxu0 0
      %1599 = vmatpush1.bf16.msra.mxu0 0
      %1600 = vmatprep.subr.bf16.mxu0 0
      %1601 = vmatpush1.bf16.msra.mxu0 0
      %1602 = vmatprep.subr.bf16.mxu0 0
      %1603 = vmatpush1.bf16.msra.mxu0 0
      %1604 = vmatprep.subr.bf16.mxu0 0
      %1605 = vmatpush1.bf16.msra.mxu0 %v1585
      %1606 = vmatprep.subr.bf16.mxu0 0
      %1607 = vmatpush2.bf16.msra.mxu0 0
      %1608 = vmatprep.subr.bf16.mxu0 0
      %1609 = vmatpush2.bf16.msra.mxu0 0
      %1610 = vmatprep.subr.bf16.mxu0 0
      %1611 = vmatpush2.bf16.msra.mxu0 0
      %1612 = vmatprep.subr.bf16.mxu0 0
      %1613 = vmatpush2.bf16.msra.mxu0 0
      %1614 = vmatprep.subr.bf16.mxu0 0
      %1615 = vmatpush2.bf16.msra.mxu0 0
      %1616 = vmatprep.subr.bf16.mxu0 0
      %1617 = vmatpush2.bf16.msra.mxu0 0
      %1618 = vmatprep.subr.bf16.mxu0 0
      %1619 = vmatpush2.bf16.msra.mxu0 0
      %1620 = vmatprep.subr.bf16.mxu0 0
      %1621 = vmatpush2.bf16.msra.mxu0 0
      %1622 = vmatprep.mubr.bf16.mxu0 0
      %1623 = vmatmul.mubr.bf16.gmra.mxu0 %v1588
      %v1624 = vpop.f32.mrf.mxu0
      %v1625 = vadd.f32 0.0, %v1624
      %v1626 = vpop.f32.mrf.mxu0
      %v1627 = vpop.f32.mrf.mxu0
      %v1628 = vadd.f32 0.0, %v1627
      %v1629 = vpop.f32.mrf.mxu0
      %1630 = vdwg.mxu0
      %1631 = vrot.lane.b32.xlu0 %v735, 56
      %v1632 = vpop.permute.xlu0 %1631
      %v1635 = vsel %vm946, %v1535, 0
      %1637 = vmatprep.subr.bf16.mxu0 0
      %1638 = vmatpush1.bf16.msra.mxu0 0
      %1639 = vmatprep.subr.bf16.mxu0 0
      %1640 = vmatpush1.bf16.msra.mxu0 0
      %1641 = vmatprep.subr.bf16.mxu0 0
      %1642 = vmatpush1.bf16.msra.mxu0 0
      %1643 = vmatprep.subr.bf16.mxu0 0
      %1644 = vmatpush1.bf16.msra.mxu0 0
      %1645 = vmatprep.subr.bf16.mxu0 0
      %1646 = vmatpush1.bf16.msra.mxu0 0
      %1647 = vmatprep.subr.bf16.mxu0 0
      %1648 = vmatpush1.bf16.msra.mxu0 0
      %1649 = vmatprep.subr.bf16.mxu0 0
      %1650 = vmatpush1.bf16.msra.mxu0 0
      %1651 = vmatprep.subr.bf16.mxu0 0
      %1652 = vmatpush1.bf16.msra.mxu0 %v1632
      %1653 = vmatprep.subr.bf16.mxu0 0
      %1654 = vmatpush2.bf16.msra.mxu0 0
      %1655 = vmatprep.subr.bf16.mxu0 0
      %1656 = vmatpush2.bf16.msra.mxu0 0
      %1657 = vmatprep.subr.bf16.mxu0 0
      %1658 = vmatpush2.bf16.msra.mxu0 0
      %1659 = vmatprep.subr.bf16.mxu0 0
      %1660 = vmatpush2.bf16.msra.mxu0 0
      %1661 = vmatprep.subr.bf16.mxu0 0
      %1662 = vmatpush2.bf16.msra.mxu0 0
      %1663 = vmatprep.subr.bf16.mxu0 0
      %1664 = vmatpush2.bf16.msra.mxu0 0
      %1665 = vmatprep.subr.bf16.mxu0 0
      %1666 = vmatpush2.bf16.msra.mxu0 0
      %1667 = vmatprep.subr.bf16.mxu0 0
      %1668 = vmatpush2.bf16.msra.mxu0 0
      %1669 = vmatprep.mubr.bf16.mxu0 0
      %1670 = vmatmul.mubr.bf16.gmra.mxu0 %v1635
      %v1671 = vpop.f32.mrf.mxu0
      %v1672 = vadd.f32 0.0, %v1671
      %v1673 = vpop.f32.mrf.mxu0
      %v1674 = vpop.f32.mrf.mxu0
      %v1675 = vadd.f32 0.0, %v1674
      %v1676 = vpop.f32.mrf.mxu0
      %1677 = vdwg.mxu0
      %1678 = vrot.lane.b32.xlu0 %v736, 56
      %v1679 = vpop.permute.xlu0 %1678
      %v1682 = vsel %vm946, %v1536, 0
      %1684 = vmatprep.subr.bf16.mxu0 0
      %1685 = vmatpush1.bf16.msra.mxu0 0
      %1686 = vmatprep.subr.bf16.mxu0 0
      %1687 = vmatpush1.bf16.msra.mxu0 0
      %1688 = vmatprep.subr.bf16.mxu0 0
      %1689 = vmatpush1.bf16.msra.mxu0 0
      %1690 = vmatprep.subr.bf16.mxu0 0
      %1691 = vmatpush1.bf16.msra.mxu0 0
      %1692 = vmatprep.subr.bf16.mxu0 0
      %1693 = vmatpush1.bf16.msra.mxu0 0
      %1694 = vmatprep.subr.bf16.mxu0 0
      %1695 = vmatpush1.bf16.msra.mxu0 0
      %1696 = vmatprep.subr.bf16.mxu0 0
      %1697 = vmatpush1.bf16.msra.mxu0 0
      %1698 = vmatprep.subr.bf16.mxu0 0
      %1699 = vmatpush1.bf16.msra.mxu0 %v1679
      %1700 = vmatprep.subr.bf16.mxu0 0
      %1701 = vmatpush2.bf16.msra.mxu0 0
      %1702 = vmatprep.subr.bf16.mxu0 0
      %1703 = vmatpush2.bf16.msra.mxu0 0
      %1704 = vmatprep.subr.bf16.mxu0 0
      %1705 = vmatpush2.bf16.msra.mxu0 0
      %1706 = vmatprep.subr.bf16.mxu0 0
      %1707 = vmatpush2.bf16.msra.mxu0 0
      %1708 = vmatprep.subr.bf16.mxu0 0
      %1709 = vmatpush2.bf16.msra.mxu0 0
      %1710 = vmatprep.subr.bf16.mxu0 0
      %1711 = vmatpush2.bf16.msra.mxu0 0
      %1712 = vmatprep.subr.bf16.mxu0 0
      %1713 = vmatpush2.bf16.msra.mxu0 0
      %1714 = vmatprep.subr.bf16.mxu0 0
      %1715 = vmatpush2.bf16.msra.mxu0 0
      %1716 = vmatprep.mubr.bf16.mxu0 0
      %1717 = vmatmul.mubr.bf16.gmra.mxu0 %v1682
      %v1718 = vpop.f32.mrf.mxu0
      %v1719 = vadd.f32 0.0, %v1718
      %v1720 = vpop.f32.mrf.mxu0
      %v1721 = vpop.f32.mrf.mxu0
      %v1722 = vadd.f32 0.0, %v1721
      %v1723 = vpop.f32.mrf.mxu0
      %1724 = vdwg.mxu0
      %v1725 = vpack.c.bf16 %v1581, %v1578
      %v1726 = vpack.c.bf16 %v1628, %v1625
      %v1727 = vpack.c.bf16 %v1675, %v1672
      %v1728 = vpack.c.bf16 %v1722, %v1719
      %s1729 = scalar_lea.vmem %s5, 4
      %v1730 = vld [vmem:[%s1729] sm:$0xf]
      %v1732 = vsel %vm748, %v1725, 0
      %v1735 = vsel %vm748, %v1726, 0
      %v1738 = vsel %vm748, %v1727, 0
      %v1741 = vsel %vm748, %v1728, 0
      %vm1743 = vcmask 1043456
      %v1745 = vsel %vm1743, %v1730, 0
      %1747 = vmatprep.subr.bf16.mxu0 0
      %1748 = vmatpush1.bf16.msra.mxu0 0
      %1749 = vmatprep.subr.bf16.mxu0 0
      %1750 = vmatpush1.bf16.msra.mxu0 0
      %1751 = vmatprep.subr.bf16.mxu0 0
      %1752 = vmatpush1.bf16.msra.mxu0 0
      %1753 = vmatprep.subr.bf16.mxu0 0
      %1754 = vmatpush1.bf16.msra.mxu0 0
      %1755 = vmatprep.subr.bf16.mxu0 0
      %1756 = vmatpush1.bf16.msra.mxu0 0
      %1757 = vmatprep.subr.bf16.mxu0 0
      %1758 = vmatpush1.bf16.msra.mxu0 0
      %1759 = vmatprep.subr.bf16.mxu0 0
      %1760 = vmatpush1.bf16.msra.mxu0 0
      %1761 = vmatprep.subr.bf16.mxu0 0
      %1762 = vmatpush1.bf16.msra.mxu0 %v1745
      %1763 = vmatprep.subr.bf16.mxu0 0
      %1764 = vmatpush2.bf16.msra.mxu0 0
      %1765 = vmatprep.subr.bf16.mxu0 0
      %1766 = vmatpush2.bf16.msra.mxu0 0
      %1767 = vmatprep.subr.bf16.mxu0 0
      %1768 = vmatpush2.bf16.msra.mxu0 0
      %1769 = vmatprep.subr.bf16.mxu0 0
      %1770 = vmatpush2.bf16.msra.mxu0 0
      %1771 = vmatprep.subr.bf16.mxu0 0
      %1772 = vmatpush2.bf16.msra.mxu0 0
      %1773 = vmatprep.subr.bf16.mxu0 0
      %1774 = vmatpush2.bf16.msra.mxu0 0
      %1775 = vmatprep.subr.bf16.mxu0 0
      %1776 = vmatpush2.bf16.msra.mxu0 0
      %1777 = vmatprep.subr.bf16.mxu0 0
      %1778 = vmatpush2.bf16.msra.mxu0 0
      %1779 = vmatprep.mubr.bf16.mxu0 0
      %1780 = vmatmul.mubr.bf16.gmra.mxu0 %v1732
      %v1781 = vpop.f32.mrf.mxu0
      %v1782 = vadd.f32 0.0, %v1781
      %v1783 = vpop.f32.mrf.mxu0
      %v1784 = vpop.f32.mrf.mxu0
      %v1785 = vadd.f32 0.0, %v1784
      %v1786 = vpop.f32.mrf.mxu0
      %1787 = vmatprep.mubr.bf16.mxu0 0
      %1788 = vmatmul.mubr.bf16.gmra.mxu0 %v1735
      %v1789 = vpop.f32.mrf.mxu0
      %v1790 = vadd.f32 0.0, %v1789
      %v1791 = vpop.f32.mrf.mxu0
      %v1792 = vpop.f32.mrf.mxu0
      %v1793 = vadd.f32 0.0, %v1792
      %v1794 = vpop.f32.mrf.mxu0
      %1795 = vmatprep.mubr.bf16.mxu0 0
      %1796 = vmatmul.mubr.bf16.gmra.mxu0 %v1738
      %v1797 = vpop.f32.mrf.mxu0
      %v1798 = vadd.f32 0.0, %v1797
      %v1799 = vpop.f32.mrf.mxu0
      %v1800 = vpop.f32.mrf.mxu0
      %v1801 = vadd.f32 0.0, %v1800
      %v1802 = vpop.f32.mrf.mxu0
      %1803 = vmatprep.mubr.bf16.mxu0 0
      %1804 = vmatmul.mubr.bf16.gmra.mxu0 %v1741
      %v1805 = vpop.f32.mrf.mxu0
      %v1806 = vadd.f32 0.0, %v1805
      %v1807 = vpop.f32.mrf.mxu0
      %v1808 = vpop.f32.mrf.mxu0
      %v1809 = vadd.f32 0.0, %v1808
      %v1810 = vpop.f32.mrf.mxu0
      %1811 = vdwg.mxu0
      %v1813 = vsel %vm748, %v1227, 0
      %v1816 = vsel %vm748, %v1228, 0
      %v1819 = vsel %vm748, %v1229, 0
      %v1822 = vsel %vm748, %v1230, 0
      %v1825 = vsel %vm1743, %v1231, 0
      %1827 = vmatprep.subr.bf16.mxu0 0
      %1828 = vmatpush1.bf16.msra.mxu0 0
      %1829 = vmatprep.subr.bf16.mxu0 0
      %1830 = vmatpush1.bf16.msra.mxu0 0
      %1831 = vmatprep.subr.bf16.mxu0 0
      %1832 = vmatpush1.bf16.msra.mxu0 0
      %1833 = vmatprep.subr.bf16.mxu0 0
      %1834 = vmatpush1.bf16.msra.mxu0 0
      %1835 = vmatprep.subr.bf16.mxu0 0
      %1836 = vmatpush1.bf16.msra.mxu0 0
      %1837 = vmatprep.subr.bf16.mxu0 0
      %1838 = vmatpush1.bf16.msra.mxu0 0
      %1839 = vmatprep.subr.bf16.mxu0 0
      %1840 = vmatpush1.bf16.msra.mxu0 0
      %1841 = vmatprep.subr.bf16.mxu0 0
      %1842 = vmatpush1.bf16.msra.mxu0 %v1825
      %1843 = vmatprep.subr.bf16.mxu0 0
      %1844 = vmatpush2.bf16.msra.mxu0 0
      %1845 = vmatprep.subr.bf16.mxu0 0
      %1846 = vmatpush2.bf16.msra.mxu0 0
      %1847 = vmatprep.subr.bf16.mxu0 0
      %1848 = vmatpush2.bf16.msra.mxu0 0
      %1849 = vmatprep.subr.bf16.mxu0 0
      %1850 = vmatpush2.bf16.msra.mxu0 0
      %1851 = vmatprep.subr.bf16.mxu0 0
      %1852 = vmatpush2.bf16.msra.mxu0 0
      %1853 = vmatprep.subr.bf16.mxu0 0
      %1854 = vmatpush2.bf16.msra.mxu0 0
      %1855 = vmatprep.subr.bf16.mxu0 0
      %1856 = vmatpush2.bf16.msra.mxu0 0
      %1857 = vmatprep.subr.bf16.mxu0 0
      %1858 = vmatpush2.bf16.msra.mxu0 0
      %1859 = vmatprep.mubr.bf16.mxu0 0
      %1860 = vmatmul.mubr.bf16.gmra.mxu0 %v1813
      %v1861 = vpop.f32.mrf.mxu0
      %v1862 = vadd.f32 %v1782, %v1861
      %v1863 = vpop.f32.mrf.mxu0
      %v1864 = vpop.f32.mrf.mxu0
      %v1865 = vadd.f32 %v1785, %v1864
      %v1866 = vpop.f32.mrf.mxu0
      %1867 = vmatprep.mubr.bf16.mxu0 0
      %1868 = vmatmul.mubr.bf16.gmra.mxu0 %v1816
      %v1869 = vpop.f32.mrf.mxu0
      %v1870 = vadd.f32 %v1790, %v1869
      %v1871 = vpop.f32.mrf.mxu0
      %v1872 = vpop.f32.mrf.mxu0
      %v1873 = vadd.f32 %v1793, %v1872
      %v1874 = vpop.f32.mrf.mxu0
      %1875 = vmatprep.mubr.bf16.mxu0 0
      %1876 = vmatmul.mubr.bf16.gmra.mxu0 %v1819
      %v1877 = vpop.f32.mrf.mxu0
      %v1878 = vadd.f32 %v1798, %v1877
      %v1879 = vpop.f32.mrf.mxu0
      %v1880 = vpop.f32.mrf.mxu0
      %v1881 = vadd.f32 %v1801, %v1880
      %v1882 = vpop.f32.mrf.mxu0
      %1883 = vmatprep.mubr.bf16.mxu0 0
      %1884 = vmatmul.mubr.bf16.gmra.mxu0 %v1822
      %v1885 = vpop.f32.mrf.mxu0
      %v1886 = vadd.f32 %v1806, %v1885
      %v1887 = vpop.f32.mrf.mxu0
      %v1888 = vpop.f32.mrf.mxu0
      %v1889 = vadd.f32 %v1809, %v1888
      %v1890 = vpop.f32.mrf.mxu0
      %1891 = vdwg.mxu0
      %s1892 = scalar_lea.vmem %s7, 128
      %v1893 = vld [vmem:[%s1892] sm:$0xff]
      %v1894 = vld [vmem:[%s1892 + $0x8] sm:$0xff]
      %v1895 = vld [vmem:[%s1892 + $0x10] sm:$0xff]
      %v1896 = vld [vmem:[%s1892 + $0x18] sm:$0xff]
      %v1897 = vld [vmem:[%s1892 + $0x20] sm:$0xff]
      %v1898 = vld [vmem:[%s1892 + $0x28] sm:$0xff]
      %v1899 = vld [vmem:[%s1892 + $0x30] sm:$0xff]
      %v1900 = vld [vmem:[%s1892 + $0x38] sm:$0xff]
      %1901 = vrot.lane.b32.xlu0 %v733, 112
      %v1902 = vpop.permute.xlu0 %1901
      %1903 = vrot.lane.b32.xlu0 %v733, 80
      %v1904 = vpop.permute.xlu0 %1903
      %v1906 = vsel %vm748, %v1902, 0
      %v1909 = vsel %vm748, %v1904, 0
      %1911 = vmatprep.subr.bf16.mxu0 0
      %1912 = vmatpush1.bf16.xpose.msra.mxu0 0
      %1913 = vmatprep.subr.bf16.mxu0 0
      %1914 = vmatpush1.bf16.xpose.msra.mxu0 0
      %1915 = vmatprep.subr.bf16.mxu0 0
      %1916 = vmatpush1.bf16.xpose.msra.mxu0 0
      %1917 = vmatprep.subr.bf16.mxu0 0
      %1918 = vmatpush1.bf16.xpose.msra.mxu0 0
      %1919 = vmatprep.subr.bf16.mxu0 0
      %1920 = vmatpush1.bf16.xpose.msra.mxu0 0
      %1921 = vmatprep.subr.bf16.mxu0 0
      %1922 = vmatpush1.bf16.xpose.msra.mxu0 0
      %1923 = vmatprep.subr.bf16.mxu0 0
      %1924 = vmatpush1.bf16.xpose.msra.mxu0 0
      %1925 = vmatprep.subr.bf16.mxu0 0
      %1926 = vmatpush1.bf16.xpose.msra.mxu0 %v1909
      %1927 = vmatprep.subr.bf16.mxu0 0
      %1928 = vmatpush2.bf16.xpose.msra.mxu0 0
      %1929 = vmatprep.subr.bf16.mxu0 0
      %1930 = vmatpush2.bf16.xpose.msra.mxu0 0
      %1931 = vmatprep.subr.bf16.mxu0 0
      %1932 = vmatpush2.bf16.xpose.msra.mxu0 0
      %1933 = vmatprep.subr.bf16.mxu0 0
      %1934 = vmatpush2.bf16.xpose.msra.mxu0 0
      %1935 = vmatprep.subr.bf16.mxu0 0
      %1936 = vmatpush2.bf16.xpose.msra.mxu0 0
      %1937 = vmatprep.subr.bf16.mxu0 0
      %1938 = vmatpush2.bf16.xpose.msra.mxu0 0
      %1939 = vmatprep.subr.bf16.mxu0 0
      %1940 = vmatpush2.bf16.xpose.msra.mxu0 0
      %1941 = vmatprep.subr.bf16.mxu0 0
      %1942 = vmatpush2.bf16.xpose.msra.mxu0 0
      %1943 = vmatprep.mubr.bf16.mxu0 0
      %1944 = vmatmul.mubr.bf16.gmra.mxu0 %v1906
      %v1945 = vpop.f32.mrf.mxu0
      %v1946 = vadd.f32 %v1893, %v1945
      %v1947 = vpop.f32.mrf.mxu0
      %v1948 = vpop.f32.mrf.mxu0
      %v1949 = vadd.f32 %v1894, %v1948
      %v1950 = vpop.f32.mrf.mxu0
      %1951 = vdwg.mxu0
      %1952 = vrot.lane.b32.xlu0 %v734, 112
      %v1953 = vpop.permute.xlu0 %1952
      %1954 = vrot.lane.b32.xlu0 %v734, 80
      %v1955 = vpop.permute.xlu0 %1954
      %v1957 = vsel %vm748, %v1953, 0
      %v1960 = vsel %vm748, %v1955, 0
      %1962 = vmatprep.subr.bf16.mxu0 0
      %1963 = vmatpush1.bf16.xpose.msra.mxu0 0
      %1964 = vmatprep.subr.bf16.mxu0 0
      %1965 = vmatpush1.bf16.xpose.msra.mxu0 0
      %1966 = vmatprep.subr.bf16.mxu0 0
      %1967 = vmatpush1.bf16.xpose.msra.mxu0 0
      %1968 = vmatprep.subr.bf16.mxu0 0
      %1969 = vmatpush1.bf16.xpose.msra.mxu0 0
      %1970 = vmatprep.subr.bf16.mxu0 0
      %1971 = vmatpush1.bf16.xpose.msra.mxu0 0
      %1972 = vmatprep.subr.bf16.mxu0 0
      %1973 = vmatpush1.bf16.xpose.msra.mxu0 0
      %1974 = vmatprep.subr.bf16.mxu0 0
      %1975 = vmatpush1.bf16.xpose.msra.mxu0 0
      %1976 = vmatprep.subr.bf16.mxu0 0
      %1977 = vmatpush1.bf16.xpose.msra.mxu0 %v1960
      %1978 = vmatprep.subr.bf16.mxu0 0
      %1979 = vmatpush2.bf16.xpose.msra.mxu0 0
      %1980 = vmatprep.subr.bf16.mxu0 0
      %1981 = vmatpush2.bf16.xpose.msra.mxu0 0
      %1982 = vmatprep.subr.bf16.mxu0 0
      %1983 = vmatpush2.bf16.xpose.msra.mxu0 0
      %1984 = vmatprep.subr.bf16.mxu0 0
      %1985 = vmatpush2.bf16.xpose.msra.mxu0 0
      %1986 = vmatprep.subr.bf16.mxu0 0
      %1987 = vmatpush2.bf16.xpose.msra.mxu0 0
      %1988 = vmatprep.subr.bf16.mxu0 0
      %1989 = vmatpush2.bf16.xpose.msra.mxu0 0
      %1990 = vmatprep.subr.bf16.mxu0 0
      %1991 = vmatpush2.bf16.xpose.msra.mxu0 0
      %1992 = vmatprep.subr.bf16.mxu0 0
      %1993 = vmatpush2.bf16.xpose.msra.mxu0 0
      %1994 = vmatprep.mubr.bf16.mxu0 0
      %1995 = vmatmul.mubr.bf16.gmra.mxu0 %v1957
      %v1996 = vpop.f32.mrf.mxu0
      %v1997 = vadd.f32 %v1895, %v1996
      %v1998 = vpop.f32.mrf.mxu0
      %v1999 = vpop.f32.mrf.mxu0
      %v2000 = vadd.f32 %v1896, %v1999
      %v2001 = vpop.f32.mrf.mxu0
      %2002 = vdwg.mxu0
      %2003 = vrot.lane.b32.xlu0 %v735, 112
      %v2004 = vpop.permute.xlu0 %2003
      %2005 = vrot.lane.b32.xlu0 %v735, 80
      %v2006 = vpop.permute.xlu0 %2005
      %v2008 = vsel %vm748, %v2004, 0
      %v2011 = vsel %vm748, %v2006, 0
      %2013 = vmatprep.subr.bf16.mxu0 0
      %2014 = vmatpush1.bf16.xpose.msra.mxu0 0
      %2015 = vmatprep.subr.bf16.mxu0 0
      %2016 = vmatpush1.bf16.xpose.msra.mxu0 0
      %2017 = vmatprep.subr.bf16.mxu0 0
      %2018 = vmatpush1.bf16.xpose.msra.mxu0 0
      %2019 = vmatprep.subr.bf16.mxu0 0
      %2020 = vmatpush1.bf16.xpose.msra.mxu0 0
      %2021 = vmatprep.subr.bf16.mxu0 0
      %2022 = vmatpush1.bf16.xpose.msra.mxu0 0
      %2023 = vmatprep.subr.bf16.mxu0 0
      %2024 = vmatpush1.bf16.xpose.msra.mxu0 0
      %2025 = vmatprep.subr.bf16.mxu0 0
      %2026 = vmatpush1.bf16.xpose.msra.mxu0 0
      %2027 = vmatprep.subr.bf16.mxu0 0
      %2028 = vmatpush1.bf16.xpose.msra.mxu0 %v2011
      %2029 = vmatprep.subr.bf16.mxu0 0
      %2030 = vmatpush2.bf16.xpose.msra.mxu0 0
      %2031 = vmatprep.subr.bf16.mxu0 0
      %2032 = vmatpush2.bf16.xpose.msra.mxu0 0
      %2033 = vmatprep.subr.bf16.mxu0 0
      %2034 = vmatpush2.bf16.xpose.msra.mxu0 0
      %2035 = vmatprep.subr.bf16.mxu0 0
      %2036 = vmatpush2.bf16.xpose.msra.mxu0 0
      %2037 = vmatprep.subr.bf16.mxu0 0
      %2038 = vmatpush2.bf16.xpose.msra.mxu0 0
      %2039 = vmatprep.subr.bf16.mxu0 0
      %2040 = vmatpush2.bf16.xpose.msra.mxu0 0
      %2041 = vmatprep.subr.bf16.mxu0 0
      %2042 = vmatpush2.bf16.xpose.msra.mxu0 0
      %2043 = vmatprep.subr.bf16.mxu0 0
      %2044 = vmatpush2.bf16.xpose.msra.mxu0 0
      %2045 = vmatprep.mubr.bf16.mxu0 0
      %2046 = vmatmul.mubr.bf16.gmra.mxu0 %v2008
      %v2047 = vpop.f32.mrf.mxu0
      %v2048 = vadd.f32 %v1897, %v2047
      %v2049 = vpop.f32.mrf.mxu0
      %v2050 = vpop.f32.mrf.mxu0
      %v2051 = vadd.f32 %v1898, %v2050
      %v2052 = vpop.f32.mrf.mxu0
      %2053 = vdwg.mxu0
      %2054 = vrot.lane.b32.xlu0 %v736, 112
      %v2055 = vpop.permute.xlu0 %2054
      %2056 = vrot.lane.b32.xlu0 %v736, 80
      %v2057 = vpop.permute.xlu0 %2056
      %v2059 = vsel %vm748, %v2055, 0
      %v2062 = vsel %vm748, %v2057, 0
      %2064 = vmatprep.subr.bf16.mxu0 0
      %2065 = vmatpush1.bf16.xpose.msra.mxu0 0
      %2066 = vmatprep.subr.bf16.mxu0 0
      %2067 = vmatpush1.bf16.xpose.msra.mxu0 0
      %2068 = vmatprep.subr.bf16.mxu0 0
      %2069 = vmatpush1.bf16.xpose.msra.mxu0 0
      %2070 = vmatprep.subr.bf16.mxu0 0
      %2071 = vmatpush1.bf16.xpose.msra.mxu0 0
      %2072 = vmatprep.subr.bf16.mxu0 0
      %2073 = vmatpush1.bf16.xpose.msra.mxu0 0
      %2074 = vmatprep.subr.bf16.mxu0 0
      %2075 = vmatpush1.bf16.xpose.msra.mxu0 0
      %2076 = vmatprep.subr.bf16.mxu0 0
      %2077 = vmatpush1.bf16.xpose.msra.mxu0 0
      %2078 = vmatprep.subr.bf16.mxu0 0
      %2079 = vmatpush1.bf16.xpose.msra.mxu0 %v2062
      %2080 = vmatprep.subr.bf16.mxu0 0
      %2081 = vmatpush2.bf16.xpose.msra.mxu0 0
      %2082 = vmatprep.subr.bf16.mxu0 0
      %2083 = vmatpush2.bf16.xpose.msra.mxu0 0
      %2084 = vmatprep.subr.bf16.mxu0 0
      %2085 = vmatpush2.bf16.xpose.msra.mxu0 0
      %2086 = vmatprep.subr.bf16.mxu0 0
      %2087 = vmatpush2.bf16.xpose.msra.mxu0 0
      %2088 = vmatprep.subr.bf16.mxu0 0
      %2089 = vmatpush2.bf16.xpose.msra.mxu0 0
      %2090 = vmatprep.subr.bf16.mxu0 0
      %2091 = vmatpush2.bf16.xpose.msra.mxu0 0
      %2092 = vmatprep.subr.bf16.mxu0 0
      %2093 = vmatpush2.bf16.xpose.msra.mxu0 0
      %2094 = vmatprep.subr.bf16.mxu0 0
      %2095 = vmatpush2.bf16.xpose.msra.mxu0 0
      %2096 = vmatprep.mubr.bf16.mxu0 0
      %2097 = vmatmul.mubr.bf16.gmra.mxu0 %v2059
      %v2098 = vpop.f32.mrf.mxu0
      %v2099 = vadd.f32 %v1899, %v2098
      %v2100 = vpop.f32.mrf.mxu0
      %v2101 = vpop.f32.mrf.mxu0
      %v2102 = vadd.f32 %v1900, %v2101
      %v2103 = vpop.f32.mrf.mxu0
      %2104 = vdwg.mxu0
      %v2105 = vsel %vm946, %v1946, -inf
      %2106 = vmax.xlane.f32.xlu0 %v2105
      %v2107 = vpop.xlane.xlu0 %2106
      %v2108 = vsel %vm946, %v1949, -inf
      %2109 = vmax.xlane.f32.xlu0 %v2108
      %v2110 = vpop.xlane.xlu0 %2109
      %v2111 = vsel %vm946, %v1997, -inf
      %2112 = vmax.xlane.f32.xlu0 %v2111
      %v2113 = vpop.xlane.xlu0 %2112
      %v2114 = vsel %vm946, %v2000, -inf
      %2115 = vmax.xlane.f32.xlu0 %v2114
      %v2116 = vpop.xlane.xlu0 %2115
      %v2117 = vsel %vm946, %v2048, -inf
      %2118 = vmax.xlane.f32.xlu0 %v2117
      %v2119 = vpop.xlane.xlu0 %2118
      %v2120 = vsel %vm946, %v2051, -inf
      %2121 = vmax.xlane.f32.xlu0 %v2120
      %v2122 = vpop.xlane.xlu0 %2121
      %v2123 = vsel %vm946, %v2099, -inf
      %2124 = vmax.xlane.f32.xlu0 %v2123
      %v2125 = vpop.xlane.xlu0 %2124
      %v2126 = vsel %vm946, %v2102, -inf
      %2127 = vmax.xlane.f32.xlu0 %v2126
      %v2128 = vpop.xlane.xlu0 %2127
      %v2129 = vsub.f32 %v1946, %v2107
      %v2130 = vsub.f32 %v1949, %v2110
      %v2131 = vsub.f32 %v1997, %v2113
      %v2132 = vsub.f32 %v2000, %v2116
      %v2133 = vsub.f32 %v2048, %v2119
      %v2134 = vsub.f32 %v2051, %v2122
      %v2135 = vsub.f32 %v2099, %v2125
      %v2136 = vsub.f32 %v2102, %v2128
      %v2137 = vmul.f32 %v2129, 1.442695
      %v2138 = vpow.pop %v2137
      %v2139 = vmul.f32 %v2130, 1.442695
      %v2140 = vpow.pop %v2139
      %v2141 = vmul.f32 %v2131, 1.442695
      %v2142 = vpow.pop %v2141
      %v2143 = vmul.f32 %v2132, 1.442695
      %v2144 = vpow.pop %v2143
      %v2145 = vmul.f32 %v2133, 1.442695
      %v2146 = vpow.pop %v2145
      %v2147 = vmul.f32 %v2134, 1.442695
      %v2148 = vpow.pop %v2147
      %v2149 = vmul.f32 %v2135, 1.442695
      %v2150 = vpow.pop %v2149
      %v2151 = vmul.f32 %v2136, 1.442695
      %v2152 = vpow.pop %v2151
      %v2153 = vsel %vm946, %v2138, 0.0
      %2154 = vadd.xlane.f32.xlu0 %v2153
      %v2155 = vpop.xlane.xlu0 %2154
      %v2156 = vsel %vm946, %v2140, 0.0
      %2157 = vadd.xlane.f32.xlu0 %v2156
      %v2158 = vpop.xlane.xlu0 %2157
      %v2159 = vsel %vm946, %v2142, 0.0
      %2160 = vadd.xlane.f32.xlu0 %v2159
      %v2161 = vpop.xlane.xlu0 %2160
      %v2162 = vsel %vm946, %v2144, 0.0
      %2163 = vadd.xlane.f32.xlu0 %v2162
      %v2164 = vpop.xlane.xlu0 %2163
      %v2165 = vsel %vm946, %v2146, 0.0
      %2166 = vadd.xlane.f32.xlu0 %v2165
      %v2167 = vpop.xlane.xlu0 %2166
      %v2168 = vsel %vm946, %v2148, 0.0
      %2169 = vadd.xlane.f32.xlu0 %v2168
      %v2170 = vpop.xlane.xlu0 %2169
      %v2171 = vsel %vm946, %v2150, 0.0
      %2172 = vadd.xlane.f32.xlu0 %v2171
      %v2173 = vpop.xlane.xlu0 %2172
      %v2174 = vsel %vm946, %v2152, 0.0
      %2175 = vadd.xlane.f32.xlu0 %v2174
      %v2176 = vpop.xlane.xlu0 %2175
      %v2177 = vrcp.pop %v2155
      %v2178 = vmul.f32 %v2138, %v2177
      %v2179 = vrcp.pop %v2158
      %v2180 = vmul.f32 %v2140, %v2179
      %v2181 = vrcp.pop %v2161
      %v2182 = vmul.f32 %v2142, %v2181
      %v2183 = vrcp.pop %v2164
      %v2184 = vmul.f32 %v2144, %v2183
      %v2185 = vrcp.pop %v2167
      %v2186 = vmul.f32 %v2146, %v2185
      %v2187 = vrcp.pop %v2170
      %v2188 = vmul.f32 %v2148, %v2187
      %v2189 = vrcp.pop %v2173
      %v2190 = vmul.f32 %v2150, %v2189
      %v2191 = vrcp.pop %v2176
      %v2192 = vmul.f32 %v2152, %v2191
      %v2193 = vpack.c.bf16 %v2180, %v2178
      %v2194 = vpack.c.bf16 %v2184, %v2182
      %v2195 = vpack.c.bf16 %v2188, %v2186
      %v2196 = vpack.c.bf16 %v2192, %v2190
      %2197 = vrot.lane.b32.xlu0 %v733, 48
      %v2198 = vpop.permute.xlu0 %2197
      %v2201 = vsel %vm946, %v2193, 0
      %2203 = vmatprep.subr.bf16.mxu0 0
      %2204 = vmatpush1.bf16.msra.mxu0 0
      %2205 = vmatprep.subr.bf16.mxu0 0
      %2206 = vmatpush1.bf16.msra.mxu0 0
      %2207 = vmatprep.subr.bf16.mxu0 0
      %2208 = vmatpush1.bf16.msra.mxu0 0
      %2209 = vmatprep.subr.bf16.mxu0 0
      %2210 = vmatpush1.bf16.msra.mxu0 0
      %2211 = vmatprep.subr.bf16.mxu0 0
      %2212 = vmatpush1.bf16.msra.mxu0 0
      %2213 = vmatprep.subr.bf16.mxu0 0
      %2214 = vmatpush1.bf16.msra.mxu0 0
      %2215 = vmatprep.subr.bf16.mxu0 0
      %2216 = vmatpush1.bf16.msra.mxu0 0
      %2217 = vmatprep.subr.bf16.mxu0 0
      %2218 = vmatpush1.bf16.msra.mxu0 %v2198
      %2219 = vmatprep.subr.bf16.mxu0 0
      %2220 = vmatpush2.bf16.msra.mxu0 0
      %2221 = vmatprep.subr.bf16.mxu0 0
      %2222 = vmatpush2.bf16.msra.mxu0 0
      %2223 = vmatprep.subr.bf16.mxu0 0
      %2224 = vmatpush2.bf16.msra.mxu0 0
      %2225 = vmatprep.subr.bf16.mxu0 0
      %2226 = vmatpush2.bf16.msra.mxu0 0
      %2227 = vmatprep.subr.bf16.mxu0 0
      %2228 = vmatpush2.bf16.msra.mxu0 0
      %2229 = vmatprep.subr.bf16.mxu0 0
      %2230 = vmatpush2.bf16.msra.mxu0 0
      %2231 = vmatprep.subr.bf16.mxu0 0
      %2232 = vmatpush2.bf16.msra.mxu0 0
      %2233 = vmatprep.subr.bf16.mxu0 0
      %2234 = vmatpush2.bf16.msra.mxu0 0
      %2235 = vmatprep.mubr.bf16.mxu0 0
      %2236 = vmatmul.mubr.bf16.gmra.mxu0 %v2201
      %v2237 = vpop.f32.mrf.mxu0
      %v2238 = vadd.f32 0.0, %v2237
      %v2239 = vpop.f32.mrf.mxu0
      %v2240 = vpop.f32.mrf.mxu0
      %v2241 = vadd.f32 0.0, %v2240
      %v2242 = vpop.f32.mrf.mxu0
      %2243 = vdwg.mxu0
      %2244 = vrot.lane.b32.xlu0 %v734, 48
      %v2245 = vpop.permute.xlu0 %2244
      %v2248 = vsel %vm946, %v2194, 0
      %2250 = vmatprep.subr.bf16.mxu0 0
      %2251 = vmatpush1.bf16.msra.mxu0 0
      %2252 = vmatprep.subr.bf16.mxu0 0
      %2253 = vmatpush1.bf16.msra.mxu0 0
      %2254 = vmatprep.subr.bf16.mxu0 0
      %2255 = vmatpush1.bf16.msra.mxu0 0
      %2256 = vmatprep.subr.bf16.mxu0 0
      %2257 = vmatpush1.bf16.msra.mxu0 0
      %2258 = vmatprep.subr.bf16.mxu0 0
      %2259 = vmatpush1.bf16.msra.mxu0 0
      %2260 = vmatprep.subr.bf16.mxu0 0
      %2261 = vmatpush1.bf16.msra.mxu0 0
      %2262 = vmatprep.subr.bf16.mxu0 0
      %2263 = vmatpush1.bf16.msra.mxu0 0
      %2264 = vmatprep.subr.bf16.mxu0 0
      %2265 = vmatpush1.bf16.msra.mxu0 %v2245
      %2266 = vmatprep.subr.bf16.mxu0 0
      %2267 = vmatpush2.bf16.msra.mxu0 0
      %2268 = vmatprep.subr.bf16.mxu0 0
      %2269 = vmatpush2.bf16.msra.mxu0 0
      %2270 = vmatprep.subr.bf16.mxu0 0
      %2271 = vmatpush2.bf16.msra.mxu0 0
      %2272 = vmatprep.subr.bf16.mxu0 0
      %2273 = vmatpush2.bf16.msra.mxu0 0
      %2274 = vmatprep.subr.bf16.mxu0 0
      %2275 = vmatpush2.bf16.msra.mxu0 0
      %2276 = vmatprep.subr.bf16.mxu0 0
      %2277 = vmatpush2.bf16.msra.mxu0 0
      %2278 = vmatprep.subr.bf16.mxu0 0
      %2279 = vmatpush2.bf16.msra.mxu0 0
      %2280 = vmatprep.subr.bf16.mxu0 0
      %2281 = vmatpush2.bf16.msra.mxu0 0
      %2282 = vmatprep.mubr.bf16.mxu0 0
      %2283 = vmatmul.mubr.bf16.gmra.mxu0 %v2248
      %v2284 = vpop.f32.mrf.mxu0
      %v2285 = vadd.f32 0.0, %v2284
      %v2286 = vpop.f32.mrf.mxu0
      %v2287 = vpop.f32.mrf.mxu0
      %v2288 = vadd.f32 0.0, %v2287
      %v2289 = vpop.f32.mrf.mxu0
      %2290 = vdwg.mxu0
      %2291 = vrot.lane.b32.xlu0 %v735, 48
      %v2292 = vpop.permute.xlu0 %2291
      %v2295 = vsel %vm946, %v2195, 0
      %2297 = vmatprep.subr.bf16.mxu0 0
      %2298 = vmatpush1.bf16.msra.mxu0 0
      %2299 = vmatprep.subr.bf16.mxu0 0
      %2300 = vmatpush1.bf16.msra.mxu0 0
      %2301 = vmatprep.subr.bf16.mxu0 0
      %2302 = vmatpush1.bf16.msra.mxu0 0
      %2303 = vmatprep.subr.bf16.mxu0 0
      %2304 = vmatpush1.bf16.msra.mxu0 0
      %2305 = vmatprep.subr.bf16.mxu0 0
      %2306 = vmatpush1.bf16.msra.mxu0 0
      %2307 = vmatprep.subr.bf16.mxu0 0
      %2308 = vmatpush1.bf16.msra.mxu0 0
      %2309 = vmatprep.subr.bf16.mxu0 0
      %2310 = vmatpush1.bf16.msra.mxu0 0
      %2311 = vmatprep.subr.bf16.mxu0 0
      %2312 = vmatpush1.bf16.msra.mxu0 %v2292
      %2313 = vmatprep.subr.bf16.mxu0 0
      %2314 = vmatpush2.bf16.msra.mxu0 0
      %2315 = vmatprep.subr.bf16.mxu0 0
      %2316 = vmatpush2.bf16.msra.mxu0 0
      %2317 = vmatprep.subr.bf16.mxu0 0
      %2318 = vmatpush2.bf16.msra.mxu0 0
      %2319 = vmatprep.subr.bf16.mxu0 0
      %2320 = vmatpush2.bf16.msra.mxu0 0
      %2321 = vmatprep.subr.bf16.mxu0 0
      %2322 = vmatpush2.bf16.msra.mxu0 0
      %2323 = vmatprep.subr.bf16.mxu0 0
      %2324 = vmatpush2.bf16.msra.mxu0 0
      %2325 = vmatprep.subr.bf16.mxu0 0
      %2326 = vmatpush2.bf16.msra.mxu0 0
      %2327 = vmatprep.subr.bf16.mxu0 0
      %2328 = vmatpush2.bf16.msra.mxu0 0
      %2329 = vmatprep.mubr.bf16.mxu0 0
      %2330 = vmatmul.mubr.bf16.gmra.mxu0 %v2295
      %v2331 = vpop.f32.mrf.mxu0
      %v2332 = vadd.f32 0.0, %v2331
      %v2333 = vpop.f32.mrf.mxu0
      %v2334 = vpop.f32.mrf.mxu0
      %v2335 = vadd.f32 0.0, %v2334
      %v2336 = vpop.f32.mrf.mxu0
      %2337 = vdwg.mxu0
      %2338 = vrot.lane.b32.xlu0 %v736, 48
      %v2339 = vpop.permute.xlu0 %2338
      %v2342 = vsel %vm946, %v2196, 0
      %2344 = vmatprep.subr.bf16.mxu0 0
      %2345 = vmatpush1.bf16.msra.mxu0 0
      %2346 = vmatprep.subr.bf16.mxu0 0
      %2347 = vmatpush1.bf16.msra.mxu0 0
      %2348 = vmatprep.subr.bf16.mxu0 0
      %2349 = vmatpush1.bf16.msra.mxu0 0
      %2350 = vmatprep.subr.bf16.mxu0 0
      %2351 = vmatpush1.bf16.msra.mxu0 0
      %2352 = vmatprep.subr.bf16.mxu0 0
      %2353 = vmatpush1.bf16.msra.mxu0 0
      %2354 = vmatprep.subr.bf16.mxu0 0
      %2355 = vmatpush1.bf16.msra.mxu0 0
      %2356 = vmatprep.subr.bf16.mxu0 0
      %2357 = vmatpush1.bf16.msra.mxu0 0
      %2358 = vmatprep.subr.bf16.mxu0 0
      %2359 = vmatpush1.bf16.msra.mxu0 %v2339
      %2360 = vmatprep.subr.bf16.mxu0 0
      %2361 = vmatpush2.bf16.msra.mxu0 0
      %2362 = vmatprep.subr.bf16.mxu0 0
      %2363 = vmatpush2.bf16.msra.mxu0 0
      %2364 = vmatprep.subr.bf16.mxu0 0
      %2365 = vmatpush2.bf16.msra.mxu0 0
      %2366 = vmatprep.subr.bf16.mxu0 0
      %2367 = vmatpush2.bf16.msra.mxu0 0
      %2368 = vmatprep.subr.bf16.mxu0 0
      %2369 = vmatpush2.bf16.msra.mxu0 0
      %2370 = vmatprep.subr.bf16.mxu0 0
      %2371 = vmatpush2.bf16.msra.mxu0 0
      %2372 = vmatprep.subr.bf16.mxu0 0
      %2373 = vmatpush2.bf16.msra.mxu0 0
      %2374 = vmatprep.subr.bf16.mxu0 0
      %2375 = vmatpush2.bf16.msra.mxu0 0
      %2376 = vmatprep.mubr.bf16.mxu0 0
      %2377 = vmatmul.mubr.bf16.gmra.mxu0 %v2342
      %v2378 = vpop.f32.mrf.mxu0
      %v2379 = vadd.f32 0.0, %v2378
      %v2380 = vpop.f32.mrf.mxu0
      %v2381 = vpop.f32.mrf.mxu0
      %v2382 = vadd.f32 0.0, %v2381
      %v2383 = vpop.f32.mrf.mxu0
      %2384 = vdwg.mxu0
      %v2385 = vpack.c.bf16 %v2241, %v2238
      %v2386 = vpack.c.bf16 %v2288, %v2285
      %v2387 = vpack.c.bf16 %v2335, %v2332
      %v2388 = vpack.c.bf16 %v2382, %v2379
      %s2389 = scalar_lea.vmem %s5, 8
      %v2390 = vld [vmem:[%s2389] sm:$0xf]
      %v2392 = vsel %vm748, %v2385, 0
      %v2395 = vsel %vm748, %v2386, 0
      %v2398 = vsel %vm748, %v2387, 0
      %v2401 = vsel %vm748, %v2388, 0
      %v2404 = vsel %vm1743, %v2390, 0
      %2406 = vmatprep.subr.bf16.mxu0 0
      %2407 = vmatpush1.bf16.msra.mxu0 0
      %2408 = vmatprep.subr.bf16.mxu0 0
      %2409 = vmatpush1.bf16.msra.mxu0 0
      %2410 = vmatprep.subr.bf16.mxu0 0
      %2411 = vmatpush1.bf16.msra.mxu0 0
      %2412 = vmatprep.subr.bf16.mxu0 0
      %2413 = vmatpush1.bf16.msra.mxu0 0
      %2414 = vmatprep.subr.bf16.mxu0 0
      %2415 = vmatpush1.bf16.msra.mxu0 0
      %2416 = vmatprep.subr.bf16.mxu0 0
      %2417 = vmatpush1.bf16.msra.mxu0 0
      %2418 = vmatprep.subr.bf16.mxu0 0
      %2419 = vmatpush1.bf16.msra.mxu0 0
      %2420 = vmatprep.subr.bf16.mxu0 0
      %2421 = vmatpush1.bf16.msra.mxu0 %v2404
      %2422 = vmatprep.subr.bf16.mxu0 0
      %2423 = vmatpush2.bf16.msra.mxu0 0
      %2424 = vmatprep.subr.bf16.mxu0 0
      %2425 = vmatpush2.bf16.msra.mxu0 0
      %2426 = vmatprep.subr.bf16.mxu0 0
      %2427 = vmatpush2.bf16.msra.mxu0 0
      %2428 = vmatprep.subr.bf16.mxu0 0
      %2429 = vmatpush2.bf16.msra.mxu0 0
      %2430 = vmatprep.subr.bf16.mxu0 0
      %2431 = vmatpush2.bf16.msra.mxu0 0
      %2432 = vmatprep.subr.bf16.mxu0 0
      %2433 = vmatpush2.bf16.msra.mxu0 0
      %2434 = vmatprep.subr.bf16.mxu0 0
      %2435 = vmatpush2.bf16.msra.mxu0 0
      %2436 = vmatprep.subr.bf16.mxu0 0
      %2437 = vmatpush2.bf16.msra.mxu0 0
      %2438 = vmatprep.mubr.bf16.mxu0 0
      %2439 = vmatmul.mubr.bf16.gmra.mxu0 %v2392
      %v2440 = vpop.f32.mrf.mxu0
      %v2441 = vadd.f32 0.0, %v2440
      %v2442 = vpop.f32.mrf.mxu0
      %v2443 = vpop.f32.mrf.mxu0
      %v2444 = vadd.f32 0.0, %v2443
      %v2445 = vpop.f32.mrf.mxu0
      %2446 = vmatprep.mubr.bf16.mxu0 0
      %2447 = vmatmul.mubr.bf16.gmra.mxu0 %v2395
      %v2448 = vpop.f32.mrf.mxu0
      %v2449 = vadd.f32 0.0, %v2448
      %v2450 = vpop.f32.mrf.mxu0
      %v2451 = vpop.f32.mrf.mxu0
      %v2452 = vadd.f32 0.0, %v2451
      %v2453 = vpop.f32.mrf.mxu0
      %2454 = vmatprep.mubr.bf16.mxu0 0
      %2455 = vmatmul.mubr.bf16.gmra.mxu0 %v2398
      %v2456 = vpop.f32.mrf.mxu0
      %v2457 = vadd.f32 0.0, %v2456
      %v2458 = vpop.f32.mrf.mxu0
      %v2459 = vpop.f32.mrf.mxu0
      %v2460 = vadd.f32 0.0, %v2459
      %v2461 = vpop.f32.mrf.mxu0
      %2462 = vmatprep.mubr.bf16.mxu0 0
      %2463 = vmatmul.mubr.bf16.gmra.mxu0 %v2401
      %v2464 = vpop.f32.mrf.mxu0
      %v2465 = vadd.f32 0.0, %v2464
      %v2466 = vpop.f32.mrf.mxu0
      %v2467 = vpop.f32.mrf.mxu0
      %v2468 = vadd.f32 0.0, %v2467
      %v2469 = vpop.f32.mrf.mxu0
      %2470 = vdwg.mxu0
      %v2471 = vadd.f32 %v1862, %v2441
      %v2472 = vadd.f32 %v1865, %v2444
      %v2473 = vadd.f32 %v1870, %v2449
      %v2474 = vadd.f32 %v1873, %v2452
      %v2475 = vadd.f32 %v1878, %v2457
      %v2476 = vadd.f32 %v1881, %v2460
      %v2477 = vadd.f32 %v1886, %v2465
      %v2478 = vadd.f32 %v1889, %v2468
      %s2479 = scalar_lea.vmem %s7, 192
      %v2480 = vld [vmem:[%s2479] sm:$0xff]
      %v2481 = vld [vmem:[%s2479 + $0x8] sm:$0xff]
      %v2482 = vld [vmem:[%s2479 + $0x10] sm:$0xff]
      %v2483 = vld [vmem:[%s2479 + $0x18] sm:$0xff]
      %v2484 = vld [vmem:[%s2479 + $0x20] sm:$0xff]
      %v2485 = vld [vmem:[%s2479 + $0x28] sm:$0xff]
      %v2486 = vld [vmem:[%s2479 + $0x30] sm:$0xff]
      %v2487 = vld [vmem:[%s2479 + $0x38] sm:$0xff]
      %2488 = vrot.lane.b32.xlu0 %v733, 104
      %v2489 = vpop.permute.xlu0 %2488
      %2490 = vrot.lane.b32.xlu0 %v733, 72
      %v2491 = vpop.permute.xlu0 %2490
      %v2493 = vsel %vm748, %v2489, 0
      %v2496 = vsel %vm748, %v2491, 0
      %2498 = vmatprep.subr.bf16.mxu0 0
      %2499 = vmatpush1.bf16.xpose.msra.mxu0 0
      %2500 = vmatprep.subr.bf16.mxu0 0
      %2501 = vmatpush1.bf16.xpose.msra.mxu0 0
      %2502 = vmatprep.subr.bf16.mxu0 0
      %2503 = vmatpush1.bf16.xpose.msra.mxu0 0
      %2504 = vmatprep.subr.bf16.mxu0 0
      %2505 = vmatpush1.bf16.xpose.msra.mxu0 0
      %2506 = vmatprep.subr.bf16.mxu0 0
      %2507 = vmatpush1.bf16.xpose.msra.mxu0 0
      %2508 = vmatprep.subr.bf16.mxu0 0
      %2509 = vmatpush1.bf16.xpose.msra.mxu0 0
      %2510 = vmatprep.subr.bf16.mxu0 0
      %2511 = vmatpush1.bf16.xpose.msra.mxu0 0
      %2512 = vmatprep.subr.bf16.mxu0 0
      %2513 = vmatpush1.bf16.xpose.msra.mxu0 %v2496
      %2514 = vmatprep.subr.bf16.mxu0 0
      %2515 = vmatpush2.bf16.xpose.msra.mxu0 0
      %2516 = vmatprep.subr.bf16.mxu0 0
      %2517 = vmatpush2.bf16.xpose.msra.mxu0 0
      %2518 = vmatprep.subr.bf16.mxu0 0
      %2519 = vmatpush2.bf16.xpose.msra.mxu0 0
      %2520 = vmatprep.subr.bf16.mxu0 0
      %2521 = vmatpush2.bf16.xpose.msra.mxu0 0
      %2522 = vmatprep.subr.bf16.mxu0 0
      %2523 = vmatpush2.bf16.xpose.msra.mxu0 0
      %2524 = vmatprep.subr.bf16.mxu0 0
      %2525 = vmatpush2.bf16.xpose.msra.mxu0 0
      %2526 = vmatprep.subr.bf16.mxu0 0
      %2527 = vmatpush2.bf16.xpose.msra.mxu0 0
      %2528 = vmatprep.subr.bf16.mxu0 0
      %2529 = vmatpush2.bf16.xpose.msra.mxu0 0
      %2530 = vmatprep.mubr.bf16.mxu0 0
      %2531 = vmatmul.mubr.bf16.gmra.mxu0 %v2493
      %v2532 = vpop.f32.mrf.mxu0
      %v2533 = vadd.f32 %v2480, %v2532
      %v2534 = vpop.f32.mrf.mxu0
      %v2535 = vpop.f32.mrf.mxu0
      %v2536 = vadd.f32 %v2481, %v2535
      %v2537 = vpop.f32.mrf.mxu0
      %2538 = vdwg.mxu0
      %2539 = vrot.lane.b32.xlu0 %v734, 104
      %v2540 = vpop.permute.xlu0 %2539
      %2541 = vrot.lane.b32.xlu0 %v734, 72
      %v2542 = vpop.permute.xlu0 %2541
      %v2544 = vsel %vm748, %v2540, 0
      %v2547 = vsel %vm748, %v2542, 0
      %2549 = vmatprep.subr.bf16.mxu0 0
      %2550 = vmatpush1.bf16.xpose.msra.mxu0 0
      %2551 = vmatprep.subr.bf16.mxu0 0
      %2552 = vmatpush1.bf16.xpose.msra.mxu0 0
      %2553 = vmatprep.subr.bf16.mxu0 0
      %2554 = vmatpush1.bf16.xpose.msra.mxu0 0
      %2555 = vmatprep.subr.bf16.mxu0 0
      %2556 = vmatpush1.bf16.xpose.msra.mxu0 0
      %2557 = vmatprep.subr.bf16.mxu0 0
      %2558 = vmatpush1.bf16.xpose.msra.mxu0 0
      %2559 = vmatprep.subr.bf16.mxu0 0
      %2560 = vmatpush1.bf16.xpose.msra.mxu0 0
      %2561 = vmatprep.subr.bf16.mxu0 0
      %2562 = vmatpush1.bf16.xpose.msra.mxu0 0
      %2563 = vmatprep.subr.bf16.mxu0 0
      %2564 = vmatpush1.bf16.xpose.msra.mxu0 %v2547
      %2565 = vmatprep.subr.bf16.mxu0 0
      %2566 = vmatpush2.bf16.xpose.msra.mxu0 0
      %2567 = vmatprep.subr.bf16.mxu0 0
      %2568 = vmatpush2.bf16.xpose.msra.mxu0 0
      %2569 = vmatprep.subr.bf16.mxu0 0
      %2570 = vmatpush2.bf16.xpose.msra.mxu0 0
      %2571 = vmatprep.subr.bf16.mxu0 0
      %2572 = vmatpush2.bf16.xpose.msra.mxu0 0
      %2573 = vmatprep.subr.bf16.mxu0 0
      %2574 = vmatpush2.bf16.xpose.msra.mxu0 0
      %2575 = vmatprep.subr.bf16.mxu0 0
      %2576 = vmatpush2.bf16.xpose.msra.mxu0 0
      %2577 = vmatprep.subr.bf16.mxu0 0
      %2578 = vmatpush2.bf16.xpose.msra.mxu0 0
      %2579 = vmatprep.subr.bf16.mxu0 0
      %2580 = vmatpush2.bf16.xpose.msra.mxu0 0
      %2581 = vmatprep.mubr.bf16.mxu0 0
      %2582 = vmatmul.mubr.bf16.gmra.mxu0 %v2544
      %v2583 = vpop.f32.mrf.mxu0
      %v2584 = vadd.f32 %v2482, %v2583
      %v2585 = vpop.f32.mrf.mxu0
      %v2586 = vpop.f32.mrf.mxu0
      %v2587 = vadd.f32 %v2483, %v2586
      %v2588 = vpop.f32.mrf.mxu0
      %2589 = vdwg.mxu0
      %2590 = vrot.lane.b32.xlu0 %v735, 104
      %v2591 = vpop.permute.xlu0 %2590
      %2592 = vrot.lane.b32.xlu0 %v735, 72
      %v2593 = vpop.permute.xlu0 %2592
      %v2595 = vsel %vm748, %v2591, 0
      %v2598 = vsel %vm748, %v2593, 0
      %2600 = vmatprep.subr.bf16.mxu0 0
      %2601 = vmatpush1.bf16.xpose.msra.mxu0 0
      %2602 = vmatprep.subr.bf16.mxu0 0
      %2603 = vmatpush1.bf16.xpose.msra.mxu0 0
      %2604 = vmatprep.subr.bf16.mxu0 0
      %2605 = vmatpush1.bf16.xpose.msra.mxu0 0
      %2606 = vmatprep.subr.bf16.mxu0 0
      %2607 = vmatpush1.bf16.xpose.msra.mxu0 0
      %2608 = vmatprep.subr.bf16.mxu0 0
      %2609 = vmatpush1.bf16.xpose.msra.mxu0 0
      %2610 = vmatprep.subr.bf16.mxu0 0
      %2611 = vmatpush1.bf16.xpose.msra.mxu0 0
      %2612 = vmatprep.subr.bf16.mxu0 0
      %2613 = vmatpush1.bf16.xpose.msra.mxu0 0
      %2614 = vmatprep.subr.bf16.mxu0 0
      %2615 = vmatpush1.bf16.xpose.msra.mxu0 %v2598
      %2616 = vmatprep.subr.bf16.mxu0 0
      %2617 = vmatpush2.bf16.xpose.msra.mxu0 0
      %2618 = vmatprep.subr.bf16.mxu0 0
      %2619 = vmatpush2.bf16.xpose.msra.mxu0 0
      %2620 = vmatprep.subr.bf16.mxu0 0
      %2621 = vmatpush2.bf16.xpose.msra.mxu0 0
      %2622 = vmatprep.subr.bf16.mxu0 0
      %2623 = vmatpush2.bf16.xpose.msra.mxu0 0
      %2624 = vmatprep.subr.bf16.mxu0 0
      %2625 = vmatpush2.bf16.xpose.msra.mxu0 0
      %2626 = vmatprep.subr.bf16.mxu0 0
      %2627 = vmatpush2.bf16.xpose.msra.mxu0 0
      %2628 = vmatprep.subr.bf16.mxu0 0
      %2629 = vmatpush2.bf16.xpose.msra.mxu0 0
      %2630 = vmatprep.subr.bf16.mxu0 0
      %2631 = vmatpush2.bf16.xpose.msra.mxu0 0
      %2632 = vmatprep.mubr.bf16.mxu0 0
      %2633 = vmatmul.mubr.bf16.gmra.mxu0 %v2595
      %v2634 = vpop.f32.mrf.mxu0
      %v2635 = vadd.f32 %v2484, %v2634
      %v2636 = vpop.f32.mrf.mxu0
      %v2637 = vpop.f32.mrf.mxu0
      %v2638 = vadd.f32 %v2485, %v2637
      %v2639 = vpop.f32.mrf.mxu0
      %2640 = vdwg.mxu0
      %2641 = vrot.lane.b32.xlu0 %v736, 104
      %v2642 = vpop.permute.xlu0 %2641
      %2643 = vrot.lane.b32.xlu0 %v736, 72
      %v2644 = vpop.permute.xlu0 %2643
      %v2646 = vsel %vm748, %v2642, 0
      %v2649 = vsel %vm748, %v2644, 0
      %2651 = vmatprep.subr.bf16.mxu0 0
      %2652 = vmatpush1.bf16.xpose.msra.mxu0 0
      %2653 = vmatprep.subr.bf16.mxu0 0
      %2654 = vmatpush1.bf16.xpose.msra.mxu0 0
      %2655 = vmatprep.subr.bf16.mxu0 0
      %2656 = vmatpush1.bf16.xpose.msra.mxu0 0
      %2657 = vmatprep.subr.bf16.mxu0 0
      %2658 = vmatpush1.bf16.xpose.msra.mxu0 0
      %2659 = vmatprep.subr.bf16.mxu0 0
      %2660 = vmatpush1.bf16.xpose.msra.mxu0 0
      %2661 = vmatprep.subr.bf16.mxu0 0
      %2662 = vmatpush1.bf16.xpose.msra.mxu0 0
      %2663 = vmatprep.subr.bf16.mxu0 0
      %2664 = vmatpush1.bf16.xpose.msra.mxu0 0
      %2665 = vmatprep.subr.bf16.mxu0 0
      %2666 = vmatpush1.bf16.xpose.msra.mxu0 %v2649
      %2667 = vmatprep.subr.bf16.mxu0 0
      %2668 = vmatpush2.bf16.xpose.msra.mxu0 0
      %2669 = vmatprep.subr.bf16.mxu0 0
      %2670 = vmatpush2.bf16.xpose.msra.mxu0 0
      %2671 = vmatprep.subr.bf16.mxu0 0
      %2672 = vmatpush2.bf16.xpose.msra.mxu0 0
      %2673 = vmatprep.subr.bf16.mxu0 0
      %2674 = vmatpush2.bf16.xpose.msra.mxu0 0
      %2675 = vmatprep.subr.bf16.mxu0 0
      %2676 = vmatpush2.bf16.xpose.msra.mxu0 0
      %2677 = vmatprep.subr.bf16.mxu0 0
      %2678 = vmatpush2.bf16.xpose.msra.mxu0 0
      %2679 = vmatprep.subr.bf16.mxu0 0
      %2680 = vmatpush2.bf16.xpose.msra.mxu0 0
      %2681 = vmatprep.subr.bf16.mxu0 0
      %2682 = vmatpush2.bf16.xpose.msra.mxu0 0
      %2683 = vmatprep.mubr.bf16.mxu0 0
      %2684 = vmatmul.mubr.bf16.gmra.mxu0 %v2646
      %v2685 = vpop.f32.mrf.mxu0
      %v2686 = vadd.f32 %v2486, %v2685
      %v2687 = vpop.f32.mrf.mxu0
      %v2688 = vpop.f32.mrf.mxu0
      %v2689 = vadd.f32 %v2487, %v2688
      %v2690 = vpop.f32.mrf.mxu0
      %2691 = vdwg.mxu0
      %v2692 = vsel %vm946, %v2533, -inf
      %2693 = vmax.xlane.f32.xlu0 %v2692
      %v2694 = vpop.xlane.xlu0 %2693
      %v2695 = vsel %vm946, %v2536, -inf
      %2696 = vmax.xlane.f32.xlu0 %v2695
      %v2697 = vpop.xlane.xlu0 %2696
      %v2698 = vsel %vm946, %v2584, -inf
      %2699 = vmax.xlane.f32.xlu0 %v2698
      %v2700 = vpop.xlane.xlu0 %2699
      %v2701 = vsel %vm946, %v2587, -inf
      %2702 = vmax.xlane.f32.xlu0 %v2701
      %v2703 = vpop.xlane.xlu0 %2702
      %v2704 = vsel %vm946, %v2635, -inf
      %2705 = vmax.xlane.f32.xlu0 %v2704
      %v2706 = vpop.xlane.xlu0 %2705
      %v2707 = vsel %vm946, %v2638, -inf
      %2708 = vmax.xlane.f32.xlu0 %v2707
      %v2709 = vpop.xlane.xlu0 %2708
      %v2710 = vsel %vm946, %v2686, -inf
      %2711 = vmax.xlane.f32.xlu0 %v2710
      %v2712 = vpop.xlane.xlu0 %2711
      %v2713 = vsel %vm946, %v2689, -inf
      %2714 = vmax.xlane.f32.xlu0 %v2713
      %v2715 = vpop.xlane.xlu0 %2714
      %v2716 = vsub.f32 %v2533, %v2694
      %v2717 = vsub.f32 %v2536, %v2697
      %v2718 = vsub.f32 %v2584, %v2700
      %v2719 = vsub.f32 %v2587, %v2703
      %v2720 = vsub.f32 %v2635, %v2706
      %v2721 = vsub.f32 %v2638, %v2709
      %v2722 = vsub.f32 %v2686, %v2712
      %v2723 = vsub.f32 %v2689, %v2715
      %v2724 = vmul.f32 %v2716, 1.442695
      %v2725 = vpow.pop %v2724
      %v2726 = vmul.f32 %v2717, 1.442695
      %v2727 = vpow.pop %v2726
      %v2728 = vmul.f32 %v2718, 1.442695
      %v2729 = vpow.pop %v2728
      %v2730 = vmul.f32 %v2719, 1.442695
      %v2731 = vpow.pop %v2730
      %v2732 = vmul.f32 %v2720, 1.442695
      %v2733 = vpow.pop %v2732
      %v2734 = vmul.f32 %v2721, 1.442695
      %v2735 = vpow.pop %v2734
      %v2736 = vmul.f32 %v2722, 1.442695
      %v2737 = vpow.pop %v2736
      %v2738 = vmul.f32 %v2723, 1.442695
      %v2739 = vpow.pop %v2738
      %v2740 = vsel %vm946, %v2725, 0.0
      %2741 = vadd.xlane.f32.xlu0 %v2740
      %v2742 = vpop.xlane.xlu0 %2741
      %v2743 = vsel %vm946, %v2727, 0.0
      %2744 = vadd.xlane.f32.xlu0 %v2743
      %v2745 = vpop.xlane.xlu0 %2744
      %v2746 = vsel %vm946, %v2729, 0.0
      %2747 = vadd.xlane.f32.xlu0 %v2746
      %v2748 = vpop.xlane.xlu0 %2747
      %v2749 = vsel %vm946, %v2731, 0.0
      %2750 = vadd.xlane.f32.xlu0 %v2749
      %v2751 = vpop.xlane.xlu0 %2750
      %v2752 = vsel %vm946, %v2733, 0.0
      %2753 = vadd.xlane.f32.xlu0 %v2752
      %v2754 = vpop.xlane.xlu0 %2753
      %v2755 = vsel %vm946, %v2735, 0.0
      %2756 = vadd.xlane.f32.xlu0 %v2755
      %v2757 = vpop.xlane.xlu0 %2756
      %v2758 = vsel %vm946, %v2737, 0.0
      %2759 = vadd.xlane.f32.xlu0 %v2758
      %v2760 = vpop.xlane.xlu0 %2759
      %v2761 = vsel %vm946, %v2739, 0.0
      %2762 = vadd.xlane.f32.xlu0 %v2761
      %v2763 = vpop.xlane.xlu0 %2762
      %v2764 = vrcp.pop %v2742
      %v2765 = vmul.f32 %v2725, %v2764
      %v2766 = vrcp.pop %v2745
      %v2767 = vmul.f32 %v2727, %v2766
      %v2768 = vrcp.pop %v2748
      %v2769 = vmul.f32 %v2729, %v2768
      %v2770 = vrcp.pop %v2751
      %v2771 = vmul.f32 %v2731, %v2770
      %v2772 = vrcp.pop %v2754
      %v2773 = vmul.f32 %v2733, %v2772
      %v2774 = vrcp.pop %v2757
      %v2775 = vmul.f32 %v2735, %v2774
      %v2776 = vrcp.pop %v2760
      %v2777 = vmul.f32 %v2737, %v2776
      %v2778 = vrcp.pop %v2763
      %v2779 = vmul.f32 %v2739, %v2778
      %v2780 = vpack.c.bf16 %v2767, %v2765
      %v2781 = vpack.c.bf16 %v2771, %v2769
      %v2782 = vpack.c.bf16 %v2775, %v2773
      %v2783 = vpack.c.bf16 %v2779, %v2777
      %2784 = vrot.lane.b32.xlu0 %v733, 40
      %v2785 = vpop.permute.xlu0 %2784
      %v2788 = vsel %vm946, %v2780, 0
      %2790 = vmatprep.subr.bf16.mxu0 0
      %2791 = vmatpush1.bf16.msra.mxu0 0
      %2792 = vmatprep.subr.bf16.mxu0 0
      %2793 = vmatpush1.bf16.msra.mxu0 0
      %2794 = vmatprep.subr.bf16.mxu0 0
      %2795 = vmatpush1.bf16.msra.mxu0 0
      %2796 = vmatprep.subr.bf16.mxu0 0
      %2797 = vmatpush1.bf16.msra.mxu0 0
      %2798 = vmatprep.subr.bf16.mxu0 0
      %2799 = vmatpush1.bf16.msra.mxu0 0
      %2800 = vmatprep.subr.bf16.mxu0 0
      %2801 = vmatpush1.bf16.msra.mxu0 0
      %2802 = vmatprep.subr.bf16.mxu0 0
      %2803 = vmatpush1.bf16.msra.mxu0 0
      %2804 = vmatprep.subr.bf16.mxu0 0
      %2805 = vmatpush1.bf16.msra.mxu0 %v2785
      %2806 = vmatprep.subr.bf16.mxu0 0
      %2807 = vmatpush2.bf16.msra.mxu0 0
      %2808 = vmatprep.subr.bf16.mxu0 0
      %2809 = vmatpush2.bf16.msra.mxu0 0
      %2810 = vmatprep.subr.bf16.mxu0 0
      %2811 = vmatpush2.bf16.msra.mxu0 0
      %2812 = vmatprep.subr.bf16.mxu0 0
      %2813 = vmatpush2.bf16.msra.mxu0 0
      %2814 = vmatprep.subr.bf16.mxu0 0
      %2815 = vmatpush2.bf16.msra.mxu0 0
      %2816 = vmatprep.subr.bf16.mxu0 0
      %2817 = vmatpush2.bf16.msra.mxu0 0
      %2818 = vmatprep.subr.bf16.mxu0 0
      %2819 = vmatpush2.bf16.msra.mxu0 0
      %2820 = vmatprep.subr.bf16.mxu0 0
      %2821 = vmatpush2.bf16.msra.mxu0 0
      %2822 = vmatprep.mubr.bf16.mxu0 0
      %2823 = vmatmul.mubr.bf16.gmra.mxu0 %v2788
      %v2824 = vpop.f32.mrf.mxu0
      %v2825 = vadd.f32 0.0, %v2824
      %v2826 = vpop.f32.mrf.mxu0
      %v2827 = vpop.f32.mrf.mxu0
      %v2828 = vadd.f32 0.0, %v2827
      %v2829 = vpop.f32.mrf.mxu0
      %2830 = vdwg.mxu0
      %2831 = vrot.lane.b32.xlu0 %v734, 40
      %v2832 = vpop.permute.xlu0 %2831
      %v2835 = vsel %vm946, %v2781, 0
      %2837 = vmatprep.subr.bf16.mxu0 0
      %2838 = vmatpush1.bf16.msra.mxu0 0
      %2839 = vmatprep.subr.bf16.mxu0 0
      %2840 = vmatpush1.bf16.msra.mxu0 0
      %2841 = vmatprep.subr.bf16.mxu0 0
      %2842 = vmatpush1.bf16.msra.mxu0 0
      %2843 = vmatprep.subr.bf16.mxu0 0
      %2844 = vmatpush1.bf16.msra.mxu0 0
      %2845 = vmatprep.subr.bf16.mxu0 0
      %2846 = vmatpush1.bf16.msra.mxu0 0
      %2847 = vmatprep.subr.bf16.mxu0 0
      %2848 = vmatpush1.bf16.msra.mxu0 0
      %2849 = vmatprep.subr.bf16.mxu0 0
      %2850 = vmatpush1.bf16.msra.mxu0 0
      %2851 = vmatprep.subr.bf16.mxu0 0
      %2852 = vmatpush1.bf16.msra.mxu0 %v2832
      %2853 = vmatprep.subr.bf16.mxu0 0
      %2854 = vmatpush2.bf16.msra.mxu0 0
      %2855 = vmatprep.subr.bf16.mxu0 0
      %2856 = vmatpush2.bf16.msra.mxu0 0
      %2857 = vmatprep.subr.bf16.mxu0 0
      %2858 = vmatpush2.bf16.msra.mxu0 0
      %2859 = vmatprep.subr.bf16.mxu0 0
      %2860 = vmatpush2.bf16.msra.mxu0 0
      %2861 = vmatprep.subr.bf16.mxu0 0
      %2862 = vmatpush2.bf16.msra.mxu0 0
      %2863 = vmatprep.subr.bf16.mxu0 0
      %2864 = vmatpush2.bf16.msra.mxu0 0
      %2865 = vmatprep.subr.bf16.mxu0 0
      %2866 = vmatpush2.bf16.msra.mxu0 0
      %2867 = vmatprep.subr.bf16.mxu0 0
      %2868 = vmatpush2.bf16.msra.mxu0 0
      %2869 = vmatprep.mubr.bf16.mxu0 0
      %2870 = vmatmul.mubr.bf16.gmra.mxu0 %v2835
      %v2871 = vpop.f32.mrf.mxu0
      %v2872 = vadd.f32 0.0, %v2871
      %v2873 = vpop.f32.mrf.mxu0
      %v2874 = vpop.f32.mrf.mxu0
      %v2875 = vadd.f32 0.0, %v2874
      %v2876 = vpop.f32.mrf.mxu0
      %2877 = vdwg.mxu0
      %2878 = vrot.lane.b32.xlu0 %v735, 40
      %v2879 = vpop.permute.xlu0 %2878
      %v2882 = vsel %vm946, %v2782, 0
      %2884 = vmatprep.subr.bf16.mxu0 0
      %2885 = vmatpush1.bf16.msra.mxu0 0
      %2886 = vmatprep.subr.bf16.mxu0 0
      %2887 = vmatpush1.bf16.msra.mxu0 0
      %2888 = vmatprep.subr.bf16.mxu0 0
      %2889 = vmatpush1.bf16.msra.mxu0 0
      %2890 = vmatprep.subr.bf16.mxu0 0
      %2891 = vmatpush1.bf16.msra.mxu0 0
      %2892 = vmatprep.subr.bf16.mxu0 0
      %2893 = vmatpush1.bf16.msra.mxu0 0
      %2894 = vmatprep.subr.bf16.mxu0 0
      %2895 = vmatpush1.bf16.msra.mxu0 0
      %2896 = vmatprep.subr.bf16.mxu0 0
      %2897 = vmatpush1.bf16.msra.mxu0 0
      %2898 = vmatprep.subr.bf16.mxu0 0
      %2899 = vmatpush1.bf16.msra.mxu0 %v2879
      %2900 = vmatprep.subr.bf16.mxu0 0
      %2901 = vmatpush2.bf16.msra.mxu0 0
      %2902 = vmatprep.subr.bf16.mxu0 0
      %2903 = vmatpush2.bf16.msra.mxu0 0
      %2904 = vmatprep.subr.bf16.mxu0 0
      %2905 = vmatpush2.bf16.msra.mxu0 0
      %2906 = vmatprep.subr.bf16.mxu0 0
      %2907 = vmatpush2.bf16.msra.mxu0 0
      %2908 = vmatprep.subr.bf16.mxu0 0
      %2909 = vmatpush2.bf16.msra.mxu0 0
      %2910 = vmatprep.subr.bf16.mxu0 0
      %2911 = vmatpush2.bf16.msra.mxu0 0
      %2912 = vmatprep.subr.bf16.mxu0 0
      %2913 = vmatpush2.bf16.msra.mxu0 0
      %2914 = vmatprep.subr.bf16.mxu0 0
      %2915 = vmatpush2.bf16.msra.mxu0 0
      %2916 = vmatprep.mubr.bf16.mxu0 0
      %2917 = vmatmul.mubr.bf16.gmra.mxu0 %v2882
      %v2918 = vpop.f32.mrf.mxu0
      %v2919 = vadd.f32 0.0, %v2918
      %v2920 = vpop.f32.mrf.mxu0
      %v2921 = vpop.f32.mrf.mxu0
      %v2922 = vadd.f32 0.0, %v2921
      %v2923 = vpop.f32.mrf.mxu0
      %2924 = vdwg.mxu0
      %2925 = vrot.lane.b32.xlu0 %v736, 40
      %v2926 = vpop.permute.xlu0 %2925
      %v2929 = vsel %vm946, %v2783, 0
      %2931 = vmatprep.subr.bf16.mxu0 0
      %2932 = vmatpush1.bf16.msra.mxu0 0
      %2933 = vmatprep.subr.bf16.mxu0 0
      %2934 = vmatpush1.bf16.msra.mxu0 0
      %2935 = vmatprep.subr.bf16.mxu0 0
      %2936 = vmatpush1.bf16.msra.mxu0 0
      %2937 = vmatprep.subr.bf16.mxu0 0
      %2938 = vmatpush1.bf16.msra.mxu0 0
      %2939 = vmatprep.subr.bf16.mxu0 0
      %2940 = vmatpush1.bf16.msra.mxu0 0
      %2941 = vmatprep.subr.bf16.mxu0 0
      %2942 = vmatpush1.bf16.msra.mxu0 0
      %2943 = vmatprep.subr.bf16.mxu0 0
      %2944 = vmatpush1.bf16.msra.mxu0 0
      %2945 = vmatprep.subr.bf16.mxu0 0
      %2946 = vmatpush1.bf16.msra.mxu0 %v2926
      %2947 = vmatprep.subr.bf16.mxu0 0
      %2948 = vmatpush2.bf16.msra.mxu0 0
      %2949 = vmatprep.subr.bf16.mxu0 0
      %2950 = vmatpush2.bf16.msra.mxu0 0
      %2951 = vmatprep.subr.bf16.mxu0 0
      %2952 = vmatpush2.bf16.msra.mxu0 0
      %2953 = vmatprep.subr.bf16.mxu0 0
      %2954 = vmatpush2.bf16.msra.mxu0 0
      %2955 = vmatprep.subr.bf16.mxu0 0
      %2956 = vmatpush2.bf16.msra.mxu0 0
      %2957 = vmatprep.subr.bf16.mxu0 0
      %2958 = vmatpush2.bf16.msra.mxu0 0
      %2959 = vmatprep.subr.bf16.mxu0 0
      %2960 = vmatpush2.bf16.msra.mxu0 0
      %2961 = vmatprep.subr.bf16.mxu0 0
      %2962 = vmatpush2.bf16.msra.mxu0 0
      %2963 = vmatprep.mubr.bf16.mxu0 0
      %2964 = vmatmul.mubr.bf16.gmra.mxu0 %v2929
      %v2965 = vpop.f32.mrf.mxu0
      %v2966 = vadd.f32 0.0, %v2965
      %v2967 = vpop.f32.mrf.mxu0
      %v2968 = vpop.f32.mrf.mxu0
      %v2969 = vadd.f32 0.0, %v2968
      %v2970 = vpop.f32.mrf.mxu0
      %2971 = vdwg.mxu0
      %v2972 = vpack.c.bf16 %v2828, %v2825
      %v2973 = vpack.c.bf16 %v2875, %v2872
      %v2974 = vpack.c.bf16 %v2922, %v2919
      %v2975 = vpack.c.bf16 %v2969, %v2966
      %s2976 = scalar_lea.vmem %s5, 12
      %v2977 = vld [vmem:[%s2976] sm:$0xf]
      %v2979 = vsel %vm748, %v2972, 0
      %v2982 = vsel %vm748, %v2973, 0
      %v2985 = vsel %vm748, %v2974, 0
      %v2988 = vsel %vm748, %v2975, 0
      %v2991 = vsel %vm1743, %v2977, 0
      %2993 = vmatprep.subr.bf16.mxu0 0
      %2994 = vmatpush1.bf16.msra.mxu0 0
      %2995 = vmatprep.subr.bf16.mxu0 0
      %2996 = vmatpush1.bf16.msra.mxu0 0
      %2997 = vmatprep.subr.bf16.mxu0 0
      %2998 = vmatpush1.bf16.msra.mxu0 0
      %2999 = vmatprep.subr.bf16.mxu0 0
      %3000 = vmatpush1.bf16.msra.mxu0 0
      %3001 = vmatprep.subr.bf16.mxu0 0
      %3002 = vmatpush1.bf16.msra.mxu0 0
      %3003 = vmatprep.subr.bf16.mxu0 0
      %3004 = vmatpush1.bf16.msra.mxu0 0
      %3005 = vmatprep.subr.bf16.mxu0 0
      %3006 = vmatpush1.bf16.msra.mxu0 0
      %3007 = vmatprep.subr.bf16.mxu0 0
      %3008 = vmatpush1.bf16.msra.mxu0 %v2991
      %3009 = vmatprep.subr.bf16.mxu0 0
      %3010 = vmatpush2.bf16.msra.mxu0 0
      %3011 = vmatprep.subr.bf16.mxu0 0
      %3012 = vmatpush2.bf16.msra.mxu0 0
      %3013 = vmatprep.subr.bf16.mxu0 0
      %3014 = vmatpush2.bf16.msra.mxu0 0
      %3015 = vmatprep.subr.bf16.mxu0 0
      %3016 = vmatpush2.bf16.msra.mxu0 0
      %3017 = vmatprep.subr.bf16.mxu0 0
      %3018 = vmatpush2.bf16.msra.mxu0 0
      %3019 = vmatprep.subr.bf16.mxu0 0
      %3020 = vmatpush2.bf16.msra.mxu0 0
      %3021 = vmatprep.subr.bf16.mxu0 0
      %3022 = vmatpush2.bf16.msra.mxu0 0
      %3023 = vmatprep.subr.bf16.mxu0 0
      %3024 = vmatpush2.bf16.msra.mxu0 0
      %3025 = vmatprep.mubr.bf16.mxu0 0
      %3026 = vmatmul.mubr.bf16.gmra.mxu0 %v2979
      %v3027 = vpop.f32.mrf.mxu0
      %v3028 = vadd.f32 0.0, %v3027
      %v3029 = vpop.f32.mrf.mxu0
      %v3030 = vpop.f32.mrf.mxu0
      %v3031 = vadd.f32 0.0, %v3030
      %v3032 = vpop.f32.mrf.mxu0
      %3033 = vmatprep.mubr.bf16.mxu0 0
      %3034 = vmatmul.mubr.bf16.gmra.mxu0 %v2982
      %v3035 = vpop.f32.mrf.mxu0
      %v3036 = vadd.f32 0.0, %v3035
      %v3037 = vpop.f32.mrf.mxu0
      %v3038 = vpop.f32.mrf.mxu0
      %v3039 = vadd.f32 0.0, %v3038
      %v3040 = vpop.f32.mrf.mxu0
      %3041 = vmatprep.mubr.bf16.mxu0 0
      %3042 = vmatmul.mubr.bf16.gmra.mxu0 %v2985
      %v3043 = vpop.f32.mrf.mxu0
      %v3044 = vadd.f32 0.0, %v3043
      %v3045 = vpop.f32.mrf.mxu0
      %v3046 = vpop.f32.mrf.mxu0
      %v3047 = vadd.f32 0.0, %v3046
      %v3048 = vpop.f32.mrf.mxu0
      %3049 = vmatprep.mubr.bf16.mxu0 0
      %3050 = vmatmul.mubr.bf16.gmra.mxu0 %v2988
      %v3051 = vpop.f32.mrf.mxu0
      %v3052 = vadd.f32 0.0, %v3051
      %v3053 = vpop.f32.mrf.mxu0
      %v3054 = vpop.f32.mrf.mxu0
      %v3055 = vadd.f32 0.0, %v3054
      %v3056 = vpop.f32.mrf.mxu0
      %3057 = vdwg.mxu0
      %v3058 = vadd.f32 %v2471, %v3028
      %v3059 = vadd.f32 %v2472, %v3031
      %v3060 = vadd.f32 %v2473, %v3036
      %v3061 = vadd.f32 %v2474, %v3039
      %v3062 = vadd.f32 %v2475, %v3044
      %v3063 = vadd.f32 %v2476, %v3047
      %v3064 = vadd.f32 %v2477, %v3052
      %v3065 = vadd.f32 %v2478, %v3055
      %v3066 = vadd.f32 %v469, %v3058
      %v3067 = vadd.f32 %v470, %v3059
      %v3068 = vadd.f32 %v471, %v3060
      %v3069 = vadd.f32 %v472, %v3061
      %v3070 = vadd.f32 %v473, %v3062
      %v3071 = vadd.f32 %v474, %v3063
      %v3072 = vadd.f32 %v475, %v3064
      %v3073 = vadd.f32 %v476, %v3065
      %v3074 = vld [vmem:[%s6] sm:$0x1]
      %v3076 = vlaneseq
      %v3077 = vshrl.u32 %v3076, 7
      %v3078 = vsub.s32 0, %v3077
      %v3079 = vrot.slane %v3074, %v3078
      %v3081 = vadd.f32 %v3066, %v3079
      %v3082 = vadd.f32 %v3067, %v3079
      %v3083 = vadd.f32 %v3068, %v3079
      %v3084 = vadd.f32 %v3069, %v3079
      %v3085 = vadd.f32 %v3070, %v3079
      %v3086 = vadd.f32 %v3071, %v3079
      %v3087 = vadd.f32 %v3072, %v3079
      %v3088 = vadd.f32 %v3073, %v3079
      %v3089 = vsel %vm477, %v3081, 0.0
      %3090 = vadd.xlane.f32.xlu0 %v3089
      %v3091 = vpop.xlane.xlu0 %3090
      %v3092 = vsel %vm477, %v3082, 0.0
      %3093 = vadd.xlane.f32.xlu0 %v3092
      %v3094 = vpop.xlane.xlu0 %3093
      %v3095 = vsel %vm477, %v3083, 0.0
      %3096 = vadd.xlane.f32.xlu0 %v3095
      %v3097 = vpop.xlane.xlu0 %3096
      %v3098 = vsel %vm477, %v3084, 0.0
      %3099 = vadd.xlane.f32.xlu0 %v3098
      %v3100 = vpop.xlane.xlu0 %3099
      %v3101 = vsel %vm477, %v3085, 0.0
      %3102 = vadd.xlane.f32.xlu0 %v3101
      %v3103 = vpop.xlane.xlu0 %3102
      %v3104 = vsel %vm477, %v3086, 0.0
      %3105 = vadd.xlane.f32.xlu0 %v3104
      %v3106 = vpop.xlane.xlu0 %3105
      %v3107 = vsel %vm477, %v3087, 0.0
      %3108 = vadd.xlane.f32.xlu0 %v3107
      %v3109 = vpop.xlane.xlu0 %3108
      %v3110 = vsel %vm477, %v3088, 0.0
      %3111 = vadd.xlane.f32.xlu0 %v3110
      %v3112 = vpop.xlane.xlu0 %3111
      %v3113 = vmul.f32 %v3091, %v502
      %v3114 = vmul.f32 %v3094, %v502
      %v3115 = vmul.f32 %v3097, %v502
      %v3116 = vmul.f32 %v3100, %v502
      %v3117 = vmul.f32 %v3103, %v502
      %v3118 = vmul.f32 %v3106, %v502
      %v3119 = vmul.f32 %v3109, %v502
      %v3120 = vmul.f32 %v3112, %v502
      %v3121 = vmul.f32 %v3081, %v3081
      %v3122 = vmul.f32 %v3082, %v3082
      %v3123 = vmul.f32 %v3083, %v3083
      %v3124 = vmul.f32 %v3084, %v3084
      %v3125 = vmul.f32 %v3085, %v3085
      %v3126 = vmul.f32 %v3086, %v3086
      %v3127 = vmul.f32 %v3087, %v3087
      %v3128 = vmul.f32 %v3088, %v3088
      %v3129 = vsel %vm477, %v3121, 0.0
      %3130 = vadd.xlane.f32.xlu0 %v3129
      %v3131 = vpop.xlane.xlu0 %3130
      %v3132 = vsel %vm477, %v3122, 0.0
      %3133 = vadd.xlane.f32.xlu0 %v3132
      %v3134 = vpop.xlane.xlu0 %3133
      %v3135 = vsel %vm477, %v3123, 0.0
      %3136 = vadd.xlane.f32.xlu0 %v3135
      %v3137 = vpop.xlane.xlu0 %3136
      %v3138 = vsel %vm477, %v3124, 0.0
      %3139 = vadd.xlane.f32.xlu0 %v3138
      %v3140 = vpop.xlane.xlu0 %3139
      %v3141 = vsel %vm477, %v3125, 0.0
      %3142 = vadd.xlane.f32.xlu0 %v3141
      %v3143 = vpop.xlane.xlu0 %3142
      %v3144 = vsel %vm477, %v3126, 0.0
      %3145 = vadd.xlane.f32.xlu0 %v3144
      %v3146 = vpop.xlane.xlu0 %3145
      %v3147 = vsel %vm477, %v3127, 0.0
      %3148 = vadd.xlane.f32.xlu0 %v3147
      %v3149 = vpop.xlane.xlu0 %3148
      %v3150 = vsel %vm477, %v3128, 0.0
      %3151 = vadd.xlane.f32.xlu0 %v3150
      %v3152 = vpop.xlane.xlu0 %3151
      %v3153 = vmul.f32 %v3131, %v502
      %v3154 = vmul.f32 %v3134, %v502
      %v3155 = vmul.f32 %v3137, %v502
      %v3156 = vmul.f32 %v3140, %v502
      %v3157 = vmul.f32 %v3143, %v502
      %v3158 = vmul.f32 %v3146, %v502
      %v3159 = vmul.f32 %v3149, %v502
      %v3160 = vmul.f32 %v3152, %v502
      %v3161 = vmul.f32 %v3113, %v3113
      %v3162 = vmul.f32 %v3114, %v3114
      %v3163 = vmul.f32 %v3115, %v3115
      %v3164 = vmul.f32 %v3116, %v3116
      %v3165 = vmul.f32 %v3117, %v3117
      %v3166 = vmul.f32 %v3118, %v3118
      %v3167 = vmul.f32 %v3119, %v3119
      %v3168 = vmul.f32 %v3120, %v3120
      %v3169 = vsub.f32 %v3153, %v3161
      %v3170 = vsub.f32 %v3154, %v3162
      %v3171 = vsub.f32 %v3155, %v3163
      %v3172 = vsub.f32 %v3156, %v3164
      %v3173 = vsub.f32 %v3157, %v3165
      %v3174 = vsub.f32 %v3158, %v3166
      %v3175 = vsub.f32 %v3159, %v3167
      %v3176 = vsub.f32 %v3160, %v3168
      %v3177 = vsub.f32 %v3081, %v3113
      %v3178 = vsub.f32 %v3082, %v3114
      %v3179 = vsub.f32 %v3083, %v3115
      %v3180 = vsub.f32 %v3084, %v3116
      %v3181 = vsub.f32 %v3085, %v3117
      %v3182 = vsub.f32 %v3086, %v3118
      %v3183 = vsub.f32 %v3087, %v3119
      %v3184 = vsub.f32 %v3088, %v3120
      %v3185 = vadd.f32 %v3169, 1e-05
      %v3186 = vadd.f32 %v3170, 1e-05
      %v3187 = vadd.f32 %v3171, 1e-05
      %v3188 = vadd.f32 %v3172, 1e-05
      %v3189 = vadd.f32 %v3173, 1e-05
      %v3190 = vadd.f32 %v3174, 1e-05
      %v3191 = vadd.f32 %v3175, 1e-05
      %v3192 = vadd.f32 %v3176, 1e-05
      %v3193 = vrsqrt.pop %v3185
      %v3194 = vrsqrt.pop %v3186
      %v3195 = vrsqrt.pop %v3187
      %v3196 = vrsqrt.pop %v3188
      %v3197 = vrsqrt.pop %v3189
      %v3198 = vrsqrt.pop %v3190
      %v3199 = vrsqrt.pop %v3191
      %v3200 = vrsqrt.pop %v3192
      %v3201 = vmul.f32 %v3177, %v3193
      %v3202 = vmul.f32 %v3178, %v3194
      %v3203 = vmul.f32 %v3179, %v3195
      %v3204 = vmul.f32 %v3180, %v3196
      %v3205 = vmul.f32 %v3181, %v3197
      %v3206 = vmul.f32 %v3182, %v3198
      %v3207 = vmul.f32 %v3183, %v3199
      %v3208 = vmul.f32 %v3184, %v3200
      %v3209 = vld [vmem:[%s8] sm:$0x1]
      %v3211 = vlaneseq
      %v3212 = vshrl.u32 %v3211, 7
      %v3213 = vsub.s32 0, %v3212
      %v3214 = vrot.slane %v3209, %v3213
      %v3216 = vmul.f32 %v3201, %v3214
      %v3217 = vmul.f32 %v3202, %v3214
      %v3218 = vmul.f32 %v3203, %v3214
      %v3219 = vmul.f32 %v3204, %v3214
      %v3220 = vmul.f32 %v3205, %v3214
      %v3221 = vmul.f32 %v3206, %v3214
      %v3222 = vmul.f32 %v3207, %v3214
      %v3223 = vmul.f32 %v3208, %v3214
      %v3224 = vld [vmem:[%s9] sm:$0x1]
      %v3226 = vlaneseq
      %v3227 = vshrl.u32 %v3226, 7
      %v3228 = vsub.s32 0, %v3227
      %v3229 = vrot.slane %v3224, %v3228
      %v3231 = vadd.f32 %v3216, %v3229
      %v3232 = vadd.f32 %v3217, %v3229
      %v3233 = vadd.f32 %v3218, %v3229
      %v3234 = vadd.f32 %v3219, %v3229
      %v3235 = vadd.f32 %v3220, %v3229
      %v3236 = vadd.f32 %v3221, %v3229
      %v3237 = vadd.f32 %v3222, %v3229
      %v3238 = vadd.f32 %v3223, %v3229
      %v3239 = vpack.c.bf16 %v3232, %v3231
      %v3240 = vpack.c.bf16 %v3234, %v3233
      %v3241 = vpack.c.bf16 %v3236, %v3235
      %v3242 = vpack.c.bf16 %v3238, %v3237
      %v3243 = vld [vmem:[%s10] sm:$0xf]
      %v3244 = vld [vmem:[%s10 + $0x4] sm:$0xf]
      %v3245 = vld [vmem:[%s10 + $0x8] sm:$0xf]
      %v3246 = vld [vmem:[%s10 + $0xc] sm:$0xf]
      %v3247 = vld [vmem:[%s11] sm:$0x1]
      %v3249 = vlaneseq
      %v3250 = vshrl.u32 %v3249, 7
      %v3251 = vsub.s32 0, %v3250
      %v3252 = vrot.slane %v3247, %v3251
      %v3258 = vunpack.c.l.b16 %v3243
      %v3259 = vunpack.c.l.b16 %v3244
      %v3260 = vunpack.c.l.b16 %v3245
      %v3261 = vunpack.c.l.b16 %v3246
      %v3262 = vpack.c.b16 %v3259, %v3258
      %v3263 = vpack.c.b16 %v3261, %v3260
      %v3267 = vsel %vm477, %v3239, 0
      %v3270 = vsel %vm477, %v3240, 0
      %v3273 = vsel %vm477, %v3241, 0
      %v3276 = vsel %vm477, %v3242, 0
      %3278 = vmatprep.subr.bf16.mxu0 0
      %3279 = vmatpush1.bf16.msra.mxu0 0
      %3280 = vmatprep.subr.bf16.mxu0 0
      %3281 = vmatpush1.bf16.msra.mxu0 0
      %3282 = vmatprep.subr.bf16.mxu0 0
      %3283 = vmatpush1.bf16.msra.mxu0 0
      %3284 = vmatprep.subr.bf16.mxu0 0
      %3285 = vmatpush1.bf16.msra.mxu0 0
      %3286 = vmatprep.subr.bf16.mxu0 0
      %3287 = vmatpush1.bf16.msra.mxu0 0
      %3288 = vmatprep.subr.bf16.mxu0 0
      %3289 = vmatpush1.bf16.msra.mxu0 0
      %3290 = vmatprep.subr.bf16.mxu0 0
      %3291 = vmatpush1.bf16.msra.mxu0 %v3263
      %3292 = vmatprep.subr.bf16.mxu0 0
      %3293 = vmatpush1.bf16.msra.mxu0 %v3262
      %3294 = vmatprep.subr.bf16.mxu0 0
      %3295 = vmatpush2.bf16.msra.mxu0 0
      %3296 = vmatprep.subr.bf16.mxu0 0
      %3297 = vmatpush2.bf16.msra.mxu0 0
      %3298 = vmatprep.subr.bf16.mxu0 0
      %3299 = vmatpush2.bf16.msra.mxu0 0
      %3300 = vmatprep.subr.bf16.mxu0 0
      %3301 = vmatpush2.bf16.msra.mxu0 0
      %3302 = vmatprep.subr.bf16.mxu0 0
      %3303 = vmatpush2.bf16.msra.mxu0 0
      %3304 = vmatprep.subr.bf16.mxu0 0
      %3305 = vmatpush2.bf16.msra.mxu0 0
      %3306 = vmatprep.subr.bf16.mxu0 0
      %3307 = vmatpush2.bf16.msra.mxu0 0
      %3308 = vmatprep.subr.bf16.mxu0 0
      %3309 = vmatpush2.bf16.msra.mxu0 0
      %3310 = vmatprep.mubr.bf16.mxu0 0
      %3311 = vmatmul.mubr.bf16.gmra.mxu0 %v3267
      %v3312 = vpop.f32.mrf.mxu0
      %v3313 = vadd.f32 %v3252, %v3312
      %v3314 = vpop.f32.mrf.mxu0
      %v3315 = vpop.f32.mrf.mxu0
      %v3316 = vadd.f32 %v3252, %v3315
      %v3317 = vpop.f32.mrf.mxu0
      %3318 = vmatprep.mubr.bf16.mxu0 0
      %3319 = vmatmul.mubr.bf16.gmra.mxu0 %v3270
      %v3320 = vpop.f32.mrf.mxu0
      %v3321 = vadd.f32 %v3252, %v3320
      %v3322 = vpop.f32.mrf.mxu0
      %v3323 = vpop.f32.mrf.mxu0
      %v3324 = vadd.f32 %v3252, %v3323
      %v3325 = vpop.f32.mrf.mxu0
      %3326 = vmatprep.mubr.bf16.mxu0 0
      %3327 = vmatmul.mubr.bf16.gmra.mxu0 %v3273
      %v3328 = vpop.f32.mrf.mxu0
      %v3329 = vadd.f32 %v3252, %v3328
      %v3330 = vpop.f32.mrf.mxu0
      %v3331 = vpop.f32.mrf.mxu0
      %v3332 = vadd.f32 %v3252, %v3331
      %v3333 = vpop.f32.mrf.mxu0
      %3334 = vmatprep.mubr.bf16.mxu0 0
      %3335 = vmatmul.mubr.bf16.gmra.mxu0 %v3276
      %v3336 = vpop.f32.mrf.mxu0
      %v3337 = vadd.f32 %v3252, %v3336
      %v3338 = vpop.f32.mrf.mxu0
      %v3339 = vpop.f32.mrf.mxu0
      %v3340 = vadd.f32 %v3252, %v3339
      %v3341 = vpop.f32.mrf.mxu0
      %3342 = vdwg.mxu0
      %v3343 = vmul.f32 %v3313, %v3313
      %v3344 = vmul.f32 %v3316, %v3316
      %v3345 = vmul.f32 %v3321, %v3321
      %v3346 = vmul.f32 %v3324, %v3324
      %v3347 = vmul.f32 %v3329, %v3329
      %v3348 = vmul.f32 %v3332, %v3332
      %v3349 = vmul.f32 %v3337, %v3337
      %v3350 = vmul.f32 %v3340, %v3340
      %v3351 = vmul.f32 %v3313, %v3343
      %v3352 = vmul.f32 %v3316, %v3344
      %v3353 = vmul.f32 %v3321, %v3345
      %v3354 = vmul.f32 %v3324, %v3346
      %v3355 = vmul.f32 %v3329, %v3347
      %v3356 = vmul.f32 %v3332, %v3348
      %v3357 = vmul.f32 %v3337, %v3349
      %v3358 = vmul.f32 %v3340, %v3350
      %v3359 = vmul.f32 %v3351, 0.044715
      %v3360 = vmul.f32 %v3352, 0.044715
      %v3361 = vmul.f32 %v3353, 0.044715
      %v3362 = vmul.f32 %v3354, 0.044715
      %v3363 = vmul.f32 %v3355, 0.044715
      %v3364 = vmul.f32 %v3356, 0.044715
      %v3365 = vmul.f32 %v3357, 0.044715
      %v3366 = vmul.f32 %v3358, 0.044715
      %v3367 = vadd.f32 %v3313, %v3359
      %v3368 = vadd.f32 %v3316, %v3360
      %v3369 = vadd.f32 %v3321, %v3361
      %v3370 = vadd.f32 %v3324, %v3362
      %v3371 = vadd.f32 %v3329, %v3363
      %v3372 = vadd.f32 %v3332, %v3364
      %v3373 = vadd.f32 %v3337, %v3365
      %v3374 = vadd.f32 %v3340, %v3366
      %v3375 = vmul.f32 %v3367, 0.7978846
      %v3376 = vmul.f32 %v3368, 0.7978846
      %v3377 = vmul.f32 %v3369, 0.7978846
      %v3378 = vmul.f32 %v3370, 0.7978846
      %v3379 = vmul.f32 %v3371, 0.7978846
      %v3380 = vmul.f32 %v3372, 0.7978846
      %v3381 = vmul.f32 %v3373, 0.7978846
      %v3382 = vmul.f32 %v3374, 0.7978846
      %v3383 = vtanh.pop %v3375
      %v3384 = vtanh.pop %v3376
      %v3385 = vtanh.pop %v3377
      %v3386 = vtanh.pop %v3378
      %v3387 = vtanh.pop %v3379
      %v3388 = vtanh.pop %v3380
      %v3389 = vtanh.pop %v3381
      %v3390 = vtanh.pop %v3382
      %v3391 = vadd.f32 %v3383, 1.0
      %v3392 = vadd.f32 %v3384, 1.0
      %v3393 = vadd.f32 %v3385, 1.0
      %v3394 = vadd.f32 %v3386, 1.0
      %v3395 = vadd.f32 %v3387, 1.0
      %v3396 = vadd.f32 %v3388, 1.0
      %v3397 = vadd.f32 %v3389, 1.0
      %v3398 = vadd.f32 %v3390, 1.0
      %v3399 = vmul.f32 %v3391, 0.5
      %v3400 = vmul.f32 %v3392, 0.5
      %v3401 = vmul.f32 %v3393, 0.5
      %v3402 = vmul.f32 %v3394, 0.5
      %v3403 = vmul.f32 %v3395, 0.5
      %v3404 = vmul.f32 %v3396, 0.5
      %v3405 = vmul.f32 %v3397, 0.5
      %v3406 = vmul.f32 %v3398, 0.5
      %v3407 = vmul.f32 %v3313, %v3399
      %v3408 = vmul.f32 %v3316, %v3400
      %v3409 = vmul.f32 %v3321, %v3401
      %v3410 = vmul.f32 %v3324, %v3402
      %v3411 = vmul.f32 %v3329, %v3403
      %v3412 = vmul.f32 %v3332, %v3404
      %v3413 = vmul.f32 %v3337, %v3405
      %v3414 = vmul.f32 %v3340, %v3406
      %v3415 = vpack.c.bf16 %v3408, %v3407
      %v3416 = vpack.c.bf16 %v3410, %v3409
      %v3417 = vpack.c.bf16 %v3412, %v3411
      %v3418 = vpack.c.bf16 %v3414, %v3413
      %v3419 = vld [vmem:[%s12] sm:$0xf]
      %v3420 = vld [vmem:[%s12 + $0x4] sm:$0xf]
      %v3421 = vld [vmem:[%s12 + $0x8] sm:$0xf]
      %v3422 = vld [vmem:[%s12 + $0xc] sm:$0xf]
      %v3423 = vld [vmem:[%s12 + $0x10] sm:$0xf]
      %v3424 = vld [vmem:[%s12 + $0x14] sm:$0xf]
      %v3425 = vld [vmem:[%s12 + $0x18] sm:$0xf]
      %v3426 = vld [vmem:[%s12 + $0x1c] sm:$0xf]
      %v3427 = vld [vmem:[%s12 + $0x20] sm:$0xf]
      %v3428 = vld [vmem:[%s12 + $0x24] sm:$0xf]
      %v3429 = vld [vmem:[%s12 + $0x28] sm:$0xf]
      %v3430 = vld [vmem:[%s12 + $0x2c] sm:$0xf]
      %v3431 = vld [vmem:[%s12 + $0x30] sm:$0xf]
      %v3432 = vld [vmem:[%s12 + $0x34] sm:$0xf]
      %v3433 = vld [vmem:[%s12 + $0x38] sm:$0xf]
      %v3434 = vld [vmem:[%s12 + $0x3c] sm:$0xf]
      %v3435 = vld [vmem:[%s13] sm:$0x1]
      %v3437 = vlaneseq
      %v3438 = vshrl.u32 %v3437, 7
      %v3439 = vsub.s32 0, %v3438
      %v3440 = vrot.slane %v3435, %v3439
      %v3458 = vunpack.c.l.b16 %v3419
      %v3459 = vunpack.c.l.b16 %v3420
      %v3460 = vunpack.c.l.b16 %v3421
      %v3461 = vunpack.c.l.b16 %v3422
      %v3462 = vunpack.c.l.b16 %v3423
      %v3463 = vunpack.c.l.b16 %v3424
      %v3464 = vunpack.c.l.b16 %v3425
      %v3465 = vunpack.c.l.b16 %v3426
      %v3466 = vunpack.c.l.b16 %v3427
      %v3467 = vunpack.c.l.b16 %v3428
      %v3468 = vunpack.c.l.b16 %v3429
      %v3469 = vunpack.c.l.b16 %v3430
      %v3470 = vunpack.c.l.b16 %v3431
      %v3471 = vunpack.c.l.b16 %v3432
      %v3472 = vunpack.c.l.b16 %v3433
      %v3473 = vunpack.c.l.b16 %v3434
      %v3474 = vpack.c.b16 %v3459, %v3458
      %v3475 = vpack.c.b16 %v3461, %v3460
      %v3476 = vpack.c.b16 %v3463, %v3462
      %v3477 = vpack.c.b16 %v3465, %v3464
      %v3478 = vpack.c.b16 %v3467, %v3466
      %v3479 = vpack.c.b16 %v3469, %v3468
      %v3480 = vpack.c.b16 %v3471, %v3470
      %v3481 = vpack.c.b16 %v3473, %v3472
      %3490 = vmatprep.subr.bf16.mxu0 0
      %3491 = vmatpush1.bf16.msra.mxu0 %v3481
      %3492 = vmatprep.subr.bf16.mxu0 0
      %3493 = vmatpush1.bf16.msra.mxu0 %v3480
      %3494 = vmatprep.subr.bf16.mxu0 0
      %3495 = vmatpush1.bf16.msra.mxu0 %v3479
      %3496 = vmatprep.subr.bf16.mxu0 0
      %3497 = vmatpush1.bf16.msra.mxu0 %v3478
      %3498 = vmatprep.subr.bf16.mxu0 0
      %3499 = vmatpush1.bf16.msra.mxu0 %v3477
      %3500 = vmatprep.subr.bf16.mxu0 0
      %3501 = vmatpush1.bf16.msra.mxu0 %v3476
      %3502 = vmatprep.subr.bf16.mxu0 0
      %3503 = vmatpush1.bf16.msra.mxu0 %v3475
      %3504 = vmatprep.subr.bf16.mxu0 0
      %3505 = vmatpush1.bf16.msra.mxu0 %v3474
      %3506 = vmatprep.subr.bf16.mxu0 0
      %3507 = vmatpush2.bf16.msra.mxu0 0
      %3508 = vmatprep.subr.bf16.mxu0 0
      %3509 = vmatpush2.bf16.msra.mxu0 0
      %3510 = vmatprep.subr.bf16.mxu0 0
      %3511 = vmatpush2.bf16.msra.mxu0 0
      %3512 = vmatprep.subr.bf16.mxu0 0
      %3513 = vmatpush2.bf16.msra.mxu0 0
      %3514 = vmatprep.subr.bf16.mxu0 0
      %3515 = vmatpush2.bf16.msra.mxu0 0
      %3516 = vmatprep.subr.bf16.mxu0 0
      %3517 = vmatpush2.bf16.msra.mxu0 0
      %3518 = vmatprep.subr.bf16.mxu0 0
      %3519 = vmatpush2.bf16.msra.mxu0 0
      %3520 = vmatprep.subr.bf16.mxu0 0
      %3521 = vmatpush2.bf16.msra.mxu0 0
      %3522 = vmatprep.mubr.bf16.mxu0 0
      %3523 = vmatmul.mubr.bf16.gmra.mxu0 %v3415
      %v3524 = vpop.f32.mrf.mxu0
      %v3525 = vadd.f32 %v3440, %v3524
      %v3526 = vpop.f32.mrf.mxu0
      %v3527 = vpop.f32.mrf.mxu0
      %v3528 = vadd.f32 %v3440, %v3527
      %v3529 = vpop.f32.mrf.mxu0
      %3530 = vmatprep.mubr.bf16.mxu0 0
      %3531 = vmatmul.mubr.bf16.gmra.mxu0 %v3416
      %v3532 = vpop.f32.mrf.mxu0
      %v3533 = vadd.f32 %v3440, %v3532
      %v3534 = vpop.f32.mrf.mxu0
      %v3535 = vpop.f32.mrf.mxu0
      %v3536 = vadd.f32 %v3440, %v3535
      %v3537 = vpop.f32.mrf.mxu0
      %3538 = vmatprep.mubr.bf16.mxu0 0
      %3539 = vmatmul.mubr.bf16.gmra.mxu0 %v3417
      %v3540 = vpop.f32.mrf.mxu0
      %v3541 = vadd.f32 %v3440, %v3540
      %v3542 = vpop.f32.mrf.mxu0
      %v3543 = vpop.f32.mrf.mxu0
      %v3544 = vadd.f32 %v3440, %v3543
      %v3545 = vpop.f32.mrf.mxu0
      %3546 = vmatprep.mubr.bf16.mxu0 0
      %3547 = vmatmul.mubr.bf16.gmra.mxu0 %v3418
      %v3548 = vpop.f32.mrf.mxu0
      %v3549 = vadd.f32 %v3440, %v3548
      %v3550 = vpop.f32.mrf.mxu0
      %v3551 = vpop.f32.mrf.mxu0
      %v3552 = vadd.f32 %v3440, %v3551
      %v3553 = vpop.f32.mrf.mxu0
      %3554 = vdwg.mxu0
      %v3555 = vadd.f32 %v3081, %v3525
      %v3556 = vadd.f32 %v3082, %v3528
      %v3557 = vadd.f32 %v3083, %v3533
      %v3558 = vadd.f32 %v3084, %v3536
      %v3559 = vadd.f32 %v3085, %v3541
      %v3560 = vadd.f32 %v3086, %v3544
      %v3561 = vadd.f32 %v3087, %v3549
      %v3562 = vadd.f32 %v3088, %v3552
      %3563 = vst.msk [vmem:[%s467] sm:$0xff] %vm477, %v3555
      %3564 = vst.msk [vmem:[%s467 + $0x8] sm:$0xff] %vm477, %v3556
      %3565 = vst.msk [vmem:[%s467 + $0x10] sm:$0xff] %vm477, %v3557
      %3566 = vst.msk [vmem:[%s467 + $0x18] sm:$0xff] %vm477, %v3558
      %3567 = vst.msk [vmem:[%s467 + $0x20] sm:$0xff] %vm477, %v3559
      %3568 = vst.msk [vmem:[%s467 + $0x28] sm:$0xff] %vm477, %v3560
      %3569 = vst.msk [vmem:[%s467 + $0x30] sm:$0xff] %vm477, %v3561
      %3570 = vst.msk [vmem:[%s467 + $0x38] sm:$0xff] %vm477, %v3562
      %p3571 = scmp.lt.s32.totalorder %s25, 1
      %s3572 = scalar_select %p3571, %s25, 1
      %s3573 = smul.addr %s3572, 8
      %s3574 = smul.addr %s3573, 8
      %s3575 = scalar_lea.vmem %s14, %s3574
      // Predicated region
      $region77: #{swin_block.3} parent=75 // pred_check
        %p3576 = pneg %p342
      $region78: #{swin_block.3} parent=75 // pred_check_branch
        %3578 = sbr.rel (%p3576) target = $region80
      $region79: #{swin_block.3} parent=75 // pred_region
        _
      $region80: #{swin_block.3} parent=75 // pred_fallthru
        _
    $region76: #{swin_block.3} parent=5 // pred_fallthru
      _
    %p3579 = scmp.le.s32.totalorder 2, %s20
    // Predicated region
    $region81: #{swin_block.3} parent=5 // pred_check
      %p3580 = pneg %p3579
    $region82: #{swin_block.3} parent=5 // pred_check_branch
      %3582 = sbr.rel (%p3580) target = $region84
    $region83: #{swin_block.3} parent=5 // pred_region
      %s3583 = ssub.s32 %s20, 2
      // Predicated region
      $region85: #{swin_block.3} parent=83 // pred_check
        %p3584 = pneg %p348
      $region86: #{swin_block.3} parent=83 // pred_check_branch
        %3586 = sbr.rel (%p3584) target = $region88
      $region87: #{swin_block.3} parent=83 // pred_region
        %p3587 = scmp.lt.s32.totalorder %s26, 1
        %s3588 = scalar_select %p3587, %s26, 1
        %s3589 = smul.addr %s3588, 8
        %s3590 = smul.addr %s3589, 8
        %s3591 = scalar_lea.vmem %s14, %s3590
      $region88: #{swin_block.3} parent=83 // pred_fallthru
        _
    $region84: #{swin_block.3} parent=5 // pred_fallthru
      _
  $region6: #{swin_block.3} parent=0 // loop_footer
    %s24 = sadd.s32 1, %s20
  $region7: #{swin_block.3} parent=0 // loop_footer_branch
    %19 = sbr.rel target = $region3
  $region8: #{swin_block.3} parent=0 // loop_exit
    _

// kernel: swin_block.2
$region0: #{swin_block.2}
  #allocation0 [shape = 'u32[]', space=smem, size = 0x4, offset = 0x4, fixed_abs, tag = 'smem constant byte address 0x4 - core index']
  #allocation1 [shape = 'u32[144,128]{1,0:T(1,128)}', space=vmem, size = 0x12000, scoped, tag = 'internal scratch']
  %s0 = inlined_call_operand.vmem [shape: f32[2,64,32], index: 0, kind: input, shape index: {}]
  %s1 = inlined_call_operand.vmem [shape: f32[1,32], index: 1, kind: input, shape index: {}]
  %s2 = inlined_call_operand.vmem [shape: f32[1,32], index: 2, kind: input, shape index: {}]
  %s3 = inlined_call_operand.vmem [shape: bf16[32,96], index: 3, kind: input, shape index: {}]
  %s4 = inlined_call_operand.vmem [shape: f32[1,96], index: 4, kind: input, shape index: {}]
  %s5 = inlined_call_operand.vmem [shape: bf16[4,8,32], index: 5, kind: input, shape index: {}]
  %s6 = inlined_call_operand.vmem [shape: f32[1,32], index: 6, kind: input, shape index: {}]
  %s7 = inlined_call_operand.vmem [shape: f32[4,1,16,16], index: 7, kind: input, shape index: {}]
  %s8 = inlined_call_operand.vmem [shape: f32[1,32], index: 8, kind: input, shape index: {}]
  %s9 = inlined_call_operand.vmem [shape: f32[1,32], index: 9, kind: input, shape index: {}]
  %s10 = inlined_call_operand.vmem [shape: bf16[32,128], index: 10, kind: input, shape index: {}]
  %s11 = inlined_call_operand.vmem [shape: f32[1,128], index: 11, kind: input, shape index: {}]
  %s12 = inlined_call_operand.vmem [shape: bf16[128,32], index: 12, kind: input, shape index: {}]
  %s13 = inlined_call_operand.vmem [shape: f32[1,32], index: 13, kind: input, shape index: {}]
  %s14 = inlined_call_operand.vmem [shape: f32[2,64,32], index: 14, kind: output, shape index: {}]
  %s15 = sld [smem:[#allocation0]]
  $region89: #{swin_block.2} parent=0
    _
  %s17 = ssub.s32 1, %s15
  %s18 = scalar_select 0, %s17, %s15
  loop: start=0, step=1, limit=4
  $region2: #{swin_block.2} parent=0 // loop_pre_header
    _
  $region3: #{swin_block.2} parent=0 // loop_header
    %s20 = sphi 0, %s24
    %p21 = scmp.ge.s32.totalorder %s20, 4
    %s30 = sphi 0, %s32
    %s33 = sphi 0, %s30
    %s34 = sphi 0, %s33
    %s50 = sphi 0, %s34
    %s54 = sphi 0, %s54
    %s56 = sphi 0, %s54
    %s57 = sphi 0, %s56
    %s71 = sphi 0, %s57
    %s75 = sphi 0, %s75
    %s77 = sphi 0, %s75
    %s78 = sphi 0, %s77
    %s92 = sphi 0, %s78
    %s96 = sphi 0, %s96
    %s98 = sphi 0, %s96
    %s99 = sphi 0, %s98
    %s113 = sphi 0, %s99
    %s117 = sphi 0, %s117
    %s119 = sphi 0, %s117
    %s120 = sphi 0, %s119
    %s134 = sphi 0, %s120
    %s138 = sphi 0, %s138
    %s140 = sphi 0, %s138
    %s141 = sphi 0, %s140
    %s155 = sphi 0, %s141
    %s159 = sphi 0, %s159
    %s161 = sphi 0, %s159
    %s162 = sphi 0, %s161
    %s176 = sphi 0, %s162
    %s180 = sphi 0, %s180
    %s182 = sphi 0, %s180
    %s183 = sphi 0, %s182
    %s197 = sphi 0, %s183
    %s201 = sphi 0, %s201
    %s203 = sphi 0, %s201
    %s204 = sphi 0, %s203
    %s218 = sphi 0, %s204
    %s222 = sphi 0, %s222
    %s224 = sphi 0, %s222
    %s225 = sphi 0, %s224
    %s239 = sphi 0, %s225
    %s243 = sphi 0, %s243
    %s245 = sphi 0, %s243
    %s246 = sphi 0, %s245
    %s260 = sphi 0, %s246
    %s264 = sphi 0, %s264
    %s266 = sphi 0, %s264
    %s267 = sphi 0, %s266
    %s281 = sphi 0, %s267
    %s285 = sphi 0, %s285
    %s287 = sphi 0, %s285
    %s288 = sphi 0, %s287
    %s302 = sphi 0, %s288
    %s306 = sphi 0, %s306
    %s308 = sphi 0, %s306
    %s309 = sphi 0, %s308
    %s323 = sphi 0, %s309
    %s329 = sphi 0, %s331
    %s332 = sphi 0, %s329
    %s333 = sphi 0, %s332
    %s349 = sphi 0, %s333
  $region4: #{swin_block.2} parent=0 // loop_header_branch
    %23 = sbr.rel (%p21) target = $region8
  $region5: #{swin_block.2} parent=0 // loop_body
    %s25 = ssub.s32 %s20, 1
    %s26 = ssub.s32 %s20, 2
    %s27 = sadd.s32 %s20, 1
    %s28 = ssub.s32 %s20, %s27
    %p29 = scmp.eq.s32.totalorder %s28, 0
    %s31 = sadd.s32 %s30, 1
    %s32 = scalar_select %p29, %s30, %s31
    %p35 = pneg %p29
    %p36 = scmp.eq.s32.totalorder %s20, 1
    %p37 = por %p35, %p36
    %p38 = scmp.ne.s32.totalorder %s30, %s33
    %p39 = scmp.eq.s32.totalorder %s20, 0
    %p40 = por %p38, %p39
    %p41 = scmp.ne.s32.totalorder %s30, %s33
    %p42 = scmp.eq.s32.totalorder %s25, 1
    %p43 = por %p41, %p42
    %p44 = scmp.ne.s32.totalorder %s33, %s34
    %p45 = scmp.eq.s32.totalorder %s25, 0
    %p46 = por %p44, %p45
    %p47 = scmp.ne.s32.totalorder %s33, %s34
    %p48 = scmp.eq.s32.totalorder %s26, 1
    %p49 = por %p47, %p48
    %p51 = scmp.ne.s32.totalorder %s34, %s50
    %p52 = scmp.eq.s32.totalorder %s26, 0
    %p53 = por %p51, %p52
    %s55 = sadd.s32 %s54, 1
    %p58 = scmp.eq.s32.totalorder %s20, 1
    %p59 = scmp.ne.s32.totalorder %s54, %s56
    %p60 = scmp.eq.s32.totalorder %s20, 0
    %p61 = por %p59, %p60
    %p62 = scmp.ne.s32.totalorder %s54, %s56
    %p63 = scmp.eq.s32.totalorder %s25, 1
    %p64 = por %p62, %p63
    %p65 = scmp.ne.s32.totalorder %s56, %s57
    %p66 = scmp.eq.s32.totalorder %s25, 0
    %p67 = por %p65, %p66
    %p68 = scmp.ne.s32.totalorder %s56, %s57
    %p69 = scmp.eq.s32.totalorder %s26, 1
    %p70 = por %p68, %p69
    %p72 = scmp.ne.s32.totalorder %s57, %s71
    %p73 = scmp.eq.s32.totalorder %s26, 0
    %p74 = por %p72, %p73
    %s76 = sadd.s32 %s75, 1
    %p79 = scmp.eq.s32.totalorder %s20, 1
    %p80 = scmp.ne.s32.totalorder %s75, %s77
    %p81 = scmp.eq.s32.totalorder %s20, 0
    %p82 = por %p80, %p81
    %p83 = scmp.ne.s32.totalorder %s75, %s77
    %p84 = scmp.eq.s32.totalorder %s25, 1
    %p85 = por %p83, %p84
    %p86 = scmp.ne.s32.totalorder %s77, %s78
    %p87 = scmp.eq.s32.totalorder %s25, 0
    %p88 = por %p86, %p87
    %p89 = scmp.ne.s32.totalorder %s77, %s78
    %p90 = scmp.eq.s32.totalorder %s26, 1
    %p91 = por %p89, %p90
    %p93 = scmp.ne.s32.totalorder %s78, %s92
    %p94 = scmp.eq.s32.totalorder %s26, 0
    %p95 = por %p93, %p94
    %s97 = sadd.s32 %s96, 1
    %p100 = scmp.eq.s32.totalorder %s20, 1
    %p101 = scmp.ne.s32.totalorder %s96, %s98
    %p102 = scmp.eq.s32.totalorder %s20, 0
    %p103 = por %p101, %p102
    %p104 = scmp.ne.s32.totalorder %s96, %s98
    %p105 = scmp.eq.s32.totalorder %s25, 1
    %p106 = por %p104, %p105
    %p107 = scmp.ne.s32.totalorder %s98, %s99
    %p108 = scmp.eq.s32.totalorder %s25, 0
    %p109 = por %p107, %p108
    %p110 = scmp.ne.s32.totalorder %s98, %s99
    %p111 = scmp.eq.s32.totalorder %s26, 1
    %p112 = por %p110, %p111
    %p114 = scmp.ne.s32.totalorder %s99, %s113
    %p115 = scmp.eq.s32.totalorder %s26, 0
    %p116 = por %p114, %p115
    %s118 = sadd.s32 %s117, 1
    %p121 = scmp.eq.s32.totalorder %s20, 1
    %p122 = scmp.ne.s32.totalorder %s117, %s119
    %p123 = scmp.eq.s32.totalorder %s20, 0
    %p124 = por %p122, %p123
    %p125 = scmp.ne.s32.totalorder %s117, %s119
    %p126 = scmp.eq.s32.totalorder %s25, 1
    %p127 = por %p125, %p126
    %p128 = scmp.ne.s32.totalorder %s119, %s120
    %p129 = scmp.eq.s32.totalorder %s25, 0
    %p130 = por %p128, %p129
    %p131 = scmp.ne.s32.totalorder %s119, %s120
    %p132 = scmp.eq.s32.totalorder %s26, 1
    %p133 = por %p131, %p132
    %p135 = scmp.ne.s32.totalorder %s120, %s134
    %p136 = scmp.eq.s32.totalorder %s26, 0
    %p137 = por %p135, %p136
    %s139 = sadd.s32 %s138, 1
    %p142 = scmp.eq.s32.totalorder %s20, 1
    %p143 = scmp.ne.s32.totalorder %s138, %s140
    %p144 = scmp.eq.s32.totalorder %s20, 0
    %p145 = por %p143, %p144
    %p146 = scmp.ne.s32.totalorder %s138, %s140
    %p147 = scmp.eq.s32.totalorder %s25, 1
    %p148 = por %p146, %p147
    %p149 = scmp.ne.s32.totalorder %s140, %s141
    %p150 = scmp.eq.s32.totalorder %s25, 0
    %p151 = por %p149, %p150
    %p152 = scmp.ne.s32.totalorder %s140, %s141
    %p153 = scmp.eq.s32.totalorder %s26, 1
    %p154 = por %p152, %p153
    %p156 = scmp.ne.s32.totalorder %s141, %s155
    %p157 = scmp.eq.s32.totalorder %s26, 0
    %p158 = por %p156, %p157
    %s160 = sadd.s32 %s159, 1
    %p163 = scmp.eq.s32.totalorder %s20, 1
    %p164 = scmp.ne.s32.totalorder %s159, %s161
    %p165 = scmp.eq.s32.totalorder %s20, 0
    %p166 = por %p164, %p165
    %p167 = scmp.ne.s32.totalorder %s159, %s161
    %p168 = scmp.eq.s32.totalorder %s25, 1
    %p169 = por %p167, %p168
    %p170 = scmp.ne.s32.totalorder %s161, %s162
    %p171 = scmp.eq.s32.totalorder %s25, 0
    %p172 = por %p170, %p171
    %p173 = scmp.ne.s32.totalorder %s161, %s162
    %p174 = scmp.eq.s32.totalorder %s26, 1
    %p175 = por %p173, %p174
    %p177 = scmp.ne.s32.totalorder %s162, %s176
    %p178 = scmp.eq.s32.totalorder %s26, 0
    %p179 = por %p177, %p178
    %s181 = sadd.s32 %s180, 1
    %p184 = scmp.eq.s32.totalorder %s20, 1
    %p185 = scmp.ne.s32.totalorder %s180, %s182
    %p186 = scmp.eq.s32.totalorder %s20, 0
    %p187 = por %p185, %p186
    %p188 = scmp.ne.s32.totalorder %s180, %s182
    %p189 = scmp.eq.s32.totalorder %s25, 1
    %p190 = por %p188, %p189
    %p191 = scmp.ne.s32.totalorder %s182, %s183
    %p192 = scmp.eq.s32.totalorder %s25, 0
    %p193 = por %p191, %p192
    %p194 = scmp.ne.s32.totalorder %s182, %s183
    %p195 = scmp.eq.s32.totalorder %s26, 1
    %p196 = por %p194, %p195
    %p198 = scmp.ne.s32.totalorder %s183, %s197
    %p199 = scmp.eq.s32.totalorder %s26, 0
    %p200 = por %p198, %p199
    %s202 = sadd.s32 %s201, 1
    %p205 = scmp.eq.s32.totalorder %s20, 1
    %p206 = scmp.ne.s32.totalorder %s201, %s203
    %p207 = scmp.eq.s32.totalorder %s20, 0
    %p208 = por %p206, %p207
    %p209 = scmp.ne.s32.totalorder %s201, %s203
    %p210 = scmp.eq.s32.totalorder %s25, 1
    %p211 = por %p209, %p210
    %p212 = scmp.ne.s32.totalorder %s203, %s204
    %p213 = scmp.eq.s32.totalorder %s25, 0
    %p214 = por %p212, %p213
    %p215 = scmp.ne.s32.totalorder %s203, %s204
    %p216 = scmp.eq.s32.totalorder %s26, 1
    %p217 = por %p215, %p216
    %p219 = scmp.ne.s32.totalorder %s204, %s218
    %p220 = scmp.eq.s32.totalorder %s26, 0
    %p221 = por %p219, %p220
    %s223 = sadd.s32 %s222, 1
    %p226 = scmp.eq.s32.totalorder %s20, 1
    %p227 = scmp.ne.s32.totalorder %s222, %s224
    %p228 = scmp.eq.s32.totalorder %s20, 0
    %p229 = por %p227, %p228
    %p230 = scmp.ne.s32.totalorder %s222, %s224
    %p231 = scmp.eq.s32.totalorder %s25, 1
    %p232 = por %p230, %p231
    %p233 = scmp.ne.s32.totalorder %s224, %s225
    %p234 = scmp.eq.s32.totalorder %s25, 0
    %p235 = por %p233, %p234
    %p236 = scmp.ne.s32.totalorder %s224, %s225
    %p237 = scmp.eq.s32.totalorder %s26, 1
    %p238 = por %p236, %p237
    %p240 = scmp.ne.s32.totalorder %s225, %s239
    %p241 = scmp.eq.s32.totalorder %s26, 0
    %p242 = por %p240, %p241
    %s244 = sadd.s32 %s243, 1
    %p247 = scmp.eq.s32.totalorder %s20, 1
    %p248 = scmp.ne.s32.totalorder %s243, %s245
    %p249 = scmp.eq.s32.totalorder %s20, 0
    %p250 = por %p248, %p249
    %p251 = scmp.ne.s32.totalorder %s243, %s245
    %p252 = scmp.eq.s32.totalorder %s25, 1
    %p253 = por %p251, %p252
    %p254 = scmp.ne.s32.totalorder %s245, %s246
    %p255 = scmp.eq.s32.totalorder %s25, 0
    %p256 = por %p254, %p255
    %p257 = scmp.ne.s32.totalorder %s245, %s246
    %p258 = scmp.eq.s32.totalorder %s26, 1
    %p259 = por %p257, %p258
    %p261 = scmp.ne.s32.totalorder %s246, %s260
    %p262 = scmp.eq.s32.totalorder %s26, 0
    %p263 = por %p261, %p262
    %s265 = sadd.s32 %s264, 1
    %p268 = scmp.eq.s32.totalorder %s20, 1
    %p269 = scmp.ne.s32.totalorder %s264, %s266
    %p270 = scmp.eq.s32.totalorder %s20, 0
    %p271 = por %p269, %p270
    %p272 = scmp.ne.s32.totalorder %s264, %s266
    %p273 = scmp.eq.s32.totalorder %s25, 1
    %p274 = por %p272, %p273
    %p275 = scmp.ne.s32.totalorder %s266, %s267
    %p276 = scmp.eq.s32.totalorder %s25, 0
    %p277 = por %p275, %p276
    %p278 = scmp.ne.s32.totalorder %s266, %s267
    %p279 = scmp.eq.s32.totalorder %s26, 1
    %p280 = por %p278, %p279
    %p282 = scmp.ne.s32.totalorder %s267, %s281
    %p283 = scmp.eq.s32.totalorder %s26, 0
    %p284 = por %p282, %p283
    %s286 = sadd.s32 %s285, 1
    %p289 = scmp.eq.s32.totalorder %s20, 1
    %p290 = scmp.ne.s32.totalorder %s285, %s287
    %p291 = scmp.eq.s32.totalorder %s20, 0
    %p292 = por %p290, %p291
    %p293 = scmp.ne.s32.totalorder %s285, %s287
    %p294 = scmp.eq.s32.totalorder %s25, 1
    %p295 = por %p293, %p294
    %p296 = scmp.ne.s32.totalorder %s287, %s288
    %p297 = scmp.eq.s32.totalorder %s25, 0
    %p298 = por %p296, %p297
    %p299 = scmp.ne.s32.totalorder %s287, %s288
    %p300 = scmp.eq.s32.totalorder %s26, 1
    %p301 = por %p299, %p300
    %p303 = scmp.ne.s32.totalorder %s288, %s302
    %p304 = scmp.eq.s32.totalorder %s26, 0
    %p305 = por %p303, %p304
    %s307 = sadd.s32 %s306, 1
    %p310 = scmp.eq.s32.totalorder %s20, 1
    %p311 = scmp.ne.s32.totalorder %s306, %s308
    %p312 = scmp.eq.s32.totalorder %s20, 0
    %p313 = por %p311, %p312
    %p314 = scmp.ne.s32.totalorder %s306, %s308
    %p315 = scmp.eq.s32.totalorder %s25, 1
    %p316 = por %p314, %p315
    %p317 = scmp.ne.s32.totalorder %s308, %s309
    %p318 = scmp.eq.s32.totalorder %s25, 0
    %p319 = por %p317, %p318
    %p320 = scmp.ne.s32.totalorder %s308, %s309
    %p321 = scmp.eq.s32.totalorder %s26, 1
    %p322 = por %p320, %p321
    %p324 = scmp.ne.s32.totalorder %s309, %s323
    %p325 = scmp.eq.s32.totalorder %s26, 0
    %p326 = por %p324, %p325
    %s327 = ssub.s32 %s20, %s27
    %p328 = scmp.eq.s32.totalorder %s327, 0
    %s330 = sadd.s32 %s329, 1
    %s331 = scalar_select %p328, %s329, %s330
    %p334 = pneg %p328
    %p335 = scmp.eq.s32.totalorder %s20, 1
    %p336 = por %p334, %p335
    %p337 = scmp.ne.s32.totalorder %s329, %s332
    %p338 = scmp.eq.s32.totalorder %s20, 0
    %p339 = por %p337, %p338
    %p340 = scmp.ne.s32.totalorder %s329, %s332
    %p341 = scmp.eq.s32.totalorder %s25, 1
    %p342 = por %p340, %p341
    %p343 = scmp.ne.s32.totalorder %s332, %s333
    %p344 = scmp.eq.s32.totalorder %s25, 0
    %p345 = por %p343, %p344
    %p346 = scmp.ne.s32.totalorder %s332, %s333
    %p347 = scmp.eq.s32.totalorder %s26, 1
    %p348 = por %p346, %p347
    %p350 = scmp.ne.s32.totalorder %s333, %s349
    %p351 = scmp.eq.s32.totalorder %s26, 0
    %p352 = por %p350, %p351
    %p353 = scmp.le.s32.totalorder 1, %s20
    %p354 = scmp.lt.s32.totalorder %s20, 3
    %p355 = pnand %p353, %p354
    %p356 = pneg %p355
    // Predicated region
    $region9: #{swin_block.2} parent=5 // pred_check
      _
    $region10: #{swin_block.2} parent=5 // pred_check_branch
      %358 = sbr.rel (%p355) target = $region12
    $region11: #{swin_block.2} parent=5 // pred_region
      %s359 = ssub.s32 %s20, 1
      // Predicated region
      $region13: #{swin_block.2} parent=11 // pred_check
        %p360 = pneg %p67
      $region14: #{swin_block.2} parent=11 // pred_check_branch
        %362 = sbr.rel (%p360) target = $region16
      $region15: #{swin_block.2} parent=11 // pred_region
        _
      $region16: #{swin_block.2} parent=11 // pred_fallthru
        _
      // Predicated region
      $region17: #{swin_block.2} parent=11 // pred_check
        %p363 = pneg %p88
      $region18: #{swin_block.2} parent=11 // pred_check_branch
        %365 = sbr.rel (%p363) target = $region20
      $region19: #{swin_block.2} parent=11 // pred_region
        _
      $region20: #{swin_block.2} parent=11 // pred_fallthru
        _
      // Predicated region
      $region21: #{swin_block.2} parent=11 // pred_check
        %p366 = pneg %p109
      $region22: #{swin_block.2} parent=11 // pred_check_branch
        %368 = sbr.rel (%p366) target = $region24
      $region23: #{swin_block.2} parent=11 // pred_region
        _
      $region24: #{swin_block.2} parent=11 // pred_fallthru
        _
      // Predicated region
      $region25: #{swin_block.2} parent=11 // pred_check
        %p369 = pneg %p130
      $region26: #{swin_block.2} parent=11 // pred_check_branch
        %371 = sbr.rel (%p369) target = $region28
      $region27: #{swin_block.2} parent=11 // pred_region
        _
      $region28: #{swin_block.2} parent=11 // pred_fallthru
        _
      // Predicated region
      $region29: #{swin_block.2} parent=11 // pred_check
        %p372 = pneg %p151
      $region30: #{swin_block.2} parent=11 // pred_check_branch
        %374 = sbr.rel (%p372) target = $region32
      $region31: #{swin_block.2} parent=11 // pred_region
        _
      $region32: #{swin_block.2} parent=11 // pred_fallthru
        _
      // Predicated region
      $region33: #{swin_block.2} parent=11 // pred_check
        %p375 = pneg %p172
      $region34: #{swin_block.2} parent=11 // pred_check_branch
        %377 = sbr.rel (%p375) target = $region36
      $region35: #{swin_block.2} parent=11 // pred_region
        _
      $region36: #{swin_block.2} parent=11 // pred_fallthru
        _
      // Predicated region
      $region37: #{swin_block.2} parent=11 // pred_check
        %p378 = pneg %p193
      $region38: #{swin_block.2} parent=11 // pred_check_branch
        %380 = sbr.rel (%p378) target = $region40
      $region39: #{swin_block.2} parent=11 // pred_region
        _
      $region40: #{swin_block.2} parent=11 // pred_fallthru
        _
      // Predicated region
      $region41: #{swin_block.2} parent=11 // pred_check
        %p381 = pneg %p214
      $region42: #{swin_block.2} parent=11 // pred_check_branch
        %383 = sbr.rel (%p381) target = $region44
      $region43: #{swin_block.2} parent=11 // pred_region
        _
      $region44: #{swin_block.2} parent=11 // pred_fallthru
        _
      // Predicated region
      $region45: #{swin_block.2} parent=11 // pred_check
        %p384 = pneg %p235
      $region46: #{swin_block.2} parent=11 // pred_check_branch
        %386 = sbr.rel (%p384) target = $region48
      $region47: #{swin_block.2} parent=11 // pred_region
        _
      $region48: #{swin_block.2} parent=11 // pred_fallthru
        _
      // Predicated region
      $region49: #{swin_block.2} parent=11 // pred_check
        %p387 = pneg %p256
      $region50: #{swin_block.2} parent=11 // pred_check_branch
        %389 = sbr.rel (%p387) target = $region52
      $region51: #{swin_block.2} parent=11 // pred_region
        _
      $region52: #{swin_block.2} parent=11 // pred_fallthru
        _
      // Predicated region
      $region53: #{swin_block.2} parent=11 // pred_check
        %p390 = pneg %p277
      $region54: #{swin_block.2} parent=11 // pred_check_branch
        %392 = sbr.rel (%p390) target = $region56
      $region55: #{swin_block.2} parent=11 // pred_region
        _
      $region56: #{swin_block.2} parent=11 // pred_fallthru
        _
      // Predicated region
      $region57: #{swin_block.2} parent=11 // pred_check
        %p393 = pneg %p298
      $region58: #{swin_block.2} parent=11 // pred_check_branch
        %395 = sbr.rel (%p393) target = $region60
      $region59: #{swin_block.2} parent=11 // pred_region
        _
      $region60: #{swin_block.2} parent=11 // pred_fallthru
        _
      // Predicated region
      $region61: #{swin_block.2} parent=11 // pred_check
        %p396 = pneg %p319
      $region62: #{swin_block.2} parent=11 // pred_check_branch
        %398 = sbr.rel (%p396) target = $region64
      $region63: #{swin_block.2} parent=11 // pred_region
        _
      $region64: #{swin_block.2} parent=11 // pred_fallthru
        _
    $region12: #{swin_block.2} parent=5 // pred_fallthru
      _
    %p399 = scmp.lt.s32.totalorder %s20, 2
    // Predicated region
    $region65: #{swin_block.2} parent=5 // pred_check
      %p400 = pneg %p399
    $region66: #{swin_block.2} parent=5 // pred_check_branch
      %402 = sbr.rel (%p400) target = $region68
    $region67: #{swin_block.2} parent=5 // pred_region
      // Predicated region
      $region69: #{swin_block.2} parent=67 // pred_check
        %p403 = pneg %p40
      $region70: #{swin_block.2} parent=67 // pred_check_branch
        %405 = sbr.rel (%p403) target = $region72
      $region71: #{swin_block.2} parent=67 // pred_region
        %p406 = scmp.lt.s32.totalorder %s20, 1
        %s407 = scalar_select %p406, %s20, 1
        %s408 = smul.addr %s407, 8
        %s409 = smul.addr %s408, 8
        %s410 = scalar_lea.vmem %s0, %s409
      $region72: #{swin_block.2} parent=67 // pred_fallthru
        _
    $region68: #{swin_block.2} parent=5 // pred_fallthru
      _
    %p411 = scmp.le.s32.totalorder 1, %s20
    %p412 = scmp.lt.s32.totalorder %s20, 3
    %p413 = pnand %p411, %p412
    %p414 = pneg %p413
    // Predicated region
    $region73: #{swin_block.2} parent=5 // pred_check
      _
    $region74: #{swin_block.2} parent=5 // pred_check_branch
      %416 = sbr.rel (%p413) target = $region76
    $region75: #{swin_block.2} parent=5 // pred_region
      %s417 = ssub.s32 %s20, 1
      %p418 = scmp.lt.s32.totalorder %s25, 1
      %s419 = scalar_select %p418, %s25, 1
      %s420 = smul.addr %s419, 8
      %s421 = smul.addr %s420, 8
      %s422 = scalar_lea.vmem %s0, %s421
      %p423 = pneg %p46
      %p424 = pneg %p43
      %p425 = pneg %p67
      %p426 = pneg %p64
      %p427 = pneg %p88
      %p428 = pneg %p85
      %p429 = pneg %p109
      %p430 = pneg %p106
      %p431 = pneg %p130
      %p432 = pneg %p127
      %p433 = pneg %p151
      %p434 = pneg %p148
      %p435 = pneg %p172
      %p436 = pneg %p169
      %p437 = pneg %p193
      %p438 = pneg %p190
      %p439 = pneg %p214
      %p440 = pneg %p211
      %p441 = pneg %p235
      %p442 = pneg %p232
      %p443 = pneg %p256
      %p444 = pneg %p253
      %p445 = pneg %p277
      %p446 = pneg %p274
      %p447 = pneg %p298
      %p448 = pneg %p295
      %p449 = pneg %p319
      %p450 = pneg %p316
      %p451 = pneg %p345
      %p452 = pneg %p342
      %p453 = scmp.lt.s32.totalorder %s25, 1
      %s454 = scalar_select %p453, %s25, 1
      %s455 = smul.addr %s454, 8
      %s456 = smul.addr %s455, 8
      %s457 = scalar_lea.vmem %s14, %s456
      %p458 = scmp.lt.s32.totalorder %s25, 1
      %s459 = scalar_select %p458, %s25, 1
      %s460 = smul.addr %s459, 8
      %s461 = smul.addr %s460, 8
      %s462 = scalar_lea.vmem %s0, %s461
      %p463 = scmp.lt.s32.totalorder %s25, 1
      %s464 = scalar_select %p463, %s25, 1
      %s465 = smul.addr %s464, 8
      %s466 = smul.addr %s465, 8
      %s467 = scalar_lea.vmem %s14, %s466
      %v469 = vld [vmem:[%s462] sm:$0xff]
      %v470 = vld [vmem:[%s462 + $0x8] sm:$0xff]
      %v471 = vld [vmem:[%s462 + $0x10] sm:$0xff]
      %v472 = vld [vmem:[%s462 + $0x18] sm:$0xff]
      %v473 = vld [vmem:[%s462 + $0x20] sm:$0xff]
      %v474 = vld [vmem:[%s462 + $0x28] sm:$0xff]
      %v475 = vld [vmem:[%s462 + $0x30] sm:$0xff]
      %v476 = vld [vmem:[%s462 + $0x38] sm:$0xff]
      %vm477 = vcmask 261120
      %v478 = vsel %vm477, %v469, 0.0
      %479 = vadd.xlane.f32.xlu0 %v478
      %v480 = vpop.xlane.xlu0 %479
      %v481 = vsel %vm477, %v470, 0.0
      %482 = vadd.xlane.f32.xlu0 %v481
      %v483 = vpop.xlane.xlu0 %482
      %v484 = vsel %vm477, %v471, 0.0
      %485 = vadd.xlane.f32.xlu0 %v484
      %v486 = vpop.xlane.xlu0 %485
      %v487 = vsel %vm477, %v472, 0.0
      %488 = vadd.xlane.f32.xlu0 %v487
      %v489 = vpop.xlane.xlu0 %488
      %v490 = vsel %vm477, %v473, 0.0
      %491 = vadd.xlane.f32.xlu0 %v490
      %v492 = vpop.xlane.xlu0 %491
      %v493 = vsel %vm477, %v474, 0.0
      %494 = vadd.xlane.f32.xlu0 %v493
      %v495 = vpop.xlane.xlu0 %494
      %v496 = vsel %vm477, %v475, 0.0
      %497 = vadd.xlane.f32.xlu0 %v496
      %v498 = vpop.xlane.xlu0 %497
      %v499 = vsel %vm477, %v476, 0.0
      %500 = vadd.xlane.f32.xlu0 %v499
      %v501 = vpop.xlane.xlu0 %500
      %v502 = vrcp.pop 32.0
      %v503 = vmul.f32 %v480, %v502
      %v504 = vmul.f32 %v483, %v502
      %v505 = vmul.f32 %v486, %v502
      %v506 = vmul.f32 %v489, %v502
      %v507 = vmul.f32 %v492, %v502
      %v508 = vmul.f32 %v495, %v502
      %v509 = vmul.f32 %v498, %v502
      %v510 = vmul.f32 %v501, %v502
      %v511 = vmul.f32 %v469, %v469
      %v512 = vmul.f32 %v470, %v470
      %v513 = vmul.f32 %v471, %v471
      %v514 = vmul.f32 %v472, %v472
      %v515 = vmul.f32 %v473, %v473
      %v516 = vmul.f32 %v474, %v474
      %v517 = vmul.f32 %v475, %v475
      %v518 = vmul.f32 %v476, %v476
      %v519 = vsel %vm477, %v511, 0.0
      %520 = vadd.xlane.f32.xlu0 %v519
      %v521 = vpop.xlane.xlu0 %520
      %v522 = vsel %vm477, %v512, 0.0
      %523 = vadd.xlane.f32.xlu0 %v522
      %v524 = vpop.xlane.xlu0 %523
      %v525 = vsel %vm477, %v513, 0.0
      %526 = vadd.xlane.f32.xlu0 %v525
      %v527 = vpop.xlane.xlu0 %526
      %v528 = vsel %vm477, %v514, 0.0
      %529 = vadd.xlane.f32.xlu0 %v528
      %v530 = vpop.xlane.xlu0 %529
      %v531 = vsel %vm477, %v515, 0.0
      %532 = vadd.xlane.f32.xlu0 %v531
      %v533 = vpop.xlane.xlu0 %532
      %v534 = vsel %vm477, %v516, 0.0
      %535 = vadd.xlane.f32.xlu0 %v534
      %v536 = vpop.xlane.xlu0 %535
      %v537 = vsel %vm477, %v517, 0.0
      %538 = vadd.xlane.f32.xlu0 %v537
      %v539 = vpop.xlane.xlu0 %538
      %v540 = vsel %vm477, %v518, 0.0
      %541 = vadd.xlane.f32.xlu0 %v540
      %v542 = vpop.xlane.xlu0 %541
      %v543 = vmul.f32 %v521, %v502
      %v544 = vmul.f32 %v524, %v502
      %v545 = vmul.f32 %v527, %v502
      %v546 = vmul.f32 %v530, %v502
      %v547 = vmul.f32 %v533, %v502
      %v548 = vmul.f32 %v536, %v502
      %v549 = vmul.f32 %v539, %v502
      %v550 = vmul.f32 %v542, %v502
      %v551 = vmul.f32 %v503, %v503
      %v552 = vmul.f32 %v504, %v504
      %v553 = vmul.f32 %v505, %v505
      %v554 = vmul.f32 %v506, %v506
      %v555 = vmul.f32 %v507, %v507
      %v556 = vmul.f32 %v508, %v508
      %v557 = vmul.f32 %v509, %v509
      %v558 = vmul.f32 %v510, %v510
      %v559 = vsub.f32 %v543, %v551
      %v560 = vsub.f32 %v544, %v552
      %v561 = vsub.f32 %v545, %v553
      %v562 = vsub.f32 %v546, %v554
      %v563 = vsub.f32 %v547, %v555
      %v564 = vsub.f32 %v548, %v556
      %v565 = vsub.f32 %v549, %v557
      %v566 = vsub.f32 %v550, %v558
      %v567 = vsub.f32 %v469, %v503
      %v568 = vsub.f32 %v470, %v504
      %v569 = vsub.f32 %v471, %v505
      %v570 = vsub.f32 %v472, %v506
      %v571 = vsub.f32 %v473, %v507
      %v572 = vsub.f32 %v474, %v508
      %v573 = vsub.f32 %v475, %v509
      %v574 = vsub.f32 %v476, %v510
      %v575 = vadd.f32 %v559, 1e-05
      %v576 = vadd.f32 %v560, 1e-05
      %v577 = vadd.f32 %v561, 1e-05
      %v578 = vadd.f32 %v562, 1e-05
      %v579 = vadd.f32 %v563, 1e-05
      %v580 = vadd.f32 %v564, 1e-05
      %v581 = vadd.f32 %v565, 1e-05
      %v582 = vadd.f32 %v566, 1e-05
      %v583 = vrsqrt.pop %v575
      %v584 = vrsqrt.pop %v576
      %v585 = vrsqrt.pop %v577
      %v586 = vrsqrt.pop %v578
      %v587 = vrsqrt.pop %v579
      %v588 = vrsqrt.pop %v580
      %v589 = vrsqrt.pop %v581
      %v590 = vrsqrt.pop %v582
      %v591 = vmul.f32 %v567, %v583
      %v592 = vmul.f32 %v568, %v584
      %v593 = vmul.f32 %v569, %v585
      %v594 = vmul.f32 %v570, %v586
      %v595 = vmul.f32 %v571, %v587
      %v596 = vmul.f32 %v572, %v588
      %v597 = vmul.f32 %v573, %v589
      %v598 = vmul.f32 %v574, %v590
      %v599 = vld [vmem:[%s1] sm:$0x1]
      %v601 = vlaneseq
      %v602 = vshrl.u32 %v601, 7
      %v603 = vsub.s32 0, %v602
      %v604 = vrot.slane %v599, %v603
      %v606 = vmul.f32 %v591, %v604
      %v607 = vmul.f32 %v592, %v604
      %v608 = vmul.f32 %v593, %v604
      %v609 = vmul.f32 %v594, %v604
      %v610 = vmul.f32 %v595, %v604
      %v611 = vmul.f32 %v596, %v604
      %v612 = vmul.f32 %v597, %v604
      %v613 = vmul.f32 %v598, %v604
      %v614 = vld [vmem:[%s2] sm:$0x1]
      %v616 = vlaneseq
      %v617 = vshrl.u32 %v616, 7
      %v618 = vsub.s32 0, %v617
      %v619 = vrot.slane %v614, %v618
      %v621 = vadd.f32 %v606, %v619
      %v622 = vadd.f32 %v607, %v619
      %v623 = vadd.f32 %v608, %v619
      %v624 = vadd.f32 %v609, %v619
      %v625 = vadd.f32 %v610, %v619
      %v626 = vadd.f32 %v611, %v619
      %v627 = vadd.f32 %v612, %v619
      %v628 = vadd.f32 %v613, %v619
      %v629 = vpack.c.bf16 %v622, %v621
      %v630 = vpack.c.bf16 %v624, %v623
      %v631 = vpack.c.bf16 %v626, %v625
      %v632 = vpack.c.bf16 %v628, %v627
      %v633 = vld [vmem:[%s3] sm:$0xf]
      %v634 = vld [vmem:[%s3 + $0x4] sm:$0xf]
      %v635 = vld [vmem:[%s3 + $0x8] sm:$0xf]
      %v636 = vld [vmem:[%s3 + $0xc] sm:$0xf]
      %v637 = vld [vmem:[%s4] sm:$0x1]
      %v639 = vlaneseq
      %v640 = vshrl.u32 %v639, 7
      %v641 = vsub.s32 0, %v640
      %v642 = vrot.slane %v637, %v641
      %v648 = vunpack.c.l.b16 %v633
      %v649 = vunpack.c.l.b16 %v634
      %v650 = vunpack.c.l.b16 %v635
      %v651 = vunpack.c.l.b16 %v636
      %v652 = vpack.c.b16 %v649, %v648
      %v653 = vpack.c.b16 %v651, %v650
      %v657 = vsel %vm477, %v629, 0
      %v660 = vsel %vm477, %v630, 0
      %v663 = vsel %vm477, %v631, 0
      %v666 = vsel %vm477, %v632, 0
      %668 = vmatprep.subr.bf16.mxu0 0
      %669 = vmatpush1.bf16.msra.mxu0 0
      %670 = vmatprep.subr.bf16.mxu0 0
      %671 = vmatpush1.bf16.msra.mxu0 0
      %672 = vmatprep.subr.bf16.mxu0 0
      %673 = vmatpush1.bf16.msra.mxu0 0
      %674 = vmatprep.subr.bf16.mxu0 0
      %675 = vmatpush1.bf16.msra.mxu0 0
      %676 = vmatprep.subr.bf16.mxu0 0
      %677 = vmatpush1.bf16.msra.mxu0 0
      %678 = vmatprep.subr.bf16.mxu0 0
      %679 = vmatpush1.bf16.msra.mxu0 0
      %680 = vmatprep.subr.bf16.mxu0 0
      %681 = vmatpush1.bf16.msra.mxu0 %v653
      %682 = vmatprep.subr.bf16.mxu0 0
      %683 = vmatpush1.bf16.msra.mxu0 %v652
      %684 = vmatprep.subr.bf16.mxu0 0
      %685 = vmatpush2.bf16.msra.mxu0 0
      %686 = vmatprep.subr.bf16.mxu0 0
      %687 = vmatpush2.bf16.msra.mxu0 0
      %688 = vmatprep.subr.bf16.mxu0 0
      %689 = vmatpush2.bf16.msra.mxu0 0
      %690 = vmatprep.subr.bf16.mxu0 0
      %691 = vmatpush2.bf16.msra.mxu0 0
      %692 = vmatprep.subr.bf16.mxu0 0
      %693 = vmatpush2.bf16.msra.mxu0 0
      %694 = vmatprep.subr.bf16.mxu0 0
      %695 = vmatpush2.bf16.msra.mxu0 0
      %696 = vmatprep.subr.bf16.mxu0 0
      %697 = vmatpush2.bf16.msra.mxu0 0
      %698 = vmatprep.subr.bf16.mxu0 0
      %699 = vmatpush2.bf16.msra.mxu0 0
      %700 = vmatprep.mubr.bf16.mxu0 0
      %701 = vmatmul.mubr.bf16.gmra.mxu0 %v657
      %v702 = vpop.f32.mrf.mxu0
      %v703 = vadd.f32 %v642, %v702
      %v704 = vpop.f32.mrf.mxu0
      %v705 = vpop.f32.mrf.mxu0
      %v706 = vadd.f32 %v642, %v705
      %v707 = vpop.f32.mrf.mxu0
      %708 = vmatprep.mubr.bf16.mxu0 0
      %709 = vmatmul.mubr.bf16.gmra.mxu0 %v660
      %v710 = vpop.f32.mrf.mxu0
      %v711 = vadd.f32 %v642, %v710
      %v712 = vpop.f32.mrf.mxu0
      %v713 = vpop.f32.mrf.mxu0
      %v714 = vadd.f32 %v642, %v713
      %v715 = vpop.f32.mrf.mxu0
      %716 = vmatprep.mubr.bf16.mxu0 0
      %717 = vmatmul.mubr.bf16.gmra.mxu0 %v663
      %v718 = vpop.f32.mrf.mxu0
      %v719 = vadd.f32 %v642, %v718
      %v720 = vpop.f32.mrf.mxu0
      %v721 = vpop.f32.mrf.mxu0
      %v722 = vadd.f32 %v642, %v721
      %v723 = vpop.f32.mrf.mxu0
      %724 = vmatprep.mubr.bf16.mxu0 0
      %725 = vmatmul.mubr.bf16.gmra.mxu0 %v666
      %v726 = vpop.f32.mrf.mxu0
      %v727 = vadd.f32 %v642, %v726
      %v728 = vpop.f32.mrf.mxu0
      %v729 = vpop.f32.mrf.mxu0
      %v730 = vadd.f32 %v642, %v729
      %v731 = vpop.f32.mrf.mxu0
      %732 = vdwg.mxu0
      %v733 = vpack.c.bf16 %v706, %v703
      %v734 = vpack.c.bf16 %v714, %v711
      %v735 = vpack.c.bf16 %v722, %v719
      %v736 = vpack.c.bf16 %v730, %v727
      %v737 = vld [vmem:[%s7] sm:$0xff]
      %v738 = vld [vmem:[%s7 + $0x8] sm:$0xff]
      %740 = vrot.lane.b32.xlu0 %v733, 96
      %v741 = vpop.permute.xlu0 %740
      %vm742 = vcmask 64512
      %v744 = vsel %vm742, %v733, 0
      %v747 = vsel %vm742, %v741, 0
      %749 = vmatprep.subr.bf16.mxu0 0
      %750 = vmatpush1.bf16.xpose.msra.mxu0 0
      %751 = vmatprep.subr.bf16.mxu0 0
      %752 = vmatpush1.bf16.xpose.msra.mxu0 0
      %753 = vmatprep.subr.bf16.mxu0 0
      %754 = vmatpush1.bf16.xpose.msra.mxu0 0
      %755 = vmatprep.subr.bf16.mxu0 0
      %756 = vmatpush1.bf16.xpose.msra.mxu0 0
      %757 = vmatprep.subr.bf16.mxu0 0
      %758 = vmatpush1.bf16.xpose.msra.mxu0 0
      %759 = vmatprep.subr.bf16.mxu0 0
      %760 = vmatpush1.bf16.xpose.msra.mxu0 0
      %761 = vmatprep.subr.bf16.mxu0 0
      %762 = vmatpush1.bf16.xpose.msra.mxu0 0
      %763 = vmatprep.subr.bf16.mxu0 0
      %764 = vmatpush1.bf16.xpose.msra.mxu0 %v747
      %765 = vmatprep.subr.bf16.mxu0 0
      %766 = vmatpush2.bf16.xpose.msra.mxu0 0
      %767 = vmatprep.subr.bf16.mxu0 0
      %768 = vmatpush2.bf16.xpose.msra.mxu0 0
      %769 = vmatprep.subr.bf16.mxu0 0
      %770 = vmatpush2.bf16.xpose.msra.mxu0 0
      %771 = vmatprep.subr.bf16.mxu0 0
      %772 = vmatpush2.bf16.xpose.msra.mxu0 0
      %773 = vmatprep.subr.bf16.mxu0 0
      %774 = vmatpush2.bf16.xpose.msra.mxu0 0
      %775 = vmatprep.subr.bf16.mxu0 0
      %776 = vmatpush2.bf16.xpose.msra.mxu0 0
      %777 = vmatprep.subr.bf16.mxu0 0
      %778 = vmatpush2.bf16.xpose.msra.mxu0 0
      %779 = vmatprep.subr.bf16.mxu0 0
      %780 = vmatpush2.bf16.xpose.msra.mxu0 0
      %781 = vmatprep.mubr.bf16.mxu0 0
      %782 = vmatmul.mubr.bf16.gmra.mxu0 %v744
      %v783 = vpop.f32.mrf.mxu0
      %v784 = vadd.f32 %v737, %v783
      %v785 = vpop.f32.mrf.mxu0
      %v786 = vpop.f32.mrf.mxu0
      %v787 = vadd.f32 %v738, %v786
      %v788 = vpop.f32.mrf.mxu0
      %789 = vdwg.mxu0
      %791 = vrot.lane.b32.xlu0 %v734, 96
      %v792 = vpop.permute.xlu0 %791
      %v794 = vsel %vm742, %v734, 0
      %v797 = vsel %vm742, %v792, 0
      %799 = vmatprep.subr.bf16.mxu0 0
      %800 = vmatpush1.bf16.xpose.msra.mxu0 0
      %801 = vmatprep.subr.bf16.mxu0 0
      %802 = vmatpush1.bf16.xpose.msra.mxu0 0
      %803 = vmatprep.subr.bf16.mxu0 0
      %804 = vmatpush1.bf16.xpose.msra.mxu0 0
      %805 = vmatprep.subr.bf16.mxu0 0
      %806 = vmatpush1.bf16.xpose.msra.mxu0 0
      %807 = vmatprep.subr.bf16.mxu0 0
      %808 = vmatpush1.bf16.xpose.msra.mxu0 0
      %809 = vmatprep.subr.bf16.mxu0 0
      %810 = vmatpush1.bf16.xpose.msra.mxu0 0
      %811 = vmatprep.subr.bf16.mxu0 0
      %812 = vmatpush1.bf16.xpose.msra.mxu0 0
      %813 = vmatprep.subr.bf16.mxu0 0
      %814 = vmatpush1.bf16.xpose.msra.mxu0 %v797
      %815 = vmatprep.subr.bf16.mxu0 0
      %816 = vmatpush2.bf16.xpose.msra.mxu0 0
      %817 = vmatprep.subr.bf16.mxu0 0
      %818 = vmatpush2.bf16.xpose.msra.mxu0 0
      %819 = vmatprep.subr.bf16.mxu0 0
      %820 = vmatpush2.bf16.xpose.msra.mxu0 0
      %821 = vmatprep.subr.bf16.mxu0 0
      %822 = vmatpush2.bf16.xpose.msra.mxu0 0
      %823 = vmatprep.subr.bf16.mxu0 0
      %824 = vmatpush2.bf16.xpose.msra.mxu0 0
      %825 = vmatprep.subr.bf16.mxu0 0
      %826 = vmatpush2.bf16.xpose.msra.mxu0 0
      %827 = vmatprep.subr.bf16.mxu0 0
      %828 = vmatpush2.bf16.xpose.msra.mxu0 0
      %829 = vmatprep.subr.bf16.mxu0 0
      %830 = vmatpush2.bf16.xpose.msra.mxu0 0
      %831 = vmatprep.mubr.bf16.mxu0 0
      %832 = vmatmul.mubr.bf16.gmra.mxu0 %v794
      %v833 = vpop.f32.mrf.mxu0
      %v834 = vadd.f32 %v737, %v833
      %v835 = vpop.f32.mrf.mxu0
      %v836 = vpop.f32.mrf.mxu0
      %v837 = vadd.f32 %v738, %v836
      %v838 = vpop.f32.mrf.mxu0
      %839 = vdwg.mxu0
      %841 = vrot.lane.b32.xlu0 %v735, 96
      %v842 = vpop.permute.xlu0 %841
      %v844 = vsel %vm742, %v735, 0
      %v847 = vsel %vm742, %v842, 0
      %849 = vmatprep.subr.bf16.mxu0 0
      %850 = vmatpush1.bf16.xpose.msra.mxu0 0
      %851 = vmatprep.subr.bf16.mxu0 0
      %852 = vmatpush1.bf16.xpose.msra.mxu0 0
      %853 = vmatprep.subr.bf16.mxu0 0
      %854 = vmatpush1.bf16.xpose.msra.mxu0 0
      %855 = vmatprep.subr.bf16.mxu0 0
      %856 = vmatpush1.bf16.xpose.msra.mxu0 0
      %857 = vmatprep.subr.bf16.mxu0 0
      %858 = vmatpush1.bf16.xpose.msra.mxu0 0
      %859 = vmatprep.subr.bf16.mxu0 0
      %860 = vmatpush1.bf16.xpose.msra.mxu0 0
      %861 = vmatprep.subr.bf16.mxu0 0
      %862 = vmatpush1.bf16.xpose.msra.mxu0 0
      %863 = vmatprep.subr.bf16.mxu0 0
      %864 = vmatpush1.bf16.xpose.msra.mxu0 %v847
      %865 = vmatprep.subr.bf16.mxu0 0
      %866 = vmatpush2.bf16.xpose.msra.mxu0 0
      %867 = vmatprep.subr.bf16.mxu0 0
      %868 = vmatpush2.bf16.xpose.msra.mxu0 0
      %869 = vmatprep.subr.bf16.mxu0 0
      %870 = vmatpush2.bf16.xpose.msra.mxu0 0
      %871 = vmatprep.subr.bf16.mxu0 0
      %872 = vmatpush2.bf16.xpose.msra.mxu0 0
      %873 = vmatprep.subr.bf16.mxu0 0
      %874 = vmatpush2.bf16.xpose.msra.mxu0 0
      %875 = vmatprep.subr.bf16.mxu0 0
      %876 = vmatpush2.bf16.xpose.msra.mxu0 0
      %877 = vmatprep.subr.bf16.mxu0 0
      %878 = vmatpush2.bf16.xpose.msra.mxu0 0
      %879 = vmatprep.subr.bf16.mxu0 0
      %880 = vmatpush2.bf16.xpose.msra.mxu0 0
      %881 = vmatprep.mubr.bf16.mxu0 0
      %882 = vmatmul.mubr.bf16.gmra.mxu0 %v844
      %v883 = vpop.f32.mrf.mxu0
      %v884 = vadd.f32 %v737, %v883
      %v885 = vpop.f32.mrf.mxu0
      %v886 = vpop.f32.mrf.mxu0
      %v887 = vadd.f32 %v738, %v886
      %v888 = vpop.f32.mrf.mxu0
      %889 = vdwg.mxu0
      %891 = vrot.lane.b32.xlu0 %v736, 96
      %v892 = vpop.permute.xlu0 %891
      %v894 = vsel %vm742, %v736, 0
      %v897 = vsel %vm742, %v892, 0
      %899 = vmatprep.subr.bf16.mxu0 0
      %900 = vmatpush1.bf16.xpose.msra.mxu0 0
      %901 = vmatprep.subr.bf16.mxu0 0
      %902 = vmatpush1.bf16.xpose.msra.mxu0 0
      %903 = vmatprep.subr.bf16.mxu0 0
      %904 = vmatpush1.bf16.xpose.msra.mxu0 0
      %905 = vmatprep.subr.bf16.mxu0 0
      %906 = vmatpush1.bf16.xpose.msra.mxu0 0
      %907 = vmatprep.subr.bf16.mxu0 0
      %908 = vmatpush1.bf16.xpose.msra.mxu0 0
      %909 = vmatprep.subr.bf16.mxu0 0
      %910 = vmatpush1.bf16.xpose.msra.mxu0 0
      %911 = vmatprep.subr.bf16.mxu0 0
      %912 = vmatpush1.bf16.xpose.msra.mxu0 0
      %913 = vmatprep.subr.bf16.mxu0 0
      %914 = vmatpush1.bf16.xpose.msra.mxu0 %v897
      %915 = vmatprep.subr.bf16.mxu0 0
      %916 = vmatpush2.bf16.xpose.msra.mxu0 0
      %917 = vmatprep.subr.bf16.mxu0 0
      %918 = vmatpush2.bf16.xpose.msra.mxu0 0
      %919 = vmatprep.subr.bf16.mxu0 0
      %920 = vmatpush2.bf16.xpose.msra.mxu0 0
      %921 = vmatprep.subr.bf16.mxu0 0
      %922 = vmatpush2.bf16.xpose.msra.mxu0 0
      %923 = vmatprep.subr.bf16.mxu0 0
      %924 = vmatpush2.bf16.xpose.msra.mxu0 0
      %925 = vmatprep.subr.bf16.mxu0 0
      %926 = vmatpush2.bf16.xpose.msra.mxu0 0
      %927 = vmatprep.subr.bf16.mxu0 0
      %928 = vmatpush2.bf16.xpose.msra.mxu0 0
      %929 = vmatprep.subr.bf16.mxu0 0
      %930 = vmatpush2.bf16.xpose.msra.mxu0 0
      %931 = vmatprep.mubr.bf16.mxu0 0
      %932 = vmatmul.mubr.bf16.gmra.mxu0 %v894
      %v933 = vpop.f32.mrf.mxu0
      %v934 = vadd.f32 %v737, %v933
      %v935 = vpop.f32.mrf.mxu0
      %v936 = vpop.f32.mrf.mxu0
      %v937 = vadd.f32 %v738, %v936
      %v938 = vpop.f32.mrf.mxu0
      %939 = vdwg.mxu0
      %vm940 = vcmask 130048
      %v941 = vsel %vm940, %v784, -inf
      %942 = vmax.xlane.f32.xlu0 %v941
      %v943 = vpop.xlane.xlu0 %942
      %v944 = vsel %vm940, %v787, -inf
      %945 = vmax.xlane.f32.xlu0 %v944
      %v946 = vpop.xlane.xlu0 %945
      %v947 = vsel %vm940, %v834, -inf
      %948 = vmax.xlane.f32.xlu0 %v947
      %v949 = vpop.xlane.xlu0 %948
      %v950 = vsel %vm940, %v837, -inf
      %951 = vmax.xlane.f32.xlu0 %v950
      %v952 = vpop.xlane.xlu0 %951
      %v953 = vsel %vm940, %v884, -inf
      %954 = vmax.xlane.f32.xlu0 %v953
      %v955 = vpop.xlane.xlu0 %954
      %v956 = vsel %vm940, %v887, -inf
      %957 = vmax.xlane.f32.xlu0 %v956
      %v958 = vpop.xlane.xlu0 %957
      %v959 = vsel %vm940, %v934, -inf
      %960 = vmax.xlane.f32.xlu0 %v959
      %v961 = vpop.xlane.xlu0 %960
      %v962 = vsel %vm940, %v937, -inf
      %963 = vmax.xlane.f32.xlu0 %v962
      %v964 = vpop.xlane.xlu0 %963
      %v965 = vsub.f32 %v784, %v943
      %v966 = vsub.f32 %v787, %v946
      %v967 = vsub.f32 %v834, %v949
      %v968 = vsub.f32 %v837, %v952
      %v969 = vsub.f32 %v884, %v955
      %v970 = vsub.f32 %v887, %v958
      %v971 = vsub.f32 %v934, %v961
      %v972 = vsub.f32 %v937, %v964
      %v973 = vmul.f32 %v965, 1.442695
      %v974 = vpow.pop %v973
      %v975 = vmul.f32 %v966, 1.442695
      %v976 = vpow.pop %v975
      %v977 = vmul.f32 %v967, 1.442695
      %v978 = vpow.pop %v977
      %v979 = vmul.f32 %v968, 1.442695
      %v980 = vpow.pop %v979
      %v981 = vmul.f32 %v969, 1.442695
      %v982 = vpow.pop %v981
      %v983 = vmul.f32 %v970, 1.442695
      %v984 = vpow.pop %v983
      %v985 = vmul.f32 %v971, 1.442695
      %v986 = vpow.pop %v985
      %v987 = vmul.f32 %v972, 1.442695
      %v988 = vpow.pop %v987
      %v989 = vsel %vm940, %v974, 0.0
      %990 = vadd.xlane.f32.xlu0 %v989
      %v991 = vpop.xlane.xlu0 %990
      %v992 = vsel %vm940, %v976, 0.0
      %993 = vadd.xlane.f32.xlu0 %v992
      %v994 = vpop.xlane.xlu0 %993
      %v995 = vsel %vm940, %v978, 0.0
      %996 = vadd.xlane.f32.xlu0 %v995
      %v997 = vpop.xlane.xlu0 %996
      %v998 = vsel %vm940, %v980, 0.0
      %999 = vadd.xlane.f32.xlu0 %v998
      %v1000 = vpop.xlane.xlu0 %999
      %v1001 = vsel %vm940, %v982, 0.0
      %1002 = vadd.xlane.f32.xlu0 %v1001
      %v1003 = vpop.xlane.xlu0 %1002
      %v1004 = vsel %vm940, %v984, 0.0
      %1005 = vadd.xlane.f32.xlu0 %v1004
      %v1006 = vpop.xlane.xlu0 %1005
      %v1007 = vsel %vm940, %v986, 0.0
      %1008 = vadd.xlane.f32.xlu0 %v1007
      %v1009 = vpop.xlane.xlu0 %1008
      %v1010 = vsel %vm940, %v988, 0.0
      %1011 = vadd.xlane.f32.xlu0 %v1010
      %v1012 = vpop.xlane.xlu0 %1011
      %v1013 = vrcp.pop %v991
      %v1014 = vmul.f32 %v974, %v1013
      %v1015 = vrcp.pop %v994
      %v1016 = vmul.f32 %v976, %v1015
      %v1017 = vrcp.pop %v997
      %v1018 = vmul.f32 %v978, %v1017
      %v1019 = vrcp.pop %v1000
      %v1020 = vmul.f32 %v980, %v1019
      %v1021 = vrcp.pop %v1003
      %v1022 = vmul.f32 %v982, %v1021
      %v1023 = vrcp.pop %v1006
      %v1024 = vmul.f32 %v984, %v1023
      %v1025 = vrcp.pop %v1009
      %v1026 = vmul.f32 %v986, %v1025
      %v1027 = vrcp.pop %v1012
      %v1028 = vmul.f32 %v988, %v1027
      %v1029 = vpack.c.bf16 %v1016, %v1014
      %v1030 = vpack.c.bf16 %v1020, %v1018
      %v1031 = vpack.c.bf16 %v1024, %v1022
      %v1032 = vpack.c.bf16 %v1028, %v1026
      %1033 = vrot.lane.b32.xlu0 %v733, 64
      %v1034 = vpop.permute.xlu0 %1033
      %v1037 = vsel %vm940, %v1029, 0
      %1039 = vmatprep.subr.bf16.mxu0 0
      %1040 = vmatpush1.bf16.msra.mxu0 0
      %1041 = vmatprep.subr.bf16.mxu0 0
      %1042 = vmatpush1.bf16.msra.mxu0 0
      %1043 = vmatprep.subr.bf16.mxu0 0
      %1044 = vmatpush1.bf16.msra.mxu0 0
      %1045 = vmatprep.subr.bf16.mxu0 0
      %1046 = vmatpush1.bf16.msra.mxu0 0
      %1047 = vmatprep.subr.bf16.mxu0 0
      %1048 = vmatpush1.bf16.msra.mxu0 0
      %1049 = vmatprep.subr.bf16.mxu0 0
      %1050 = vmatpush1.bf16.msra.mxu0 0
      %1051 = vmatprep.subr.bf16.mxu0 0
      %1052 = vmatpush1.bf16.msra.mxu0 0
      %1053 = vmatprep.subr.bf16.mxu0 0
      %1054 = vmatpush1.bf16.msra.mxu0 %v1034
      %1055 = vmatprep.subr.bf16.mxu0 0
      %1056 = vmatpush2.bf16.msra.mxu0 0
      %1057 = vmatprep.subr.bf16.mxu0 0
      %1058 = vmatpush2.bf16.msra.mxu0 0
      %1059 = vmatprep.subr.bf16.mxu0 0
      %1060 = vmatpush2.bf16.msra.mxu0 0
      %1061 = vmatprep.subr.bf16.mxu0 0
      %1062 = vmatpush2.bf16.msra.mxu0 0
      %1063 = vmatprep.subr.bf16.mxu0 0
      %1064 = vmatpush2.bf16.msra.mxu0 0
      %1065 = vmatprep.subr.bf16.mxu0 0
      %1066 = vmatpush2.bf16.msra.mxu0 0
      %1067 = vmatprep.subr.bf16.mxu0 0
      %1068 = vmatpush2.bf16.msra.mxu0 0
      %1069 = vmatprep.subr.bf16.mxu0 0
      %1070 = vmatpush2.bf16.msra.mxu0 0
      %1071 = vmatprep.mubr.bf16.mxu0 0
      %1072 = vmatmul.mubr.bf16.gmra.mxu0 %v1037
      %v1073 = vpop.f32.mrf.mxu0
      %v1074 = vadd.f32 0.0, %v1073
      %v1075 = vpop.f32.mrf.mxu0
      %v1076 = vpop.f32.mrf.mxu0
      %v1077 = vadd.f32 0.0, %v1076
      %v1078 = vpop.f32.mrf.mxu0
      %1079 = vdwg.mxu0
      %1080 = vrot.lane.b32.xlu0 %v734, 64
      %v1081 = vpop.permute.xlu0 %1080
      %v1084 = vsel %vm940, %v1030, 0
      %1086 = vmatprep.subr.bf16.mxu0 0
      %1087 = vmatpush1.bf16.msra.mxu0 0
      %1088 = vmatprep.subr.bf16.mxu0 0
      %1089 = vmatpush1.bf16.msra.mxu0 0
      %1090 = vmatprep.subr.bf16.mxu0 0
      %1091 = vmatpush1.bf16.msra.mxu0 0
      %1092 = vmatprep.subr.bf16.mxu0 0
      %1093 = vmatpush1.bf16.msra.mxu0 0
      %1094 = vmatprep.subr.bf16.mxu0 0
      %1095 = vmatpush1.bf16.msra.mxu0 0
      %1096 = vmatprep.subr.bf16.mxu0 0
      %1097 = vmatpush1.bf16.msra.mxu0 0
      %1098 = vmatprep.subr.bf16.mxu0 0
      %1099 = vmatpush1.bf16.msra.mxu0 0
      %1100 = vmatprep.subr.bf16.mxu0 0
      %1101 = vmatpush1.bf16.msra.mxu0 %v1081
      %1102 = vmatprep.subr.bf16.mxu0 0
      %1103 = vmatpush2.bf16.msra.mxu0 0
      %1104 = vmatprep.subr.bf16.mxu0 0
      %1105 = vmatpush2.bf16.msra.mxu0 0
      %1106 = vmatprep.subr.bf16.mxu0 0
      %1107 = vmatpush2.bf16.msra.mxu0 0
      %1108 = vmatprep.subr.bf16.mxu0 0
      %1109 = vmatpush2.bf16.msra.mxu0 0
      %1110 = vmatprep.subr.bf16.mxu0 0
      %1111 = vmatpush2.bf16.msra.mxu0 0
      %1112 = vmatprep.subr.bf16.mxu0 0
      %1113 = vmatpush2.bf16.msra.mxu0 0
      %1114 = vmatprep.subr.bf16.mxu0 0
      %1115 = vmatpush2.bf16.msra.mxu0 0
      %1116 = vmatprep.subr.bf16.mxu0 0
      %1117 = vmatpush2.bf16.msra.mxu0 0
      %1118 = vmatprep.mubr.bf16.mxu0 0
      %1119 = vmatmul.mubr.bf16.gmra.mxu0 %v1084
      %v1120 = vpop.f32.mrf.mxu0
      %v1121 = vadd.f32 0.0, %v1120
      %v1122 = vpop.f32.mrf.mxu0
      %v1123 = vpop.f32.mrf.mxu0
      %v1124 = vadd.f32 0.0, %v1123
      %v1125 = vpop.f32.mrf.mxu0
      %1126 = vdwg.mxu0
      %1127 = vrot.lane.b32.xlu0 %v735, 64
      %v1128 = vpop.permute.xlu0 %1127
      %v1131 = vsel %vm940, %v1031, 0
      %1133 = vmatprep.subr.bf16.mxu0 0
      %1134 = vmatpush1.bf16.msra.mxu0 0
      %1135 = vmatprep.subr.bf16.mxu0 0
      %1136 = vmatpush1.bf16.msra.mxu0 0
      %1137 = vmatprep.subr.bf16.mxu0 0
      %1138 = vmatpush1.bf16.msra.mxu0 0
      %1139 = vmatprep.subr.bf16.mxu0 0
      %1140 = vmatpush1.bf16.msra.mxu0 0
      %1141 = vmatprep.subr.bf16.mxu0 0
      %1142 = vmatpush1.bf16.msra.mxu0 0
      %1143 = vmatprep.subr.bf16.mxu0 0
      %1144 = vmatpush1.bf16.msra.mxu0 0
      %1145 = vmatprep.subr.bf16.mxu0 0
      %1146 = vmatpush1.bf16.msra.mxu0 0
      %1147 = vmatprep.subr.bf16.mxu0 0
      %1148 = vmatpush1.bf16.msra.mxu0 %v1128
      %1149 = vmatprep.subr.bf16.mxu0 0
      %1150 = vmatpush2.bf16.msra.mxu0 0
      %1151 = vmatprep.subr.bf16.mxu0 0
      %1152 = vmatpush2.bf16.msra.mxu0 0
      %1153 = vmatprep.subr.bf16.mxu0 0
      %1154 = vmatpush2.bf16.msra.mxu0 0
      %1155 = vmatprep.subr.bf16.mxu0 0
      %1156 = vmatpush2.bf16.msra.mxu0 0
      %1157 = vmatprep.subr.bf16.mxu0 0
      %1158 = vmatpush2.bf16.msra.mxu0 0
      %1159 = vmatprep.subr.bf16.mxu0 0
      %1160 = vmatpush2.bf16.msra.mxu0 0
      %1161 = vmatprep.subr.bf16.mxu0 0
      %1162 = vmatpush2.bf16.msra.mxu0 0
      %1163 = vmatprep.subr.bf16.mxu0 0
      %1164 = vmatpush2.bf16.msra.mxu0 0
      %1165 = vmatprep.mubr.bf16.mxu0 0
      %1166 = vmatmul.mubr.bf16.gmra.mxu0 %v1131
      %v1167 = vpop.f32.mrf.mxu0
      %v1168 = vadd.f32 0.0, %v1167
      %v1169 = vpop.f32.mrf.mxu0
      %v1170 = vpop.f32.mrf.mxu0
      %v1171 = vadd.f32 0.0, %v1170
      %v1172 = vpop.f32.mrf.mxu0
      %1173 = vdwg.mxu0
      %1174 = vrot.lane.b32.xlu0 %v736, 64
      %v1175 = vpop.permute.xlu0 %1174
      %v1178 = vsel %vm940, %v1032, 0
      %1180 = vmatprep.subr.bf16.mxu0 0
      %1181 = vmatpush1.bf16.msra.mxu0 0
      %1182 = vmatprep.subr.bf16.mxu0 0
      %1183 = vmatpush1.bf16.msra.mxu0 0
      %1184 = vmatprep.subr.bf16.mxu0 0
      %1185 = vmatpush1.bf16.msra.mxu0 0
      %1186 = vmatprep.subr.bf16.mxu0 0
      %1187 = vmatpush1.bf16.msra.mxu0 0
      %1188 = vmatprep.subr.bf16.mxu0 0
      %1189 = vmatpush1.bf16.msra.mxu0 0
      %1190 = vmatprep.subr.bf16.mxu0 0
      %1191 = vmatpush1.bf16.msra.mxu0 0
      %1192 = vmatprep.subr.bf16.mxu0 0
      %1193 = vmatpush1.bf16.msra.mxu0 0
      %1194 = vmatprep.subr.bf16.mxu0 0
      %1195 = vmatpush1.bf16.msra.mxu0 %v1175
      %1196 = vmatprep.subr.bf16.mxu0 0
      %1197 = vmatpush2.bf16.msra.mxu0 0
      %1198 = vmatprep.subr.bf16.mxu0 0
      %1199 = vmatpush2.bf16.msra.mxu0 0
      %1200 = vmatprep.subr.bf16.mxu0 0
      %1201 = vmatpush2.bf16.msra.mxu0 0
      %1202 = vmatprep.subr.bf16.mxu0 0
      %1203 = vmatpush2.bf16.msra.mxu0 0
      %1204 = vmatprep.subr.bf16.mxu0 0
      %1205 = vmatpush2.bf16.msra.mxu0 0
      %1206 = vmatprep.subr.bf16.mxu0 0
      %1207 = vmatpush2.bf16.msra.mxu0 0
      %1208 = vmatprep.subr.bf16.mxu0 0
      %1209 = vmatpush2.bf16.msra.mxu0 0
      %1210 = vmatprep.subr.bf16.mxu0 0
      %1211 = vmatpush2.bf16.msra.mxu0 0
      %1212 = vmatprep.mubr.bf16.mxu0 0
      %1213 = vmatmul.mubr.bf16.gmra.mxu0 %v1178
      %v1214 = vpop.f32.mrf.mxu0
      %v1215 = vadd.f32 0.0, %v1214
      %v1216 = vpop.f32.mrf.mxu0
      %v1217 = vpop.f32.mrf.mxu0
      %v1218 = vadd.f32 0.0, %v1217
      %v1219 = vpop.f32.mrf.mxu0
      %1220 = vdwg.mxu0
      %v1221 = vpack.c.bf16 %v1077, %v1074
      %v1222 = vpack.c.bf16 %v1124, %v1121
      %v1223 = vpack.c.bf16 %v1171, %v1168
      %v1224 = vpack.c.bf16 %v1218, %v1215
      %v1225 = vld [vmem:[%s5] sm:$0xf]
      %s1226 = scalar_lea.vmem %s7, 16
      %v1227 = vld [vmem:[%s1226] sm:$0xff]
      %v1228 = vld [vmem:[%s1226 + $0x8] sm:$0xff]
      %1229 = vrot.lane.b32.xlu0 %v733, 120
      %v1230 = vpop.permute.xlu0 %1229
      %1231 = vrot.lane.b32.xlu0 %v733, 88
      %v1232 = vpop.permute.xlu0 %1231
      %v1234 = vsel %vm742, %v1230, 0
      %v1237 = vsel %vm742, %v1232, 0
      %1239 = vmatprep.subr.bf16.mxu0 0
      %1240 = vmatpush1.bf16.xpose.msra.mxu0 0
      %1241 = vmatprep.subr.bf16.mxu0 0
      %1242 = vmatpush1.bf16.xpose.msra.mxu0 0
      %1243 = vmatprep.subr.bf16.mxu0 0
      %1244 = vmatpush1.bf16.xpose.msra.mxu0 0
      %1245 = vmatprep.subr.bf16.mxu0 0
      %1246 = vmatpush1.bf16.xpose.msra.mxu0 0
      %1247 = vmatprep.subr.bf16.mxu0 0
      %1248 = vmatpush1.bf16.xpose.msra.mxu0 0
      %1249 = vmatprep.subr.bf16.mxu0 0
      %1250 = vmatpush1.bf16.xpose.msra.mxu0 0
      %1251 = vmatprep.subr.bf16.mxu0 0
      %1252 = vmatpush1.bf16.xpose.msra.mxu0 0
      %1253 = vmatprep.subr.bf16.mxu0 0
      %1254 = vmatpush1.bf16.xpose.msra.mxu0 %v1237
      %1255 = vmatprep.subr.bf16.mxu0 0
      %1256 = vmatpush2.bf16.xpose.msra.mxu0 0
      %1257 = vmatprep.subr.bf16.mxu0 0
      %1258 = vmatpush2.bf16.xpose.msra.mxu0 0
      %1259 = vmatprep.subr.bf16.mxu0 0
      %1260 = vmatpush2.bf16.xpose.msra.mxu0 0
      %1261 = vmatprep.subr.bf16.mxu0 0
      %1262 = vmatpush2.bf16.xpose.msra.mxu0 0
      %1263 = vmatprep.subr.bf16.mxu0 0
      %1264 = vmatpush2.bf16.xpose.msra.mxu0 0
      %1265 = vmatprep.subr.bf16.mxu0 0
      %1266 = vmatpush2.bf16.xpose.msra.mxu0 0
      %1267 = vmatprep.subr.bf16.mxu0 0
      %1268 = vmatpush2.bf16.xpose.msra.mxu0 0
      %1269 = vmatprep.subr.bf16.mxu0 0
      %1270 = vmatpush2.bf16.xpose.msra.mxu0 0
      %1271 = vmatprep.mubr.bf16.mxu0 0
      %1272 = vmatmul.mubr.bf16.gmra.mxu0 %v1234
      %v1273 = vpop.f32.mrf.mxu0
      %v1274 = vadd.f32 %v1227, %v1273
      %v1275 = vpop.f32.mrf.mxu0
      %v1276 = vpop.f32.mrf.mxu0
      %v1277 = vadd.f32 %v1228, %v1276
      %v1278 = vpop.f32.mrf.mxu0
      %1279 = vdwg.mxu0
      %1280 = vrot.lane.b32.xlu0 %v734, 120
      %v1281 = vpop.permute.xlu0 %1280
      %1282 = vrot.lane.b32.xlu0 %v734, 88
      %v1283 = vpop.permute.xlu0 %1282
      %v1285 = vsel %vm742, %v1281, 0
      %v1288 = vsel %vm742, %v1283, 0
      %1290 = vmatprep.subr.bf16.mxu0 0
      %1291 = vmatpush1.bf16.xpose.msra.mxu0 0
      %1292 = vmatprep.subr.bf16.mxu0 0
      %1293 = vmatpush1.bf16.xpose.msra.mxu0 0
      %1294 = vmatprep.subr.bf16.mxu0 0
      %1295 = vmatpush1.bf16.xpose.msra.mxu0 0
      %1296 = vmatprep.subr.bf16.mxu0 0
      %1297 = vmatpush1.bf16.xpose.msra.mxu0 0
      %1298 = vmatprep.subr.bf16.mxu0 0
      %1299 = vmatpush1.bf16.xpose.msra.mxu0 0
      %1300 = vmatprep.subr.bf16.mxu0 0
      %1301 = vmatpush1.bf16.xpose.msra.mxu0 0
      %1302 = vmatprep.subr.bf16.mxu0 0
      %1303 = vmatpush1.bf16.xpose.msra.mxu0 0
      %1304 = vmatprep.subr.bf16.mxu0 0
      %1305 = vmatpush1.bf16.xpose.msra.mxu0 %v1288
      %1306 = vmatprep.subr.bf16.mxu0 0
      %1307 = vmatpush2.bf16.xpose.msra.mxu0 0
      %1308 = vmatprep.subr.bf16.mxu0 0
      %1309 = vmatpush2.bf16.xpose.msra.mxu0 0
      %1310 = vmatprep.subr.bf16.mxu0 0
      %1311 = vmatpush2.bf16.xpose.msra.mxu0 0
      %1312 = vmatprep.subr.bf16.mxu0 0
      %1313 = vmatpush2.bf16.xpose.msra.mxu0 0
      %1314 = vmatprep.subr.bf16.mxu0 0
      %1315 = vmatpush2.bf16.xpose.msra.mxu0 0
      %1316 = vmatprep.subr.bf16.mxu0 0
      %1317 = vmatpush2.bf16.xpose.msra.mxu0 0
      %1318 = vmatprep.subr.bf16.mxu0 0
      %1319 = vmatpush2.bf16.xpose.msra.mxu0 0
      %1320 = vmatprep.subr.bf16.mxu0 0
      %1321 = vmatpush2.bf16.xpose.msra.mxu0 0
      %1322 = vmatprep.mubr.bf16.mxu0 0
      %1323 = vmatmul.mubr.bf16.gmra.mxu0 %v1285
      %v1324 = vpop.f32.mrf.mxu0
      %v1325 = vadd.f32 %v1227, %v1324
      %v1326 = vpop.f32.mrf.mxu0
      %v1327 = vpop.f32.mrf.mxu0
      %v1328 = vadd.f32 %v1228, %v1327
      %v1329 = vpop.f32.mrf.mxu0
      %1330 = vdwg.mxu0
      %1331 = vrot.lane.b32.xlu0 %v735, 120
      %v1332 = vpop.permute.xlu0 %1331
      %1333 = vrot.lane.b32.xlu0 %v735, 88
      %v1334 = vpop.permute.xlu0 %1333
      %v1336 = vsel %vm742, %v1332, 0
      %v1339 = vsel %vm742, %v1334, 0
      %1341 = vmatprep.subr.bf16.mxu0 0
      %1342 = vmatpush1.bf16.xpose.msra.mxu0 0
      %1343 = vmatprep.subr.bf16.mxu0 0
      %1344 = vmatpush1.bf16.xpose.msra.mxu0 0
      %1345 = vmatprep.subr.bf16.mxu0 0
      %1346 = vmatpush1.bf16.xpose.msra.mxu0 0
      %1347 = vmatprep.subr.bf16.mxu0 0
      %1348 = vmatpush1.bf16.xpose.msra.mxu0 0
      %1349 = vmatprep.subr.bf16.mxu0 0
      %1350 = vmatpush1.bf16.xpose.msra.mxu0 0
      %1351 = vmatprep.subr.bf16.mxu0 0
      %1352 = vmatpush1.bf16.xpose.msra.mxu0 0
      %1353 = vmatprep.subr.bf16.mxu0 0
      %1354 = vmatpush1.bf16.xpose.msra.mxu0 0
      %1355 = vmatprep.subr.bf16.mxu0 0
      %1356 = vmatpush1.bf16.xpose.msra.mxu0 %v1339
      %1357 = vmatprep.subr.bf16.mxu0 0
      %1358 = vmatpush2.bf16.xpose.msra.mxu0 0
      %1359 = vmatprep.subr.bf16.mxu0 0
      %1360 = vmatpush2.bf16.xpose.msra.mxu0 0
      %1361 = vmatprep.subr.bf16.mxu0 0
      %1362 = vmatpush2.bf16.xpose.msra.mxu0 0
      %1363 = vmatprep.subr.bf16.mxu0 0
      %1364 = vmatpush2.bf16.xpose.msra.mxu0 0
      %1365 = vmatprep.subr.bf16.mxu0 0
      %1366 = vmatpush2.bf16.xpose.msra.mxu0 0
      %1367 = vmatprep.subr.bf16.mxu0 0
      %1368 = vmatpush2.bf16.xpose.msra.mxu0 0
      %1369 = vmatprep.subr.bf16.mxu0 0
      %1370 = vmatpush2.bf16.xpose.msra.mxu0 0
      %1371 = vmatprep.subr.bf16.mxu0 0
      %1372 = vmatpush2.bf16.xpose.msra.mxu0 0
      %1373 = vmatprep.mubr.bf16.mxu0 0
      %1374 = vmatmul.mubr.bf16.gmra.mxu0 %v1336
      %v1375 = vpop.f32.mrf.mxu0
      %v1376 = vadd.f32 %v1227, %v1375
      %v1377 = vpop.f32.mrf.mxu0
      %v1378 = vpop.f32.mrf.mxu0
      %v1379 = vadd.f32 %v1228, %v1378
      %v1380 = vpop.f32.mrf.mxu0
      %1381 = vdwg.mxu0
      %1382 = vrot.lane.b32.xlu0 %v736, 120
      %v1383 = vpop.permute.xlu0 %1382
      %1384 = vrot.lane.b32.xlu0 %v736, 88
      %v1385 = vpop.permute.xlu0 %1384
      %v1387 = vsel %vm742, %v1383, 0
      %v1390 = vsel %vm742, %v1385, 0
      %1392 = vmatprep.subr.bf16.mxu0 0
      %1393 = vmatpush1.bf16.xpose.msra.mxu0 0
      %1394 = vmatprep.subr.bf16.mxu0 0
      %1395 = vmatpush1.bf16.xpose.msra.mxu0 0
      %1396 = vmatprep.subr.bf16.mxu0 0
      %1397 = vmatpush1.bf16.xpose.msra.mxu0 0
      %1398 = vmatprep.subr.bf16.mxu0 0
      %1399 = vmatpush1.bf16.xpose.msra.mxu0 0
      %1400 = vmatprep.subr.bf16.mxu0 0
      %1401 = vmatpush1.bf16.xpose.msra.mxu0 0
      %1402 = vmatprep.subr.bf16.mxu0 0
      %1403 = vmatpush1.bf16.xpose.msra.mxu0 0
      %1404 = vmatprep.subr.bf16.mxu0 0
      %1405 = vmatpush1.bf16.xpose.msra.mxu0 0
      %1406 = vmatprep.subr.bf16.mxu0 0
      %1407 = vmatpush1.bf16.xpose.msra.mxu0 %v1390
      %1408 = vmatprep.subr.bf16.mxu0 0
      %1409 = vmatpush2.bf16.xpose.msra.mxu0 0
      %1410 = vmatprep.subr.bf16.mxu0 0
      %1411 = vmatpush2.bf16.xpose.msra.mxu0 0
      %1412 = vmatprep.subr.bf16.mxu0 0
      %1413 = vmatpush2.bf16.xpose.msra.mxu0 0
      %1414 = vmatprep.subr.bf16.mxu0 0
      %1415 = vmatpush2.bf16.xpose.msra.mxu0 0
      %1416 = vmatprep.subr.bf16.mxu0 0
      %1417 = vmatpush2.bf16.xpose.msra.mxu0 0
      %1418 = vmatprep.subr.bf16.mxu0 0
      %1419 = vmatpush2.bf16.xpose.msra.mxu0 0
      %1420 = vmatprep.subr.bf16.mxu0 0
      %1421 = vmatpush2.bf16.xpose.msra.mxu0 0
      %1422 = vmatprep.subr.bf16.mxu0 0
      %1423 = vmatpush2.bf16.xpose.msra.mxu0 0
      %1424 = vmatprep.mubr.bf16.mxu0 0
      %1425 = vmatmul.mubr.bf16.gmra.mxu0 %v1387
      %v1426 = vpop.f32.mrf.mxu0
      %v1427 = vadd.f32 %v1227, %v1426
      %v1428 = vpop.f32.mrf.mxu0
      %v1429 = vpop.f32.mrf.mxu0
      %v1430 = vadd.f32 %v1228, %v1429
      %v1431 = vpop.f32.mrf.mxu0
      %1432 = vdwg.mxu0
      %v1433 = vsel %vm940, %v1274, -inf
      %1434 = vmax.xlane.f32.xlu0 %v1433
      %v1435 = vpop.xlane.xlu0 %1434
      %v1436 = vsel %vm940, %v1277, -inf
      %1437 = vmax.xlane.f32.xlu0 %v1436
      %v1438 = vpop.xlane.xlu0 %1437
      %v1439 = vsel %vm940, %v1325, -inf
      %1440 = vmax.xlane.f32.xlu0 %v1439
      %v1441 = vpop.xlane.xlu0 %1440
      %v1442 = vsel %vm940, %v1328, -inf
      %1443 = vmax.xlane.f32.xlu0 %v1442
      %v1444 = vpop.xlane.xlu0 %1443
      %v1445 = vsel %vm940, %v1376, -inf
      %1446 = vmax.xlane.f32.xlu0 %v1445
      %v1447 = vpop.xlane.xlu0 %1446
      %v1448 = vsel %vm940, %v1379, -inf
      %1449 = vmax.xlane.f32.xlu0 %v1448
      %v1450 = vpop.xlane.xlu0 %1449
      %v1451 = vsel %vm940, %v1427, -inf
      %1452 = vmax.xlane.f32.xlu0 %v1451
      %v1453 = vpop.xlane.xlu0 %1452
      %v1454 = vsel %vm940, %v1430, -inf
      %1455 = vmax.xlane.f32.xlu0 %v1454
      %v1456 = vpop.xlane.xlu0 %1455
      %v1457 = vsub.f32 %v1274, %v1435
      %v1458 = vsub.f32 %v1277, %v1438
      %v1459 = vsub.f32 %v1325, %v1441
      %v1460 = vsub.f32 %v1328, %v1444
      %v1461 = vsub.f32 %v1376, %v1447
      %v1462 = vsub.f32 %v1379, %v1450
      %v1463 = vsub.f32 %v1427, %v1453
      %v1464 = vsub.f32 %v1430, %v1456
      %v1465 = vmul.f32 %v1457, 1.442695
      %v1466 = vpow.pop %v1465
      %v1467 = vmul.f32 %v1458, 1.442695
      %v1468 = vpow.pop %v1467
      %v1469 = vmul.f32 %v1459, 1.442695
      %v1470 = vpow.pop %v1469
      %v1471 = vmul.f32 %v1460, 1.442695
      %v1472 = vpow.pop %v1471
      %v1473 = vmul.f32 %v1461, 1.442695
      %v1474 = vpow.pop %v1473
      %v1475 = vmul.f32 %v1462, 1.442695
      %v1476 = vpow.pop %v1475
      %v1477 = vmul.f32 %v1463, 1.442695
      %v1478 = vpow.pop %v1477
      %v1479 = vmul.f32 %v1464, 1.442695
      %v1480 = vpow.pop %v1479
      %v1481 = vsel %vm940, %v1466, 0.0
      %1482 = vadd.xlane.f32.xlu0 %v1481
      %v1483 = vpop.xlane.xlu0 %1482
      %v1484 = vsel %vm940, %v1468, 0.0
      %1485 = vadd.xlane.f32.xlu0 %v1484
      %v1486 = vpop.xlane.xlu0 %1485
      %v1487 = vsel %vm940, %v1470, 0.0
      %1488 = vadd.xlane.f32.xlu0 %v1487
      %v1489 = vpop.xlane.xlu0 %1488
      %v1490 = vsel %vm940, %v1472, 0.0
      %1491 = vadd.xlane.f32.xlu0 %v1490
      %v1492 = vpop.xlane.xlu0 %1491
      %v1493 = vsel %vm940, %v1474, 0.0
      %1494 = vadd.xlane.f32.xlu0 %v1493
      %v1495 = vpop.xlane.xlu0 %1494
      %v1496 = vsel %vm940, %v1476, 0.0
      %1497 = vadd.xlane.f32.xlu0 %v1496
      %v1498 = vpop.xlane.xlu0 %1497
      %v1499 = vsel %vm940, %v1478, 0.0
      %1500 = vadd.xlane.f32.xlu0 %v1499
      %v1501 = vpop.xlane.xlu0 %1500
      %v1502 = vsel %vm940, %v1480, 0.0
      %1503 = vadd.xlane.f32.xlu0 %v1502
      %v1504 = vpop.xlane.xlu0 %1503
      %v1505 = vrcp.pop %v1483
      %v1506 = vmul.f32 %v1466, %v1505
      %v1507 = vrcp.pop %v1486
      %v1508 = vmul.f32 %v1468, %v1507
      %v1509 = vrcp.pop %v1489
      %v1510 = vmul.f32 %v1470, %v1509
      %v1511 = vrcp.pop %v1492
      %v1512 = vmul.f32 %v1472, %v1511
      %v1513 = vrcp.pop %v1495
      %v1514 = vmul.f32 %v1474, %v1513
      %v1515 = vrcp.pop %v1498
      %v1516 = vmul.f32 %v1476, %v1515
      %v1517 = vrcp.pop %v1501
      %v1518 = vmul.f32 %v1478, %v1517
      %v1519 = vrcp.pop %v1504
      %v1520 = vmul.f32 %v1480, %v1519
      %v1521 = vpack.c.bf16 %v1508, %v1506
      %v1522 = vpack.c.bf16 %v1512, %v1510
      %v1523 = vpack.c.bf16 %v1516, %v1514
      %v1524 = vpack.c.bf16 %v1520, %v1518
      %1525 = vrot.lane.b32.xlu0 %v733, 56
      %v1526 = vpop.permute.xlu0 %1525
      %v1529 = vsel %vm940, %v1521, 0
      %1531 = vmatprep.subr.bf16.mxu0 0
      %1532 = vmatpush1.bf16.msra.mxu0 0
      %1533 = vmatprep.subr.bf16.mxu0 0
      %1534 = vmatpush1.bf16.msra.mxu0 0
      %1535 = vmatprep.subr.bf16.mxu0 0
      %1536 = vmatpush1.bf16.msra.mxu0 0
      %1537 = vmatprep.subr.bf16.mxu0 0
      %1538 = vmatpush1.bf16.msra.mxu0 0
      %1539 = vmatprep.subr.bf16.mxu0 0
      %1540 = vmatpush1.bf16.msra.mxu0 0
      %1541 = vmatprep.subr.bf16.mxu0 0
      %1542 = vmatpush1.bf16.msra.mxu0 0
      %1543 = vmatprep.subr.bf16.mxu0 0
      %1544 = vmatpush1.bf16.msra.mxu0 0
      %1545 = vmatprep.subr.bf16.mxu0 0
      %1546 = vmatpush1.bf16.msra.mxu0 %v1526
      %1547 = vmatprep.subr.bf16.mxu0 0
      %1548 = vmatpush2.bf16.msra.mxu0 0
      %1549 = vmatprep.subr.bf16.mxu0 0
      %1550 = vmatpush2.bf16.msra.mxu0 0
      %1551 = vmatprep.subr.bf16.mxu0 0
      %1552 = vmatpush2.bf16.msra.mxu0 0
      %1553 = vmatprep.subr.bf16.mxu0 0
      %1554 = vmatpush2.bf16.msra.mxu0 0
      %1555 = vmatprep.subr.bf16.mxu0 0
      %1556 = vmatpush2.bf16.msra.mxu0 0
      %1557 = vmatprep.subr.bf16.mxu0 0
      %1558 = vmatpush2.bf16.msra.mxu0 0
      %1559 = vmatprep.subr.bf16.mxu0 0
      %1560 = vmatpush2.bf16.msra.mxu0 0
      %1561 = vmatprep.subr.bf16.mxu0 0
      %1562 = vmatpush2.bf16.msra.mxu0 0
      %1563 = vmatprep.mubr.bf16.mxu0 0
      %1564 = vmatmul.mubr.bf16.gmra.mxu0 %v1529
      %v1565 = vpop.f32.mrf.mxu0
      %v1566 = vadd.f32 0.0, %v1565
      %v1567 = vpop.f32.mrf.mxu0
      %v1568 = vpop.f32.mrf.mxu0
      %v1569 = vadd.f32 0.0, %v1568
      %v1570 = vpop.f32.mrf.mxu0
      %1571 = vdwg.mxu0
      %1572 = vrot.lane.b32.xlu0 %v734, 56
      %v1573 = vpop.permute.xlu0 %1572
      %v1576 = vsel %vm940, %v1522, 0
      %1578 = vmatprep.subr.bf16.mxu0 0
      %1579 = vmatpush1.bf16.msra.mxu0 0
      %1580 = vmatprep.subr.bf16.mxu0 0
      %1581 = vmatpush1.bf16.msra.mxu0 0
      %1582 = vmatprep.subr.bf16.mxu0 0
      %1583 = vmatpush1.bf16.msra.mxu0 0
      %1584 = vmatprep.subr.bf16.mxu0 0
      %1585 = vmatpush1.bf16.msra.mxu0 0
      %1586 = vmatprep.subr.bf16.mxu0 0
      %1587 = vmatpush1.bf16.msra.mxu0 0
      %1588 = vmatprep.subr.bf16.mxu0 0
      %1589 = vmatpush1.bf16.msra.mxu0 0
      %1590 = vmatprep.subr.bf16.mxu0 0
      %1591 = vmatpush1.bf16.msra.mxu0 0
      %1592 = vmatprep.subr.bf16.mxu0 0
      %1593 = vmatpush1.bf16.msra.mxu0 %v1573
      %1594 = vmatprep.subr.bf16.mxu0 0
      %1595 = vmatpush2.bf16.msra.mxu0 0
      %1596 = vmatprep.subr.bf16.mxu0 0
      %1597 = vmatpush2.bf16.msra.mxu0 0
      %1598 = vmatprep.subr.bf16.mxu0 0
      %1599 = vmatpush2.bf16.msra.mxu0 0
      %1600 = vmatprep.subr.bf16.mxu0 0
      %1601 = vmatpush2.bf16.msra.mxu0 0
      %1602 = vmatprep.subr.bf16.mxu0 0
      %1603 = vmatpush2.bf16.msra.mxu0 0
      %1604 = vmatprep.subr.bf16.mxu0 0
      %1605 = vmatpush2.bf16.msra.mxu0 0
      %1606 = vmatprep.subr.bf16.mxu0 0
      %1607 = vmatpush2.bf16.msra.mxu0 0
      %1608 = vmatprep.subr.bf16.mxu0 0
      %1609 = vmatpush2.bf16.msra.mxu0 0
      %1610 = vmatprep.mubr.bf16.mxu0 0
      %1611 = vmatmul.mubr.bf16.gmra.mxu0 %v1576
      %v1612 = vpop.f32.mrf.mxu0
      %v1613 = vadd.f32 0.0, %v1612
      %v1614 = vpop.f32.mrf.mxu0
      %v1615 = vpop.f32.mrf.mxu0
      %v1616 = vadd.f32 0.0, %v1615
      %v1617 = vpop.f32.mrf.mxu0
      %1618 = vdwg.mxu0
      %1619 = vrot.lane.b32.xlu0 %v735, 56
      %v1620 = vpop.permute.xlu0 %1619
      %v1623 = vsel %vm940, %v1523, 0
      %1625 = vmatprep.subr.bf16.mxu0 0
      %1626 = vmatpush1.bf16.msra.mxu0 0
      %1627 = vmatprep.subr.bf16.mxu0 0
      %1628 = vmatpush1.bf16.msra.mxu0 0
      %1629 = vmatprep.subr.bf16.mxu0 0
      %1630 = vmatpush1.bf16.msra.mxu0 0
      %1631 = vmatprep.subr.bf16.mxu0 0
      %1632 = vmatpush1.bf16.msra.mxu0 0
      %1633 = vmatprep.subr.bf16.mxu0 0
      %1634 = vmatpush1.bf16.msra.mxu0 0
      %1635 = vmatprep.subr.bf16.mxu0 0
      %1636 = vmatpush1.bf16.msra.mxu0 0
      %1637 = vmatprep.subr.bf16.mxu0 0
      %1638 = vmatpush1.bf16.msra.mxu0 0
      %1639 = vmatprep.subr.bf16.mxu0 0
      %1640 = vmatpush1.bf16.msra.mxu0 %v1620
      %1641 = vmatprep.subr.bf16.mxu0 0
      %1642 = vmatpush2.bf16.msra.mxu0 0
      %1643 = vmatprep.subr.bf16.mxu0 0
      %1644 = vmatpush2.bf16.msra.mxu0 0
      %1645 = vmatprep.subr.bf16.mxu0 0
      %1646 = vmatpush2.bf16.msra.mxu0 0
      %1647 = vmatprep.subr.bf16.mxu0 0
      %1648 = vmatpush2.bf16.msra.mxu0 0
      %1649 = vmatprep.subr.bf16.mxu0 0
      %1650 = vmatpush2.bf16.msra.mxu0 0
      %1651 = vmatprep.subr.bf16.mxu0 0
      %1652 = vmatpush2.bf16.msra.mxu0 0
      %1653 = vmatprep.subr.bf16.mxu0 0
      %1654 = vmatpush2.bf16.msra.mxu0 0
      %1655 = vmatprep.subr.bf16.mxu0 0
      %1656 = vmatpush2.bf16.msra.mxu0 0
      %1657 = vmatprep.mubr.bf16.mxu0 0
      %1658 = vmatmul.mubr.bf16.gmra.mxu0 %v1623
      %v1659 = vpop.f32.mrf.mxu0
      %v1660 = vadd.f32 0.0, %v1659
      %v1661 = vpop.f32.mrf.mxu0
      %v1662 = vpop.f32.mrf.mxu0
      %v1663 = vadd.f32 0.0, %v1662
      %v1664 = vpop.f32.mrf.mxu0
      %1665 = vdwg.mxu0
      %1666 = vrot.lane.b32.xlu0 %v736, 56
      %v1667 = vpop.permute.xlu0 %1666
      %v1670 = vsel %vm940, %v1524, 0
      %1672 = vmatprep.subr.bf16.mxu0 0
      %1673 = vmatpush1.bf16.msra.mxu0 0
      %1674 = vmatprep.subr.bf16.mxu0 0
      %1675 = vmatpush1.bf16.msra.mxu0 0
      %1676 = vmatprep.subr.bf16.mxu0 0
      %1677 = vmatpush1.bf16.msra.mxu0 0
      %1678 = vmatprep.subr.bf16.mxu0 0
      %1679 = vmatpush1.bf16.msra.mxu0 0
      %1680 = vmatprep.subr.bf16.mxu0 0
      %1681 = vmatpush1.bf16.msra.mxu0 0
      %1682 = vmatprep.subr.bf16.mxu0 0
      %1683 = vmatpush1.bf16.msra.mxu0 0
      %1684 = vmatprep.subr.bf16.mxu0 0
      %1685 = vmatpush1.bf16.msra.mxu0 0
      %1686 = vmatprep.subr.bf16.mxu0 0
      %1687 = vmatpush1.bf16.msra.mxu0 %v1667
      %1688 = vmatprep.subr.bf16.mxu0 0
      %1689 = vmatpush2.bf16.msra.mxu0 0
      %1690 = vmatprep.subr.bf16.mxu0 0
      %1691 = vmatpush2.bf16.msra.mxu0 0
      %1692 = vmatprep.subr.bf16.mxu0 0
      %1693 = vmatpush2.bf16.msra.mxu0 0
      %1694 = vmatprep.subr.bf16.mxu0 0
      %1695 = vmatpush2.bf16.msra.mxu0 0
      %1696 = vmatprep.subr.bf16.mxu0 0
      %1697 = vmatpush2.bf16.msra.mxu0 0
      %1698 = vmatprep.subr.bf16.mxu0 0
      %1699 = vmatpush2.bf16.msra.mxu0 0
      %1700 = vmatprep.subr.bf16.mxu0 0
      %1701 = vmatpush2.bf16.msra.mxu0 0
      %1702 = vmatprep.subr.bf16.mxu0 0
      %1703 = vmatpush2.bf16.msra.mxu0 0
      %1704 = vmatprep.mubr.bf16.mxu0 0
      %1705 = vmatmul.mubr.bf16.gmra.mxu0 %v1670
      %v1706 = vpop.f32.mrf.mxu0
      %v1707 = vadd.f32 0.0, %v1706
      %v1708 = vpop.f32.mrf.mxu0
      %v1709 = vpop.f32.mrf.mxu0
      %v1710 = vadd.f32 0.0, %v1709
      %v1711 = vpop.f32.mrf.mxu0
      %1712 = vdwg.mxu0
      %v1713 = vpack.c.bf16 %v1569, %v1566
      %v1714 = vpack.c.bf16 %v1616, %v1613
      %v1715 = vpack.c.bf16 %v1663, %v1660
      %v1716 = vpack.c.bf16 %v1710, %v1707
      %s1717 = scalar_lea.vmem %s5, 4
      %v1718 = vld [vmem:[%s1717] sm:$0xf]
      %v1720 = vsel %vm742, %v1713, 0
      %v1723 = vsel %vm742, %v1714, 0
      %v1726 = vsel %vm742, %v1715, 0
      %v1729 = vsel %vm742, %v1716, 0
      %vm1731 = vcmask 1043456
      %v1733 = vsel %vm1731, %v1718, 0
      %1735 = vmatprep.subr.bf16.mxu0 0
      %1736 = vmatpush1.bf16.msra.mxu0 0
      %1737 = vmatprep.subr.bf16.mxu0 0
      %1738 = vmatpush1.bf16.msra.mxu0 0
      %1739 = vmatprep.subr.bf16.mxu0 0
      %1740 = vmatpush1.bf16.msra.mxu0 0
      %1741 = vmatprep.subr.bf16.mxu0 0
      %1742 = vmatpush1.bf16.msra.mxu0 0
      %1743 = vmatprep.subr.bf16.mxu0 0
      %1744 = vmatpush1.bf16.msra.mxu0 0
      %1745 = vmatprep.subr.bf16.mxu0 0
      %1746 = vmatpush1.bf16.msra.mxu0 0
      %1747 = vmatprep.subr.bf16.mxu0 0
      %1748 = vmatpush1.bf16.msra.mxu0 0
      %1749 = vmatprep.subr.bf16.mxu0 0
      %1750 = vmatpush1.bf16.msra.mxu0 %v1733
      %1751 = vmatprep.subr.bf16.mxu0 0
      %1752 = vmatpush2.bf16.msra.mxu0 0
      %1753 = vmatprep.subr.bf16.mxu0 0
      %1754 = vmatpush2.bf16.msra.mxu0 0
      %1755 = vmatprep.subr.bf16.mxu0 0
      %1756 = vmatpush2.bf16.msra.mxu0 0
      %1757 = vmatprep.subr.bf16.mxu0 0
      %1758 = vmatpush2.bf16.msra.mxu0 0
      %1759 = vmatprep.subr.bf16.mxu0 0
      %1760 = vmatpush2.bf16.msra.mxu0 0
      %1761 = vmatprep.subr.bf16.mxu0 0
      %1762 = vmatpush2.bf16.msra.mxu0 0
      %1763 = vmatprep.subr.bf16.mxu0 0
      %1764 = vmatpush2.bf16.msra.mxu0 0
      %1765 = vmatprep.subr.bf16.mxu0 0
      %1766 = vmatpush2.bf16.msra.mxu0 0
      %1767 = vmatprep.mubr.bf16.mxu0 0
      %1768 = vmatmul.mubr.bf16.gmra.mxu0 %v1720
      %v1769 = vpop.f32.mrf.mxu0
      %v1770 = vadd.f32 0.0, %v1769
      %v1771 = vpop.f32.mrf.mxu0
      %v1772 = vpop.f32.mrf.mxu0
      %v1773 = vadd.f32 0.0, %v1772
      %v1774 = vpop.f32.mrf.mxu0
      %1775 = vmatprep.mubr.bf16.mxu0 0
      %1776 = vmatmul.mubr.bf16.gmra.mxu0 %v1723
      %v1777 = vpop.f32.mrf.mxu0
      %v1778 = vadd.f32 0.0, %v1777
      %v1779 = vpop.f32.mrf.mxu0
      %v1780 = vpop.f32.mrf.mxu0
      %v1781 = vadd.f32 0.0, %v1780
      %v1782 = vpop.f32.mrf.mxu0
      %1783 = vmatprep.mubr.bf16.mxu0 0
      %1784 = vmatmul.mubr.bf16.gmra.mxu0 %v1726
      %v1785 = vpop.f32.mrf.mxu0
      %v1786 = vadd.f32 0.0, %v1785
      %v1787 = vpop.f32.mrf.mxu0
      %v1788 = vpop.f32.mrf.mxu0
      %v1789 = vadd.f32 0.0, %v1788
      %v1790 = vpop.f32.mrf.mxu0
      %1791 = vmatprep.mubr.bf16.mxu0 0
      %1792 = vmatmul.mubr.bf16.gmra.mxu0 %v1729
      %v1793 = vpop.f32.mrf.mxu0
      %v1794 = vadd.f32 0.0, %v1793
      %v1795 = vpop.f32.mrf.mxu0
      %v1796 = vpop.f32.mrf.mxu0
      %v1797 = vadd.f32 0.0, %v1796
      %v1798 = vpop.f32.mrf.mxu0
      %1799 = vdwg.mxu0
      %v1801 = vsel %vm742, %v1221, 0
      %v1804 = vsel %vm742, %v1222, 0
      %v1807 = vsel %vm742, %v1223, 0
      %v1810 = vsel %vm742, %v1224, 0
      %v1813 = vsel %vm1731, %v1225, 0
      %1815 = vmatprep.subr.bf16.mxu0 0
      %1816 = vmatpush1.bf16.msra.mxu0 0
      %1817 = vmatprep.subr.bf16.mxu0 0
      %1818 = vmatpush1.bf16.msra.mxu0 0
      %1819 = vmatprep.subr.bf16.mxu0 0
      %1820 = vmatpush1.bf16.msra.mxu0 0
      %1821 = vmatprep.subr.bf16.mxu0 0
      %1822 = vmatpush1.bf16.msra.mxu0 0
      %1823 = vmatprep.subr.bf16.mxu0 0
      %1824 = vmatpush1.bf16.msra.mxu0 0
      %1825 = vmatprep.subr.bf16.mxu0 0
      %1826 = vmatpush1.bf16.msra.mxu0 0
      %1827 = vmatprep.subr.bf16.mxu0 0
      %1828 = vmatpush1.bf16.msra.mxu0 0
      %1829 = vmatprep.subr.bf16.mxu0 0
      %1830 = vmatpush1.bf16.msra.mxu0 %v1813
      %1831 = vmatprep.subr.bf16.mxu0 0
      %1832 = vmatpush2.bf16.msra.mxu0 0
      %1833 = vmatprep.subr.bf16.mxu0 0
      %1834 = vmatpush2.bf16.msra.mxu0 0
      %1835 = vmatprep.subr.bf16.mxu0 0
      %1836 = vmatpush2.bf16.msra.mxu0 0
      %1837 = vmatprep.subr.bf16.mxu0 0
      %1838 = vmatpush2.bf16.msra.mxu0 0
      %1839 = vmatprep.subr.bf16.mxu0 0
      %1840 = vmatpush2.bf16.msra.mxu0 0
      %1841 = vmatprep.subr.bf16.mxu0 0
      %1842 = vmatpush2.bf16.msra.mxu0 0
      %1843 = vmatprep.subr.bf16.mxu0 0
      %1844 = vmatpush2.bf16.msra.mxu0 0
      %1845 = vmatprep.subr.bf16.mxu0 0
      %1846 = vmatpush2.bf16.msra.mxu0 0
      %1847 = vmatprep.mubr.bf16.mxu0 0
      %1848 = vmatmul.mubr.bf16.gmra.mxu0 %v1801
      %v1849 = vpop.f32.mrf.mxu0
      %v1850 = vadd.f32 %v1770, %v1849
      %v1851 = vpop.f32.mrf.mxu0
      %v1852 = vpop.f32.mrf.mxu0
      %v1853 = vadd.f32 %v1773, %v1852
      %v1854 = vpop.f32.mrf.mxu0
      %1855 = vmatprep.mubr.bf16.mxu0 0
      %1856 = vmatmul.mubr.bf16.gmra.mxu0 %v1804
      %v1857 = vpop.f32.mrf.mxu0
      %v1858 = vadd.f32 %v1778, %v1857
      %v1859 = vpop.f32.mrf.mxu0
      %v1860 = vpop.f32.mrf.mxu0
      %v1861 = vadd.f32 %v1781, %v1860
      %v1862 = vpop.f32.mrf.mxu0
      %1863 = vmatprep.mubr.bf16.mxu0 0
      %1864 = vmatmul.mubr.bf16.gmra.mxu0 %v1807
      %v1865 = vpop.f32.mrf.mxu0
      %v1866 = vadd.f32 %v1786, %v1865
      %v1867 = vpop.f32.mrf.mxu0
      %v1868 = vpop.f32.mrf.mxu0
      %v1869 = vadd.f32 %v1789, %v1868
      %v1870 = vpop.f32.mrf.mxu0
      %1871 = vmatprep.mubr.bf16.mxu0 0
      %1872 = vmatmul.mubr.bf16.gmra.mxu0 %v1810
      %v1873 = vpop.f32.mrf.mxu0
      %v1874 = vadd.f32 %v1794, %v1873
      %v1875 = vpop.f32.mrf.mxu0
      %v1876 = vpop.f32.mrf.mxu0
      %v1877 = vadd.f32 %v1797, %v1876
      %v1878 = vpop.f32.mrf.mxu0
      %1879 = vdwg.mxu0
      %s1880 = scalar_lea.vmem %s7, 32
      %v1881 = vld [vmem:[%s1880] sm:$0xff]
      %v1882 = vld [vmem:[%s1880 + $0x8] sm:$0xff]
      %1883 = vrot.lane.b32.xlu0 %v733, 112
      %v1884 = vpop.permute.xlu0 %1883
      %1885 = vrot.lane.b32.xlu0 %v733, 80
      %v1886 = vpop.permute.xlu0 %1885
      %v1888 = vsel %vm742, %v1884, 0
      %v1891 = vsel %vm742, %v1886, 0
      %1893 = vmatprep.subr.bf16.mxu0 0
      %1894 = vmatpush1.bf16.xpose.msra.mxu0 0
      %1895 = vmatprep.subr.bf16.mxu0 0
      %1896 = vmatpush1.bf16.xpose.msra.mxu0 0
      %1897 = vmatprep.subr.bf16.mxu0 0
      %1898 = vmatpush1.bf16.xpose.msra.mxu0 0
      %1899 = vmatprep.subr.bf16.mxu0 0
      %1900 = vmatpush1.bf16.xpose.msra.mxu0 0
      %1901 = vmatprep.subr.bf16.mxu0 0
      %1902 = vmatpush1.bf16.xpose.msra.mxu0 0
      %1903 = vmatprep.subr.bf16.mxu0 0
      %1904 = vmatpush1.bf16.xpose.msra.mxu0 0
      %1905 = vmatprep.subr.bf16.mxu0 0
      %1906 = vmatpush1.bf16.xpose.msra.mxu0 0
      %1907 = vmatprep.subr.bf16.mxu0 0
      %1908 = vmatpush1.bf16.xpose.msra.mxu0 %v1891
      %1909 = vmatprep.subr.bf16.mxu0 0
      %1910 = vmatpush2.bf16.xpose.msra.mxu0 0
      %1911 = vmatprep.subr.bf16.mxu0 0
      %1912 = vmatpush2.bf16.xpose.msra.mxu0 0
      %1913 = vmatprep.subr.bf16.mxu0 0
      %1914 = vmatpush2.bf16.xpose.msra.mxu0 0
      %1915 = vmatprep.subr.bf16.mxu0 0
      %1916 = vmatpush2.bf16.xpose.msra.mxu0 0
      %1917 = vmatprep.subr.bf16.mxu0 0
      %1918 = vmatpush2.bf16.xpose.msra.mxu0 0
      %1919 = vmatprep.subr.bf16.mxu0 0
      %1920 = vmatpush2.bf16.xpose.msra.mxu0 0
      %1921 = vmatprep.subr.bf16.mxu0 0
      %1922 = vmatpush2.bf16.xpose.msra.mxu0 0
      %1923 = vmatprep.subr.bf16.mxu0 0
      %1924 = vmatpush2.bf16.xpose.msra.mxu0 0
      %1925 = vmatprep.mubr.bf16.mxu0 0
      %1926 = vmatmul.mubr.bf16.gmra.mxu0 %v1888
      %v1927 = vpop.f32.mrf.mxu0
      %v1928 = vadd.f32 %v1881, %v1927
      %v1929 = vpop.f32.mrf.mxu0
      %v1930 = vpop.f32.mrf.mxu0
      %v1931 = vadd.f32 %v1882, %v1930
      %v1932 = vpop.f32.mrf.mxu0
      %1933 = vdwg.mxu0
      %1934 = vrot.lane.b32.xlu0 %v734, 112
      %v1935 = vpop.permute.xlu0 %1934
      %1936 = vrot.lane.b32.xlu0 %v734, 80
      %v1937 = vpop.permute.xlu0 %1936
      %v1939 = vsel %vm742, %v1935, 0
      %v1942 = vsel %vm742, %v1937, 0
      %1944 = vmatprep.subr.bf16.mxu0 0
      %1945 = vmatpush1.bf16.xpose.msra.mxu0 0
      %1946 = vmatprep.subr.bf16.mxu0 0
      %1947 = vmatpush1.bf16.xpose.msra.mxu0 0
      %1948 = vmatprep.subr.bf16.mxu0 0
      %1949 = vmatpush1.bf16.xpose.msra.mxu0 0
      %1950 = vmatprep.subr.bf16.mxu0 0
      %1951 = vmatpush1.bf16.xpose.msra.mxu0 0
      %1952 = vmatprep.subr.bf16.mxu0 0
      %1953 = vmatpush1.bf16.xpose.msra.mxu0 0
      %1954 = vmatprep.subr.bf16.mxu0 0
      %1955 = vmatpush1.bf16.xpose.msra.mxu0 0
      %1956 = vmatprep.subr.bf16.mxu0 0
      %1957 = vmatpush1.bf16.xpose.msra.mxu0 0
      %1958 = vmatprep.subr.bf16.mxu0 0
      %1959 = vmatpush1.bf16.xpose.msra.mxu0 %v1942
      %1960 = vmatprep.subr.bf16.mxu0 0
      %1961 = vmatpush2.bf16.xpose.msra.mxu0 0
      %1962 = vmatprep.subr.bf16.mxu0 0
      %1963 = vmatpush2.bf16.xpose.msra.mxu0 0
      %1964 = vmatprep.subr.bf16.mxu0 0
      %1965 = vmatpush2.bf16.xpose.msra.mxu0 0
      %1966 = vmatprep.subr.bf16.mxu0 0
      %1967 = vmatpush2.bf16.xpose.msra.mxu0 0
      %1968 = vmatprep.subr.bf16.mxu0 0
      %1969 = vmatpush2.bf16.xpose.msra.mxu0 0
      %1970 = vmatprep.subr.bf16.mxu0 0
      %1971 = vmatpush2.bf16.xpose.msra.mxu0 0
      %1972 = vmatprep.subr.bf16.mxu0 0
      %1973 = vmatpush2.bf16.xpose.msra.mxu0 0
      %1974 = vmatprep.subr.bf16.mxu0 0
      %1975 = vmatpush2.bf16.xpose.msra.mxu0 0
      %1976 = vmatprep.mubr.bf16.mxu0 0
      %1977 = vmatmul.mubr.bf16.gmra.mxu0 %v1939
      %v1978 = vpop.f32.mrf.mxu0
      %v1979 = vadd.f32 %v1881, %v1978
      %v1980 = vpop.f32.mrf.mxu0
      %v1981 = vpop.f32.mrf.mxu0
      %v1982 = vadd.f32 %v1882, %v1981
      %v1983 = vpop.f32.mrf.mxu0
      %1984 = vdwg.mxu0
      %1985 = vrot.lane.b32.xlu0 %v735, 112
      %v1986 = vpop.permute.xlu0 %1985
      %1987 = vrot.lane.b32.xlu0 %v735, 80
      %v1988 = vpop.permute.xlu0 %1987
      %v1990 = vsel %vm742, %v1986, 0
      %v1993 = vsel %vm742, %v1988, 0
      %1995 = vmatprep.subr.bf16.mxu0 0
      %1996 = vmatpush1.bf16.xpose.msra.mxu0 0
      %1997 = vmatprep.subr.bf16.mxu0 0
      %1998 = vmatpush1.bf16.xpose.msra.mxu0 0
      %1999 = vmatprep.subr.bf16.mxu0 0
      %2000 = vmatpush1.bf16.xpose.msra.mxu0 0
      %2001 = vmatprep.subr.bf16.mxu0 0
      %2002 = vmatpush1.bf16.xpose.msra.mxu0 0
      %2003 = vmatprep.subr.bf16.mxu0 0
      %2004 = vmatpush1.bf16.xpose.msra.mxu0 0
      %2005 = vmatprep.subr.bf16.mxu0 0
      %2006 = vmatpush1.bf16.xpose.msra.mxu0 0
      %2007 = vmatprep.subr.bf16.mxu0 0
      %2008 = vmatpush1.bf16.xpose.msra.mxu0 0
      %2009 = vmatprep.subr.bf16.mxu0 0
      %2010 = vmatpush1.bf16.xpose.msra.mxu0 %v1993
      %2011 = vmatprep.subr.bf16.mxu0 0
      %2012 = vmatpush2.bf16.xpose.msra.mxu0 0
      %2013 = vmatprep.subr.bf16.mxu0 0
      %2014 = vmatpush2.bf16.xpose.msra.mxu0 0
      %2015 = vmatprep.subr.bf16.mxu0 0
      %2016 = vmatpush2.bf16.xpose.msra.mxu0 0
      %2017 = vmatprep.subr.bf16.mxu0 0
      %2018 = vmatpush2.bf16.xpose.msra.mxu0 0
      %2019 = vmatprep.subr.bf16.mxu0 0
      %2020 = vmatpush2.bf16.xpose.msra.mxu0 0
      %2021 = vmatprep.subr.bf16.mxu0 0
      %2022 = vmatpush2.bf16.xpose.msra.mxu0 0
      %2023 = vmatprep.subr.bf16.mxu0 0
      %2024 = vmatpush2.bf16.xpose.msra.mxu0 0
      %2025 = vmatprep.subr.bf16.mxu0 0
      %2026 = vmatpush2.bf16.xpose.msra.mxu0 0
      %2027 = vmatprep.mubr.bf16.mxu0 0
      %2028 = vmatmul.mubr.bf16.gmra.mxu0 %v1990
      %v2029 = vpop.f32.mrf.mxu0
      %v2030 = vadd.f32 %v1881, %v2029
      %v2031 = vpop.f32.mrf.mxu0
      %v2032 = vpop.f32.mrf.mxu0
      %v2033 = vadd.f32 %v1882, %v2032
      %v2034 = vpop.f32.mrf.mxu0
      %2035 = vdwg.mxu0
      %2036 = vrot.lane.b32.xlu0 %v736, 112
      %v2037 = vpop.permute.xlu0 %2036
      %2038 = vrot.lane.b32.xlu0 %v736, 80
      %v2039 = vpop.permute.xlu0 %2038
      %v2041 = vsel %vm742, %v2037, 0
      %v2044 = vsel %vm742, %v2039, 0
      %2046 = vmatprep.subr.bf16.mxu0 0
      %2047 = vmatpush1.bf16.xpose.msra.mxu0 0
      %2048 = vmatprep.subr.bf16.mxu0 0
      %2049 = vmatpush1.bf16.xpose.msra.mxu0 0
      %2050 = vmatprep.subr.bf16.mxu0 0
      %2051 = vmatpush1.bf16.xpose.msra.mxu0 0
      %2052 = vmatprep.subr.bf16.mxu0 0
      %2053 = vmatpush1.bf16.xpose.msra.mxu0 0
      %2054 = vmatprep.subr.bf16.mxu0 0
      %2055 = vmatpush1.bf16.xpose.msra.mxu0 0
      %2056 = vmatprep.subr.bf16.mxu0 0
      %2057 = vmatpush1.bf16.xpose.msra.mxu0 0
      %2058 = vmatprep.subr.bf16.mxu0 0
      %2059 = vmatpush1.bf16.xpose.msra.mxu0 0
      %2060 = vmatprep.subr.bf16.mxu0 0
      %2061 = vmatpush1.bf16.xpose.msra.mxu0 %v2044
      %2062 = vmatprep.subr.bf16.mxu0 0
      %2063 = vmatpush2.bf16.xpose.msra.mxu0 0
      %2064 = vmatprep.subr.bf16.mxu0 0
      %2065 = vmatpush2.bf16.xpose.msra.mxu0 0
      %2066 = vmatprep.subr.bf16.mxu0 0
      %2067 = vmatpush2.bf16.xpose.msra.mxu0 0
      %2068 = vmatprep.subr.bf16.mxu0 0
      %2069 = vmatpush2.bf16.xpose.msra.mxu0 0
      %2070 = vmatprep.subr.bf16.mxu0 0
      %2071 = vmatpush2.bf16.xpose.msra.mxu0 0
      %2072 = vmatprep.subr.bf16.mxu0 0
      %2073 = vmatpush2.bf16.xpose.msra.mxu0 0
      %2074 = vmatprep.subr.bf16.mxu0 0
      %2075 = vmatpush2.bf16.xpose.msra.mxu0 0
      %2076 = vmatprep.subr.bf16.mxu0 0
      %2077 = vmatpush2.bf16.xpose.msra.mxu0 0
      %2078 = vmatprep.mubr.bf16.mxu0 0
      %2079 = vmatmul.mubr.bf16.gmra.mxu0 %v2041
      %v2080 = vpop.f32.mrf.mxu0
      %v2081 = vadd.f32 %v1881, %v2080
      %v2082 = vpop.f32.mrf.mxu0
      %v2083 = vpop.f32.mrf.mxu0
      %v2084 = vadd.f32 %v1882, %v2083
      %v2085 = vpop.f32.mrf.mxu0
      %2086 = vdwg.mxu0
      %v2087 = vsel %vm940, %v1928, -inf
      %2088 = vmax.xlane.f32.xlu0 %v2087
      %v2089 = vpop.xlane.xlu0 %2088
      %v2090 = vsel %vm940, %v1931, -inf
      %2091 = vmax.xlane.f32.xlu0 %v2090
      %v2092 = vpop.xlane.xlu0 %2091
      %v2093 = vsel %vm940, %v1979, -inf
      %2094 = vmax.xlane.f32.xlu0 %v2093
      %v2095 = vpop.xlane.xlu0 %2094
      %v2096 = vsel %vm940, %v1982, -inf
      %2097 = vmax.xlane.f32.xlu0 %v2096
      %v2098 = vpop.xlane.xlu0 %2097
      %v2099 = vsel %vm940, %v2030, -inf
      %2100 = vmax.xlane.f32.xlu0 %v2099
      %v2101 = vpop.xlane.xlu0 %2100
      %v2102 = vsel %vm940, %v2033, -inf
      %2103 = vmax.xlane.f32.xlu0 %v2102
      %v2104 = vpop.xlane.xlu0 %2103
      %v2105 = vsel %vm940, %v2081, -inf
      %2106 = vmax.xlane.f32.xlu0 %v2105
      %v2107 = vpop.xlane.xlu0 %2106
      %v2108 = vsel %vm940, %v2084, -inf
      %2109 = vmax.xlane.f32.xlu0 %v2108
      %v2110 = vpop.xlane.xlu0 %2109
      %v2111 = vsub.f32 %v1928, %v2089
      %v2112 = vsub.f32 %v1931, %v2092
      %v2113 = vsub.f32 %v1979, %v2095
      %v2114 = vsub.f32 %v1982, %v2098
      %v2115 = vsub.f32 %v2030, %v2101
      %v2116 = vsub.f32 %v2033, %v2104
      %v2117 = vsub.f32 %v2081, %v2107
      %v2118 = vsub.f32 %v2084, %v2110
      %v2119 = vmul.f32 %v2111, 1.442695
      %v2120 = vpow.pop %v2119
      %v2121 = vmul.f32 %v2112, 1.442695
      %v2122 = vpow.pop %v2121
      %v2123 = vmul.f32 %v2113, 1.442695
      %v2124 = vpow.pop %v2123
      %v2125 = vmul.f32 %v2114, 1.442695
      %v2126 = vpow.pop %v2125
      %v2127 = vmul.f32 %v2115, 1.442695
      %v2128 = vpow.pop %v2127
      %v2129 = vmul.f32 %v2116, 1.442695
      %v2130 = vpow.pop %v2129
      %v2131 = vmul.f32 %v2117, 1.442695
      %v2132 = vpow.pop %v2131
      %v2133 = vmul.f32 %v2118, 1.442695
      %v2134 = vpow.pop %v2133
      %v2135 = vsel %vm940, %v2120, 0.0
      %2136 = vadd.xlane.f32.xlu0 %v2135
      %v2137 = vpop.xlane.xlu0 %2136
      %v2138 = vsel %vm940, %v2122, 0.0
      %2139 = vadd.xlane.f32.xlu0 %v2138
      %v2140 = vpop.xlane.xlu0 %2139
      %v2141 = vsel %vm940, %v2124, 0.0
      %2142 = vadd.xlane.f32.xlu0 %v2141
      %v2143 = vpop.xlane.xlu0 %2142
      %v2144 = vsel %vm940, %v2126, 0.0
      %2145 = vadd.xlane.f32.xlu0 %v2144
      %v2146 = vpop.xlane.xlu0 %2145
      %v2147 = vsel %vm940, %v2128, 0.0
      %2148 = vadd.xlane.f32.xlu0 %v2147
      %v2149 = vpop.xlane.xlu0 %2148
      %v2150 = vsel %vm940, %v2130, 0.0
      %2151 = vadd.xlane.f32.xlu0 %v2150
      %v2152 = vpop.xlane.xlu0 %2151
      %v2153 = vsel %vm940, %v2132, 0.0
      %2154 = vadd.xlane.f32.xlu0 %v2153
      %v2155 = vpop.xlane.xlu0 %2154
      %v2156 = vsel %vm940, %v2134, 0.0
      %2157 = vadd.xlane.f32.xlu0 %v2156
      %v2158 = vpop.xlane.xlu0 %2157
      %v2159 = vrcp.pop %v2137
      %v2160 = vmul.f32 %v2120, %v2159
      %v2161 = vrcp.pop %v2140
      %v2162 = vmul.f32 %v2122, %v2161
      %v2163 = vrcp.pop %v2143
      %v2164 = vmul.f32 %v2124, %v2163
      %v2165 = vrcp.pop %v2146
      %v2166 = vmul.f32 %v2126, %v2165
      %v2167 = vrcp.pop %v2149
      %v2168 = vmul.f32 %v2128, %v2167
      %v2169 = vrcp.pop %v2152
      %v2170 = vmul.f32 %v2130, %v2169
      %v2171 = vrcp.pop %v2155
      %v2172 = vmul.f32 %v2132, %v2171
      %v2173 = vrcp.pop %v2158
      %v2174 = vmul.f32 %v2134, %v2173
      %v2175 = vpack.c.bf16 %v2162, %v2160
      %v2176 = vpack.c.bf16 %v2166, %v2164
      %v2177 = vpack.c.bf16 %v2170, %v2168
      %v2178 = vpack.c.bf16 %v2174, %v2172
      %2179 = vrot.lane.b32.xlu0 %v733, 48
      %v2180 = vpop.permute.xlu0 %2179
      %v2183 = vsel %vm940, %v2175, 0
      %2185 = vmatprep.subr.bf16.mxu0 0
      %2186 = vmatpush1.bf16.msra.mxu0 0
      %2187 = vmatprep.subr.bf16.mxu0 0
      %2188 = vmatpush1.bf16.msra.mxu0 0
      %2189 = vmatprep.subr.bf16.mxu0 0
      %2190 = vmatpush1.bf16.msra.mxu0 0
      %2191 = vmatprep.subr.bf16.mxu0 0
      %2192 = vmatpush1.bf16.msra.mxu0 0
      %2193 = vmatprep.subr.bf16.mxu0 0
      %2194 = vmatpush1.bf16.msra.mxu0 0
      %2195 = vmatprep.subr.bf16.mxu0 0
      %2196 = vmatpush1.bf16.msra.mxu0 0
      %2197 = vmatprep.subr.bf16.mxu0 0
      %2198 = vmatpush1.bf16.msra.mxu0 0
      %2199 = vmatprep.subr.bf16.mxu0 0
      %2200 = vmatpush1.bf16.msra.mxu0 %v2180
      %2201 = vmatprep.subr.bf16.mxu0 0
      %2202 = vmatpush2.bf16.msra.mxu0 0
      %2203 = vmatprep.subr.bf16.mxu0 0
      %2204 = vmatpush2.bf16.msra.mxu0 0
      %2205 = vmatprep.subr.bf16.mxu0 0
      %2206 = vmatpush2.bf16.msra.mxu0 0
      %2207 = vmatprep.subr.bf16.mxu0 0
      %2208 = vmatpush2.bf16.msra.mxu0 0
      %2209 = vmatprep.subr.bf16.mxu0 0
      %2210 = vmatpush2.bf16.msra.mxu0 0
      %2211 = vmatprep.subr.bf16.mxu0 0
      %2212 = vmatpush2.bf16.msra.mxu0 0
      %2213 = vmatprep.subr.bf16.mxu0 0
      %2214 = vmatpush2.bf16.msra.mxu0 0
      %2215 = vmatprep.subr.bf16.mxu0 0
      %2216 = vmatpush2.bf16.msra.mxu0 0
      %2217 = vmatprep.mubr.bf16.mxu0 0
      %2218 = vmatmul.mubr.bf16.gmra.mxu0 %v2183
      %v2219 = vpop.f32.mrf.mxu0
      %v2220 = vadd.f32 0.0, %v2219
      %v2221 = vpop.f32.mrf.mxu0
      %v2222 = vpop.f32.mrf.mxu0
      %v2223 = vadd.f32 0.0, %v2222
      %v2224 = vpop.f32.mrf.mxu0
      %2225 = vdwg.mxu0
      %2226 = vrot.lane.b32.xlu0 %v734, 48
      %v2227 = vpop.permute.xlu0 %2226
      %v2230 = vsel %vm940, %v2176, 0
      %2232 = vmatprep.subr.bf16.mxu0 0
      %2233 = vmatpush1.bf16.msra.mxu0 0
      %2234 = vmatprep.subr.bf16.mxu0 0
      %2235 = vmatpush1.bf16.msra.mxu0 0
      %2236 = vmatprep.subr.bf16.mxu0 0
      %2237 = vmatpush1.bf16.msra.mxu0 0
      %2238 = vmatprep.subr.bf16.mxu0 0
      %2239 = vmatpush1.bf16.msra.mxu0 0
      %2240 = vmatprep.subr.bf16.mxu0 0
      %2241 = vmatpush1.bf16.msra.mxu0 0
      %2242 = vmatprep.subr.bf16.mxu0 0
      %2243 = vmatpush1.bf16.msra.mxu0 0
      %2244 = vmatprep.subr.bf16.mxu0 0
      %2245 = vmatpush1.bf16.msra.mxu0 0
      %2246 = vmatprep.subr.bf16.mxu0 0
      %2247 = vmatpush1.bf16.msra.mxu0 %v2227
      %2248 = vmatprep.subr.bf16.mxu0 0
      %2249 = vmatpush2.bf16.msra.mxu0 0
      %2250 = vmatprep.subr.bf16.mxu0 0
      %2251 = vmatpush2.bf16.msra.mxu0 0
      %2252 = vmatprep.subr.bf16.mxu0 0
      %2253 = vmatpush2.bf16.msra.mxu0 0
      %2254 = vmatprep.subr.bf16.mxu0 0
      %2255 = vmatpush2.bf16.msra.mxu0 0
      %2256 = vmatprep.subr.bf16.mxu0 0
      %2257 = vmatpush2.bf16.msra.mxu0 0
      %2258 = vmatprep.subr.bf16.mxu0 0
      %2259 = vmatpush2.bf16.msra.mxu0 0
      %2260 = vmatprep.subr.bf16.mxu0 0
      %2261 = vmatpush2.bf16.msra.mxu0 0
      %2262 = vmatprep.subr.bf16.mxu0 0
      %2263 = vmatpush2.bf16.msra.mxu0 0
      %2264 = vmatprep.mubr.bf16.mxu0 0
      %2265 = vmatmul.mubr.bf16.gmra.mxu0 %v2230
      %v2266 = vpop.f32.mrf.mxu0
      %v2267 = vadd.f32 0.0, %v2266
      %v2268 = vpop.f32.mrf.mxu0
      %v2269 = vpop.f32.mrf.mxu0
      %v2270 = vadd.f32 0.0, %v2269
      %v2271 = vpop.f32.mrf.mxu0
      %2272 = vdwg.mxu0
      %2273 = vrot.lane.b32.xlu0 %v735, 48
      %v2274 = vpop.permute.xlu0 %2273
      %v2277 = vsel %vm940, %v2177, 0
      %2279 = vmatprep.subr.bf16.mxu0 0
      %2280 = vmatpush1.bf16.msra.mxu0 0
      %2281 = vmatprep.subr.bf16.mxu0 0
      %2282 = vmatpush1.bf16.msra.mxu0 0
      %2283 = vmatprep.subr.bf16.mxu0 0
      %2284 = vmatpush1.bf16.msra.mxu0 0
      %2285 = vmatprep.subr.bf16.mxu0 0
      %2286 = vmatpush1.bf16.msra.mxu0 0
      %2287 = vmatprep.subr.bf16.mxu0 0
      %2288 = vmatpush1.bf16.msra.mxu0 0
      %2289 = vmatprep.subr.bf16.mxu0 0
      %2290 = vmatpush1.bf16.msra.mxu0 0
      %2291 = vmatprep.subr.bf16.mxu0 0
      %2292 = vmatpush1.bf16.msra.mxu0 0
      %2293 = vmatprep.subr.bf16.mxu0 0
      %2294 = vmatpush1.bf16.msra.mxu0 %v2274
      %2295 = vmatprep.subr.bf16.mxu0 0
      %2296 = vmatpush2.bf16.msra.mxu0 0
      %2297 = vmatprep.subr.bf16.mxu0 0
      %2298 = vmatpush2.bf16.msra.mxu0 0
      %2299 = vmatprep.subr.bf16.mxu0 0
      %2300 = vmatpush2.bf16.msra.mxu0 0
      %2301 = vmatprep.subr.bf16.mxu0 0
      %2302 = vmatpush2.bf16.msra.mxu0 0
      %2303 = vmatprep.subr.bf16.mxu0 0
      %2304 = vmatpush2.bf16.msra.mxu0 0
      %2305 = vmatprep.subr.bf16.mxu0 0
      %2306 = vmatpush2.bf16.msra.mxu0 0
      %2307 = vmatprep.subr.bf16.mxu0 0
      %2308 = vmatpush2.bf16.msra.mxu0 0
      %2309 = vmatprep.subr.bf16.mxu0 0
      %2310 = vmatpush2.bf16.msra.mxu0 0
      %2311 = vmatprep.mubr.bf16.mxu0 0
      %2312 = vmatmul.mubr.bf16.gmra.mxu0 %v2277
      %v2313 = vpop.f32.mrf.mxu0
      %v2314 = vadd.f32 0.0, %v2313
      %v2315 = vpop.f32.mrf.mxu0
      %v2316 = vpop.f32.mrf.mxu0
      %v2317 = vadd.f32 0.0, %v2316
      %v2318 = vpop.f32.mrf.mxu0
      %2319 = vdwg.mxu0
      %2320 = vrot.lane.b32.xlu0 %v736, 48
      %v2321 = vpop.permute.xlu0 %2320
      %v2324 = vsel %vm940, %v2178, 0
      %2326 = vmatprep.subr.bf16.mxu0 0
      %2327 = vmatpush1.bf16.msra.mxu0 0
      %2328 = vmatprep.subr.bf16.mxu0 0
      %2329 = vmatpush1.bf16.msra.mxu0 0
      %2330 = vmatprep.subr.bf16.mxu0 0
      %2331 = vmatpush1.bf16.msra.mxu0 0
      %2332 = vmatprep.subr.bf16.mxu0 0
      %2333 = vmatpush1.bf16.msra.mxu0 0
      %2334 = vmatprep.subr.bf16.mxu0 0
      %2335 = vmatpush1.bf16.msra.mxu0 0
      %2336 = vmatprep.subr.bf16.mxu0 0
      %2337 = vmatpush1.bf16.msra.mxu0 0
      %2338 = vmatprep.subr.bf16.mxu0 0
      %2339 = vmatpush1.bf16.msra.mxu0 0
      %2340 = vmatprep.subr.bf16.mxu0 0
      %2341 = vmatpush1.bf16.msra.mxu0 %v2321
      %2342 = vmatprep.subr.bf16.mxu0 0
      %2343 = vmatpush2.bf16.msra.mxu0 0
      %2344 = vmatprep.subr.bf16.mxu0 0
      %2345 = vmatpush2.bf16.msra.mxu0 0
      %2346 = vmatprep.subr.bf16.mxu0 0
      %2347 = vmatpush2.bf16.msra.mxu0 0
      %2348 = vmatprep.subr.bf16.mxu0 0
      %2349 = vmatpush2.bf16.msra.mxu0 0
      %2350 = vmatprep.subr.bf16.mxu0 0
      %2351 = vmatpush2.bf16.msra.mxu0 0
      %2352 = vmatprep.subr.bf16.mxu0 0
      %2353 = vmatpush2.bf16.msra.mxu0 0
      %2354 = vmatprep.subr.bf16.mxu0 0
      %2355 = vmatpush2.bf16.msra.mxu0 0
      %2356 = vmatprep.subr.bf16.mxu0 0
      %2357 = vmatpush2.bf16.msra.mxu0 0
      %2358 = vmatprep.mubr.bf16.mxu0 0
      %2359 = vmatmul.mubr.bf16.gmra.mxu0 %v2324
      %v2360 = vpop.f32.mrf.mxu0
      %v2361 = vadd.f32 0.0, %v2360
      %v2362 = vpop.f32.mrf.mxu0
      %v2363 = vpop.f32.mrf.mxu0
      %v2364 = vadd.f32 0.0, %v2363
      %v2365 = vpop.f32.mrf.mxu0
      %2366 = vdwg.mxu0
      %v2367 = vpack.c.bf16 %v2223, %v2220
      %v2368 = vpack.c.bf16 %v2270, %v2267
      %v2369 = vpack.c.bf16 %v2317, %v2314
      %v2370 = vpack.c.bf16 %v2364, %v2361
      %s2371 = scalar_lea.vmem %s5, 8
      %v2372 = vld [vmem:[%s2371] sm:$0xf]
      %v2374 = vsel %vm742, %v2367, 0
      %v2377 = vsel %vm742, %v2368, 0
      %v2380 = vsel %vm742, %v2369, 0
      %v2383 = vsel %vm742, %v2370, 0
      %v2386 = vsel %vm1731, %v2372, 0
      %2388 = vmatprep.subr.bf16.mxu0 0
      %2389 = vmatpush1.bf16.msra.mxu0 0
      %2390 = vmatprep.subr.bf16.mxu0 0
      %2391 = vmatpush1.bf16.msra.mxu0 0
      %2392 = vmatprep.subr.bf16.mxu0 0
      %2393 = vmatpush1.bf16.msra.mxu0 0
      %2394 = vmatprep.subr.bf16.mxu0 0
      %2395 = vmatpush1.bf16.msra.mxu0 0
      %2396 = vmatprep.subr.bf16.mxu0 0
      %2397 = vmatpush1.bf16.msra.mxu0 0
      %2398 = vmatprep.subr.bf16.mxu0 0
      %2399 = vmatpush1.bf16.msra.mxu0 0
      %2400 = vmatprep.subr.bf16.mxu0 0
      %2401 = vmatpush1.bf16.msra.mxu0 0
      %2402 = vmatprep.subr.bf16.mxu0 0
      %2403 = vmatpush1.bf16.msra.mxu0 %v2386
      %2404 = vmatprep.subr.bf16.mxu0 0
      %2405 = vmatpush2.bf16.msra.mxu0 0
      %2406 = vmatprep.subr.bf16.mxu0 0
      %2407 = vmatpush2.bf16.msra.mxu0 0
      %2408 = vmatprep.subr.bf16.mxu0 0
      %2409 = vmatpush2.bf16.msra.mxu0 0
      %2410 = vmatprep.subr.bf16.mxu0 0
      %2411 = vmatpush2.bf16.msra.mxu0 0
      %2412 = vmatprep.subr.bf16.mxu0 0
      %2413 = vmatpush2.bf16.msra.mxu0 0
      %2414 = vmatprep.subr.bf16.mxu0 0
      %2415 = vmatpush2.bf16.msra.mxu0 0
      %2416 = vmatprep.subr.bf16.mxu0 0
      %2417 = vmatpush2.bf16.msra.mxu0 0
      %2418 = vmatprep.subr.bf16.mxu0 0
      %2419 = vmatpush2.bf16.msra.mxu0 0
      %2420 = vmatprep.mubr.bf16.mxu0 0
      %2421 = vmatmul.mubr.bf16.gmra.mxu0 %v2374
      %v2422 = vpop.f32.mrf.mxu0
      %v2423 = vadd.f32 0.0, %v2422
      %v2424 = vpop.f32.mrf.mxu0
      %v2425 = vpop.f32.mrf.mxu0
      %v2426 = vadd.f32 0.0, %v2425
      %v2427 = vpop.f32.mrf.mxu0
      %2428 = vmatprep.mubr.bf16.mxu0 0
      %2429 = vmatmul.mubr.bf16.gmra.mxu0 %v2377
      %v2430 = vpop.f32.mrf.mxu0
      %v2431 = vadd.f32 0.0, %v2430
      %v2432 = vpop.f32.mrf.mxu0
      %v2433 = vpop.f32.mrf.mxu0
      %v2434 = vadd.f32 0.0, %v2433
      %v2435 = vpop.f32.mrf.mxu0
      %2436 = vmatprep.mubr.bf16.mxu0 0
      %2437 = vmatmul.mubr.bf16.gmra.mxu0 %v2380
      %v2438 = vpop.f32.mrf.mxu0
      %v2439 = vadd.f32 0.0, %v2438
      %v2440 = vpop.f32.mrf.mxu0
      %v2441 = vpop.f32.mrf.mxu0
      %v2442 = vadd.f32 0.0, %v2441
      %v2443 = vpop.f32.mrf.mxu0
      %2444 = vmatprep.mubr.bf16.mxu0 0
      %2445 = vmatmul.mubr.bf16.gmra.mxu0 %v2383
      %v2446 = vpop.f32.mrf.mxu0
      %v2447 = vadd.f32 0.0, %v2446
      %v2448 = vpop.f32.mrf.mxu0
      %v2449 = vpop.f32.mrf.mxu0
      %v2450 = vadd.f32 0.0, %v2449
      %v2451 = vpop.f32.mrf.mxu0
      %2452 = vdwg.mxu0
      %v2453 = vadd.f32 %v1850, %v2423
      %v2454 = vadd.f32 %v1853, %v2426
      %v2455 = vadd.f32 %v1858, %v2431
      %v2456 = vadd.f32 %v1861, %v2434
      %v2457 = vadd.f32 %v1866, %v2439
      %v2458 = vadd.f32 %v1869, %v2442
      %v2459 = vadd.f32 %v1874, %v2447
      %v2460 = vadd.f32 %v1877, %v2450
      %s2461 = scalar_lea.vmem %s7, 48
      %v2462 = vld [vmem:[%s2461] sm:$0xff]
      %v2463 = vld [vmem:[%s2461 + $0x8] sm:$0xff]
      %2464 = vrot.lane.b32.xlu0 %v733, 104
      %v2465 = vpop.permute.xlu0 %2464
      %2466 = vrot.lane.b32.xlu0 %v733, 72
      %v2467 = vpop.permute.xlu0 %2466
      %v2469 = vsel %vm742, %v2465, 0
      %v2472 = vsel %vm742, %v2467, 0
      %2474 = vmatprep.subr.bf16.mxu0 0
      %2475 = vmatpush1.bf16.xpose.msra.mxu0 0
      %2476 = vmatprep.subr.bf16.mxu0 0
      %2477 = vmatpush1.bf16.xpose.msra.mxu0 0
      %2478 = vmatprep.subr.bf16.mxu0 0
      %2479 = vmatpush1.bf16.xpose.msra.mxu0 0
      %2480 = vmatprep.subr.bf16.mxu0 0
      %2481 = vmatpush1.bf16.xpose.msra.mxu0 0
      %2482 = vmatprep.subr.bf16.mxu0 0
      %2483 = vmatpush1.bf16.xpose.msra.mxu0 0
      %2484 = vmatprep.subr.bf16.mxu0 0
      %2485 = vmatpush1.bf16.xpose.msra.mxu0 0
      %2486 = vmatprep.subr.bf16.mxu0 0
      %2487 = vmatpush1.bf16.xpose.msra.mxu0 0
      %2488 = vmatprep.subr.bf16.mxu0 0
      %2489 = vmatpush1.bf16.xpose.msra.mxu0 %v2472
      %2490 = vmatprep.subr.bf16.mxu0 0
      %2491 = vmatpush2.bf16.xpose.msra.mxu0 0
      %2492 = vmatprep.subr.bf16.mxu0 0
      %2493 = vmatpush2.bf16.xpose.msra.mxu0 0
      %2494 = vmatprep.subr.bf16.mxu0 0
      %2495 = vmatpush2.bf16.xpose.msra.mxu0 0
      %2496 = vmatprep.subr.bf16.mxu0 0
      %2497 = vmatpush2.bf16.xpose.msra.mxu0 0
      %2498 = vmatprep.subr.bf16.mxu0 0
      %2499 = vmatpush2.bf16.xpose.msra.mxu0 0
      %2500 = vmatprep.subr.bf16.mxu0 0
      %2501 = vmatpush2.bf16.xpose.msra.mxu0 0
      %2502 = vmatprep.subr.bf16.mxu0 0
      %2503 = vmatpush2.bf16.xpose.msra.mxu0 0
      %2504 = vmatprep.subr.bf16.mxu0 0
      %2505 = vmatpush2.bf16.xpose.msra.mxu0 0
      %2506 = vmatprep.mubr.bf16.mxu0 0
      %2507 = vmatmul.mubr.bf16.gmra.mxu0 %v2469
      %v2508 = vpop.f32.mrf.mxu0
      %v2509 = vadd.f32 %v2462, %v2508
      %v2510 = vpop.f32.mrf.mxu0
      %v2511 = vpop.f32.mrf.mxu0
      %v2512 = vadd.f32 %v2463, %v2511
      %v2513 = vpop.f32.mrf.mxu0
      %2514 = vdwg.mxu0
      %2515 = vrot.lane.b32.xlu0 %v734, 104
      %v2516 = vpop.permute.xlu0 %2515
      %2517 = vrot.lane.b32.xlu0 %v734, 72
      %v2518 = vpop.permute.xlu0 %2517
      %v2520 = vsel %vm742, %v2516, 0
      %v2523 = vsel %vm742, %v2518, 0
      %2525 = vmatprep.subr.bf16.mxu0 0
      %2526 = vmatpush1.bf16.xpose.msra.mxu0 0
      %2527 = vmatprep.subr.bf16.mxu0 0
      %2528 = vmatpush1.bf16.xpose.msra.mxu0 0
      %2529 = vmatprep.subr.bf16.mxu0 0
      %2530 = vmatpush1.bf16.xpose.msra.mxu0 0
      %2531 = vmatprep.subr.bf16.mxu0 0
      %2532 = vmatpush1.bf16.xpose.msra.mxu0 0
      %2533 = vmatprep.subr.bf16.mxu0 0
      %2534 = vmatpush1.bf16.xpose.msra.mxu0 0
      %2535 = vmatprep.subr.bf16.mxu0 0
      %2536 = vmatpush1.bf16.xpose.msra.mxu0 0
      %2537 = vmatprep.subr.bf16.mxu0 0
      %2538 = vmatpush1.bf16.xpose.msra.mxu0 0
      %2539 = vmatprep.subr.bf16.mxu0 0
      %2540 = vmatpush1.bf16.xpose.msra.mxu0 %v2523
      %2541 = vmatprep.subr.bf16.mxu0 0
      %2542 = vmatpush2.bf16.xpose.msra.mxu0 0
      %2543 = vmatprep.subr.bf16.mxu0 0
      %2544 = vmatpush2.bf16.xpose.msra.mxu0 0
      %2545 = vmatprep.subr.bf16.mxu0 0
      %2546 = vmatpush2.bf16.xpose.msra.mxu0 0
      %2547 = vmatprep.subr.bf16.mxu0 0
      %2548 = vmatpush2.bf16.xpose.msra.mxu0 0
      %2549 = vmatprep.subr.bf16.mxu0 0
      %2550 = vmatpush2.bf16.xpose.msra.mxu0 0
      %2551 = vmatprep.subr.bf16.mxu0 0
      %2552 = vmatpush2.bf16.xpose.msra.mxu0 0
      %2553 = vmatprep.subr.bf16.mxu0 0
      %2554 = vmatpush2.bf16.xpose.msra.mxu0 0
      %2555 = vmatprep.subr.bf16.mxu0 0
      %2556 = vmatpush2.bf16.xpose.msra.mxu0 0
      %2557 = vmatprep.mubr.bf16.mxu0 0
      %2558 = vmatmul.mubr.bf16.gmra.mxu0 %v2520
      %v2559 = vpop.f32.mrf.mxu0
      %v2560 = vadd.f32 %v2462, %v2559
      %v2561 = vpop.f32.mrf.mxu0
      %v2562 = vpop.f32.mrf.mxu0
      %v2563 = vadd.f32 %v2463, %v2562
      %v2564 = vpop.f32.mrf.mxu0
      %2565 = vdwg.mxu0
      %2566 = vrot.lane.b32.xlu0 %v735, 104
      %v2567 = vpop.permute.xlu0 %2566
      %2568 = vrot.lane.b32.xlu0 %v735, 72
      %v2569 = vpop.permute.xlu0 %2568
      %v2571 = vsel %vm742, %v2567, 0
      %v2574 = vsel %vm742, %v2569, 0
      %2576 = vmatprep.subr.bf16.mxu0 0
      %2577 = vmatpush1.bf16.xpose.msra.mxu0 0
      %2578 = vmatprep.subr.bf16.mxu0 0
      %2579 = vmatpush1.bf16.xpose.msra.mxu0 0
      %2580 = vmatprep.subr.bf16.mxu0 0
      %2581 = vmatpush1.bf16.xpose.msra.mxu0 0
      %2582 = vmatprep.subr.bf16.mxu0 0
      %2583 = vmatpush1.bf16.xpose.msra.mxu0 0
      %2584 = vmatprep.subr.bf16.mxu0 0
      %2585 = vmatpush1.bf16.xpose.msra.mxu0 0
      %2586 = vmatprep.subr.bf16.mxu0 0
      %2587 = vmatpush1.bf16.xpose.msra.mxu0 0
      %2588 = vmatprep.subr.bf16.mxu0 0
      %2589 = vmatpush1.bf16.xpose.msra.mxu0 0
      %2590 = vmatprep.subr.bf16.mxu0 0
      %2591 = vmatpush1.bf16.xpose.msra.mxu0 %v2574
      %2592 = vmatprep.subr.bf16.mxu0 0
      %2593 = vmatpush2.bf16.xpose.msra.mxu0 0
      %2594 = vmatprep.subr.bf16.mxu0 0
      %2595 = vmatpush2.bf16.xpose.msra.mxu0 0
      %2596 = vmatprep.subr.bf16.mxu0 0
      %2597 = vmatpush2.bf16.xpose.msra.mxu0 0
      %2598 = vmatprep.subr.bf16.mxu0 0
      %2599 = vmatpush2.bf16.xpose.msra.mxu0 0
      %2600 = vmatprep.subr.bf16.mxu0 0
      %2601 = vmatpush2.bf16.xpose.msra.mxu0 0
      %2602 = vmatprep.subr.bf16.mxu0 0
      %2603 = vmatpush2.bf16.xpose.msra.mxu0 0
      %2604 = vmatprep.subr.bf16.mxu0 0
      %2605 = vmatpush2.bf16.xpose.msra.mxu0 0
      %2606 = vmatprep.subr.bf16.mxu0 0
      %2607 = vmatpush2.bf16.xpose.msra.mxu0 0
      %2608 = vmatprep.mubr.bf16.mxu0 0
      %2609 = vmatmul.mubr.bf16.gmra.mxu0 %v2571
      %v2610 = vpop.f32.mrf.mxu0
      %v2611 = vadd.f32 %v2462, %v2610
      %v2612 = vpop.f32.mrf.mxu0
      %v2613 = vpop.f32.mrf.mxu0
      %v2614 = vadd.f32 %v2463, %v2613
      %v2615 = vpop.f32.mrf.mxu0
      %2616 = vdwg.mxu0
      %2617 = vrot.lane.b32.xlu0 %v736, 104
      %v2618 = vpop.permute.xlu0 %2617
      %2619 = vrot.lane.b32.xlu0 %v736, 72
      %v2620 = vpop.permute.xlu0 %2619
      %v2622 = vsel %vm742, %v2618, 0
      %v2625 = vsel %vm742, %v2620, 0
      %2627 = vmatprep.subr.bf16.mxu0 0
      %2628 = vmatpush1.bf16.xpose.msra.mxu0 0
      %2629 = vmatprep.subr.bf16.mxu0 0
      %2630 = vmatpush1.bf16.xpose.msra.mxu0 0
      %2631 = vmatprep.subr.bf16.mxu0 0
      %2632 = vmatpush1.bf16.xpose.msra.mxu0 0
      %2633 = vmatprep.subr.bf16.mxu0 0
      %2634 = vmatpush1.bf16.xpose.msra.mxu0 0
      %2635 = vmatprep.subr.bf16.mxu0 0
      %2636 = vmatpush1.bf16.xpose.msra.mxu0 0
      %2637 = vmatprep.subr.bf16.mxu0 0
      %2638 = vmatpush1.bf16.xpose.msra.mxu0 0
      %2639 = vmatprep.subr.bf16.mxu0 0
      %2640 = vmatpush1.bf16.xpose.msra.mxu0 0
      %2641 = vmatprep.subr.bf16.mxu0 0
      %2642 = vmatpush1.bf16.xpose.msra.mxu0 %v2625
      %2643 = vmatprep.subr.bf16.mxu0 0
      %2644 = vmatpush2.bf16.xpose.msra.mxu0 0
      %2645 = vmatprep.subr.bf16.mxu0 0
      %2646 = vmatpush2.bf16.xpose.msra.mxu0 0
      %2647 = vmatprep.subr.bf16.mxu0 0
      %2648 = vmatpush2.bf16.xpose.msra.mxu0 0
      %2649 = vmatprep.subr.bf16.mxu0 0
      %2650 = vmatpush2.bf16.xpose.msra.mxu0 0
      %2651 = vmatprep.subr.bf16.mxu0 0
      %2652 = vmatpush2.bf16.xpose.msra.mxu0 0
      %2653 = vmatprep.subr.bf16.mxu0 0
      %2654 = vmatpush2.bf16.xpose.msra.mxu0 0
      %2655 = vmatprep.subr.bf16.mxu0 0
      %2656 = vmatpush2.bf16.xpose.msra.mxu0 0
      %2657 = vmatprep.subr.bf16.mxu0 0
      %2658 = vmatpush2.bf16.xpose.msra.mxu0 0
      %2659 = vmatprep.mubr.bf16.mxu0 0
      %2660 = vmatmul.mubr.bf16.gmra.mxu0 %v2622
      %v2661 = vpop.f32.mrf.mxu0
      %v2662 = vadd.f32 %v2462, %v2661
      %v2663 = vpop.f32.mrf.mxu0
      %v2664 = vpop.f32.mrf.mxu0
      %v2665 = vadd.f32 %v2463, %v2664
      %v2666 = vpop.f32.mrf.mxu0
      %2667 = vdwg.mxu0
      %v2668 = vsel %vm940, %v2509, -inf
      %2669 = vmax.xlane.f32.xlu0 %v2668
      %v2670 = vpop.xlane.xlu0 %2669
      %v2671 = vsel %vm940, %v2512, -inf
      %2672 = vmax.xlane.f32.xlu0 %v2671
      %v2673 = vpop.xlane.xlu0 %2672
      %v2674 = vsel %vm940, %v2560, -inf
      %2675 = vmax.xlane.f32.xlu0 %v2674
      %v2676 = vpop.xlane.xlu0 %2675
      %v2677 = vsel %vm940, %v2563, -inf
      %2678 = vmax.xlane.f32.xlu0 %v2677
      %v2679 = vpop.xlane.xlu0 %2678
      %v2680 = vsel %vm940, %v2611, -inf
      %2681 = vmax.xlane.f32.xlu0 %v2680
      %v2682 = vpop.xlane.xlu0 %2681
      %v2683 = vsel %vm940, %v2614, -inf
      %2684 = vmax.xlane.f32.xlu0 %v2683
      %v2685 = vpop.xlane.xlu0 %2684
      %v2686 = vsel %vm940, %v2662, -inf
      %2687 = vmax.xlane.f32.xlu0 %v2686
      %v2688 = vpop.xlane.xlu0 %2687
      %v2689 = vsel %vm940, %v2665, -inf
      %2690 = vmax.xlane.f32.xlu0 %v2689
      %v2691 = vpop.xlane.xlu0 %2690
      %v2692 = vsub.f32 %v2509, %v2670
      %v2693 = vsub.f32 %v2512, %v2673
      %v2694 = vsub.f32 %v2560, %v2676
      %v2695 = vsub.f32 %v2563, %v2679
      %v2696 = vsub.f32 %v2611, %v2682
      %v2697 = vsub.f32 %v2614, %v2685
      %v2698 = vsub.f32 %v2662, %v2688
      %v2699 = vsub.f32 %v2665, %v2691
      %v2700 = vmul.f32 %v2692, 1.442695
      %v2701 = vpow.pop %v2700
      %v2702 = vmul.f32 %v2693, 1.442695
      %v2703 = vpow.pop %v2702
      %v2704 = vmul.f32 %v2694, 1.442695
      %v2705 = vpow.pop %v2704
      %v2706 = vmul.f32 %v2695, 1.442695
      %v2707 = vpow.pop %v2706
      %v2708 = vmul.f32 %v2696, 1.442695
      %v2709 = vpow.pop %v2708
      %v2710 = vmul.f32 %v2697, 1.442695
      %v2711 = vpow.pop %v2710
      %v2712 = vmul.f32 %v2698, 1.442695
      %v2713 = vpow.pop %v2712
      %v2714 = vmul.f32 %v2699, 1.442695
      %v2715 = vpow.pop %v2714
      %v2716 = vsel %vm940, %v2701, 0.0
      %2717 = vadd.xlane.f32.xlu0 %v2716
      %v2718 = vpop.xlane.xlu0 %2717
      %v2719 = vsel %vm940, %v2703, 0.0
      %2720 = vadd.xlane.f32.xlu0 %v2719
      %v2721 = vpop.xlane.xlu0 %2720
      %v2722 = vsel %vm940, %v2705, 0.0
      %2723 = vadd.xlane.f32.xlu0 %v2722
      %v2724 = vpop.xlane.xlu0 %2723
      %v2725 = vsel %vm940, %v2707, 0.0
      %2726 = vadd.xlane.f32.xlu0 %v2725
      %v2727 = vpop.xlane.xlu0 %2726
      %v2728 = vsel %vm940, %v2709, 0.0
      %2729 = vadd.xlane.f32.xlu0 %v2728
      %v2730 = vpop.xlane.xlu0 %2729
      %v2731 = vsel %vm940, %v2711, 0.0
      %2732 = vadd.xlane.f32.xlu0 %v2731
      %v2733 = vpop.xlane.xlu0 %2732
      %v2734 = vsel %vm940, %v2713, 0.0
      %2735 = vadd.xlane.f32.xlu0 %v2734
      %v2736 = vpop.xlane.xlu0 %2735
      %v2737 = vsel %vm940, %v2715, 0.0
      %2738 = vadd.xlane.f32.xlu0 %v2737
      %v2739 = vpop.xlane.xlu0 %2738
      %v2740 = vrcp.pop %v2718
      %v2741 = vmul.f32 %v2701, %v2740
      %v2742 = vrcp.pop %v2721
      %v2743 = vmul.f32 %v2703, %v2742
      %v2744 = vrcp.pop %v2724
      %v2745 = vmul.f32 %v2705, %v2744
      %v2746 = vrcp.pop %v2727
      %v2747 = vmul.f32 %v2707, %v2746
      %v2748 = vrcp.pop %v2730
      %v2749 = vmul.f32 %v2709, %v2748
      %v2750 = vrcp.pop %v2733
      %v2751 = vmul.f32 %v2711, %v2750
      %v2752 = vrcp.pop %v2736
      %v2753 = vmul.f32 %v2713, %v2752
      %v2754 = vrcp.pop %v2739
      %v2755 = vmul.f32 %v2715, %v2754
      %v2756 = vpack.c.bf16 %v2743, %v2741
      %v2757 = vpack.c.bf16 %v2747, %v2745
      %v2758 = vpack.c.bf16 %v2751, %v2749
      %v2759 = vpack.c.bf16 %v2755, %v2753
      %2760 = vrot.lane.b32.xlu0 %v733, 40
      %v2761 = vpop.permute.xlu0 %2760
      %v2764 = vsel %vm940, %v2756, 0
      %2766 = vmatprep.subr.bf16.mxu0 0
      %2767 = vmatpush1.bf16.msra.mxu0 0
      %2768 = vmatprep.subr.bf16.mxu0 0
      %2769 = vmatpush1.bf16.msra.mxu0 0
      %2770 = vmatprep.subr.bf16.mxu0 0
      %2771 = vmatpush1.bf16.msra.mxu0 0
      %2772 = vmatprep.subr.bf16.mxu0 0
      %2773 = vmatpush1.bf16.msra.mxu0 0
      %2774 = vmatprep.subr.bf16.mxu0 0
      %2775 = vmatpush1.bf16.msra.mxu0 0
      %2776 = vmatprep.subr.bf16.mxu0 0
      %2777 = vmatpush1.bf16.msra.mxu0 0
      %2778 = vmatprep.subr.bf16.mxu0 0
      %2779 = vmatpush1.bf16.msra.mxu0 0
      %2780 = vmatprep.subr.bf16.mxu0 0
      %2781 = vmatpush1.bf16.msra.mxu0 %v2761
      %2782 = vmatprep.subr.bf16.mxu0 0
      %2783 = vmatpush2.bf16.msra.mxu0 0
      %2784 = vmatprep.subr.bf16.mxu0 0
      %2785 = vmatpush2.bf16.msra.mxu0 0
      %2786 = vmatprep.subr.bf16.mxu0 0
      %2787 = vmatpush2.bf16.msra.mxu0 0
      %2788 = vmatprep.subr.bf16.mxu0 0
      %2789 = vmatpush2.bf16.msra.mxu0 0
      %2790 = vmatprep.subr.bf16.mxu0 0
      %2791 = vmatpush2.bf16.msra.mxu0 0
      %2792 = vmatprep.subr.bf16.mxu0 0
      %2793 = vmatpush2.bf16.msra.mxu0 0
      %2794 = vmatprep.subr.bf16.mxu0 0
      %2795 = vmatpush2.bf16.msra.mxu0 0
      %2796 = vmatprep.subr.bf16.mxu0 0
      %2797 = vmatpush2.bf16.msra.mxu0 0
      %2798 = vmatprep.mubr.bf16.mxu0 0
      %2799 = vmatmul.mubr.bf16.gmra.mxu0 %v2764
      %v2800 = vpop.f32.mrf.mxu0
      %v2801 = vadd.f32 0.0, %v2800
      %v2802 = vpop.f32.mrf.mxu0
      %v2803 = vpop.f32.mrf.mxu0
      %v2804 = vadd.f32 0.0, %v2803
      %v2805 = vpop.f32.mrf.mxu0
      %2806 = vdwg.mxu0
      %2807 = vrot.lane.b32.xlu0 %v734, 40
      %v2808 = vpop.permute.xlu0 %2807
      %v2811 = vsel %vm940, %v2757, 0
      %2813 = vmatprep.subr.bf16.mxu0 0
      %2814 = vmatpush1.bf16.msra.mxu0 0
      %2815 = vmatprep.subr.bf16.mxu0 0
      %2816 = vmatpush1.bf16.msra.mxu0 0
      %2817 = vmatprep.subr.bf16.mxu0 0
      %2818 = vmatpush1.bf16.msra.mxu0 0
      %2819 = vmatprep.subr.bf16.mxu0 0
      %2820 = vmatpush1.bf16.msra.mxu0 0
      %2821 = vmatprep.subr.bf16.mxu0 0
      %2822 = vmatpush1.bf16.msra.mxu0 0
      %2823 = vmatprep.subr.bf16.mxu0 0
      %2824 = vmatpush1.bf16.msra.mxu0 0
      %2825 = vmatprep.subr.bf16.mxu0 0
      %2826 = vmatpush1.bf16.msra.mxu0 0
      %2827 = vmatprep.subr.bf16.mxu0 0
      %2828 = vmatpush1.bf16.msra.mxu0 %v2808
      %2829 = vmatprep.subr.bf16.mxu0 0
      %2830 = vmatpush2.bf16.msra.mxu0 0
      %2831 = vmatprep.subr.bf16.mxu0 0
      %2832 = vmatpush2.bf16.msra.mxu0 0
      %2833 = vmatprep.subr.bf16.mxu0 0
      %2834 = vmatpush2.bf16.msra.mxu0 0
      %2835 = vmatprep.subr.bf16.mxu0 0
      %2836 = vmatpush2.bf16.msra.mxu0 0
      %2837 = vmatprep.subr.bf16.mxu0 0
      %2838 = vmatpush2.bf16.msra.mxu0 0
      %2839 = vmatprep.subr.bf16.mxu0 0
      %2840 = vmatpush2.bf16.msra.mxu0 0
      %2841 = vmatprep.subr.bf16.mxu0 0
      %2842 = vmatpush2.bf16.msra.mxu0 0
      %2843 = vmatprep.subr.bf16.mxu0 0
      %2844 = vmatpush2.bf16.msra.mxu0 0
      %2845 = vmatprep.mubr.bf16.mxu0 0
      %2846 = vmatmul.mubr.bf16.gmra.mxu0 %v2811
      %v2847 = vpop.f32.mrf.mxu0
      %v2848 = vadd.f32 0.0, %v2847
      %v2849 = vpop.f32.mrf.mxu0
      %v2850 = vpop.f32.mrf.mxu0
      %v2851 = vadd.f32 0.0, %v2850
      %v2852 = vpop.f32.mrf.mxu0
      %2853 = vdwg.mxu0
      %2854 = vrot.lane.b32.xlu0 %v735, 40
      %v2855 = vpop.permute.xlu0 %2854
      %v2858 = vsel %vm940, %v2758, 0
      %2860 = vmatprep.subr.bf16.mxu0 0
      %2861 = vmatpush1.bf16.msra.mxu0 0
      %2862 = vmatprep.subr.bf16.mxu0 0
      %2863 = vmatpush1.bf16.msra.mxu0 0
      %2864 = vmatprep.subr.bf16.mxu0 0
      %2865 = vmatpush1.bf16.msra.mxu0 0
      %2866 = vmatprep.subr.bf16.mxu0 0
      %2867 = vmatpush1.bf16.msra.mxu0 0
      %2868 = vmatprep.subr.bf16.mxu0 0
      %2869 = vmatpush1.bf16.msra.mxu0 0
      %2870 = vmatprep.subr.bf16.mxu0 0
      %2871 = vmatpush1.bf16.msra.mxu0 0
      %2872 = vmatprep.subr.bf16.mxu0 0
      %2873 = vmatpush1.bf16.msra.mxu0 0
      %2874 = vmatprep.subr.bf16.mxu0 0
      %2875 = vmatpush1.bf16.msra.mxu0 %v2855
      %2876 = vmatprep.subr.bf16.mxu0 0
      %2877 = vmatpush2.bf16.msra.mxu0 0
      %2878 = vmatprep.subr.bf16.mxu0 0
      %2879 = vmatpush2.bf16.msra.mxu0 0
      %2880 = vmatprep.subr.bf16.mxu0 0
      %2881 = vmatpush2.bf16.msra.mxu0 0
      %2882 = vmatprep.subr.bf16.mxu0 0
      %2883 = vmatpush2.bf16.msra.mxu0 0
      %2884 = vmatprep.subr.bf16.mxu0 0
      %2885 = vmatpush2.bf16.msra.mxu0 0
      %2886 = vmatprep.subr.bf16.mxu0 0
      %2887 = vmatpush2.bf16.msra.mxu0 0
      %2888 = vmatprep.subr.bf16.mxu0 0
      %2889 = vmatpush2.bf16.msra.mxu0 0
      %2890 = vmatprep.subr.bf16.mxu0 0
      %2891 = vmatpush2.bf16.msra.mxu0 0
      %2892 = vmatprep.mubr.bf16.mxu0 0
      %2893 = vmatmul.mubr.bf16.gmra.mxu0 %v2858
      %v2894 = vpop.f32.mrf.mxu0
      %v2895 = vadd.f32 0.0, %v2894
      %v2896 = vpop.f32.mrf.mxu0
      %v2897 = vpop.f32.mrf.mxu0
      %v2898 = vadd.f32 0.0, %v2897
      %v2899 = vpop.f32.mrf.mxu0
      %2900 = vdwg.mxu0
      %2901 = vrot.lane.b32.xlu0 %v736, 40
      %v2902 = vpop.permute.xlu0 %2901
      %v2905 = vsel %vm940, %v2759, 0
      %2907 = vmatprep.subr.bf16.mxu0 0
      %2908 = vmatpush1.bf16.msra.mxu0 0
      %2909 = vmatprep.subr.bf16.mxu0 0
      %2910 = vmatpush1.bf16.msra.mxu0 0
      %2911 = vmatprep.subr.bf16.mxu0 0
      %2912 = vmatpush1.bf16.msra.mxu0 0
      %2913 = vmatprep.subr.bf16.mxu0 0
      %2914 = vmatpush1.bf16.msra.mxu0 0
      %2915 = vmatprep.subr.bf16.mxu0 0
      %2916 = vmatpush1.bf16.msra.mxu0 0
      %2917 = vmatprep.subr.bf16.mxu0 0
      %2918 = vmatpush1.bf16.msra.mxu0 0
      %2919 = vmatprep.subr.bf16.mxu0 0
      %2920 = vmatpush1.bf16.msra.mxu0 0
      %2921 = vmatprep.subr.bf16.mxu0 0
      %2922 = vmatpush1.bf16.msra.mxu0 %v2902
      %2923 = vmatprep.subr.bf16.mxu0 0
      %2924 = vmatpush2.bf16.msra.mxu0 0
      %2925 = vmatprep.subr.bf16.mxu0 0
      %2926 = vmatpush2.bf16.msra.mxu0 0
      %2927 = vmatprep.subr.bf16.mxu0 0
      %2928 = vmatpush2.bf16.msra.mxu0 0
      %2929 = vmatprep.subr.bf16.mxu0 0
      %2930 = vmatpush2.bf16.msra.mxu0 0
      %2931 = vmatprep.subr.bf16.mxu0 0
      %2932 = vmatpush2.bf16.msra.mxu0 0
      %2933 = vmatprep.subr.bf16.mxu0 0
      %2934 = vmatpush2.bf16.msra.mxu0 0
      %2935 = vmatprep.subr.bf16.mxu0 0
      %2936 = vmatpush2.bf16.msra.mxu0 0
      %2937 = vmatprep.subr.bf16.mxu0 0
      %2938 = vmatpush2.bf16.msra.mxu0 0
      %2939 = vmatprep.mubr.bf16.mxu0 0
      %2940 = vmatmul.mubr.bf16.gmra.mxu0 %v2905
      %v2941 = vpop.f32.mrf.mxu0
      %v2942 = vadd.f32 0.0, %v2941
      %v2943 = vpop.f32.mrf.mxu0
      %v2944 = vpop.f32.mrf.mxu0
      %v2945 = vadd.f32 0.0, %v2944
      %v2946 = vpop.f32.mrf.mxu0
      %2947 = vdwg.mxu0
      %v2948 = vpack.c.bf16 %v2804, %v2801
      %v2949 = vpack.c.bf16 %v2851, %v2848
      %v2950 = vpack.c.bf16 %v2898, %v2895
      %v2951 = vpack.c.bf16 %v2945, %v2942
      %s2952 = scalar_lea.vmem %s5, 12
      %v2953 = vld [vmem:[%s2952] sm:$0xf]
      %v2955 = vsel %vm742, %v2948, 0
      %v2958 = vsel %vm742, %v2949, 0
      %v2961 = vsel %vm742, %v2950, 0
      %v2964 = vsel %vm742, %v2951, 0
      %v2967 = vsel %vm1731, %v2953, 0
      %2969 = vmatprep.subr.bf16.mxu0 0
      %2970 = vmatpush1.bf16.msra.mxu0 0
      %2971 = vmatprep.subr.bf16.mxu0 0
      %2972 = vmatpush1.bf16.msra.mxu0 0
      %2973 = vmatprep.subr.bf16.mxu0 0
      %2974 = vmatpush1.bf16.msra.mxu0 0
      %2975 = vmatprep.subr.bf16.mxu0 0
      %2976 = vmatpush1.bf16.msra.mxu0 0
      %2977 = vmatprep.subr.bf16.mxu0 0
      %2978 = vmatpush1.bf16.msra.mxu0 0
      %2979 = vmatprep.subr.bf16.mxu0 0
      %2980 = vmatpush1.bf16.msra.mxu0 0
      %2981 = vmatprep.subr.bf16.mxu0 0
      %2982 = vmatpush1.bf16.msra.mxu0 0
      %2983 = vmatprep.subr.bf16.mxu0 0
      %2984 = vmatpush1.bf16.msra.mxu0 %v2967
      %2985 = vmatprep.subr.bf16.mxu0 0
      %2986 = vmatpush2.bf16.msra.mxu0 0
      %2987 = vmatprep.subr.bf16.mxu0 0
      %2988 = vmatpush2.bf16.msra.mxu0 0
      %2989 = vmatprep.subr.bf16.mxu0 0
      %2990 = vmatpush2.bf16.msra.mxu0 0
      %2991 = vmatprep.subr.bf16.mxu0 0
      %2992 = vmatpush2.bf16.msra.mxu0 0
      %2993 = vmatprep.subr.bf16.mxu0 0
      %2994 = vmatpush2.bf16.msra.mxu0 0
      %2995 = vmatprep.subr.bf16.mxu0 0
      %2996 = vmatpush2.bf16.msra.mxu0 0
      %2997 = vmatprep.subr.bf16.mxu0 0
      %2998 = vmatpush2.bf16.msra.mxu0 0
      %2999 = vmatprep.subr.bf16.mxu0 0
      %3000 = vmatpush2.bf16.msra.mxu0 0
      %3001 = vmatprep.mubr.bf16.mxu0 0
      %3002 = vmatmul.mubr.bf16.gmra.mxu0 %v2955
      %v3003 = vpop.f32.mrf.mxu0
      %v3004 = vadd.f32 0.0, %v3003
      %v3005 = vpop.f32.mrf.mxu0
      %v3006 = vpop.f32.mrf.mxu0
      %v3007 = vadd.f32 0.0, %v3006
      %v3008 = vpop.f32.mrf.mxu0
      %3009 = vmatprep.mubr.bf16.mxu0 0
      %3010 = vmatmul.mubr.bf16.gmra.mxu0 %v2958
      %v3011 = vpop.f32.mrf.mxu0
      %v3012 = vadd.f32 0.0, %v3011
      %v3013 = vpop.f32.mrf.mxu0
      %v3014 = vpop.f32.mrf.mxu0
      %v3015 = vadd.f32 0.0, %v3014
      %v3016 = vpop.f32.mrf.mxu0
      %3017 = vmatprep.mubr.bf16.mxu0 0
      %3018 = vmatmul.mubr.bf16.gmra.mxu0 %v2961
      %v3019 = vpop.f32.mrf.mxu0
      %v3020 = vadd.f32 0.0, %v3019
      %v3021 = vpop.f32.mrf.mxu0
      %v3022 = vpop.f32.mrf.mxu0
      %v3023 = vadd.f32 0.0, %v3022
      %v3024 = vpop.f32.mrf.mxu0
      %3025 = vmatprep.mubr.bf16.mxu0 0
      %3026 = vmatmul.mubr.bf16.gmra.mxu0 %v2964
      %v3027 = vpop.f32.mrf.mxu0
      %v3028 = vadd.f32 0.0, %v3027
      %v3029 = vpop.f32.mrf.mxu0
      %v3030 = vpop.f32.mrf.mxu0
      %v3031 = vadd.f32 0.0, %v3030
      %v3032 = vpop.f32.mrf.mxu0
      %3033 = vdwg.mxu0
      %v3034 = vadd.f32 %v2453, %v3004
      %v3035 = vadd.f32 %v2454, %v3007
      %v3036 = vadd.f32 %v2455, %v3012
      %v3037 = vadd.f32 %v2456, %v3015
      %v3038 = vadd.f32 %v2457, %v3020
      %v3039 = vadd.f32 %v2458, %v3023
      %v3040 = vadd.f32 %v2459, %v3028
      %v3041 = vadd.f32 %v2460, %v3031
      %v3042 = vadd.f32 %v469, %v3034
      %v3043 = vadd.f32 %v470, %v3035
      %v3044 = vadd.f32 %v471, %v3036
      %v3045 = vadd.f32 %v472, %v3037
      %v3046 = vadd.f32 %v473, %v3038
      %v3047 = vadd.f32 %v474, %v3039
      %v3048 = vadd.f32 %v475, %v3040
      %v3049 = vadd.f32 %v476, %v3041
      %v3050 = vld [vmem:[%s6] sm:$0x1]
      %v3052 = vlaneseq
      %v3053 = vshrl.u32 %v3052, 7
      %v3054 = vsub.s32 0, %v3053
      %v3055 = vrot.slane %v3050, %v3054
      %v3057 = vadd.f32 %v3042, %v3055
      %v3058 = vadd.f32 %v3043, %v3055
      %v3059 = vadd.f32 %v3044, %v3055
      %v3060 = vadd.f32 %v3045, %v3055
      %v3061 = vadd.f32 %v3046, %v3055
      %v3062 = vadd.f32 %v3047, %v3055
      %v3063 = vadd.f32 %v3048, %v3055
      %v3064 = vadd.f32 %v3049, %v3055
      %v3065 = vsel %vm477, %v3057, 0.0
      %3066 = vadd.xlane.f32.xlu0 %v3065
      %v3067 = vpop.xlane.xlu0 %3066
      %v3068 = vsel %vm477, %v3058, 0.0
      %3069 = vadd.xlane.f32.xlu0 %v3068
      %v3070 = vpop.xlane.xlu0 %3069
      %v3071 = vsel %vm477, %v3059, 0.0
      %3072 = vadd.xlane.f32.xlu0 %v3071
      %v3073 = vpop.xlane.xlu0 %3072
      %v3074 = vsel %vm477, %v3060, 0.0
      %3075 = vadd.xlane.f32.xlu0 %v3074
      %v3076 = vpop.xlane.xlu0 %3075
      %v3077 = vsel %vm477, %v3061, 0.0
      %3078 = vadd.xlane.f32.xlu0 %v3077
      %v3079 = vpop.xlane.xlu0 %3078
      %v3080 = vsel %vm477, %v3062, 0.0
      %3081 = vadd.xlane.f32.xlu0 %v3080
      %v3082 = vpop.xlane.xlu0 %3081
      %v3083 = vsel %vm477, %v3063, 0.0
      %3084 = vadd.xlane.f32.xlu0 %v3083
      %v3085 = vpop.xlane.xlu0 %3084
      %v3086 = vsel %vm477, %v3064, 0.0
      %3087 = vadd.xlane.f32.xlu0 %v3086
      %v3088 = vpop.xlane.xlu0 %3087
      %v3089 = vmul.f32 %v3067, %v502
      %v3090 = vmul.f32 %v3070, %v502
      %v3091 = vmul.f32 %v3073, %v502
      %v3092 = vmul.f32 %v3076, %v502
      %v3093 = vmul.f32 %v3079, %v502
      %v3094 = vmul.f32 %v3082, %v502
      %v3095 = vmul.f32 %v3085, %v502
      %v3096 = vmul.f32 %v3088, %v502
      %v3097 = vmul.f32 %v3057, %v3057
      %v3098 = vmul.f32 %v3058, %v3058
      %v3099 = vmul.f32 %v3059, %v3059
      %v3100 = vmul.f32 %v3060, %v3060
      %v3101 = vmul.f32 %v3061, %v3061
      %v3102 = vmul.f32 %v3062, %v3062
      %v3103 = vmul.f32 %v3063, %v3063
      %v3104 = vmul.f32 %v3064, %v3064
      %v3105 = vsel %vm477, %v3097, 0.0
      %3106 = vadd.xlane.f32.xlu0 %v3105
      %v3107 = vpop.xlane.xlu0 %3106
      %v3108 = vsel %vm477, %v3098, 0.0
      %3109 = vadd.xlane.f32.xlu0 %v3108
      %v3110 = vpop.xlane.xlu0 %3109
      %v3111 = vsel %vm477, %v3099, 0.0
      %3112 = vadd.xlane.f32.xlu0 %v3111
      %v3113 = vpop.xlane.xlu0 %3112
      %v3114 = vsel %vm477, %v3100, 0.0
      %3115 = vadd.xlane.f32.xlu0 %v3114
      %v3116 = vpop.xlane.xlu0 %3115
      %v3117 = vsel %vm477, %v3101, 0.0
      %3118 = vadd.xlane.f32.xlu0 %v3117
      %v3119 = vpop.xlane.xlu0 %3118
      %v3120 = vsel %vm477, %v3102, 0.0
      %3121 = vadd.xlane.f32.xlu0 %v3120
      %v3122 = vpop.xlane.xlu0 %3121
      %v3123 = vsel %vm477, %v3103, 0.0
      %3124 = vadd.xlane.f32.xlu0 %v3123
      %v3125 = vpop.xlane.xlu0 %3124
      %v3126 = vsel %vm477, %v3104, 0.0
      %3127 = vadd.xlane.f32.xlu0 %v3126
      %v3128 = vpop.xlane.xlu0 %3127
      %v3129 = vmul.f32 %v3107, %v502
      %v3130 = vmul.f32 %v3110, %v502
      %v3131 = vmul.f32 %v3113, %v502
      %v3132 = vmul.f32 %v3116, %v502
      %v3133 = vmul.f32 %v3119, %v502
      %v3134 = vmul.f32 %v3122, %v502
      %v3135 = vmul.f32 %v3125, %v502
      %v3136 = vmul.f32 %v3128, %v502
      %v3137 = vmul.f32 %v3089, %v3089
      %v3138 = vmul.f32 %v3090, %v3090
      %v3139 = vmul.f32 %v3091, %v3091
      %v3140 = vmul.f32 %v3092, %v3092
      %v3141 = vmul.f32 %v3093, %v3093
      %v3142 = vmul.f32 %v3094, %v3094
      %v3143 = vmul.f32 %v3095, %v3095
      %v3144 = vmul.f32 %v3096, %v3096
      %v3145 = vsub.f32 %v3129, %v3137
      %v3146 = vsub.f32 %v3130, %v3138
      %v3147 = vsub.f32 %v3131, %v3139
      %v3148 = vsub.f32 %v3132, %v3140
      %v3149 = vsub.f32 %v3133, %v3141
      %v3150 = vsub.f32 %v3134, %v3142
      %v3151 = vsub.f32 %v3135, %v3143
      %v3152 = vsub.f32 %v3136, %v3144
      %v3153 = vsub.f32 %v3057, %v3089
      %v3154 = vsub.f32 %v3058, %v3090
      %v3155 = vsub.f32 %v3059, %v3091
      %v3156 = vsub.f32 %v3060, %v3092
      %v3157 = vsub.f32 %v3061, %v3093
      %v3158 = vsub.f32 %v3062, %v3094
      %v3159 = vsub.f32 %v3063, %v3095
      %v3160 = vsub.f32 %v3064, %v3096
      %v3161 = vadd.f32 %v3145, 1e-05
      %v3162 = vadd.f32 %v3146, 1e-05
      %v3163 = vadd.f32 %v3147, 1e-05
      %v3164 = vadd.f32 %v3148, 1e-05
      %v3165 = vadd.f32 %v3149, 1e-05
      %v3166 = vadd.f32 %v3150, 1e-05
      %v3167 = vadd.f32 %v3151, 1e-05
      %v3168 = vadd.f32 %v3152, 1e-05
      %v3169 = vrsqrt.pop %v3161
      %v3170 = vrsqrt.pop %v3162
      %v3171 = vrsqrt.pop %v3163
      %v3172 = vrsqrt.pop %v3164
      %v3173 = vrsqrt.pop %v3165
      %v3174 = vrsqrt.pop %v3166
      %v3175 = vrsqrt.pop %v3167
      %v3176 = vrsqrt.pop %v3168
      %v3177 = vmul.f32 %v3153, %v3169
      %v3178 = vmul.f32 %v3154, %v3170
      %v3179 = vmul.f32 %v3155, %v3171
      %v3180 = vmul.f32 %v3156, %v3172
      %v3181 = vmul.f32 %v3157, %v3173
      %v3182 = vmul.f32 %v3158, %v3174
      %v3183 = vmul.f32 %v3159, %v3175
      %v3184 = vmul.f32 %v3160, %v3176
      %v3185 = vld [vmem:[%s8] sm:$0x1]
      %v3187 = vlaneseq
      %v3188 = vshrl.u32 %v3187, 7
      %v3189 = vsub.s32 0, %v3188
      %v3190 = vrot.slane %v3185, %v3189
      %v3192 = vmul.f32 %v3177, %v3190
      %v3193 = vmul.f32 %v3178, %v3190
      %v3194 = vmul.f32 %v3179, %v3190
      %v3195 = vmul.f32 %v3180, %v3190
      %v3196 = vmul.f32 %v3181, %v3190
      %v3197 = vmul.f32 %v3182, %v3190
      %v3198 = vmul.f32 %v3183, %v3190
      %v3199 = vmul.f32 %v3184, %v3190
      %v3200 = vld [vmem:[%s9] sm:$0x1]
      %v3202 = vlaneseq
      %v3203 = vshrl.u32 %v3202, 7
      %v3204 = vsub.s32 0, %v3203
      %v3205 = vrot.slane %v3200, %v3204
      %v3207 = vadd.f32 %v3192, %v3205
      %v3208 = vadd.f32 %v3193, %v3205
      %v3209 = vadd.f32 %v3194, %v3205
      %v3210 = vadd.f32 %v3195, %v3205
      %v3211 = vadd.f32 %v3196, %v3205
      %v3212 = vadd.f32 %v3197, %v3205
      %v3213 = vadd.f32 %v3198, %v3205
      %v3214 = vadd.f32 %v3199, %v3205
      %v3215 = vpack.c.bf16 %v3208, %v3207
      %v3216 = vpack.c.bf16 %v3210, %v3209
      %v3217 = vpack.c.bf16 %v3212, %v3211
      %v3218 = vpack.c.bf16 %v3214, %v3213
      %v3219 = vld [vmem:[%s10] sm:$0xf]
      %v3220 = vld [vmem:[%s10 + $0x4] sm:$0xf]
      %v3221 = vld [vmem:[%s10 + $0x8] sm:$0xf]
      %v3222 = vld [vmem:[%s10 + $0xc] sm:$0xf]
      %v3223 = vld [vmem:[%s11] sm:$0x1]
      %v3225 = vlaneseq
      %v3226 = vshrl.u32 %v3225, 7
      %v3227 = vsub.s32 0, %v3226
      %v3228 = vrot.slane %v3223, %v3227
      %v3234 = vunpack.c.l.b16 %v3219
      %v3235 = vunpack.c.l.b16 %v3220
      %v3236 = vunpack.c.l.b16 %v3221
      %v3237 = vunpack.c.l.b16 %v3222
      %v3238 = vpack.c.b16 %v3235, %v3234
      %v3239 = vpack.c.b16 %v3237, %v3236
      %v3243 = vsel %vm477, %v3215, 0
      %v3246 = vsel %vm477, %v3216, 0
      %v3249 = vsel %vm477, %v3217, 0
      %v3252 = vsel %vm477, %v3218, 0
      %3254 = vmatprep.subr.bf16.mxu0 0
      %3255 = vmatpush1.bf16.msra.mxu0 0
      %3256 = vmatprep.subr.bf16.mxu0 0
      %3257 = vmatpush1.bf16.msra.mxu0 0
      %3258 = vmatprep.subr.bf16.mxu0 0
      %3259 = vmatpush1.bf16.msra.mxu0 0
      %3260 = vmatprep.subr.bf16.mxu0 0
      %3261 = vmatpush1.bf16.msra.mxu0 0
      %3262 = vmatprep.subr.bf16.mxu0 0
      %3263 = vmatpush1.bf16.msra.mxu0 0
      %3264 = vmatprep.subr.bf16.mxu0 0
      %3265 = vmatpush1.bf16.msra.mxu0 0
      %3266 = vmatprep.subr.bf16.mxu0 0
      %3267 = vmatpush1.bf16.msra.mxu0 %v3239
      %3268 = vmatprep.subr.bf16.mxu0 0
      %3269 = vmatpush1.bf16.msra.mxu0 %v3238
      %3270 = vmatprep.subr.bf16.mxu0 0
      %3271 = vmatpush2.bf16.msra.mxu0 0
      %3272 = vmatprep.subr.bf16.mxu0 0
      %3273 = vmatpush2.bf16.msra.mxu0 0
      %3274 = vmatprep.subr.bf16.mxu0 0
      %3275 = vmatpush2.bf16.msra.mxu0 0
      %3276 = vmatprep.subr.bf16.mxu0 0
      %3277 = vmatpush2.bf16.msra.mxu0 0
      %3278 = vmatprep.subr.bf16.mxu0 0
      %3279 = vmatpush2.bf16.msra.mxu0 0
      %3280 = vmatprep.subr.bf16.mxu0 0
      %3281 = vmatpush2.bf16.msra.mxu0 0
      %3282 = vmatprep.subr.bf16.mxu0 0
      %3283 = vmatpush2.bf16.msra.mxu0 0
      %3284 = vmatprep.subr.bf16.mxu0 0
      %3285 = vmatpush2.bf16.msra.mxu0 0
      %3286 = vmatprep.mubr.bf16.mxu0 0
      %3287 = vmatmul.mubr.bf16.gmra.mxu0 %v3243
      %v3288 = vpop.f32.mrf.mxu0
      %v3289 = vadd.f32 %v3228, %v3288
      %v3290 = vpop.f32.mrf.mxu0
      %v3291 = vpop.f32.mrf.mxu0
      %v3292 = vadd.f32 %v3228, %v3291
      %v3293 = vpop.f32.mrf.mxu0
      %3294 = vmatprep.mubr.bf16.mxu0 0
      %3295 = vmatmul.mubr.bf16.gmra.mxu0 %v3246
      %v3296 = vpop.f32.mrf.mxu0
      %v3297 = vadd.f32 %v3228, %v3296
      %v3298 = vpop.f32.mrf.mxu0
      %v3299 = vpop.f32.mrf.mxu0
      %v3300 = vadd.f32 %v3228, %v3299
      %v3301 = vpop.f32.mrf.mxu0
      %3302 = vmatprep.mubr.bf16.mxu0 0
      %3303 = vmatmul.mubr.bf16.gmra.mxu0 %v3249
      %v3304 = vpop.f32.mrf.mxu0
      %v3305 = vadd.f32 %v3228, %v3304
      %v3306 = vpop.f32.mrf.mxu0
      %v3307 = vpop.f32.mrf.mxu0
      %v3308 = vadd.f32 %v3228, %v3307
      %v3309 = vpop.f32.mrf.mxu0
      %3310 = vmatprep.mubr.bf16.mxu0 0
      %3311 = vmatmul.mubr.bf16.gmra.mxu0 %v3252
      %v3312 = vpop.f32.mrf.mxu0
      %v3313 = vadd.f32 %v3228, %v3312
      %v3314 = vpop.f32.mrf.mxu0
      %v3315 = vpop.f32.mrf.mxu0
      %v3316 = vadd.f32 %v3228, %v3315
      %v3317 = vpop.f32.mrf.mxu0
      %3318 = vdwg.mxu0
      %v3319 = vmul.f32 %v3289, %v3289
      %v3320 = vmul.f32 %v3292, %v3292
      %v3321 = vmul.f32 %v3297, %v3297
      %v3322 = vmul.f32 %v3300, %v3300
      %v3323 = vmul.f32 %v3305, %v3305
      %v3324 = vmul.f32 %v3308, %v3308
      %v3325 = vmul.f32 %v3313, %v3313
      %v3326 = vmul.f32 %v3316, %v3316
      %v3327 = vmul.f32 %v3289, %v3319
      %v3328 = vmul.f32 %v3292, %v3320
      %v3329 = vmul.f32 %v3297, %v3321
      %v3330 = vmul.f32 %v3300, %v3322
      %v3331 = vmul.f32 %v3305, %v3323
      %v3332 = vmul.f32 %v3308, %v3324
      %v3333 = vmul.f32 %v3313, %v3325
      %v3334 = vmul.f32 %v3316, %v3326
      %v3335 = vmul.f32 %v3327, 0.044715
      %v3336 = vmul.f32 %v3328, 0.044715
      %v3337 = vmul.f32 %v3329, 0.044715
      %v3338 = vmul.f32 %v3330, 0.044715
      %v3339 = vmul.f32 %v3331, 0.044715
      %v3340 = vmul.f32 %v3332, 0.044715
      %v3341 = vmul.f32 %v3333, 0.044715
      %v3342 = vmul.f32 %v3334, 0.044715
      %v3343 = vadd.f32 %v3289, %v3335
      %v3344 = vadd.f32 %v3292, %v3336
      %v3345 = vadd.f32 %v3297, %v3337
      %v3346 = vadd.f32 %v3300, %v3338
      %v3347 = vadd.f32 %v3305, %v3339
      %v3348 = vadd.f32 %v3308, %v3340
      %v3349 = vadd.f32 %v3313, %v3341
      %v3350 = vadd.f32 %v3316, %v3342
      %v3351 = vmul.f32 %v3343, 0.7978846
      %v3352 = vmul.f32 %v3344, 0.7978846
      %v3353 = vmul.f32 %v3345, 0.7978846
      %v3354 = vmul.f32 %v3346, 0.7978846
      %v3355 = vmul.f32 %v3347, 0.7978846
      %v3356 = vmul.f32 %v3348, 0.7978846
      %v3357 = vmul.f32 %v3349, 0.7978846
      %v3358 = vmul.f32 %v3350, 0.7978846
      %v3359 = vtanh.pop %v3351
      %v3360 = vtanh.pop %v3352
      %v3361 = vtanh.pop %v3353
      %v3362 = vtanh.pop %v3354
      %v3363 = vtanh.pop %v3355
      %v3364 = vtanh.pop %v3356
      %v3365 = vtanh.pop %v3357
      %v3366 = vtanh.pop %v3358
      %v3367 = vadd.f32 %v3359, 1.0
      %v3368 = vadd.f32 %v3360, 1.0
      %v3369 = vadd.f32 %v3361, 1.0
      %v3370 = vadd.f32 %v3362, 1.0
      %v3371 = vadd.f32 %v3363, 1.0
      %v3372 = vadd.f32 %v3364, 1.0
      %v3373 = vadd.f32 %v3365, 1.0
      %v3374 = vadd.f32 %v3366, 1.0
      %v3375 = vmul.f32 %v3367, 0.5
      %v3376 = vmul.f32 %v3368, 0.5
      %v3377 = vmul.f32 %v3369, 0.5
      %v3378 = vmul.f32 %v3370, 0.5
      %v3379 = vmul.f32 %v3371, 0.5
      %v3380 = vmul.f32 %v3372, 0.5
      %v3381 = vmul.f32 %v3373, 0.5
      %v3382 = vmul.f32 %v3374, 0.5
      %v3383 = vmul.f32 %v3289, %v3375
      %v3384 = vmul.f32 %v3292, %v3376
      %v3385 = vmul.f32 %v3297, %v3377
      %v3386 = vmul.f32 %v3300, %v3378
      %v3387 = vmul.f32 %v3305, %v3379
      %v3388 = vmul.f32 %v3308, %v3380
      %v3389 = vmul.f32 %v3313, %v3381
      %v3390 = vmul.f32 %v3316, %v3382
      %v3391 = vpack.c.bf16 %v3384, %v3383
      %v3392 = vpack.c.bf16 %v3386, %v3385
      %v3393 = vpack.c.bf16 %v3388, %v3387
      %v3394 = vpack.c.bf16 %v3390, %v3389
      %v3395 = vld [vmem:[%s12] sm:$0xf]
      %v3396 = vld [vmem:[%s12 + $0x4] sm:$0xf]
      %v3397 = vld [vmem:[%s12 + $0x8] sm:$0xf]
      %v3398 = vld [vmem:[%s12 + $0xc] sm:$0xf]
      %v3399 = vld [vmem:[%s12 + $0x10] sm:$0xf]
      %v3400 = vld [vmem:[%s12 + $0x14] sm:$0xf]
      %v3401 = vld [vmem:[%s12 + $0x18] sm:$0xf]
      %v3402 = vld [vmem:[%s12 + $0x1c] sm:$0xf]
      %v3403 = vld [vmem:[%s12 + $0x20] sm:$0xf]
      %v3404 = vld [vmem:[%s12 + $0x24] sm:$0xf]
      %v3405 = vld [vmem:[%s12 + $0x28] sm:$0xf]
      %v3406 = vld [vmem:[%s12 + $0x2c] sm:$0xf]
      %v3407 = vld [vmem:[%s12 + $0x30] sm:$0xf]
      %v3408 = vld [vmem:[%s12 + $0x34] sm:$0xf]
      %v3409 = vld [vmem:[%s12 + $0x38] sm:$0xf]
      %v3410 = vld [vmem:[%s12 + $0x3c] sm:$0xf]
      %v3411 = vld [vmem:[%s13] sm:$0x1]
      %v3413 = vlaneseq
      %v3414 = vshrl.u32 %v3413, 7
      %v3415 = vsub.s32 0, %v3414
      %v3416 = vrot.slane %v3411, %v3415
      %v3434 = vunpack.c.l.b16 %v3395
      %v3435 = vunpack.c.l.b16 %v3396
      %v3436 = vunpack.c.l.b16 %v3397
      %v3437 = vunpack.c.l.b16 %v3398
      %v3438 = vunpack.c.l.b16 %v3399
      %v3439 = vunpack.c.l.b16 %v3400
      %v3440 = vunpack.c.l.b16 %v3401
      %v3441 = vunpack.c.l.b16 %v3402
      %v3442 = vunpack.c.l.b16 %v3403
      %v3443 = vunpack.c.l.b16 %v3404
      %v3444 = vunpack.c.l.b16 %v3405
      %v3445 = vunpack.c.l.b16 %v3406
      %v3446 = vunpack.c.l.b16 %v3407
      %v3447 = vunpack.c.l.b16 %v3408
      %v3448 = vunpack.c.l.b16 %v3409
      %v3449 = vunpack.c.l.b16 %v3410
      %v3450 = vpack.c.b16 %v3435, %v3434
      %v3451 = vpack.c.b16 %v3437, %v3436
      %v3452 = vpack.c.b16 %v3439, %v3438
      %v3453 = vpack.c.b16 %v3441, %v3440
      %v3454 = vpack.c.b16 %v3443, %v3442
      %v3455 = vpack.c.b16 %v3445, %v3444
      %v3456 = vpack.c.b16 %v3447, %v3446
      %v3457 = vpack.c.b16 %v3449, %v3448
      %3466 = vmatprep.subr.bf16.mxu0 0
      %3467 = vmatpush1.bf16.msra.mxu0 %v3457
      %3468 = vmatprep.subr.bf16.mxu0 0
      %3469 = vmatpush1.bf16.msra.mxu0 %v3456
      %3470 = vmatprep.subr.bf16.mxu0 0
      %3471 = vmatpush1.bf16.msra.mxu0 %v3455
      %3472 = vmatprep.subr.bf16.mxu0 0
      %3473 = vmatpush1.bf16.msra.mxu0 %v3454
      %3474 = vmatprep.subr.bf16.mxu0 0
      %3475 = vmatpush1.bf16.msra.mxu0 %v3453
      %3476 = vmatprep.subr.bf16.mxu0 0
      %3477 = vmatpush1.bf16.msra.mxu0 %v3452
      %3478 = vmatprep.subr.bf16.mxu0 0
      %3479 = vmatpush1.bf16.msra.mxu0 %v3451
      %3480 = vmatprep.subr.bf16.mxu0 0
      %3481 = vmatpush1.bf16.msra.mxu0 %v3450
      %3482 = vmatprep.subr.bf16.mxu0 0
      %3483 = vmatpush2.bf16.msra.mxu0 0
      %3484 = vmatprep.subr.bf16.mxu0 0
      %3485 = vmatpush2.bf16.msra.mxu0 0
      %3486 = vmatprep.subr.bf16.mxu0 0
      %3487 = vmatpush2.bf16.msra.mxu0 0
      %3488 = vmatprep.subr.bf16.mxu0 0
      %3489 = vmatpush2.bf16.msra.mxu0 0
      %3490 = vmatprep.subr.bf16.mxu0 0
      %3491 = vmatpush2.bf16.msra.mxu0 0
      %3492 = vmatprep.subr.bf16.mxu0 0
      %3493 = vmatpush2.bf16.msra.mxu0 0
      %3494 = vmatprep.subr.bf16.mxu0 0
      %3495 = vmatpush2.bf16.msra.mxu0 0
      %3496 = vmatprep.subr.bf16.mxu0 0
      %3497 = vmatpush2.bf16.msra.mxu0 0
      %3498 = vmatprep.mubr.bf16.mxu0 0
      %3499 = vmatmul.mubr.bf16.gmra.mxu0 %v3391
      %v3500 = vpop.f32.mrf.mxu0
      %v3501 = vadd.f32 %v3416, %v3500
      %v3502 = vpop.f32.mrf.mxu0
      %v3503 = vpop.f32.mrf.mxu0
      %v3504 = vadd.f32 %v3416, %v3503
      %v3505 = vpop.f32.mrf.mxu0
      %3506 = vmatprep.mubr.bf16.mxu0 0
      %3507 = vmatmul.mubr.bf16.gmra.mxu0 %v3392
      %v3508 = vpop.f32.mrf.mxu0
      %v3509 = vadd.f32 %v3416, %v3508
      %v3510 = vpop.f32.mrf.mxu0
      %v3511 = vpop.f32.mrf.mxu0
      %v3512 = vadd.f32 %v3416, %v3511
      %v3513 = vpop.f32.mrf.mxu0
      %3514 = vmatprep.mubr.bf16.mxu0 0
      %3515 = vmatmul.mubr.bf16.gmra.mxu0 %v3393
      %v3516 = vpop.f32.mrf.mxu0
      %v3517 = vadd.f32 %v3416, %v3516
      %v3518 = vpop.f32.mrf.mxu0
      %v3519 = vpop.f32.mrf.mxu0
      %v3520 = vadd.f32 %v3416, %v3519
      %v3521 = vpop.f32.mrf.mxu0
      %3522 = vmatprep.mubr.bf16.mxu0 0
      %3523 = vmatmul.mubr.bf16.gmra.mxu0 %v3394
      %v3524 = vpop.f32.mrf.mxu0
      %v3525 = vadd.f32 %v3416, %v3524
      %v3526 = vpop.f32.mrf.mxu0
      %v3527 = vpop.f32.mrf.mxu0
      %v3528 = vadd.f32 %v3416, %v3527
      %v3529 = vpop.f32.mrf.mxu0
      %3530 = vdwg.mxu0
      %v3531 = vadd.f32 %v3057, %v3501
      %v3532 = vadd.f32 %v3058, %v3504
      %v3533 = vadd.f32 %v3059, %v3509
      %v3534 = vadd.f32 %v3060, %v3512
      %v3535 = vadd.f32 %v3061, %v3517
      %v3536 = vadd.f32 %v3062, %v3520
      %v3537 = vadd.f32 %v3063, %v3525
      %v3538 = vadd.f32 %v3064, %v3528
      %3539 = vst.msk [vmem:[%s467] sm:$0xff] %vm477, %v3531
      %3540 = vst.msk [vmem:[%s467 + $0x8] sm:$0xff] %vm477, %v3532
      %3541 = vst.msk [vmem:[%s467 + $0x10] sm:$0xff] %vm477, %v3533
      %3542 = vst.msk [vmem:[%s467 + $0x18] sm:$0xff] %vm477, %v3534
      %3543 = vst.msk [vmem:[%s467 + $0x20] sm:$0xff] %vm477, %v3535
      %3544 = vst.msk [vmem:[%s467 + $0x28] sm:$0xff] %vm477, %v3536
      %3545 = vst.msk [vmem:[%s467 + $0x30] sm:$0xff] %vm477, %v3537
      %3546 = vst.msk [vmem:[%s467 + $0x38] sm:$0xff] %vm477, %v3538
      %p3547 = scmp.lt.s32.totalorder %s25, 1
      %s3548 = scalar_select %p3547, %s25, 1
      %s3549 = smul.addr %s3548, 8
      %s3550 = smul.addr %s3549, 8
      %s3551 = scalar_lea.vmem %s14, %s3550
      // Predicated region
      $region77: #{swin_block.2} parent=75 // pred_check
        %p3552 = pneg %p342
      $region78: #{swin_block.2} parent=75 // pred_check_branch
        %3554 = sbr.rel (%p3552) target = $region80
      $region79: #{swin_block.2} parent=75 // pred_region
        _
      $region80: #{swin_block.2} parent=75 // pred_fallthru
        _
    $region76: #{swin_block.2} parent=5 // pred_fallthru
      _
    %p3555 = scmp.le.s32.totalorder 2, %s20
    // Predicated region
    $region81: #{swin_block.2} parent=5 // pred_check
      %p3556 = pneg %p3555
    $region82: #{swin_block.2} parent=5 // pred_check_branch
      %3558 = sbr.rel (%p3556) target = $region84
    $region83: #{swin_block.2} parent=5 // pred_region
      %s3559 = ssub.s32 %s20, 2
      // Predicated region
      $region85: #{swin_block.2} parent=83 // pred_check
        %p3560 = pneg %p348
      $region86: #{swin_block.2} parent=83 // pred_check_branch
        %3562 = sbr.rel (%p3560) target = $region88
      $region87: #{swin_block.2} parent=83 // pred_region
        %p3563 = scmp.lt.s32.totalorder %s26, 1
        %s3564 = scalar_select %p3563, %s26, 1
        %s3565 = smul.addr %s3564, 8
        %s3566 = smul.addr %s3565, 8
        %s3567 = scalar_lea.vmem %s14, %s3566
      $region88: #{swin_block.2} parent=83 // pred_fallthru
        _
    $region84: #{swin_block.2} parent=5 // pred_fallthru
      _
  $region6: #{swin_block.2} parent=0 // loop_footer
    %s24 = sadd.s32 1, %s20
  $region7: #{swin_block.2} parent=0 // loop_footer_branch
    %19 = sbr.rel target = $region3
  $region8: #{swin_block.2} parent=0 // loop_exit
    _

</llo_original>
